<compile_context>
chip_gen: v5e
topology: v5e:2x2
jax: 0.10.0
libtpu: 0.0.40
codegen_flags: <defaults>
</compile_context>

<pallas_src>
import math

import jax
import jax.numpy as jnp
from jax.experimental import pallas as pl
from jax.experimental.pallas import tpu as pltpu

# ----------------------------- small config ---------------------------------
B = 2
IMG_C, IMG_H, IMG_W = 3, 24, 24          # stands in for (3, 224, 224)
STEM_K = 8                                # conv-stem kernel == stride
CF = 8                                    # backbone output channels (plays 512)
HF = IMG_H // STEM_K                      # 3
HW = HF * HF                              # 9   image "embedding" (plays 784)
CKK = IMG_C * STEM_K * STEM_K             # 192 im2col depth
PATCH_B = 6
PH = IMG_H // PATCH_B                     # 4
PATCH_DIM = IMG_C * PH * PH               # 48  (plays 4107)
N_PATCH = PATCH_B * PATCH_B               # 36
L_IMG = CF + N_PATCH                      # 44  real image sequence length
LI = 48                                   # L_IMG padded to a sublane multiple
D_IMG, NH_IMG = 32, 8                     # plays d_model=128, nhead=8
D_TXT, NH_TXT = 30, 15                    # plays d_model=300, nhead=15
FF = 64                                   # ffn hidden (plays 2048)
FFP = 128                                 # FF padded to a full lane tile
VOCAB = 100                               # vocabulary size (no vocabulary -> 100)
PAD = 0                                   # '<padding>' index
L_TXT = 7
LT = 8                                    # L_TXT padded to a sublane multiple
DP = 128                                  # padded lane width for all model dims
VOCABP = 128                              # padded vocab width
NEG = -1e30                               # stands in for float('-inf') in masks

_ENC_KEYS = ("wqkv", "bqkv", "wo", "bo", "g1", "n1",
             "wf1", "bf1", "wf2", "bf2", "g2", "n2")
_DEC_KEYS = ("s_wqkv", "s_bqkv", "s_wo", "s_bo", "g1", "n1",
             "c_wq", "c_bq", "c_wkv", "c_bkv", "c_wo", "c_bo", "g2", "n2",
             "wf1", "bf1", "wf2", "bf2", "g3", "n3")
_ARG_NAMES = (
    ("ps", "p6", "x_txt", "kpm",
     "hm_img", "hm_txt", "bias_img", "bias_txt", "bias_x",
     "w_stem", "b_stem", "w2", "b2", "w3", "b3")
    + tuple("ie_" + k for k in _ENC_KEYS) + ("w5", "b5")
    + tuple("te_" + k for k in _ENC_KEYS)
    + tuple("de_" + k for k in _DEC_KEYS) + ("w_out", "b_out")
)


# --------------------------- in-kernel helpers --------------------------------
def _mm(a, w):
    """bf16 MXU matmul with f32 accumulation (weights already bf16)."""
    return jnp.dot(a.astype(jnp.bfloat16), w, preferred_element_type=jnp.float32)


def _layer_norm(x, g, b, inv_d):
    """LayerNorm over the real d lanes; padded lanes of x / g / b are zero."""
    mean = jnp.sum(x, axis=-1, keepdims=True) * inv_d
    var = jnp.sum(x * x, axis=-1, keepdims=True) * inv_d - mean * mean
    return (x - mean) * jax.lax.rsqrt(var + 1e-5) * g + b


def _mha(q, k, v, bias, hm, nhead):
    """Batch+head-stacked attention; all operands 2-D and lane-dense.

    q: (Rq, DP) f32, k/v: (Rk, DP) f32 (rows = batch-major sequence),
    bias: (Rq, Rk) f32 additive mask (cross-batch / causal / key-padding / seq-pad),
    hm: (nhead, DP) f32 per-head column mask.
    The 1/sqrt(dh) scale is pre-folded into the Q projection weights.
    """
    rq = q.shape[0]
    qe = jnp.concatenate([q * hm[h:h + 1] for h in range(nhead)], axis=0)     # (H*Rq, DP)
    s = jnp.dot(qe.astype(jnp.bfloat16), k.T.astype(jnp.bfloat16),
                preferred_element_type=jnp.float32)                           # (H*Rq, Rk)
    s = s + jnp.concatenate([bias] * nhead, axis=0)
    m = jnp.max(s, axis=-1, keepdims=True)
    p = jnp.exp(s - m)
    p = p * pl.reciprocal(jnp.sum(p, axis=-1, keepdims=True), approx=True)
    cf = jnp.dot(p.astype(jnp.bfloat16), v.astype(jnp.bfloat16),
                 preferred_element_type=jnp.float32)                          # (H*Rq, DP)
    out = cf[0:rq] * hm[0:1]
    for h in range(1, nhead):
        out = out + cf[h * rq:(h + 1) * rq] * hm[h:h + 1]
    return out                                                                # (Rq, DP)


def _encoder_layer(r, pfx, x, bias, hm, nhead, inv_d):
    qkv = _mm(x, r[pfx + "wqkv"][...]) + r[pfx + "bqkv"][...]
    ctx = _mha(qkv[:, :DP], qkv[:, DP:2 * DP], qkv[:, 2 * DP:], bias, hm, nhead)
    sa = _mm(ctx, r[pfx + "wo"][...]) + r[pfx + "bo"][...]
    h1 = _layer_norm(x + sa, r[pfx + "g1"][...], r[pfx + "n1"][...], inv_d)
    ff = jnp.maximum(_mm(h1, r[pfx + "wf1"][...]) + r[pfx + "bf1"][...], 0.0)
    ff = _mm(ff, r[pfx + "wf2"][...]) + r[pfx + "bf2"][...]
    return _layer_norm(h1 + ff, r[pfx + "g2"][...], r[pfx + "n2"][...], inv_d)


def _decoder_layer(r, x, memory, bias_self, bias_cross, hm, nhead, inv_d):
    qkv = _mm(x, r["de_s_wqkv"][...]) + r["de_s_bqkv"][...]
    ctx = _mha(qkv[:, :DP], qkv[:, DP:2 * DP], qkv[:, 2 * DP:], bias_self, hm, nhead)
    sa = _mm(ctx, r["de_s_wo"][...]) + r["de_s_bo"][...]
    h1 = _layer_norm(x + sa, r["de_g1"][...], r["de_n1"][...], inv_d)

    qc = _mm(h1, r["de_c_wq"][...]) + r["de_c_bq"][...]
    kv = _mm(memory, r["de_c_wkv"][...]) + r["de_c_bkv"][...]
    ctx2 = _mha(qc, kv[:, :DP], kv[:, DP:2 * DP], bias_cross, hm, nhead)
    ca = _mm(ctx2, r["de_c_wo"][...]) + r["de_c_bo"][...]
    h2 = _layer_norm(h1 + ca, r["de_g2"][...], r["de_n2"][...], inv_d)

    ff = jnp.maximum(_mm(h2, r["de_wf1"][...]) + r["de_bf1"][...], 0.0)
    ff = _mm(ff, r["de_wf2"][...]) + r["de_bf2"][...]
    return _layer_norm(h2 + ff, r["de_g3"][...], r["de_n3"][...], inv_d)


# ------------------------------ fused Pallas kernel ----------------------------
def _fused_forward_kernel(*refs):
    r = dict(zip(_ARG_NAMES, refs))
    o_ref = refs[-1]
    f32 = jnp.float32

    # ---- image front-end: conv stem (im2col) + patch linear + shared l3 ----
    wst = r["w_stem"][...]
    bst = r["b_stem"][...]
    w2 = r["w2"][...]
    b2 = r["b2"][...]
    parts = []
    for b in range(B):
        v1 = jnp.maximum(
            jnp.dot(wst, r["ps"][b], preferred_element_type=f32) + bst, 0.0)   # (CF, DP)
        v2 = jnp.tanh(
            jnp.dot(r["p6"][b], w2, preferred_element_type=f32) + b2)          # (36, DP)
        parts += [v1, v2, jnp.zeros((LI - L_IMG, DP), f32)]
    u = jnp.concatenate(parts, axis=0)                                         # (B*LI, DP)
    x_img = jnp.tanh(_mm(u, r["w3"][...]) + r["b3"][...])                      # (B*LI, DP)

    # ---- masks (all precomputed, only the text key-padding bias is runtime) ----
    hm_i = r["hm_img"][...]
    hm_t = r["hm_txt"][...]
    bias_i = r["bias_img"][...]
    bias_t = r["bias_txt"][...] + r["kpm"][...]        # (B*LT, B*LT) + (1, B*LT)
    bias_x = r["bias_x"][...]

    # ---- image encoder layer + l5 projection -> decoder memory ----
    enc_img = _encoder_layer(r, "ie_", x_img, bias_i, hm_i, NH_IMG, 1.0 / D_IMG)
    memory = _mm(enc_img, r["w5"][...]) + r["b5"][...]                         # (B*LI, DP)

    # ---- text encoder layer (causal + key padding) ----
    v_txt = _encoder_layer(r, "te_", r["x_txt"][...], bias_t, hm_t, NH_TXT, 1.0 / D_TXT)

    # ---- decoder layer + vocab projection ----
    h = _decoder_layer(r, v_txt, memory, bias_t, bias_x, hm_t, NH_TXT, 1.0 / D_TXT)
    o_ref[...] = _mm(h, r["w_out"][...]) + r["b_out"][...]                     # (B*LT, VOCABP)


# ------------------------------ JAX-side glue ----------------------------------
def _im2col_stem(x):
    """NCHW -> (B, C*K*K, Hf*Wf): pre-transposed im2col so the stem is W @ P."""
    bsz = x.shape[0]
    t = x.reshape(bsz, IMG_C, HF, STEM_K, HF, STEM_K)
    t = t.transpose(0, 1, 3, 5, 2, 4)                     # (B, C, K, K, Hf, Wf)
    return t.reshape(bsz, CKK, HW)


def _patch6(x):
    """PyTorch patch() as a single reshape+transpose: (B, 36, C*ph*pw)."""
    bsz = x.shape[0]
    t = x.reshape(bsz, IMG_C, PATCH_B, PH, PATCH_B, PH)
    t = t.transpose(0, 2, 4, 1, 3, 5)                     # (B, 6, 6, C, ph, pw)
    return t.reshape(bsz, N_PATCH, PATCH_DIM)


def _kernel_args(ps, p6, x_txt, kpm, params):
    img, txt, dec = params["image"], params["text"], params["dec"]
    named = {
        "ps": ps, "p6": p6, "x_txt": x_txt, "kpm": kpm,
        "hm_img": params["hm_img"], "hm_txt": params["hm_txt"],
        "bias_img": params["bias_img"], "bias_txt": params["bias_txt"],
        "bias_x": params["bias_x"],
        "w_stem": img["w_stem"], "b_stem": img["b_stem"],
        "w2": img["w2"], "b2": img["b2"], "w3": img["w3"], "b3": img["b3"],
        "w5": img["w5"], "b5": img["b5"],
        "w_out": params["w_out"], "b_out": params["b_out"],
    }
    for k in _ENC_KEYS:
        named["ie_" + k] = img["enc"][k]
        named["te_" + k] = txt["enc"][k]
    for k in _DEC_KEYS:
        named["de_" + k] = dec[k]
    return [named[n] for n in _ARG_NAMES]


def attention_forward(image_x, text_x, params):
    """image_x: (B, C, H, W) f32 ; text_x: (L_TXT, B) int. Returns (L_TXT, B, VOCAB)."""
    bsz = image_x.shape[0]

    # image front-end inputs: im2col + 6x6 patches, lane-padded, bf16 for the MXU
    ps = jnp.pad(_im2col_stem(image_x), ((0, 0), (0, 0), (0, DP - HW))).astype(jnp.bfloat16)
    p6 = jnp.pad(_patch6(image_x), ((0, 0), (0, 0), (0, DP - PATCH_DIM))).astype(jnp.bfloat16)

    # text embeddings (gather in XLA) + key-padding bias, batch folded into sublanes
    tok = text_x.T                                                    # (B, L_TXT)
    x_txt = params["text"]["emb_e"][tok] + params["text"]["emb_p"][:L_TXT][None]
    x_txt = jnp.pad(x_txt, ((0, 0), (0, LT - L_TXT), (0, 0))).reshape(bsz * LT, DP)
    kpm = jnp.where(tok == PAD, NEG, 0.0).astype(jnp.float32)
    kpm = jnp.pad(kpm, ((0, 0), (0, LT - L_TXT))).reshape(1, bsz * LT)

    logits = pl.pallas_call(
        _fused_forward_kernel,
        out_shape=jax.ShapeDtypeStruct((bsz * LT, VOCABP), jnp.float32),
        compiler_params=pltpu.CompilerParams(vmem_limit_bytes=32 * 1024 * 1024),
    )(*_kernel_args(ps, p6, x_txt, kpm, params))

    logits = logits.reshape(bsz, LT, VOCABP)[:, :L_TXT, :VOCAB]
    return logits.transpose(1, 0, 2)                                  # (L_TXT, B, VOCAB)


# ------------------------------ parameter init ----------------------------------
def _init_linear(key, din, dout):
    k1, k2 = jax.random.split(key)
    bound = 1.0 / math.sqrt(din)
    w = jax.random.uniform(k1, (din, dout), jnp.float32, -bound, bound)
    b = jax.random.uniform(k2, (dout,), jnp.float32, -bound, bound)
    return w, b


def _pad2(w, rows, cols):
    out = jnp.zeros((rows, cols), jnp.float32)
    return out.at[: w.shape[0], : w.shape[1]].set(w)


def _padb(b, cols):
    out = jnp.zeros((1, cols), jnp.float32)
    return out.at[0, : b.shape[0]].set(b)


def _bf(w):
    return w.astype(jnp.bfloat16)


def _head_mask(nhead, dh):
    h = jnp.arange(nhead)[:, None]
    c = jnp.arange(DP)[None, :]
    return ((c >= h * dh) & (c < (h + 1) * dh)).astype(jnp.float32)   # (nhead, DP)


def _attn_bias(lq, lk, valid_k, causal):
    """Additive bias over batch-stacked rows/cols: (B*lq, B*lk)."""
    r = jnp.arange(B * lq)[:, None]
    c = jnp.arange(B * lk)[None, :]
    mask = (r // lq != c // lk) | ((c % lk) >= valid_k)
    if causal:
        mask = mask | ((c % lk) > (r % lq))
    return jnp.where(mask, NEG, 0.0).astype(jnp.float32)


def _init_encoder(key, d, nhead):
    dh = d // nhead
    scale = 1.0 / math.sqrt(dh)
    ks = jax.random.split(key, 6)
    wq, bq = _init_linear(ks[0], d, d)
    wk, bk = _init_linear(ks[1], d, d)
    wv, bv = _init_linear(ks[2], d, d)
    wo, bo = _init_linear(ks[3], d, d)
    wf1, bf1 = _init_linear(ks[4], d, FF)
    wf2, bf2 = _init_linear(ks[5], FF, d)
    ones = jnp.ones((d,), jnp.float32)
    zeros = jnp.zeros((d,), jnp.float32)
    return {
        "wqkv": _bf(jnp.concatenate([_pad2(wq * scale, DP, DP), _pad2(wk, DP, DP),
                                     _pad2(wv, DP, DP)], axis=1)),
        "bqkv": jnp.concatenate([_padb(bq * scale, DP), _padb(bk, DP), _padb(bv, DP)], axis=1),
        "wo": _bf(_pad2(wo, DP, DP)), "bo": _padb(bo, DP),
        "g1": _padb(ones, DP), "n1": _padb(zeros, DP),
        "wf1": _bf(_pad2(wf1, DP, FFP)), "bf1": _padb(bf1, FFP),
        "wf2": _bf(_pad2(wf2, FFP, DP)), "bf2": _padb(bf2, DP),
        "g2": _padb(ones, DP), "n2": _padb(zeros, DP),
    }


def _init_decoder(key, d, nhead):
    dh = d // nhead
    scale = 1.0 / math.sqrt(dh)
    ks = jax.random.split(key, 10)
    swq, sbq = _init_linear(ks[0], d, d)
    swk, sbk = _init_linear(ks[1], d, d)
    swv, sbv = _init_linear(ks[2], d, d)
    swo, sbo = _init_linear(ks[3], d, d)
    cwq, cbq = _init_linear(ks[4], d, d)
    cwk, cbk = _init_linear(ks[5], d, d)
    cwv, cbv = _init_linear(ks[6], d, d)
    cwo, cbo = _init_linear(ks[7], d, d)
    wf1, bf1 = _init_linear(ks[8], d, FF)
    wf2, bf2 = _init_linear(ks[9], FF, d)
    ones = jnp.ones((d,), jnp.float32)
    zeros = jnp.zeros((d,), jnp.float32)
    return {
        "s_wqkv": _bf(jnp.concatenate([_pad2(swq * scale, DP, DP), _pad2(swk, DP, DP),
                                       _pad2(swv, DP, DP)], axis=1)),
        "s_bqkv": jnp.concatenate([_padb(sbq * scale, DP), _padb(sbk, DP), _padb(sbv, DP)], axis=1),
        "s_wo": _bf(_pad2(swo, DP, DP)), "s_bo": _padb(sbo, DP),
        "g1": _padb(ones, DP), "n1": _padb(zeros, DP),
        "c_wq": _bf(_pad2(cwq * scale, DP, DP)), "c_bq": _padb(cbq * scale, DP),
        "c_wkv": _bf(jnp.concatenate([_pad2(cwk, DP, DP), _pad2(cwv, DP, DP)], axis=1)),
        "c_bkv": jnp.concatenate([_padb(cbk, DP), _padb(cbv, DP)], axis=1),
        "c_wo": _bf(_pad2(cwo, DP, DP)), "c_bo": _padb(cbo, DP),
        "g2": _padb(ones, DP), "n2": _padb(zeros, DP),
        "wf1": _bf(_pad2(wf1, DP, FFP)), "bf1": _padb(bf1, FFP),
        "wf2": _bf(_pad2(wf2, FFP, DP)), "bf2": _padb(bf2, DP),
        "g3": _padb(ones, DP), "n3": _padb(zeros, DP),
    }


def _init_image(key):
    ks = jax.random.split(key, 6)
    bound = 1.0 / math.sqrt(CKK)
    w_stem = jax.random.uniform(ks[0], (CF, CKK), jnp.float32, -bound, bound)
    b_stem = jax.random.uniform(ks[1], (CF, 1), jnp.float32, -bound, bound)
    w2, b2 = _init_linear(ks[2], PATCH_DIM, HW)
    w3, b3 = _init_linear(ks[3], HW, D_IMG)
    w5, b5 = _init_linear(ks[4], D_IMG, D_TXT)
    return {
        "w_stem": _bf(w_stem),
        "b_stem": jnp.tile(b_stem, (1, DP)),
        "w2": _bf(_pad2(w2, DP, DP)), "b2": _padb(b2, DP),
        "w3": _bf(_pad2(w3, DP, DP)), "b3": _padb(b3, DP),
        "enc": _init_encoder(ks[5], D_IMG, NH_IMG),
        "w5": _bf(_pad2(w5, DP, DP)), "b5": _padb(b5, DP),
    }


def _init_text(key):
    ks = jax.random.split(key, 3)
    emb_e = 0.02 * jax.random.normal(ks[0], (VOCAB, D_TXT), jnp.float32)
    emb_p = 0.02 * jax.random.normal(ks[1], (VOCAB, D_TXT), jnp.float32)
    return {
        "emb_e": _pad2(emb_e, VOCAB, DP),
        "emb_p": _pad2(emb_p, VOCAB, DP),
        "enc": _init_encoder(ks[2], D_TXT, NH_TXT),
    }


def init_params(key):
    ks = jax.random.split(key, 4)
    w_out, b_out = _init_linear(ks[3], D_TXT, VOCAB)
    return {
        "image": _init_image(ks[0]),
        "text": _init_text(ks[1]),
        "dec": _init_decoder(ks[2], D_TXT, NH_TXT),
        "w_out": _bf(_pad2(w_out, DP, VOCABP)),
        "b_out": _padb(b_out, VOCABP),
        "hm_img": _head_mask(NH_IMG, D_IMG // NH_IMG),
        "hm_txt": _head_mask(NH_TXT, D_TXT // NH_TXT),
        "bias_img": _attn_bias(LI, LI, L_IMG, causal=False),   # image self-attn
        "bias_txt": _attn_bias(LT, LT, L_TXT, causal=True),    # text / decoder self-attn
        "bias_x": _attn_bias(LT, LI, L_IMG, causal=False),     # decoder cross-attn
    }


# ----------------------------------- main ---------------------------------------
if __name__ == "__main__":
    key = jax.random.PRNGKey(0)
    k_img, k_txt, k_par = jax.random.split(key, 3)

    image_x = jax.random.normal(k_img, (B, IMG_C, IMG_H, IMG_W), jnp.float32)
    # tokens in [1, 20) so the '<padding>' (=0) key-padding mask never fully masks a row
    text_x = jax.random.randint(k_txt, (L_TXT, B), 1, 20)

    params = init_params(k_par)

    fwd = jax.jit(attention_forward)
    y = jax.block_until_ready(fwd(image_x, text_x, params))

    assert y.shape == (L_TXT, B, VOCAB), y.shape
    assert bool(jnp.all(jnp.isfinite(y)))
    print("KERNEL_OK")
</pallas_src>

<mosaic_0001>
module attributes {stable_mosaic.version = 11 : i64} {
  func.func @_fused_forward_kernel(%arg0: memref<2x192x128xbf16, #tpu.memory_space<vmem>>, %arg1: memref<2x36x128xbf16, #tpu.memory_space<vmem>>, %arg2: memref<16x128xf32, #tpu.memory_space<vmem>>, %arg3: memref<1x16xf32, #tpu.memory_space<vmem>>, %arg4: memref<8x128xf32, #tpu.memory_space<vmem>>, %arg5: memref<15x128xf32, #tpu.memory_space<vmem>>, %arg6: memref<96x96xf32, #tpu.memory_space<vmem>>, %arg7: memref<16x16xf32, #tpu.memory_space<vmem>>, %arg8: memref<16x96xf32, #tpu.memory_space<vmem>>, %arg9: memref<8x192xbf16, #tpu.memory_space<vmem>>, %arg10: memref<8x128xf32, #tpu.memory_space<vmem>>, %arg11: memref<128x128xbf16, #tpu.memory_space<vmem>>, %arg12: memref<1x128xf32, #tpu.memory_space<vmem>>, %arg13: memref<128x128xbf16, #tpu.memory_space<vmem>>, %arg14: memref<1x128xf32, #tpu.memory_space<vmem>>, %arg15: memref<128x384xbf16, #tpu.memory_space<vmem>>, %arg16: memref<1x384xf32, #tpu.memory_space<vmem>>, %arg17: memref<128x128xbf16, #tpu.memory_space<vmem>>, %arg18: memref<1x128xf32, #tpu.memory_space<vmem>>, %arg19: memref<1x128xf32, #tpu.memory_space<vmem>>, %arg20: memref<1x128xf32, #tpu.memory_space<vmem>>, %arg21: memref<128x128xbf16, #tpu.memory_space<vmem>>, %arg22: memref<1x128xf32, #tpu.memory_space<vmem>>, %arg23: memref<128x128xbf16, #tpu.memory_space<vmem>>, %arg24: memref<1x128xf32, #tpu.memory_space<vmem>>, %arg25: memref<1x128xf32, #tpu.memory_space<vmem>>, %arg26: memref<1x128xf32, #tpu.memory_space<vmem>>, %arg27: memref<128x128xbf16, #tpu.memory_space<vmem>>, %arg28: memref<1x128xf32, #tpu.memory_space<vmem>>, %arg29: memref<128x384xbf16, #tpu.memory_space<vmem>>, %arg30: memref<1x384xf32, #tpu.memory_space<vmem>>, %arg31: memref<128x128xbf16, #tpu.memory_space<vmem>>, %arg32: memref<1x128xf32, #tpu.memory_space<vmem>>, %arg33: memref<1x128xf32, #tpu.memory_space<vmem>>, %arg34: memref<1x128xf32, #tpu.memory_space<vmem>>, %arg35: memref<128x128xbf16, #tpu.memory_space<vmem>>, %arg36: memref<1x128xf32, #tpu.memory_space<vmem>>, %arg37: memref<128x128xbf16, #tpu.memory_space<vmem>>, %arg38: memref<1x128xf32, #tpu.memory_space<vmem>>, %arg39: memref<1x128xf32, #tpu.memory_space<vmem>>, %arg40: memref<1x128xf32, #tpu.memory_space<vmem>>, %arg41: memref<128x384xbf16, #tpu.memory_space<vmem>>, %arg42: memref<1x384xf32, #tpu.memory_space<vmem>>, %arg43: memref<128x128xbf16, #tpu.memory_space<vmem>>, %arg44: memref<1x128xf32, #tpu.memory_space<vmem>>, %arg45: memref<1x128xf32, #tpu.memory_space<vmem>>, %arg46: memref<1x128xf32, #tpu.memory_space<vmem>>, %arg47: memref<128x128xbf16, #tpu.memory_space<vmem>>, %arg48: memref<1x128xf32, #tpu.memory_space<vmem>>, %arg49: memref<128x256xbf16, #tpu.memory_space<vmem>>, %arg50: memref<1x256xf32, #tpu.memory_space<vmem>>, %arg51: memref<128x128xbf16, #tpu.memory_space<vmem>>, %arg52: memref<1x128xf32, #tpu.memory_space<vmem>>, %arg53: memref<1x128xf32, #tpu.memory_space<vmem>>, %arg54: memref<1x128xf32, #tpu.memory_space<vmem>>, %arg55: memref<128x128xbf16, #tpu.memory_space<vmem>>, %arg56: memref<1x128xf32, #tpu.memory_space<vmem>>, %arg57: memref<128x128xbf16, #tpu.memory_space<vmem>>, %arg58: memref<1x128xf32, #tpu.memory_space<vmem>>, %arg59: memref<1x128xf32, #tpu.memory_space<vmem>>, %arg60: memref<1x128xf32, #tpu.memory_space<vmem>>, %arg61: memref<128x128xbf16, #tpu.memory_space<vmem>>, %arg62: memref<1x128xf32, #tpu.memory_space<vmem>>, %arg63: memref<16x128xf32, #tpu.memory_space<vmem>>) attributes {dimension_semantics = [], scalar_prefetch = 0 : i64, scratch_operands = 0 : i64, tpu.core_type = #tpu.core_type<tc>} {
    %c0 = arith.constant 0 : index
    %c0_0 = arith.constant 0 : index
    %0 = vector.load %arg9[%c0, %c0_0] : memref<8x192xbf16, #tpu.memory_space<vmem>>, vector<8x192xbf16>
    %c0_1 = arith.constant 0 : index
    %c0_2 = arith.constant 0 : index
    %1 = vector.load %arg10[%c0_1, %c0_2] : memref<8x128xf32, #tpu.memory_space<vmem>>, vector<8x128xf32>
    %c0_3 = arith.constant 0 : index
    %c0_4 = arith.constant 0 : index
    %2 = vector.load %arg11[%c0_3, %c0_4] : memref<128x128xbf16, #tpu.memory_space<vmem>>, vector<128x128xbf16>
    %c0_5 = arith.constant 0 : index
    %c0_6 = arith.constant 0 : index
    %3 = vector.load %arg12[%c0_5, %c0_6] : memref<1x128xf32, #tpu.memory_space<vmem>>, vector<1x128xf32>
    %c0_7 = arith.constant 0 : index
    %c0_8 = arith.constant 0 : index
    %c0_9 = arith.constant 0 : index
    %4 = vector.load %arg0[%c0_7, %c0_8, %c0_9] : memref<2x192x128xbf16, #tpu.memory_space<vmem>>, vector<1x192x128xbf16>
    %5 = vector.shape_cast %4 : vector<1x192x128xbf16> to vector<192x128xbf16>
    %cst = arith.constant dense<0.000000e+00> : vector<8x128xf32>
    %6 = tpu.matmul %0, %5, %cst {dimension_numbers = #tpu.dot_dimension_numbers<[1], [0], [0], [1], [0, 0, 1, 1], [], []>} : vector<8x192xbf16>, vector<192x128xbf16>, vector<8x128xf32> -> vector<8x128xf32>
    %7 = arith.addf %6, %1 : vector<8x128xf32>
    %cst_10 = arith.constant 0.000000e+00 : f32
    %8 = vector.broadcast %cst_10 : f32 to vector<8x128xf32>
    %9 = arith.maximumf %7, %8 : vector<8x128xf32>
    %c0_11 = arith.constant 0 : index
    %c0_12 = arith.constant 0 : index
    %c0_13 = arith.constant 0 : index
    %10 = vector.load %arg1[%c0_11, %c0_12, %c0_13] : memref<2x36x128xbf16, #tpu.memory_space<vmem>>, vector<1x36x128xbf16>
    %11 = vector.shape_cast %10 : vector<1x36x128xbf16> to vector<36x128xbf16>
    %cst_14 = arith.constant dense<0.000000e+00> : vector<36x128xf32>
    %12 = tpu.matmul %11, %2, %cst_14 {dimension_numbers = #tpu.dot_dimension_numbers<[1], [0], [0], [1], [0, 0, 1, 1], [], []>} : vector<36x128xbf16>, vector<128x128xbf16>, vector<36x128xf32> -> vector<36x128xf32>
    %13 = vector.broadcast %3 : vector<1x128xf32> to vector<36x128xf32>
    %14 = arith.addf %12, %13 : vector<36x128xf32>
    %15 = math.tanh %14 : vector<36x128xf32>
    %cst_15 = arith.constant 0.000000e+00 : f32
    %16 = vector.broadcast %cst_15 : f32 to vector<4x128xf32>
    %c1 = arith.constant 1 : index
    %c0_16 = arith.constant 0 : index
    %c0_17 = arith.constant 0 : index
    %17 = vector.load %arg0[%c1, %c0_16, %c0_17] : memref<2x192x128xbf16, #tpu.memory_space<vmem>>, vector<1x192x128xbf16>
    %18 = vector.shape_cast %17 : vector<1x192x128xbf16> to vector<192x128xbf16>
    %cst_18 = arith.constant dense<0.000000e+00> : vector<8x128xf32>
    %19 = tpu.matmul %0, %18, %cst_18 {dimension_numbers = #tpu.dot_dimension_numbers<[1], [0], [0], [1], [0, 0, 1, 1], [], []>} : vector<8x192xbf16>, vector<192x128xbf16>, vector<8x128xf32> -> vector<8x128xf32>
    %20 = arith.addf %19, %1 : vector<8x128xf32>
    %cst_19 = arith.constant 0.000000e+00 : f32
    %21 = vector.broadcast %cst_19 : f32 to vector<8x128xf32>
    %22 = arith.maximumf %20, %21 : vector<8x128xf32>
    %c1_20 = arith.constant 1 : index
    %c0_21 = arith.constant 0 : index
    %c0_22 = arith.constant 0 : index
    %23 = vector.load %arg1[%c1_20, %c0_21, %c0_22] : memref<2x36x128xbf16, #tpu.memory_space<vmem>>, vector<1x36x128xbf16>
    %24 = vector.shape_cast %23 : vector<1x36x128xbf16> to vector<36x128xbf16>
    %cst_23 = arith.constant dense<0.000000e+00> : vector<36x128xf32>
    %25 = tpu.matmul %24, %2, %cst_23 {dimension_numbers = #tpu.dot_dimension_numbers<[1], [0], [0], [1], [0, 0, 1, 1], [], []>} : vector<36x128xbf16>, vector<128x128xbf16>, vector<36x128xf32> -> vector<36x128xf32>
    %26 = vector.broadcast %3 : vector<1x128xf32> to vector<36x128xf32>
    %27 = arith.addf %25, %26 : vector<36x128xf32>
    %28 = math.tanh %27 : vector<36x128xf32>
    %cst_24 = arith.constant 0.000000e+00 : f32
    %29 = vector.broadcast %cst_24 : f32 to vector<4x128xf32>
    %30 = tpu.concatenate %9, %15, %16, %22, %28, %29 in 0 : vector<8x128xf32>, vector<36x128xf32>, vector<4x128xf32>, vector<8x128xf32>, vector<36x128xf32>, vector<4x128xf32> -> vector<96x128xf32>
    %c0_25 = arith.constant 0 : index
    %c0_26 = arith.constant 0 : index
    %31 = vector.load %arg13[%c0_25, %c0_26] : memref<128x128xbf16, #tpu.memory_space<vmem>>, vector<128x128xbf16>
    %32 = arith.truncf %30 : vector<96x128xf32> to vector<96x128xbf16>
    %cst_27 = arith.constant dense<0.000000e+00> : vector<96x128xf32>
    %33 = tpu.matmul %32, %31, %cst_27 {dimension_numbers = #tpu.dot_dimension_numbers<[1], [0], [0], [1], [0, 0, 1, 1], [], []>} : vector<96x128xbf16>, vector<128x128xbf16>, vector<96x128xf32> -> vector<96x128xf32>
    %c0_28 = arith.constant 0 : index
    %c0_29 = arith.constant 0 : index
    %34 = vector.load %arg14[%c0_28, %c0_29] : memref<1x128xf32, #tpu.memory_space<vmem>>, vector<1x128xf32>
    %35 = vector.broadcast %34 : vector<1x128xf32> to vector<96x128xf32>
    %36 = arith.addf %33, %35 : vector<96x128xf32>
    %37 = math.tanh %36 : vector<96x128xf32>
    %c0_30 = arith.constant 0 : index
    %c0_31 = arith.constant 0 : index
    %38 = vector.load %arg4[%c0_30, %c0_31] : memref<8x128xf32, #tpu.memory_space<vmem>>, vector<8x128xf32>
    %c0_32 = arith.constant 0 : index
    %c0_33 = arith.constant 0 : index
    %39 = vector.load %arg5[%c0_32, %c0_33] : memref<15x128xf32, #tpu.memory_space<vmem>>, vector<15x128xf32>
    %c0_34 = arith.constant 0 : index
    %c0_35 = arith.constant 0 : index
    %40 = vector.load %arg6[%c0_34, %c0_35] : memref<96x96xf32, #tpu.memory_space<vmem>>, vector<96x96xf32>
    %c0_36 = arith.constant 0 : index
    %c0_37 = arith.constant 0 : index
    %41 = vector.load %arg7[%c0_36, %c0_37] : memref<16x16xf32, #tpu.memory_space<vmem>>, vector<16x16xf32>
    %c0_38 = arith.constant 0 : index
    %c0_39 = arith.constant 0 : index
    %42 = vector.load %arg3[%c0_38, %c0_39] : memref<1x16xf32, #tpu.memory_space<vmem>>, vector<1x16xf32>
    %43 = vector.broadcast %42 : vector<1x16xf32> to vector<16x16xf32>
    %44 = arith.addf %41, %43 : vector<16x16xf32>
    %c0_40 = arith.constant 0 : index
    %c0_41 = arith.constant 0 : index
    %45 = vector.load %arg8[%c0_40, %c0_41] : memref<16x96xf32, #tpu.memory_space<vmem>>, vector<16x96xf32>
    %c0_42 = arith.constant 0 : index
    %c0_43 = arith.constant 0 : index
    %46 = vector.load %arg15[%c0_42, %c0_43] : memref<128x384xbf16, #tpu.memory_space<vmem>>, vector<128x384xbf16>
    %47 = arith.truncf %37 : vector<96x128xf32> to vector<96x128xbf16>
    %cst_44 = arith.constant dense<0.000000e+00> : vector<96x384xf32>
    %48 = tpu.matmul %47, %46, %cst_44 {dimension_numbers = #tpu.dot_dimension_numbers<[1], [0], [0], [1], [0, 0, 1, 1], [], []>} : vector<96x128xbf16>, vector<128x384xbf16>, vector<96x384xf32> -> vector<96x384xf32>
    %c0_45 = arith.constant 0 : index
    %c0_46 = arith.constant 0 : index
    %49 = vector.load %arg16[%c0_45, %c0_46] : memref<1x384xf32, #tpu.memory_space<vmem>>, vector<1x384xf32>
    %50 = vector.broadcast %49 : vector<1x384xf32> to vector<96x384xf32>
    %51 = arith.addf %48, %50 : vector<96x384xf32>
    %52 = vector.extract_strided_slice %51 {offsets = [0, 0], sizes = [96, 128], strides = [1, 1]} : vector<96x384xf32> to vector<96x128xf32>
    %53 = vector.extract_strided_slice %51 {offsets = [0, 128], sizes = [96, 128], strides = [1, 1]} : vector<96x384xf32> to vector<96x128xf32>
    %54 = vector.extract_strided_slice %51 {offsets = [0, 256], sizes = [96, 128], strides = [1, 1]} : vector<96x384xf32> to vector<96x128xf32>
    %55 = vector.extract_strided_slice %38 {offsets = [0, 0], sizes = [1, 128], strides = [1, 1]} : vector<8x128xf32> to vector<1x128xf32>
    %56 = vector.broadcast %55 : vector<1x128xf32> to vector<96x128xf32>
    %57 = arith.mulf %52, %56 : vector<96x128xf32>
    %58 = vector.extract_strided_slice %38 {offsets = [1, 0], sizes = [1, 128], strides = [1, 1]} : vector<8x128xf32> to vector<1x128xf32>
    %59 = vector.broadcast %58 : vector<1x128xf32> to vector<96x128xf32>
    %60 = arith.mulf %52, %59 : vector<96x128xf32>
    %61 = vector.extract_strided_slice %38 {offsets = [2, 0], sizes = [1, 128], strides = [1, 1]} : vector<8x128xf32> to vector<1x128xf32>
    %62 = vector.broadcast %61 : vector<1x128xf32> to vector<96x128xf32>
    %63 = arith.mulf %52, %62 : vector<96x128xf32>
    %64 = vector.extract_strided_slice %38 {offsets = [3, 0], sizes = [1, 128], strides = [1, 1]} : vector<8x128xf32> to vector<1x128xf32>
    %65 = vector.broadcast %64 : vector<1x128xf32> to vector<96x128xf32>
    %66 = arith.mulf %52, %65 : vector<96x128xf32>
    %67 = vector.extract_strided_slice %38 {offsets = [4, 0], sizes = [1, 128], strides = [1, 1]} : vector<8x128xf32> to vector<1x128xf32>
    %68 = vector.broadcast %67 : vector<1x128xf32> to vector<96x128xf32>
    %69 = arith.mulf %52, %68 : vector<96x128xf32>
    %70 = vector.extract_strided_slice %38 {offsets = [5, 0], sizes = [1, 128], strides = [1, 1]} : vector<8x128xf32> to vector<1x128xf32>
    %71 = vector.broadcast %70 : vector<1x128xf32> to vector<96x128xf32>
    %72 = arith.mulf %52, %71 : vector<96x128xf32>
    %73 = vector.extract_strided_slice %38 {offsets = [6, 0], sizes = [1, 128], strides = [1, 1]} : vector<8x128xf32> to vector<1x128xf32>
    %74 = vector.broadcast %73 : vector<1x128xf32> to vector<96x128xf32>
    %75 = arith.mulf %52, %74 : vector<96x128xf32>
    %76 = vector.extract_strided_slice %38 {offsets = [7, 0], sizes = [1, 128], strides = [1, 1]} : vector<8x128xf32> to vector<1x128xf32>
    %77 = vector.broadcast %76 : vector<1x128xf32> to vector<96x128xf32>
    %78 = arith.mulf %52, %77 : vector<96x128xf32>
    %79 = tpu.concatenate %57, %60, %63, %66, %69, %72, %75, %78 in 0 : vector<96x128xf32>, vector<96x128xf32>, vector<96x128xf32>, vector<96x128xf32>, vector<96x128xf32>, vector<96x128xf32>, vector<96x128xf32>, vector<96x128xf32> -> vector<768x128xf32>
    %80 = arith.truncf %79 : vector<768x128xf32> to vector<768x128xbf16>
    %81 = tpu.transpose %53, [1, 0] : vector<96x128xf32> -> vector<128x96xf32>
    %82 = arith.truncf %81 : vector<128x96xf32> to vector<128x96xbf16>
    %cst_47 = arith.constant dense<0.000000e+00> : vector<768x96xf32>
    %83 = tpu.matmul %80, %82, %cst_47 {dimension_numbers = #tpu.dot_dimension_numbers<[1], [0], [0], [1], [0, 0, 1, 1], [], []>} : vector<768x128xbf16>, vector<128x96xbf16>, vector<768x96xf32> -> vector<768x96xf32>
    %84 = tpu.concatenate %40, %40, %40, %40, %40, %40, %40, %40 in 0 : vector<96x96xf32>, vector<96x96xf32>, vector<96x96xf32>, vector<96x96xf32>, vector<96x96xf32>, vector<96x96xf32>, vector<96x96xf32>, vector<96x96xf32> -> vector<768x96xf32>
    %85 = arith.addf %83, %84 : vector<768x96xf32>
    %cst_48 = arith.constant dense<0xFF800000> : vector<768xf32>
    %86 = vector.multi_reduction <maximumf>, %85, %cst_48 [1] : vector<768x96xf32> to vector<768xf32>
    %87 = vector.shape_cast %86 : vector<768xf32> to vector<768x1xf32>
    %88 = vector.broadcast %87 : vector<768x1xf32> to vector<768x96xf32>
    %89 = arith.subf %85, %88 : vector<768x96xf32>
    %90 = math.exp %89 : vector<768x96xf32>
    %cst_49 = arith.constant dense<0.000000e+00> : vector<768xf32>
    %91 = vector.multi_reduction <add>, %90, %cst_49 [1] : vector<768x96xf32> to vector<768xf32>
    %92 = vector.shape_cast %91 : vector<768xf32> to vector<768x1xf32>
    %93 = tpu.reciprocal %92 {approx = true} : vector<768x1xf32> -> vector<768x1xf32>
    %94 = vector.broadcast %93 : vector<768x1xf32> to vector<768x96xf32>
    %95 = arith.mulf %90, %94 : vector<768x96xf32>
    %96 = arith.truncf %95 : vector<768x96xf32> to vector<768x96xbf16>
    %97 = arith.truncf %54 : vector<96x128xf32> to vector<96x128xbf16>
    %cst_50 = arith.constant dense<0.000000e+00> : vector<768x128xf32>
    %98 = tpu.matmul %96, %97, %cst_50 {dimension_numbers = #tpu.dot_dimension_numbers<[1], [0], [0], [1], [0, 0, 1, 1], [], []>} : vector<768x96xbf16>, vector<96x128xbf16>, vector<768x128xf32> -> vector<768x128xf32>
    %99 = vector.extract_strided_slice %98 {offsets = [0, 0], sizes = [96, 128], strides = [1, 1]} : vector<768x128xf32> to vector<96x128xf32>
    %100 = vector.extract_strided_slice %38 {offsets = [0, 0], sizes = [1, 128], strides = [1, 1]} : vector<8x128xf32> to vector<1x128xf32>
    %101 = vector.broadcast %100 : vector<1x128xf32> to vector<96x128xf32>
    %102 = arith.mulf %99, %101 : vector<96x128xf32>
    %103 = vector.extract_strided_slice %98 {offsets = [96, 0], sizes = [96, 128], strides = [1, 1]} : vector<768x128xf32> to vector<96x128xf32>
    %104 = vector.extract_strided_slice %38 {offsets = [1, 0], sizes = [1, 128], strides = [1, 1]} : vector<8x128xf32> to vector<1x128xf32>
    %105 = vector.broadcast %104 : vector<1x128xf32> to vector<96x128xf32>
    %106 = arith.mulf %103, %105 : vector<96x128xf32>
    %107 = arith.addf %102, %106 : vector<96x128xf32>
    %108 = vector.extract_strided_slice %98 {offsets = [192, 0], sizes = [96, 128], strides = [1, 1]} : vector<768x128xf32> to vector<96x128xf32>
    %109 = vector.extract_strided_slice %38 {offsets = [2, 0], sizes = [1, 128], strides = [1, 1]} : vector<8x128xf32> to vector<1x128xf32>
    %110 = vector.broadcast %109 : vector<1x128xf32> to vector<96x128xf32>
    %111 = arith.mulf %108, %110 : vector<96x128xf32>
    %112 = arith.addf %107, %111 : vector<96x128xf32>
    %113 = vector.extract_strided_slice %98 {offsets = [288, 0], sizes = [96, 128], strides = [1, 1]} : vector<768x128xf32> to vector<96x128xf32>
    %114 = vector.extract_strided_slice %38 {offsets = [3, 0], sizes = [1, 128], strides = [1, 1]} : vector<8x128xf32> to vector<1x128xf32>
    %115 = vector.broadcast %114 : vector<1x128xf32> to vector<96x128xf32>
    %116 = arith.mulf %113, %115 : vector<96x128xf32>
    %117 = arith.addf %112, %116 : vector<96x128xf32>
    %118 = vector.extract_strided_slice %98 {offsets = [384, 0], sizes = [96, 128], strides = [1, 1]} : vector<768x128xf32> to vector<96x128xf32>
    %119 = vector.extract_strided_slice %38 {offsets = [4, 0], sizes = [1, 128], strides = [1, 1]} : vector<8x128xf32> to vector<1x128xf32>
    %120 = vector.broadcast %119 : vector<1x128xf32> to vector<96x128xf32>
    %121 = arith.mulf %118, %120 : vector<96x128xf32>
    %122 = arith.addf %117, %121 : vector<96x128xf32>
    %123 = vector.extract_strided_slice %98 {offsets = [480, 0], sizes = [96, 128], strides = [1, 1]} : vector<768x128xf32> to vector<96x128xf32>
    %124 = vector.extract_strided_slice %38 {offsets = [5, 0], sizes = [1, 128], strides = [1, 1]} : vector<8x128xf32> to vector<1x128xf32>
    %125 = vector.broadcast %124 : vector<1x128xf32> to vector<96x128xf32>
    %126 = arith.mulf %123, %125 : vector<96x128xf32>
    %127 = arith.addf %122, %126 : vector<96x128xf32>
    %128 = vector.extract_strided_slice %98 {offsets = [576, 0], sizes = [96, 128], strides = [1, 1]} : vector<768x128xf32> to vector<96x128xf32>
    %129 = vector.extract_strided_slice %38 {offsets = [6, 0], sizes = [1, 128], strides = [1, 1]} : vector<8x128xf32> to vector<1x128xf32>
    %130 = vector.broadcast %129 : vector<1x128xf32> to vector<96x128xf32>
    %131 = arith.mulf %128, %130 : vector<96x128xf32>
    %132 = arith.addf %127, %131 : vector<96x128xf32>
    %133 = vector.extract_strided_slice %98 {offsets = [672, 0], sizes = [96, 128], strides = [1, 1]} : vector<768x128xf32> to vector<96x128xf32>
    %134 = vector.extract_strided_slice %38 {offsets = [7, 0], sizes = [1, 128], strides = [1, 1]} : vector<8x128xf32> to vector<1x128xf32>
    %135 = vector.broadcast %134 : vector<1x128xf32> to vector<96x128xf32>
    %136 = arith.mulf %133, %135 : vector<96x128xf32>
    %137 = arith.addf %132, %136 : vector<96x128xf32>
    %c0_51 = arith.constant 0 : index
    %c0_52 = arith.constant 0 : index
    %138 = vector.load %arg17[%c0_51, %c0_52] : memref<128x128xbf16, #tpu.memory_space<vmem>>, vector<128x128xbf16>
    %139 = arith.truncf %137 : vector<96x128xf32> to vector<96x128xbf16>
    %cst_53 = arith.constant dense<0.000000e+00> : vector<96x128xf32>
    %140 = tpu.matmul %139, %138, %cst_53 {dimension_numbers = #tpu.dot_dimension_numbers<[1], [0], [0], [1], [0, 0, 1, 1], [], []>} : vector<96x128xbf16>, vector<128x128xbf16>, vector<96x128xf32> -> vector<96x128xf32>
    %c0_54 = arith.constant 0 : index
    %c0_55 = arith.constant 0 : index
    %141 = vector.load %arg18[%c0_54, %c0_55] : memref<1x128xf32, #tpu.memory_space<vmem>>, vector<1x128xf32>
    %142 = vector.broadcast %141 : vector<1x128xf32> to vector<96x128xf32>
    %143 = arith.addf %140, %142 : vector<96x128xf32>
    %144 = arith.addf %37, %143 : vector<96x128xf32>
    %c0_56 = arith.constant 0 : index
    %c0_57 = arith.constant 0 : index
    %145 = vector.load %arg19[%c0_56, %c0_57] : memref<1x128xf32, #tpu.memory_space<vmem>>, vector<1x128xf32>
    %c0_58 = arith.constant 0 : index
    %c0_59 = arith.constant 0 : index
    %146 = vector.load %arg20[%c0_58, %c0_59] : memref<1x128xf32, #tpu.memory_space<vmem>>, vector<1x128xf32>
    %cst_60 = arith.constant dense<0.000000e+00> : vector<96xf32>
    %147 = vector.multi_reduction <add>, %144, %cst_60 [1] : vector<96x128xf32> to vector<96xf32>
    %148 = vector.shape_cast %147 : vector<96xf32> to vector<96x1xf32>
    %cst_61 = arith.constant 3.125000e-02 : f32
    %149 = vector.broadcast %cst_61 : f32 to vector<96x1xf32>
    %150 = arith.mulf %148, %149 : vector<96x1xf32>
    %151 = arith.mulf %144, %144 : vector<96x128xf32>
    %cst_62 = arith.constant dense<0.000000e+00> : vector<96xf32>
    %152 = vector.multi_reduction <add>, %151, %cst_62 [1] : vector<96x128xf32> to vector<96xf32>
    %153 = vector.shape_cast %152 : vector<96xf32> to vector<96x1xf32>
    %cst_63 = arith.constant 3.125000e-02 : f32
    %154 = vector.broadcast %cst_63 : f32 to vector<96x1xf32>
    %155 = arith.mulf %153, %154 : vector<96x1xf32>
    %156 = arith.mulf %150, %150 : vector<96x1xf32>
    %157 = arith.subf %155, %156 : vector<96x1xf32>
    %158 = vector.broadcast %150 : vector<96x1xf32> to vector<96x128xf32>
    %159 = arith.subf %144, %158 : vector<96x128xf32>
    %cst_64 = arith.constant 9.99999974E-6 : f32
    %160 = vector.broadcast %cst_64 : f32 to vector<96x1xf32>
    %161 = arith.addf %157, %160 : vector<96x1xf32>
    %162 = math.rsqrt %161 : vector<96x1xf32>
    %163 = vector.broadcast %162 : vector<96x1xf32> to vector<96x128xf32>
    %164 = arith.mulf %159, %163 : vector<96x128xf32>
    %165 = vector.broadcast %145 : vector<1x128xf32> to vector<96x128xf32>
    %166 = arith.mulf %164, %165 : vector<96x128xf32>
    %167 = vector.broadcast %146 : vector<1x128xf32> to vector<96x128xf32>
    %168 = arith.addf %166, %167 : vector<96x128xf32>
    %c0_65 = arith.constant 0 : index
    %c0_66 = arith.constant 0 : index
    %169 = vector.load %arg21[%c0_65, %c0_66] : memref<128x128xbf16, #tpu.memory_space<vmem>>, vector<128x128xbf16>
    %170 = arith.truncf %168 : vector<96x128xf32> to vector<96x128xbf16>
    %cst_67 = arith.constant dense<0.000000e+00> : vector<96x128xf32>
    %171 = tpu.matmul %170, %169, %cst_67 {dimension_numbers = #tpu.dot_dimension_numbers<[1], [0], [0], [1], [0, 0, 1, 1], [], []>} : vector<96x128xbf16>, vector<128x128xbf16>, vector<96x128xf32> -> vector<96x128xf32>
    %c0_68 = arith.constant 0 : index
    %c0_69 = arith.constant 0 : index
    %172 = vector.load %arg22[%c0_68, %c0_69] : memref<1x128xf32, #tpu.memory_space<vmem>>, vector<1x128xf32>
    %173 = vector.broadcast %172 : vector<1x128xf32> to vector<96x128xf32>
    %174 = arith.addf %171, %173 : vector<96x128xf32>
    %cst_70 = arith.constant 0.000000e+00 : f32
    %175 = vector.broadcast %cst_70 : f32 to vector<96x128xf32>
    %176 = arith.maximumf %174, %175 : vector<96x128xf32>
    %c0_71 = arith.constant 0 : index
    %c0_72 = arith.constant 0 : index
    %177 = vector.load %arg23[%c0_71, %c0_72] : memref<128x128xbf16, #tpu.memory_space<vmem>>, vector<128x128xbf16>
    %178 = arith.truncf %176 : vector<96x128xf32> to vector<96x128xbf16>
    %cst_73 = arith.constant dense<0.000000e+00> : vector<96x128xf32>
    %179 = tpu.matmul %178, %177, %cst_73 {dimension_numbers = #tpu.dot_dimension_numbers<[1], [0], [0], [1], [0, 0, 1, 1], [], []>} : vector<96x128xbf16>, vector<128x128xbf16>, vector<96x128xf32> -> vector<96x128xf32>
    %c0_74 = arith.constant 0 : index
    %c0_75 = arith.constant 0 : index
    %180 = vector.load %arg24[%c0_74, %c0_75] : memref<1x128xf32, #tpu.memory_space<vmem>>, vector<1x128xf32>
    %181 = vector.broadcast %180 : vector<1x128xf32> to vector<96x128xf32>
    %182 = arith.addf %179, %181 : vector<96x128xf32>
    %183 = arith.addf %168, %182 : vector<96x128xf32>
    %c0_76 = arith.constant 0 : index
    %c0_77 = arith.constant 0 : index
    %184 = vector.load %arg25[%c0_76, %c0_77] : memref<1x128xf32, #tpu.memory_space<vmem>>, vector<1x128xf32>
    %c0_78 = arith.constant 0 : index
    %c0_79 = arith.constant 0 : index
    %185 = vector.load %arg26[%c0_78, %c0_79] : memref<1x128xf32, #tpu.memory_space<vmem>>, vector<1x128xf32>
    %cst_80 = arith.constant dense<0.000000e+00> : vector<96xf32>
    %186 = vector.multi_reduction <add>, %183, %cst_80 [1] : vector<96x128xf32> to vector<96xf32>
    %187 = vector.shape_cast %186 : vector<96xf32> to vector<96x1xf32>
    %cst_81 = arith.constant 3.125000e-02 : f32
    %188 = vector.broadcast %cst_81 : f32 to vector<96x1xf32>
    %189 = arith.mulf %187, %188 : vector<96x1xf32>
    %190 = arith.mulf %183, %183 : vector<96x128xf32>
    %cst_82 = arith.constant dense<0.000000e+00> : vector<96xf32>
    %191 = vector.multi_reduction <add>, %190, %cst_82 [1] : vector<96x128xf32> to vector<96xf32>
    %192 = vector.shape_cast %191 : vector<96xf32> to vector<96x1xf32>
    %cst_83 = arith.constant 3.125000e-02 : f32
    %193 = vector.broadcast %cst_83 : f32 to vector<96x1xf32>
    %194 = arith.mulf %192, %193 : vector<96x1xf32>
    %195 = arith.mulf %189, %189 : vector<96x1xf32>
    %196 = arith.subf %194, %195 : vector<96x1xf32>
    %197 = vector.broadcast %189 : vector<96x1xf32> to vector<96x128xf32>
    %198 = arith.subf %183, %197 : vector<96x128xf32>
    %cst_84 = arith.constant 9.99999974E-6 : f32
    %199 = vector.broadcast %cst_84 : f32 to vector<96x1xf32>
    %200 = arith.addf %196, %199 : vector<96x1xf32>
    %201 = math.rsqrt %200 : vector<96x1xf32>
    %202 = vector.broadcast %201 : vector<96x1xf32> to vector<96x128xf32>
    %203 = arith.mulf %198, %202 : vector<96x128xf32>
    %204 = vector.broadcast %184 : vector<1x128xf32> to vector<96x128xf32>
    %205 = arith.mulf %203, %204 : vector<96x128xf32>
    %206 = vector.broadcast %185 : vector<1x128xf32> to vector<96x128xf32>
    %207 = arith.addf %205, %206 : vector<96x128xf32>
    %c0_85 = arith.constant 0 : index
    %c0_86 = arith.constant 0 : index
    %208 = vector.load %arg27[%c0_85, %c0_86] : memref<128x128xbf16, #tpu.memory_space<vmem>>, vector<128x128xbf16>
    %209 = arith.truncf %207 : vector<96x128xf32> to vector<96x128xbf16>
    %cst_87 = arith.constant dense<0.000000e+00> : vector<96x128xf32>
    %210 = tpu.matmul %209, %208, %cst_87 {dimension_numbers = #tpu.dot_dimension_numbers<[1], [0], [0], [1], [0, 0, 1, 1], [], []>} : vector<96x128xbf16>, vector<128x128xbf16>, vector<96x128xf32> -> vector<96x128xf32>
    %c0_88 = arith.constant 0 : index
    %c0_89 = arith.constant 0 : index
    %211 = vector.load %arg28[%c0_88, %c0_89] : memref<1x128xf32, #tpu.memory_space<vmem>>, vector<1x128xf32>
    %212 = vector.broadcast %211 : vector<1x128xf32> to vector<96x128xf32>
    %213 = arith.addf %210, %212 : vector<96x128xf32>
    %c0_90 = arith.constant 0 : index
    %c0_91 = arith.constant 0 : index
    %214 = vector.load %arg2[%c0_90, %c0_91] : memref<16x128xf32, #tpu.memory_space<vmem>>, vector<16x128xf32>
    %c0_92 = arith.constant 0 : index
    %c0_93 = arith.constant 0 : index
    %215 = vector.load %arg29[%c0_92, %c0_93] : memref<128x384xbf16, #tpu.memory_space<vmem>>, vector<128x384xbf16>
    %216 = arith.truncf %214 : vector<16x128xf32> to vector<16x128xbf16>
    %cst_94 = arith.constant dense<0.000000e+00> : vector<16x384xf32>
    %217 = tpu.matmul %216, %215, %cst_94 {dimension_numbers = #tpu.dot_dimension_numbers<[1], [0], [0], [1], [0, 0, 1, 1], [], []>} : vector<16x128xbf16>, vector<128x384xbf16>, vector<16x384xf32> -> vector<16x384xf32>
    %c0_95 = arith.constant 0 : index
    %c0_96 = arith.constant 0 : index
    %218 = vector.load %arg30[%c0_95, %c0_96] : memref<1x384xf32, #tpu.memory_space<vmem>>, vector<1x384xf32>
    %219 = vector.broadcast %218 : vector<1x384xf32> to vector<16x384xf32>
    %220 = arith.addf %217, %219 : vector<16x384xf32>
    %221 = vector.extract_strided_slice %220 {offsets = [0, 0], sizes = [16, 128], strides = [1, 1]} : vector<16x384xf32> to vector<16x128xf32>
    %222 = vector.extract_strided_slice %220 {offsets = [0, 128], sizes = [16, 128], strides = [1, 1]} : vector<16x384xf32> to vector<16x128xf32>
    %223 = vector.extract_strided_slice %220 {offsets = [0, 256], sizes = [16, 128], strides = [1, 1]} : vector<16x384xf32> to vector<16x128xf32>
    %224 = vector.extract_strided_slice %39 {offsets = [0, 0], sizes = [1, 128], strides = [1, 1]} : vector<15x128xf32> to vector<1x128xf32>
    %225 = vector.broadcast %224 : vector<1x128xf32> to vector<16x128xf32>
    %226 = arith.mulf %221, %225 : vector<16x128xf32>
    %227 = vector.extract_strided_slice %39 {offsets = [1, 0], sizes = [1, 128], strides = [1, 1]} : vector<15x128xf32> to vector<1x128xf32>
    %228 = vector.broadcast %227 : vector<1x128xf32> to vector<16x128xf32>
    %229 = arith.mulf %221, %228 : vector<16x128xf32>
    %230 = vector.extract_strided_slice %39 {offsets = [2, 0], sizes = [1, 128], strides = [1, 1]} : vector<15x128xf32> to vector<1x128xf32>
    %231 = vector.broadcast %230 : vector<1x128xf32> to vector<16x128xf32>
    %232 = arith.mulf %221, %231 : vector<16x128xf32>
    %233 = vector.extract_strided_slice %39 {offsets = [3, 0], sizes = [1, 128], strides = [1, 1]} : vector<15x128xf32> to vector<1x128xf32>
    %234 = vector.broadcast %233 : vector<1x128xf32> to vector<16x128xf32>
    %235 = arith.mulf %221, %234 : vector<16x128xf32>
    %236 = vector.extract_strided_slice %39 {offsets = [4, 0], sizes = [1, 128], strides = [1, 1]} : vector<15x128xf32> to vector<1x128xf32>
    %237 = vector.broadcast %236 : vector<1x128xf32> to vector<16x128xf32>
    %238 = arith.mulf %221, %237 : vector<16x128xf32>
    %239 = vector.extract_strided_slice %39 {offsets = [5, 0], sizes = [1, 128], strides = [1, 1]} : vector<15x128xf32> to vector<1x128xf32>
    %240 = vector.broadcast %239 : vector<1x128xf32> to vector<16x128xf32>
    %241 = arith.mulf %221, %240 : vector<16x128xf32>
    %242 = vector.extract_strided_slice %39 {offsets = [6, 0], sizes = [1, 128], strides = [1, 1]} : vector<15x128xf32> to vector<1x128xf32>
    %243 = vector.broadcast %242 : vector<1x128xf32> to vector<16x128xf32>
    %244 = arith.mulf %221, %243 : vector<16x128xf32>
    %245 = vector.extract_strided_slice %39 {offsets = [7, 0], sizes = [1, 128], strides = [1, 1]} : vector<15x128xf32> to vector<1x128xf32>
    %246 = vector.broadcast %245 : vector<1x128xf32> to vector<16x128xf32>
    %247 = arith.mulf %221, %246 : vector<16x128xf32>
    %248 = vector.extract_strided_slice %39 {offsets = [8, 0], sizes = [1, 128], strides = [1, 1]} : vector<15x128xf32> to vector<1x128xf32>
    %249 = vector.broadcast %248 : vector<1x128xf32> to vector<16x128xf32>
    %250 = arith.mulf %221, %249 : vector<16x128xf32>
    %251 = vector.extract_strided_slice %39 {offsets = [9, 0], sizes = [1, 128], strides = [1, 1]} : vector<15x128xf32> to vector<1x128xf32>
    %252 = vector.broadcast %251 : vector<1x128xf32> to vector<16x128xf32>
    %253 = arith.mulf %221, %252 : vector<16x128xf32>
    %254 = vector.extract_strided_slice %39 {offsets = [10, 0], sizes = [1, 128], strides = [1, 1]} : vector<15x128xf32> to vector<1x128xf32>
    %255 = vector.broadcast %254 : vector<1x128xf32> to vector<16x128xf32>
    %256 = arith.mulf %221, %255 : vector<16x128xf32>
    %257 = vector.extract_strided_slice %39 {offsets = [11, 0], sizes = [1, 128], strides = [1, 1]} : vector<15x128xf32> to vector<1x128xf32>
    %258 = vector.broadcast %257 : vector<1x128xf32> to vector<16x128xf32>
    %259 = arith.mulf %221, %258 : vector<16x128xf32>
    %260 = vector.extract_strided_slice %39 {offsets = [12, 0], sizes = [1, 128], strides = [1, 1]} : vector<15x128xf32> to vector<1x128xf32>
    %261 = vector.broadcast %260 : vector<1x128xf32> to vector<16x128xf32>
    %262 = arith.mulf %221, %261 : vector<16x128xf32>
    %263 = vector.extract_strided_slice %39 {offsets = [13, 0], sizes = [1, 128], strides = [1, 1]} : vector<15x128xf32> to vector<1x128xf32>
    %264 = vector.broadcast %263 : vector<1x128xf32> to vector<16x128xf32>
    %265 = arith.mulf %221, %264 : vector<16x128xf32>
    %266 = vector.extract_strided_slice %39 {offsets = [14, 0], sizes = [1, 128], strides = [1, 1]} : vector<15x128xf32> to vector<1x128xf32>
    %267 = vector.broadcast %266 : vector<1x128xf32> to vector<16x128xf32>
    %268 = arith.mulf %221, %267 : vector<16x128xf32>
    %269 = tpu.concatenate %226, %229, %232, %235, %238, %241, %244, %247, %250, %253, %256, %259, %262, %265, %268 in 0 : vector<16x128xf32>, vector<16x128xf32>, vector<16x128xf32>, vector<16x128xf32>, vector<16x128xf32>, vector<16x128xf32>, vector<16x128xf32>, vector<16x128xf32>, vector<16x128xf32>, vector<16x128xf32>, vector<16x128xf32>, vector<16x128xf32>, vector<16x128xf32>, vector<16x128xf32>, vector<16x128xf32> -> vector<240x128xf32>
    %270 = arith.truncf %269 : vector<240x128xf32> to vector<240x128xbf16>
    %271 = tpu.transpose %222, [1, 0] : vector<16x128xf32> -> vector<128x16xf32>
    %272 = arith.truncf %271 : vector<128x16xf32> to vector<128x16xbf16>
    %cst_97 = arith.constant dense<0.000000e+00> : vector<240x16xf32>
    %273 = tpu.matmul %270, %272, %cst_97 {dimension_numbers = #tpu.dot_dimension_numbers<[1], [0], [0], [1], [0, 0, 1, 1], [], []>} : vector<240x128xbf16>, vector<128x16xbf16>, vector<240x16xf32> -> vector<240x16xf32>
    %274 = tpu.concatenate %44, %44, %44, %44, %44, %44, %44, %44, %44, %44, %44, %44, %44, %44, %44 in 0 : vector<16x16xf32>, vector<16x16xf32>, vector<16x16xf32>, vector<16x16xf32>, vector<16x16xf32>, vector<16x16xf32>, vector<16x16xf32>, vector<16x16xf32>, vector<16x16xf32>, vector<16x16xf32>, vector<16x16xf32>, vector<16x16xf32>, vector<16x16xf32>, vector<16x16xf32>, vector<16x16xf32> -> vector<240x16xf32>
    %275 = arith.addf %273, %274 : vector<240x16xf32>
    %cst_98 = arith.constant dense<0xFF800000> : vector<240xf32>
    %276 = vector.multi_reduction <maximumf>, %275, %cst_98 [1] : vector<240x16xf32> to vector<240xf32>
    %277 = vector.shape_cast %276 : vector<240xf32> to vector<240x1xf32>
    %278 = vector.broadcast %277 : vector<240x1xf32> to vector<240x16xf32>
    %279 = arith.subf %275, %278 : vector<240x16xf32>
    %280 = math.exp %279 : vector<240x16xf32>
    %cst_99 = arith.constant dense<0.000000e+00> : vector<240xf32>
    %281 = vector.multi_reduction <add>, %280, %cst_99 [1] : vector<240x16xf32> to vector<240xf32>
    %282 = vector.shape_cast %281 : vector<240xf32> to vector<240x1xf32>
    %283 = tpu.reciprocal %282 {approx = true} : vector<240x1xf32> -> vector<240x1xf32>
    %284 = vector.broadcast %283 : vector<240x1xf32> to vector<240x16xf32>
    %285 = arith.mulf %280, %284 : vector<240x16xf32>
    %286 = arith.truncf %285 : vector<240x16xf32> to vector<240x16xbf16>
    %287 = arith.truncf %223 : vector<16x128xf32> to vector<16x128xbf16>
    %cst_100 = arith.constant dense<0.000000e+00> : vector<240x128xf32>
    %288 = tpu.matmul %286, %287, %cst_100 {dimension_numbers = #tpu.dot_dimension_numbers<[1], [0], [0], [1], [0, 0, 1, 1], [], []>} : vector<240x16xbf16>, vector<16x128xbf16>, vector<240x128xf32> -> vector<240x128xf32>
    %289 = vector.extract_strided_slice %288 {offsets = [0, 0], sizes = [16, 128], strides = [1, 1]} : vector<240x128xf32> to vector<16x128xf32>
    %290 = vector.extract_strided_slice %39 {offsets = [0, 0], sizes = [1, 128], strides = [1, 1]} : vector<15x128xf32> to vector<1x128xf32>
    %291 = vector.broadcast %290 : vector<1x128xf32> to vector<16x128xf32>
    %292 = arith.mulf %289, %291 : vector<16x128xf32>
    %293 = vector.extract_strided_slice %288 {offsets = [16, 0], sizes = [16, 128], strides = [1, 1]} : vector<240x128xf32> to vector<16x128xf32>
    %294 = vector.extract_strided_slice %39 {offsets = [1, 0], sizes = [1, 128], strides = [1, 1]} : vector<15x128xf32> to vector<1x128xf32>
    %295 = vector.broadcast %294 : vector<1x128xf32> to vector<16x128xf32>
    %296 = arith.mulf %293, %295 : vector<16x128xf32>
    %297 = arith.addf %292, %296 : vector<16x128xf32>
    %298 = vector.extract_strided_slice %288 {offsets = [32, 0], sizes = [16, 128], strides = [1, 1]} : vector<240x128xf32> to vector<16x128xf32>
    %299 = vector.extract_strided_slice %39 {offsets = [2, 0], sizes = [1, 128], strides = [1, 1]} : vector<15x128xf32> to vector<1x128xf32>
    %300 = vector.broadcast %299 : vector<1x128xf32> to vector<16x128xf32>
    %301 = arith.mulf %298, %300 : vector<16x128xf32>
    %302 = arith.addf %297, %301 : vector<16x128xf32>
    %303 = vector.extract_strided_slice %288 {offsets = [48, 0], sizes = [16, 128], strides = [1, 1]} : vector<240x128xf32> to vector<16x128xf32>
    %304 = vector.extract_strided_slice %39 {offsets = [3, 0], sizes = [1, 128], strides = [1, 1]} : vector<15x128xf32> to vector<1x128xf32>
    %305 = vector.broadcast %304 : vector<1x128xf32> to vector<16x128xf32>
    %306 = arith.mulf %303, %305 : vector<16x128xf32>
    %307 = arith.addf %302, %306 : vector<16x128xf32>
    %308 = vector.extract_strided_slice %288 {offsets = [64, 0], sizes = [16, 128], strides = [1, 1]} : vector<240x128xf32> to vector<16x128xf32>
    %309 = vector.extract_strided_slice %39 {offsets = [4, 0], sizes = [1, 128], strides = [1, 1]} : vector<15x128xf32> to vector<1x128xf32>
    %310 = vector.broadcast %309 : vector<1x128xf32> to vector<16x128xf32>
    %311 = arith.mulf %308, %310 : vector<16x128xf32>
    %312 = arith.addf %307, %311 : vector<16x128xf32>
    %313 = vector.extract_strided_slice %288 {offsets = [80, 0], sizes = [16, 128], strides = [1, 1]} : vector<240x128xf32> to vector<16x128xf32>
    %314 = vector.extract_strided_slice %39 {offsets = [5, 0], sizes = [1, 128], strides = [1, 1]} : vector<15x128xf32> to vector<1x128xf32>
    %315 = vector.broadcast %314 : vector<1x128xf32> to vector<16x128xf32>
    %316 = arith.mulf %313, %315 : vector<16x128xf32>
    %317 = arith.addf %312, %316 : vector<16x128xf32>
    %318 = vector.extract_strided_slice %288 {offsets = [96, 0], sizes = [16, 128], strides = [1, 1]} : vector<240x128xf32> to vector<16x128xf32>
    %319 = vector.extract_strided_slice %39 {offsets = [6, 0], sizes = [1, 128], strides = [1, 1]} : vector<15x128xf32> to vector<1x128xf32>
    %320 = vector.broadcast %319 : vector<1x128xf32> to vector<16x128xf32>
    %321 = arith.mulf %318, %320 : vector<16x128xf32>
    %322 = arith.addf %317, %321 : vector<16x128xf32>
    %323 = vector.extract_strided_slice %288 {offsets = [112, 0], sizes = [16, 128], strides = [1, 1]} : vector<240x128xf32> to vector<16x128xf32>
    %324 = vector.extract_strided_slice %39 {offsets = [7, 0], sizes = [1, 128], strides = [1, 1]} : vector<15x128xf32> to vector<1x128xf32>
    %325 = vector.broadcast %324 : vector<1x128xf32> to vector<16x128xf32>
    %326 = arith.mulf %323, %325 : vector<16x128xf32>
    %327 = arith.addf %322, %326 : vector<16x128xf32>
    %328 = vector.extract_strided_slice %288 {offsets = [128, 0], sizes = [16, 128], strides = [1, 1]} : vector<240x128xf32> to vector<16x128xf32>
    %329 = vector.extract_strided_slice %39 {offsets = [8, 0], sizes = [1, 128], strides = [1, 1]} : vector<15x128xf32> to vector<1x128xf32>
    %330 = vector.broadcast %329 : vector<1x128xf32> to vector<16x128xf32>
    %331 = arith.mulf %328, %330 : vector<16x128xf32>
    %332 = arith.addf %327, %331 : vector<16x128xf32>
    %333 = vector.extract_strided_slice %288 {offsets = [144, 0], sizes = [16, 128], strides = [1, 1]} : vector<240x128xf32> to vector<16x128xf32>
    %334 = vector.extract_strided_slice %39 {offsets = [9, 0], sizes = [1, 128], strides = [1, 1]} : vector<15x128xf32> to vector<1x128xf32>
    %335 = vector.broadcast %334 : vector<1x128xf32> to vector<16x128xf32>
    %336 = arith.mulf %333, %335 : vector<16x128xf32>
    %337 = arith.addf %332, %336 : vector<16x128xf32>
    %338 = vector.extract_strided_slice %288 {offsets = [160, 0], sizes = [16, 128], strides = [1, 1]} : vector<240x128xf32> to vector<16x128xf32>
    %339 = vector.extract_strided_slice %39 {offsets = [10, 0], sizes = [1, 128], strides = [1, 1]} : vector<15x128xf32> to vector<1x128xf32>
    %340 = vector.broadcast %339 : vector<1x128xf32> to vector<16x128xf32>
    %341 = arith.mulf %338, %340 : vector<16x128xf32>
    %342 = arith.addf %337, %341 : vector<16x128xf32>
    %343 = vector.extract_strided_slice %288 {offsets = [176, 0], sizes = [16, 128], strides = [1, 1]} : vector<240x128xf32> to vector<16x128xf32>
    %344 = vector.extract_strided_slice %39 {offsets = [11, 0], sizes = [1, 128], strides = [1, 1]} : vector<15x128xf32> to vector<1x128xf32>
    %345 = vector.broadcast %344 : vector<1x128xf32> to vector<16x128xf32>
    %346 = arith.mulf %343, %345 : vector<16x128xf32>
    %347 = arith.addf %342, %346 : vector<16x128xf32>
    %348 = vector.extract_strided_slice %288 {offsets = [192, 0], sizes = [16, 128], strides = [1, 1]} : vector<240x128xf32> to vector<16x128xf32>
    %349 = vector.extract_strided_slice %39 {offsets = [12, 0], sizes = [1, 128], strides = [1, 1]} : vector<15x128xf32> to vector<1x128xf32>
    %350 = vector.broadcast %349 : vector<1x128xf32> to vector<16x128xf32>
    %351 = arith.mulf %348, %350 : vector<16x128xf32>
    %352 = arith.addf %347, %351 : vector<16x128xf32>
    %353 = vector.extract_strided_slice %288 {offsets = [208, 0], sizes = [16, 128], strides = [1, 1]} : vector<240x128xf32> to vector<16x128xf32>
    %354 = vector.extract_strided_slice %39 {offsets = [13, 0], sizes = [1, 128], strides = [1, 1]} : vector<15x128xf32> to vector<1x128xf32>
    %355 = vector.broadcast %354 : vector<1x128xf32> to vector<16x128xf32>
    %356 = arith.mulf %353, %355 : vector<16x128xf32>
    %357 = arith.addf %352, %356 : vector<16x128xf32>
    %358 = vector.extract_strided_slice %288 {offsets = [224, 0], sizes = [16, 128], strides = [1, 1]} : vector<240x128xf32> to vector<16x128xf32>
    %359 = vector.extract_strided_slice %39 {offsets = [14, 0], sizes = [1, 128], strides = [1, 1]} : vector<15x128xf32> to vector<1x128xf32>
    %360 = vector.broadcast %359 : vector<1x128xf32> to vector<16x128xf32>
    %361 = arith.mulf %358, %360 : vector<16x128xf32>
    %362 = arith.addf %357, %361 : vector<16x128xf32>
    %c0_101 = arith.constant 0 : index
    %c0_102 = arith.constant 0 : index
    %363 = vector.load %arg31[%c0_101, %c0_102] : memref<128x128xbf16, #tpu.memory_space<vmem>>, vector<128x128xbf16>
    %364 = arith.truncf %362 : vector<16x128xf32> to vector<16x128xbf16>
    %cst_103 = arith.constant dense<0.000000e+00> : vector<16x128xf32>
    %365 = tpu.matmul %364, %363, %cst_103 {dimension_numbers = #tpu.dot_dimension_numbers<[1], [0], [0], [1], [0, 0, 1, 1], [], []>} : vector<16x128xbf16>, vector<128x128xbf16>, vector<16x128xf32> -> vector<16x128xf32>
    %c0_104 = arith.constant 0 : index
    %c0_105 = arith.constant 0 : index
    %366 = vector.load %arg32[%c0_104, %c0_105] : memref<1x128xf32, #tpu.memory_space<vmem>>, vector<1x128xf32>
    %367 = vector.broadcast %366 : vector<1x128xf32> to vector<16x128xf32>
    %368 = arith.addf %365, %367 : vector<16x128xf32>
    %369 = arith.addf %214, %368 : vector<16x128xf32>
    %c0_106 = arith.constant 0 : index
    %c0_107 = arith.constant 0 : index
    %370 = vector.load %arg33[%c0_106, %c0_107] : memref<1x128xf32, #tpu.memory_space<vmem>>, vector<1x128xf32>
    %c0_108 = arith.constant 0 : index
    %c0_109 = arith.constant 0 : index
    %371 = vector.load %arg34[%c0_108, %c0_109] : memref<1x128xf32, #tpu.memory_space<vmem>>, vector<1x128xf32>
    %cst_110 = arith.constant dense<0.000000e+00> : vector<16xf32>
    %372 = vector.multi_reduction <add>, %369, %cst_110 [1] : vector<16x128xf32> to vector<16xf32>
    %373 = vector.shape_cast %372 : vector<16xf32> to vector<16x1xf32>
    %cst_111 = arith.constant 0.0333333351 : f32
    %374 = vector.broadcast %cst_111 : f32 to vector<16x1xf32>
    %375 = arith.mulf %373, %374 : vector<16x1xf32>
    %376 = arith.mulf %369, %369 : vector<16x128xf32>
    %cst_112 = arith.constant dense<0.000000e+00> : vector<16xf32>
    %377 = vector.multi_reduction <add>, %376, %cst_112 [1] : vector<16x128xf32> to vector<16xf32>
    %378 = vector.shape_cast %377 : vector<16xf32> to vector<16x1xf32>
    %cst_113 = arith.constant 0.0333333351 : f32
    %379 = vector.broadcast %cst_113 : f32 to vector<16x1xf32>
    %380 = arith.mulf %378, %379 : vector<16x1xf32>
    %381 = arith.mulf %375, %375 : vector<16x1xf32>
    %382 = arith.subf %380, %381 : vector<16x1xf32>
    %383 = vector.broadcast %375 : vector<16x1xf32> to vector<16x128xf32>
    %384 = arith.subf %369, %383 : vector<16x128xf32>
    %cst_114 = arith.constant 9.99999974E-6 : f32
    %385 = vector.broadcast %cst_114 : f32 to vector<16x1xf32>
    %386 = arith.addf %382, %385 : vector<16x1xf32>
    %387 = math.rsqrt %386 : vector<16x1xf32>
    %388 = vector.broadcast %387 : vector<16x1xf32> to vector<16x128xf32>
    %389 = arith.mulf %384, %388 : vector<16x128xf32>
    %390 = vector.broadcast %370 : vector<1x128xf32> to vector<16x128xf32>
    %391 = arith.mulf %389, %390 : vector<16x128xf32>
    %392 = vector.broadcast %371 : vector<1x128xf32> to vector<16x128xf32>
    %393 = arith.addf %391, %392 : vector<16x128xf32>
    %c0_115 = arith.constant 0 : index
    %c0_116 = arith.constant 0 : index
    %394 = vector.load %arg35[%c0_115, %c0_116] : memref<128x128xbf16, #tpu.memory_space<vmem>>, vector<128x128xbf16>
    %395 = arith.truncf %393 : vector<16x128xf32> to vector<16x128xbf16>
    %cst_117 = arith.constant dense<0.000000e+00> : vector<16x128xf32>
    %396 = tpu.matmul %395, %394, %cst_117 {dimension_numbers = #tpu.dot_dimension_numbers<[1], [0], [0], [1], [0, 0, 1, 1], [], []>} : vector<16x128xbf16>, vector<128x128xbf16>, vector<16x128xf32> -> vector<16x128xf32>
    %c0_118 = arith.constant 0 : index
    %c0_119 = arith.constant 0 : index
    %397 = vector.load %arg36[%c0_118, %c0_119] : memref<1x128xf32, #tpu.memory_space<vmem>>, vector<1x128xf32>
    %398 = vector.broadcast %397 : vector<1x128xf32> to vector<16x128xf32>
    %399 = arith.addf %396, %398 : vector<16x128xf32>
    %cst_120 = arith.constant 0.000000e+00 : f32
    %400 = vector.broadcast %cst_120 : f32 to vector<16x128xf32>
    %401 = arith.maximumf %399, %400 : vector<16x128xf32>
    %c0_121 = arith.constant 0 : index
    %c0_122 = arith.constant 0 : index
    %402 = vector.load %arg37[%c0_121, %c0_122] : memref<128x128xbf16, #tpu.memory_space<vmem>>, vector<128x128xbf16>
    %403 = arith.truncf %401 : vector<16x128xf32> to vector<16x128xbf16>
    %cst_123 = arith.constant dense<0.000000e+00> : vector<16x128xf32>
    %404 = tpu.matmul %403, %402, %cst_123 {dimension_numbers = #tpu.dot_dimension_numbers<[1], [0], [0], [1], [0, 0, 1, 1], [], []>} : vector<16x128xbf16>, vector<128x128xbf16>, vector<16x128xf32> -> vector<16x128xf32>
    %c0_124 = arith.constant 0 : index
    %c0_125 = arith.constant 0 : index
    %405 = vector.load %arg38[%c0_124, %c0_125] : memref<1x128xf32, #tpu.memory_space<vmem>>, vector<1x128xf32>
    %406 = vector.broadcast %405 : vector<1x128xf32> to vector<16x128xf32>
    %407 = arith.addf %404, %406 : vector<16x128xf32>
    %408 = arith.addf %393, %407 : vector<16x128xf32>
    %c0_126 = arith.constant 0 : index
    %c0_127 = arith.constant 0 : index
    %409 = vector.load %arg39[%c0_126, %c0_127] : memref<1x128xf32, #tpu.memory_space<vmem>>, vector<1x128xf32>
    %c0_128 = arith.constant 0 : index
    %c0_129 = arith.constant 0 : index
    %410 = vector.load %arg40[%c0_128, %c0_129] : memref<1x128xf32, #tpu.memory_space<vmem>>, vector<1x128xf32>
    %cst_130 = arith.constant dense<0.000000e+00> : vector<16xf32>
    %411 = vector.multi_reduction <add>, %408, %cst_130 [1] : vector<16x128xf32> to vector<16xf32>
    %412 = vector.shape_cast %411 : vector<16xf32> to vector<16x1xf32>
    %cst_131 = arith.constant 0.0333333351 : f32
    %413 = vector.broadcast %cst_131 : f32 to vector<16x1xf32>
    %414 = arith.mulf %412, %413 : vector<16x1xf32>
    %415 = arith.mulf %408, %408 : vector<16x128xf32>
    %cst_132 = arith.constant dense<0.000000e+00> : vector<16xf32>
    %416 = vector.multi_reduction <add>, %415, %cst_132 [1] : vector<16x128xf32> to vector<16xf32>
    %417 = vector.shape_cast %416 : vector<16xf32> to vector<16x1xf32>
    %cst_133 = arith.constant 0.0333333351 : f32
    %418 = vector.broadcast %cst_133 : f32 to vector<16x1xf32>
    %419 = arith.mulf %417, %418 : vector<16x1xf32>
    %420 = arith.mulf %414, %414 : vector<16x1xf32>
    %421 = arith.subf %419, %420 : vector<16x1xf32>
    %422 = vector.broadcast %414 : vector<16x1xf32> to vector<16x128xf32>
    %423 = arith.subf %408, %422 : vector<16x128xf32>
    %cst_134 = arith.constant 9.99999974E-6 : f32
    %424 = vector.broadcast %cst_134 : f32 to vector<16x1xf32>
    %425 = arith.addf %421, %424 : vector<16x1xf32>
    %426 = math.rsqrt %425 : vector<16x1xf32>
    %427 = vector.broadcast %426 : vector<16x1xf32> to vector<16x128xf32>
    %428 = arith.mulf %423, %427 : vector<16x128xf32>
    %429 = vector.broadcast %409 : vector<1x128xf32> to vector<16x128xf32>
    %430 = arith.mulf %428, %429 : vector<16x128xf32>
    %431 = vector.broadcast %410 : vector<1x128xf32> to vector<16x128xf32>
    %432 = arith.addf %430, %431 : vector<16x128xf32>
    %c0_135 = arith.constant 0 : index
    %c0_136 = arith.constant 0 : index
    %433 = vector.load %arg41[%c0_135, %c0_136] : memref<128x384xbf16, #tpu.memory_space<vmem>>, vector<128x384xbf16>
    %434 = arith.truncf %432 : vector<16x128xf32> to vector<16x128xbf16>
    %cst_137 = arith.constant dense<0.000000e+00> : vector<16x384xf32>
    %435 = tpu.matmul %434, %433, %cst_137 {dimension_numbers = #tpu.dot_dimension_numbers<[1], [0], [0], [1], [0, 0, 1, 1], [], []>} : vector<16x128xbf16>, vector<128x384xbf16>, vector<16x384xf32> -> vector<16x384xf32>
    %c0_138 = arith.constant 0 : index
    %c0_139 = arith.constant 0 : index
    %436 = vector.load %arg42[%c0_138, %c0_139] : memref<1x384xf32, #tpu.memory_space<vmem>>, vector<1x384xf32>
    %437 = vector.broadcast %436 : vector<1x384xf32> to vector<16x384xf32>
    %438 = arith.addf %435, %437 : vector<16x384xf32>
    %439 = vector.extract_strided_slice %438 {offsets = [0, 0], sizes = [16, 128], strides = [1, 1]} : vector<16x384xf32> to vector<16x128xf32>
    %440 = vector.extract_strided_slice %438 {offsets = [0, 128], sizes = [16, 128], strides = [1, 1]} : vector<16x384xf32> to vector<16x128xf32>
    %441 = vector.extract_strided_slice %438 {offsets = [0, 256], sizes = [16, 128], strides = [1, 1]} : vector<16x384xf32> to vector<16x128xf32>
    %442 = vector.extract_strided_slice %39 {offsets = [0, 0], sizes = [1, 128], strides = [1, 1]} : vector<15x128xf32> to vector<1x128xf32>
    %443 = vector.broadcast %442 : vector<1x128xf32> to vector<16x128xf32>
    %444 = arith.mulf %439, %443 : vector<16x128xf32>
    %445 = vector.extract_strided_slice %39 {offsets = [1, 0], sizes = [1, 128], strides = [1, 1]} : vector<15x128xf32> to vector<1x128xf32>
    %446 = vector.broadcast %445 : vector<1x128xf32> to vector<16x128xf32>
    %447 = arith.mulf %439, %446 : vector<16x128xf32>
    %448 = vector.extract_strided_slice %39 {offsets = [2, 0], sizes = [1, 128], strides = [1, 1]} : vector<15x128xf32> to vector<1x128xf32>
    %449 = vector.broadcast %448 : vector<1x128xf32> to vector<16x128xf32>
    %450 = arith.mulf %439, %449 : vector<16x128xf32>
    %451 = vector.extract_strided_slice %39 {offsets = [3, 0], sizes = [1, 128], strides = [1, 1]} : vector<15x128xf32> to vector<1x128xf32>
    %452 = vector.broadcast %451 : vector<1x128xf32> to vector<16x128xf32>
    %453 = arith.mulf %439, %452 : vector<16x128xf32>
    %454 = vector.extract_strided_slice %39 {offsets = [4, 0], sizes = [1, 128], strides = [1, 1]} : vector<15x128xf32> to vector<1x128xf32>
    %455 = vector.broadcast %454 : vector<1x128xf32> to vector<16x128xf32>
    %456 = arith.mulf %439, %455 : vector<16x128xf32>
    %457 = vector.extract_strided_slice %39 {offsets = [5, 0], sizes = [1, 128], strides = [1, 1]} : vector<15x128xf32> to vector<1x128xf32>
    %458 = vector.broadcast %457 : vector<1x128xf32> to vector<16x128xf32>
    %459 = arith.mulf %439, %458 : vector<16x128xf32>
    %460 = vector.extract_strided_slice %39 {offsets = [6, 0], sizes = [1, 128], strides = [1, 1]} : vector<15x128xf32> to vector<1x128xf32>
    %461 = vector.broadcast %460 : vector<1x128xf32> to vector<16x128xf32>
    %462 = arith.mulf %439, %461 : vector<16x128xf32>
    %463 = vector.extract_strided_slice %39 {offsets = [7, 0], sizes = [1, 128], strides = [1, 1]} : vector<15x128xf32> to vector<1x128xf32>
    %464 = vector.broadcast %463 : vector<1x128xf32> to vector<16x128xf32>
    %465 = arith.mulf %439, %464 : vector<16x128xf32>
    %466 = vector.extract_strided_slice %39 {offsets = [8, 0], sizes = [1, 128], strides = [1, 1]} : vector<15x128xf32> to vector<1x128xf32>
    %467 = vector.broadcast %466 : vector<1x128xf32> to vector<16x128xf32>
    %468 = arith.mulf %439, %467 : vector<16x128xf32>
    %469 = vector.extract_strided_slice %39 {offsets = [9, 0], sizes = [1, 128], strides = [1, 1]} : vector<15x128xf32> to vector<1x128xf32>
    %470 = vector.broadcast %469 : vector<1x128xf32> to vector<16x128xf32>
    %471 = arith.mulf %439, %470 : vector<16x128xf32>
    %472 = vector.extract_strided_slice %39 {offsets = [10, 0], sizes = [1, 128], strides = [1, 1]} : vector<15x128xf32> to vector<1x128xf32>
    %473 = vector.broadcast %472 : vector<1x128xf32> to vector<16x128xf32>
    %474 = arith.mulf %439, %473 : vector<16x128xf32>
    %475 = vector.extract_strided_slice %39 {offsets = [11, 0], sizes = [1, 128], strides = [1, 1]} : vector<15x128xf32> to vector<1x128xf32>
    %476 = vector.broadcast %475 : vector<1x128xf32> to vector<16x128xf32>
    %477 = arith.mulf %439, %476 : vector<16x128xf32>
    %478 = vector.extract_strided_slice %39 {offsets = [12, 0], sizes = [1, 128], strides = [1, 1]} : vector<15x128xf32> to vector<1x128xf32>
    %479 = vector.broadcast %478 : vector<1x128xf32> to vector<16x128xf32>
    %480 = arith.mulf %439, %479 : vector<16x128xf32>
    %481 = vector.extract_strided_slice %39 {offsets = [13, 0], sizes = [1, 128], strides = [1, 1]} : vector<15x128xf32> to vector<1x128xf32>
    %482 = vector.broadcast %481 : vector<1x128xf32> to vector<16x128xf32>
    %483 = arith.mulf %439, %482 : vector<16x128xf32>
    %484 = vector.extract_strided_slice %39 {offsets = [14, 0], sizes = [1, 128], strides = [1, 1]} : vector<15x128xf32> to vector<1x128xf32>
    %485 = vector.broadcast %484 : vector<1x128xf32> to vector<16x128xf32>
    %486 = arith.mulf %439, %485 : vector<16x128xf32>
    %487 = tpu.concatenate %444, %447, %450, %453, %456, %459, %462, %465, %468, %471, %474, %477, %480, %483, %486 in 0 : vector<16x128xf32>, vector<16x128xf32>, vector<16x128xf32>, vector<16x128xf32>, vector<16x128xf32>, vector<16x128xf32>, vector<16x128xf32>, vector<16x128xf32>, vector<16x128xf32>, vector<16x128xf32>, vector<16x128xf32>, vector<16x128xf32>, vector<16x128xf32>, vector<16x128xf32>, vector<16x128xf32> -> vector<240x128xf32>
    %488 = arith.truncf %487 : vector<240x128xf32> to vector<240x128xbf16>
    %489 = tpu.transpose %440, [1, 0] : vector<16x128xf32> -> vector<128x16xf32>
    %490 = arith.truncf %489 : vector<128x16xf32> to vector<128x16xbf16>
    %cst_140 = arith.constant dense<0.000000e+00> : vector<240x16xf32>
    %491 = tpu.matmul %488, %490, %cst_140 {dimension_numbers = #tpu.dot_dimension_numbers<[1], [0], [0], [1], [0, 0, 1, 1], [], []>} : vector<240x128xbf16>, vector<128x16xbf16>, vector<240x16xf32> -> vector<240x16xf32>
    %492 = tpu.concatenate %44, %44, %44, %44, %44, %44, %44, %44, %44, %44, %44, %44, %44, %44, %44 in 0 : vector<16x16xf32>, vector<16x16xf32>, vector<16x16xf32>, vector<16x16xf32>, vector<16x16xf32>, vector<16x16xf32>, vector<16x16xf32>, vector<16x16xf32>, vector<16x16xf32>, vector<16x16xf32>, vector<16x16xf32>, vector<16x16xf32>, vector<16x16xf32>, vector<16x16xf32>, vector<16x16xf32> -> vector<240x16xf32>
    %493 = arith.addf %491, %492 : vector<240x16xf32>
    %cst_141 = arith.constant dense<0xFF800000> : vector<240xf32>
    %494 = vector.multi_reduction <maximumf>, %493, %cst_141 [1] : vector<240x16xf32> to vector<240xf32>
    %495 = vector.shape_cast %494 : vector<240xf32> to vector<240x1xf32>
    %496 = vector.broadcast %495 : vector<240x1xf32> to vector<240x16xf32>
    %497 = arith.subf %493, %496 : vector<240x16xf32>
    %498 = math.exp %497 : vector<240x16xf32>
    %cst_142 = arith.constant dense<0.000000e+00> : vector<240xf32>
    %499 = vector.multi_reduction <add>, %498, %cst_142 [1] : vector<240x16xf32> to vector<240xf32>
    %500 = vector.shape_cast %499 : vector<240xf32> to vector<240x1xf32>
    %501 = tpu.reciprocal %500 {approx = true} : vector<240x1xf32> -> vector<240x1xf32>
    %502 = vector.broadcast %501 : vector<240x1xf32> to vector<240x16xf32>
    %503 = arith.mulf %498, %502 : vector<240x16xf32>
    %504 = arith.truncf %503 : vector<240x16xf32> to vector<240x16xbf16>
    %505 = arith.truncf %441 : vector<16x128xf32> to vector<16x128xbf16>
    %cst_143 = arith.constant dense<0.000000e+00> : vector<240x128xf32>
    %506 = tpu.matmul %504, %505, %cst_143 {dimension_numbers = #tpu.dot_dimension_numbers<[1], [0], [0], [1], [0, 0, 1, 1], [], []>} : vector<240x16xbf16>, vector<16x128xbf16>, vector<240x128xf32> -> vector<240x128xf32>
    %507 = vector.extract_strided_slice %506 {offsets = [0, 0], sizes = [16, 128], strides = [1, 1]} : vector<240x128xf32> to vector<16x128xf32>
    %508 = vector.extract_strided_slice %39 {offsets = [0, 0], sizes = [1, 128], strides = [1, 1]} : vector<15x128xf32> to vector<1x128xf32>
    %509 = vector.broadcast %508 : vector<1x128xf32> to vector<16x128xf32>
    %510 = arith.mulf %507, %509 : vector<16x128xf32>
    %511 = vector.extract_strided_slice %506 {offsets = [16, 0], sizes = [16, 128], strides = [1, 1]} : vector<240x128xf32> to vector<16x128xf32>
    %512 = vector.extract_strided_slice %39 {offsets = [1, 0], sizes = [1, 128], strides = [1, 1]} : vector<15x128xf32> to vector<1x128xf32>
    %513 = vector.broadcast %512 : vector<1x128xf32> to vector<16x128xf32>
    %514 = arith.mulf %511, %513 : vector<16x128xf32>
    %515 = arith.addf %510, %514 : vector<16x128xf32>
    %516 = vector.extract_strided_slice %506 {offsets = [32, 0], sizes = [16, 128], strides = [1, 1]} : vector<240x128xf32> to vector<16x128xf32>
    %517 = vector.extract_strided_slice %39 {offsets = [2, 0], sizes = [1, 128], strides = [1, 1]} : vector<15x128xf32> to vector<1x128xf32>
    %518 = vector.broadcast %517 : vector<1x128xf32> to vector<16x128xf32>
    %519 = arith.mulf %516, %518 : vector<16x128xf32>
    %520 = arith.addf %515, %519 : vector<16x128xf32>
    %521 = vector.extract_strided_slice %506 {offsets = [48, 0], sizes = [16, 128], strides = [1, 1]} : vector<240x128xf32> to vector<16x128xf32>
    %522 = vector.extract_strided_slice %39 {offsets = [3, 0], sizes = [1, 128], strides = [1, 1]} : vector<15x128xf32> to vector<1x128xf32>
    %523 = vector.broadcast %522 : vector<1x128xf32> to vector<16x128xf32>
    %524 = arith.mulf %521, %523 : vector<16x128xf32>
    %525 = arith.addf %520, %524 : vector<16x128xf32>
    %526 = vector.extract_strided_slice %506 {offsets = [64, 0], sizes = [16, 128], strides = [1, 1]} : vector<240x128xf32> to vector<16x128xf32>
    %527 = vector.extract_strided_slice %39 {offsets = [4, 0], sizes = [1, 128], strides = [1, 1]} : vector<15x128xf32> to vector<1x128xf32>
    %528 = vector.broadcast %527 : vector<1x128xf32> to vector<16x128xf32>
    %529 = arith.mulf %526, %528 : vector<16x128xf32>
    %530 = arith.addf %525, %529 : vector<16x128xf32>
    %531 = vector.extract_strided_slice %506 {offsets = [80, 0], sizes = [16, 128], strides = [1, 1]} : vector<240x128xf32> to vector<16x128xf32>
    %532 = vector.extract_strided_slice %39 {offsets = [5, 0], sizes = [1, 128], strides = [1, 1]} : vector<15x128xf32> to vector<1x128xf32>
    %533 = vector.broadcast %532 : vector<1x128xf32> to vector<16x128xf32>
    %534 = arith.mulf %531, %533 : vector<16x128xf32>
    %535 = arith.addf %530, %534 : vector<16x128xf32>
    %536 = vector.extract_strided_slice %506 {offsets = [96, 0], sizes = [16, 128], strides = [1, 1]} : vector<240x128xf32> to vector<16x128xf32>
    %537 = vector.extract_strided_slice %39 {offsets = [6, 0], sizes = [1, 128], strides = [1, 1]} : vector<15x128xf32> to vector<1x128xf32>
    %538 = vector.broadcast %537 : vector<1x128xf32> to vector<16x128xf32>
    %539 = arith.mulf %536, %538 : vector<16x128xf32>
    %540 = arith.addf %535, %539 : vector<16x128xf32>
    %541 = vector.extract_strided_slice %506 {offsets = [112, 0], sizes = [16, 128], strides = [1, 1]} : vector<240x128xf32> to vector<16x128xf32>
    %542 = vector.extract_strided_slice %39 {offsets = [7, 0], sizes = [1, 128], strides = [1, 1]} : vector<15x128xf32> to vector<1x128xf32>
    %543 = vector.broadcast %542 : vector<1x128xf32> to vector<16x128xf32>
    %544 = arith.mulf %541, %543 : vector<16x128xf32>
    %545 = arith.addf %540, %544 : vector<16x128xf32>
    %546 = vector.extract_strided_slice %506 {offsets = [128, 0], sizes = [16, 128], strides = [1, 1]} : vector<240x128xf32> to vector<16x128xf32>
    %547 = vector.extract_strided_slice %39 {offsets = [8, 0], sizes = [1, 128], strides = [1, 1]} : vector<15x128xf32> to vector<1x128xf32>
    %548 = vector.broadcast %547 : vector<1x128xf32> to vector<16x128xf32>
    %549 = arith.mulf %546, %548 : vector<16x128xf32>
    %550 = arith.addf %545, %549 : vector<16x128xf32>
    %551 = vector.extract_strided_slice %506 {offsets = [144, 0], sizes = [16, 128], strides = [1, 1]} : vector<240x128xf32> to vector<16x128xf32>
    %552 = vector.extract_strided_slice %39 {offsets = [9, 0], sizes = [1, 128], strides = [1, 1]} : vector<15x128xf32> to vector<1x128xf32>
    %553 = vector.broadcast %552 : vector<1x128xf32> to vector<16x128xf32>
    %554 = arith.mulf %551, %553 : vector<16x128xf32>
    %555 = arith.addf %550, %554 : vector<16x128xf32>
    %556 = vector.extract_strided_slice %506 {offsets = [160, 0], sizes = [16, 128], strides = [1, 1]} : vector<240x128xf32> to vector<16x128xf32>
    %557 = vector.extract_strided_slice %39 {offsets = [10, 0], sizes = [1, 128], strides = [1, 1]} : vector<15x128xf32> to vector<1x128xf32>
    %558 = vector.broadcast %557 : vector<1x128xf32> to vector<16x128xf32>
    %559 = arith.mulf %556, %558 : vector<16x128xf32>
    %560 = arith.addf %555, %559 : vector<16x128xf32>
    %561 = vector.extract_strided_slice %506 {offsets = [176, 0], sizes = [16, 128], strides = [1, 1]} : vector<240x128xf32> to vector<16x128xf32>
    %562 = vector.extract_strided_slice %39 {offsets = [11, 0], sizes = [1, 128], strides = [1, 1]} : vector<15x128xf32> to vector<1x128xf32>
    %563 = vector.broadcast %562 : vector<1x128xf32> to vector<16x128xf32>
    %564 = arith.mulf %561, %563 : vector<16x128xf32>
    %565 = arith.addf %560, %564 : vector<16x128xf32>
    %566 = vector.extract_strided_slice %506 {offsets = [192, 0], sizes = [16, 128], strides = [1, 1]} : vector<240x128xf32> to vector<16x128xf32>
    %567 = vector.extract_strided_slice %39 {offsets = [12, 0], sizes = [1, 128], strides = [1, 1]} : vector<15x128xf32> to vector<1x128xf32>
    %568 = vector.broadcast %567 : vector<1x128xf32> to vector<16x128xf32>
    %569 = arith.mulf %566, %568 : vector<16x128xf32>
    %570 = arith.addf %565, %569 : vector<16x128xf32>
    %571 = vector.extract_strided_slice %506 {offsets = [208, 0], sizes = [16, 128], strides = [1, 1]} : vector<240x128xf32> to vector<16x128xf32>
    %572 = vector.extract_strided_slice %39 {offsets = [13, 0], sizes = [1, 128], strides = [1, 1]} : vector<15x128xf32> to vector<1x128xf32>
    %573 = vector.broadcast %572 : vector<1x128xf32> to vector<16x128xf32>
    %574 = arith.mulf %571, %573 : vector<16x128xf32>
    %575 = arith.addf %570, %574 : vector<16x128xf32>
    %576 = vector.extract_strided_slice %506 {offsets = [224, 0], sizes = [16, 128], strides = [1, 1]} : vector<240x128xf32> to vector<16x128xf32>
    %577 = vector.extract_strided_slice %39 {offsets = [14, 0], sizes = [1, 128], strides = [1, 1]} : vector<15x128xf32> to vector<1x128xf32>
    %578 = vector.broadcast %577 : vector<1x128xf32> to vector<16x128xf32>
    %579 = arith.mulf %576, %578 : vector<16x128xf32>
    %580 = arith.addf %575, %579 : vector<16x128xf32>
    %c0_144 = arith.constant 0 : index
    %c0_145 = arith.constant 0 : index
    %581 = vector.load %arg43[%c0_144, %c0_145] : memref<128x128xbf16, #tpu.memory_space<vmem>>, vector<128x128xbf16>
    %582 = arith.truncf %580 : vector<16x128xf32> to vector<16x128xbf16>
    %cst_146 = arith.constant dense<0.000000e+00> : vector<16x128xf32>
    %583 = tpu.matmul %582, %581, %cst_146 {dimension_numbers = #tpu.dot_dimension_numbers<[1], [0], [0], [1], [0, 0, 1, 1], [], []>} : vector<16x128xbf16>, vector<128x128xbf16>, vector<16x128xf32> -> vector<16x128xf32>
    %c0_147 = arith.constant 0 : index
    %c0_148 = arith.constant 0 : index
    %584 = vector.load %arg44[%c0_147, %c0_148] : memref<1x128xf32, #tpu.memory_space<vmem>>, vector<1x128xf32>
    %585 = vector.broadcast %584 : vector<1x128xf32> to vector<16x128xf32>
    %586 = arith.addf %583, %585 : vector<16x128xf32>
    %587 = arith.addf %432, %586 : vector<16x128xf32>
    %c0_149 = arith.constant 0 : index
    %c0_150 = arith.constant 0 : index
    %588 = vector.load %arg45[%c0_149, %c0_150] : memref<1x128xf32, #tpu.memory_space<vmem>>, vector<1x128xf32>
    %c0_151 = arith.constant 0 : index
    %c0_152 = arith.constant 0 : index
    %589 = vector.load %arg46[%c0_151, %c0_152] : memref<1x128xf32, #tpu.memory_space<vmem>>, vector<1x128xf32>
    %cst_153 = arith.constant dense<0.000000e+00> : vector<16xf32>
    %590 = vector.multi_reduction <add>, %587, %cst_153 [1] : vector<16x128xf32> to vector<16xf32>
    %591 = vector.shape_cast %590 : vector<16xf32> to vector<16x1xf32>
    %cst_154 = arith.constant 0.0333333351 : f32
    %592 = vector.broadcast %cst_154 : f32 to vector<16x1xf32>
    %593 = arith.mulf %591, %592 : vector<16x1xf32>
    %594 = arith.mulf %587, %587 : vector<16x128xf32>
    %cst_155 = arith.constant dense<0.000000e+00> : vector<16xf32>
    %595 = vector.multi_reduction <add>, %594, %cst_155 [1] : vector<16x128xf32> to vector<16xf32>
    %596 = vector.shape_cast %595 : vector<16xf32> to vector<16x1xf32>
    %cst_156 = arith.constant 0.0333333351 : f32
    %597 = vector.broadcast %cst_156 : f32 to vector<16x1xf32>
    %598 = arith.mulf %596, %597 : vector<16x1xf32>
    %599 = arith.mulf %593, %593 : vector<16x1xf32>
    %600 = arith.subf %598, %599 : vector<16x1xf32>
    %601 = vector.broadcast %593 : vector<16x1xf32> to vector<16x128xf32>
    %602 = arith.subf %587, %601 : vector<16x128xf32>
    %cst_157 = arith.constant 9.99999974E-6 : f32
    %603 = vector.broadcast %cst_157 : f32 to vector<16x1xf32>
    %604 = arith.addf %600, %603 : vector<16x1xf32>
    %605 = math.rsqrt %604 : vector<16x1xf32>
    %606 = vector.broadcast %605 : vector<16x1xf32> to vector<16x128xf32>
    %607 = arith.mulf %602, %606 : vector<16x128xf32>
    %608 = vector.broadcast %588 : vector<1x128xf32> to vector<16x128xf32>
    %609 = arith.mulf %607, %608 : vector<16x128xf32>
    %610 = vector.broadcast %589 : vector<1x128xf32> to vector<16x128xf32>
    %611 = arith.addf %609, %610 : vector<16x128xf32>
    %c0_158 = arith.constant 0 : index
    %c0_159 = arith.constant 0 : index
    %612 = vector.load %arg47[%c0_158, %c0_159] : memref<128x128xbf16, #tpu.memory_space<vmem>>, vector<128x128xbf16>
    %613 = arith.truncf %611 : vector<16x128xf32> to vector<16x128xbf16>
    %cst_160 = arith.constant dense<0.000000e+00> : vector<16x128xf32>
    %614 = tpu.matmul %613, %612, %cst_160 {dimension_numbers = #tpu.dot_dimension_numbers<[1], [0], [0], [1], [0, 0, 1, 1], [], []>} : vector<16x128xbf16>, vector<128x128xbf16>, vector<16x128xf32> -> vector<16x128xf32>
    %c0_161 = arith.constant 0 : index
    %c0_162 = arith.constant 0 : index
    %615 = vector.load %arg48[%c0_161, %c0_162] : memref<1x128xf32, #tpu.memory_space<vmem>>, vector<1x128xf32>
    %616 = vector.broadcast %615 : vector<1x128xf32> to vector<16x128xf32>
    %617 = arith.addf %614, %616 : vector<16x128xf32>
    %c0_163 = arith.constant 0 : index
    %c0_164 = arith.constant 0 : index
    %618 = vector.load %arg49[%c0_163, %c0_164] : memref<128x256xbf16, #tpu.memory_space<vmem>>, vector<128x256xbf16>
    %619 = arith.truncf %213 : vector<96x128xf32> to vector<96x128xbf16>
    %cst_165 = arith.constant dense<0.000000e+00> : vector<96x256xf32>
    %620 = tpu.matmul %619, %618, %cst_165 {dimension_numbers = #tpu.dot_dimension_numbers<[1], [0], [0], [1], [0, 0, 1, 1], [], []>} : vector<96x128xbf16>, vector<128x256xbf16>, vector<96x256xf32> -> vector<96x256xf32>
    %c0_166 = arith.constant 0 : index
    %c0_167 = arith.constant 0 : index
    %621 = vector.load %arg50[%c0_166, %c0_167] : memref<1x256xf32, #tpu.memory_space<vmem>>, vector<1x256xf32>
    %622 = vector.broadcast %621 : vector<1x256xf32> to vector<96x256xf32>
    %623 = arith.addf %620, %622 : vector<96x256xf32>
    %624 = vector.extract_strided_slice %623 {offsets = [0, 0], sizes = [96, 128], strides = [1, 1]} : vector<96x256xf32> to vector<96x128xf32>
    %625 = vector.extract_strided_slice %623 {offsets = [0, 128], sizes = [96, 128], strides = [1, 1]} : vector<96x256xf32> to vector<96x128xf32>
    %626 = vector.extract_strided_slice %39 {offsets = [0, 0], sizes = [1, 128], strides = [1, 1]} : vector<15x128xf32> to vector<1x128xf32>
    %627 = vector.broadcast %626 : vector<1x128xf32> to vector<16x128xf32>
    %628 = arith.mulf %617, %627 : vector<16x128xf32>
    %629 = vector.extract_strided_slice %39 {offsets = [1, 0], sizes = [1, 128], strides = [1, 1]} : vector<15x128xf32> to vector<1x128xf32>
    %630 = vector.broadcast %629 : vector<1x128xf32> to vector<16x128xf32>
    %631 = arith.mulf %617, %630 : vector<16x128xf32>
    %632 = vector.extract_strided_slice %39 {offsets = [2, 0], sizes = [1, 128], strides = [1, 1]} : vector<15x128xf32> to vector<1x128xf32>
    %633 = vector.broadcast %632 : vector<1x128xf32> to vector<16x128xf32>
    %634 = arith.mulf %617, %633 : vector<16x128xf32>
    %635 = vector.extract_strided_slice %39 {offsets = [3, 0], sizes = [1, 128], strides = [1, 1]} : vector<15x128xf32> to vector<1x128xf32>
    %636 = vector.broadcast %635 : vector<1x128xf32> to vector<16x128xf32>
    %637 = arith.mulf %617, %636 : vector<16x128xf32>
    %638 = vector.extract_strided_slice %39 {offsets = [4, 0], sizes = [1, 128], strides = [1, 1]} : vector<15x128xf32> to vector<1x128xf32>
    %639 = vector.broadcast %638 : vector<1x128xf32> to vector<16x128xf32>
    %640 = arith.mulf %617, %639 : vector<16x128xf32>
    %641 = vector.extract_strided_slice %39 {offsets = [5, 0], sizes = [1, 128], strides = [1, 1]} : vector<15x128xf32> to vector<1x128xf32>
    %642 = vector.broadcast %641 : vector<1x128xf32> to vector<16x128xf32>
    %643 = arith.mulf %617, %642 : vector<16x128xf32>
    %644 = vector.extract_strided_slice %39 {offsets = [6, 0], sizes = [1, 128], strides = [1, 1]} : vector<15x128xf32> to vector<1x128xf32>
    %645 = vector.broadcast %644 : vector<1x128xf32> to vector<16x128xf32>
    %646 = arith.mulf %617, %645 : vector<16x128xf32>
    %647 = vector.extract_strided_slice %39 {offsets = [7, 0], sizes = [1, 128], strides = [1, 1]} : vector<15x128xf32> to vector<1x128xf32>
    %648 = vector.broadcast %647 : vector<1x128xf32> to vector<16x128xf32>
    %649 = arith.mulf %617, %648 : vector<16x128xf32>
    %650 = vector.extract_strided_slice %39 {offsets = [8, 0], sizes = [1, 128], strides = [1, 1]} : vector<15x128xf32> to vector<1x128xf32>
    %651 = vector.broadcast %650 : vector<1x128xf32> to vector<16x128xf32>
    %652 = arith.mulf %617, %651 : vector<16x128xf32>
    %653 = vector.extract_strided_slice %39 {offsets = [9, 0], sizes = [1, 128], strides = [1, 1]} : vector<15x128xf32> to vector<1x128xf32>
    %654 = vector.broadcast %653 : vector<1x128xf32> to vector<16x128xf32>
    %655 = arith.mulf %617, %654 : vector<16x128xf32>
    %656 = vector.extract_strided_slice %39 {offsets = [10, 0], sizes = [1, 128], strides = [1, 1]} : vector<15x128xf32> to vector<1x128xf32>
    %657 = vector.broadcast %656 : vector<1x128xf32> to vector<16x128xf32>
    %658 = arith.mulf %617, %657 : vector<16x128xf32>
    %659 = vector.extract_strided_slice %39 {offsets = [11, 0], sizes = [1, 128], strides = [1, 1]} : vector<15x128xf32> to vector<1x128xf32>
    %660 = vector.broadcast %659 : vector<1x128xf32> to vector<16x128xf32>
    %661 = arith.mulf %617, %660 : vector<16x128xf32>
    %662 = vector.extract_strided_slice %39 {offsets = [12, 0], sizes = [1, 128], strides = [1, 1]} : vector<15x128xf32> to vector<1x128xf32>
    %663 = vector.broadcast %662 : vector<1x128xf32> to vector<16x128xf32>
    %664 = arith.mulf %617, %663 : vector<16x128xf32>
    %665 = vector.extract_strided_slice %39 {offsets = [13, 0], sizes = [1, 128], strides = [1, 1]} : vector<15x128xf32> to vector<1x128xf32>
    %666 = vector.broadcast %665 : vector<1x128xf32> to vector<16x128xf32>
    %667 = arith.mulf %617, %666 : vector<16x128xf32>
    %668 = vector.extract_strided_slice %39 {offsets = [14, 0], sizes = [1, 128], strides = [1, 1]} : vector<15x128xf32> to vector<1x128xf32>
    %669 = vector.broadcast %668 : vector<1x128xf32> to vector<16x128xf32>
    %670 = arith.mulf %617, %669 : vector<16x128xf32>
    %671 = tpu.concatenate %628, %631, %634, %637, %640, %643, %646, %649, %652, %655, %658, %661, %664, %667, %670 in 0 : vector<16x128xf32>, vector<16x128xf32>, vector<16x128xf32>, vector<16x128xf32>, vector<16x128xf32>, vector<16x128xf32>, vector<16x128xf32>, vector<16x128xf32>, vector<16x128xf32>, vector<16x128xf32>, vector<16x128xf32>, vector<16x128xf32>, vector<16x128xf32>, vector<16x128xf32>, vector<16x128xf32> -> vector<240x128xf32>
    %672 = arith.truncf %671 : vector<240x128xf32> to vector<240x128xbf16>
    %673 = tpu.transpose %624, [1, 0] : vector<96x128xf32> -> vector<128x96xf32>
    %674 = arith.truncf %673 : vector<128x96xf32> to vector<128x96xbf16>
    %cst_168 = arith.constant dense<0.000000e+00> : vector<240x96xf32>
    %675 = tpu.matmul %672, %674, %cst_168 {dimension_numbers = #tpu.dot_dimension_numbers<[1], [0], [0], [1], [0, 0, 1, 1], [], []>} : vector<240x128xbf16>, vector<128x96xbf16>, vector<240x96xf32> -> vector<240x96xf32>
    %676 = tpu.concatenate %45, %45, %45, %45, %45, %45, %45, %45, %45, %45, %45, %45, %45, %45, %45 in 0 : vector<16x96xf32>, vector<16x96xf32>, vector<16x96xf32>, vector<16x96xf32>, vector<16x96xf32>, vector<16x96xf32>, vector<16x96xf32>, vector<16x96xf32>, vector<16x96xf32>, vector<16x96xf32>, vector<16x96xf32>, vector<16x96xf32>, vector<16x96xf32>, vector<16x96xf32>, vector<16x96xf32> -> vector<240x96xf32>
    %677 = arith.addf %675, %676 : vector<240x96xf32>
    %cst_169 = arith.constant dense<0xFF800000> : vector<240xf32>
    %678 = vector.multi_reduction <maximumf>, %677, %cst_169 [1] : vector<240x96xf32> to vector<240xf32>
    %679 = vector.shape_cast %678 : vector<240xf32> to vector<240x1xf32>
    %680 = vector.broadcast %679 : vector<240x1xf32> to vector<240x96xf32>
    %681 = arith.subf %677, %680 : vector<240x96xf32>
    %682 = math.exp %681 : vector<240x96xf32>
    %cst_170 = arith.constant dense<0.000000e+00> : vector<240xf32>
    %683 = vector.multi_reduction <add>, %682, %cst_170 [1] : vector<240x96xf32> to vector<240xf32>
    %684 = vector.shape_cast %683 : vector<240xf32> to vector<240x1xf32>
    %685 = tpu.reciprocal %684 {approx = true} : vector<240x1xf32> -> vector<240x1xf32>
    %686 = vector.broadcast %685 : vector<240x1xf32> to vector<240x96xf32>
    %687 = arith.mulf %682, %686 : vector<240x96xf32>
    %688 = arith.truncf %687 : vector<240x96xf32> to vector<240x96xbf16>
    %689 = arith.truncf %625 : vector<96x128xf32> to vector<96x128xbf16>
    %cst_171 = arith.constant dense<0.000000e+00> : vector<240x128xf32>
    %690 = tpu.matmul %688, %689, %cst_171 {dimension_numbers = #tpu.dot_dimension_numbers<[1], [0], [0], [1], [0, 0, 1, 1], [], []>} : vector<240x96xbf16>, vector<96x128xbf16>, vector<240x128xf32> -> vector<240x128xf32>
    %691 = vector.extract_strided_slice %690 {offsets = [0, 0], sizes = [16, 128], strides = [1, 1]} : vector<240x128xf32> to vector<16x128xf32>
    %692 = vector.extract_strided_slice %39 {offsets = [0, 0], sizes = [1, 128], strides = [1, 1]} : vector<15x128xf32> to vector<1x128xf32>
    %693 = vector.broadcast %692 : vector<1x128xf32> to vector<16x128xf32>
    %694 = arith.mulf %691, %693 : vector<16x128xf32>
    %695 = vector.extract_strided_slice %690 {offsets = [16, 0], sizes = [16, 128], strides = [1, 1]} : vector<240x128xf32> to vector<16x128xf32>
    %696 = vector.extract_strided_slice %39 {offsets = [1, 0], sizes = [1, 128], strides = [1, 1]} : vector<15x128xf32> to vector<1x128xf32>
    %697 = vector.broadcast %696 : vector<1x128xf32> to vector<16x128xf32>
    %698 = arith.mulf %695, %697 : vector<16x128xf32>
    %699 = arith.addf %694, %698 : vector<16x128xf32>
    %700 = vector.extract_strided_slice %690 {offsets = [32, 0], sizes = [16, 128], strides = [1, 1]} : vector<240x128xf32> to vector<16x128xf32>
    %701 = vector.extract_strided_slice %39 {offsets = [2, 0], sizes = [1, 128], strides = [1, 1]} : vector<15x128xf32> to vector<1x128xf32>
    %702 = vector.broadcast %701 : vector<1x128xf32> to vector<16x128xf32>
    %703 = arith.mulf %700, %702 : vector<16x128xf32>
    %704 = arith.addf %699, %703 : vector<16x128xf32>
    %705 = vector.extract_strided_slice %690 {offsets = [48, 0], sizes = [16, 128], strides = [1, 1]} : vector<240x128xf32> to vector<16x128xf32>
    %706 = vector.extract_strided_slice %39 {offsets = [3, 0], sizes = [1, 128], strides = [1, 1]} : vector<15x128xf32> to vector<1x128xf32>
    %707 = vector.broadcast %706 : vector<1x128xf32> to vector<16x128xf32>
    %708 = arith.mulf %705, %707 : vector<16x128xf32>
    %709 = arith.addf %704, %708 : vector<16x128xf32>
    %710 = vector.extract_strided_slice %690 {offsets = [64, 0], sizes = [16, 128], strides = [1, 1]} : vector<240x128xf32> to vector<16x128xf32>
    %711 = vector.extract_strided_slice %39 {offsets = [4, 0], sizes = [1, 128], strides = [1, 1]} : vector<15x128xf32> to vector<1x128xf32>
    %712 = vector.broadcast %711 : vector<1x128xf32> to vector<16x128xf32>
    %713 = arith.mulf %710, %712 : vector<16x128xf32>
    %714 = arith.addf %709, %713 : vector<16x128xf32>
    %715 = vector.extract_strided_slice %690 {offsets = [80, 0], sizes = [16, 128], strides = [1, 1]} : vector<240x128xf32> to vector<16x128xf32>
    %716 = vector.extract_strided_slice %39 {offsets = [5, 0], sizes = [1, 128], strides = [1, 1]} : vector<15x128xf32> to vector<1x128xf32>
    %717 = vector.broadcast %716 : vector<1x128xf32> to vector<16x128xf32>
    %718 = arith.mulf %715, %717 : vector<16x128xf32>
    %719 = arith.addf %714, %718 : vector<16x128xf32>
    %720 = vector.extract_strided_slice %690 {offsets = [96, 0], sizes = [16, 128], strides = [1, 1]} : vector<240x128xf32> to vector<16x128xf32>
    %721 = vector.extract_strided_slice %39 {offsets = [6, 0], sizes = [1, 128], strides = [1, 1]} : vector<15x128xf32> to vector<1x128xf32>
    %722 = vector.broadcast %721 : vector<1x128xf32> to vector<16x128xf32>
    %723 = arith.mulf %720, %722 : vector<16x128xf32>
    %724 = arith.addf %719, %723 : vector<16x128xf32>
    %725 = vector.extract_strided_slice %690 {offsets = [112, 0], sizes = [16, 128], strides = [1, 1]} : vector<240x128xf32> to vector<16x128xf32>
    %726 = vector.extract_strided_slice %39 {offsets = [7, 0], sizes = [1, 128], strides = [1, 1]} : vector<15x128xf32> to vector<1x128xf32>
    %727 = vector.broadcast %726 : vector<1x128xf32> to vector<16x128xf32>
    %728 = arith.mulf %725, %727 : vector<16x128xf32>
    %729 = arith.addf %724, %728 : vector<16x128xf32>
    %730 = vector.extract_strided_slice %690 {offsets = [128, 0], sizes = [16, 128], strides = [1, 1]} : vector<240x128xf32> to vector<16x128xf32>
    %731 = vector.extract_strided_slice %39 {offsets = [8, 0], sizes = [1, 128], strides = [1, 1]} : vector<15x128xf32> to vector<1x128xf32>
    %732 = vector.broadcast %731 : vector<1x128xf32> to vector<16x128xf32>
    %733 = arith.mulf %730, %732 : vector<16x128xf32>
    %734 = arith.addf %729, %733 : vector<16x128xf32>
    %735 = vector.extract_strided_slice %690 {offsets = [144, 0], sizes = [16, 128], strides = [1, 1]} : vector<240x128xf32> to vector<16x128xf32>
    %736 = vector.extract_strided_slice %39 {offsets = [9, 0], sizes = [1, 128], strides = [1, 1]} : vector<15x128xf32> to vector<1x128xf32>
    %737 = vector.broadcast %736 : vector<1x128xf32> to vector<16x128xf32>
    %738 = arith.mulf %735, %737 : vector<16x128xf32>
    %739 = arith.addf %734, %738 : vector<16x128xf32>
    %740 = vector.extract_strided_slice %690 {offsets = [160, 0], sizes = [16, 128], strides = [1, 1]} : vector<240x128xf32> to vector<16x128xf32>
    %741 = vector.extract_strided_slice %39 {offsets = [10, 0], sizes = [1, 128], strides = [1, 1]} : vector<15x128xf32> to vector<1x128xf32>
    %742 = vector.broadcast %741 : vector<1x128xf32> to vector<16x128xf32>
    %743 = arith.mulf %740, %742 : vector<16x128xf32>
    %744 = arith.addf %739, %743 : vector<16x128xf32>
    %745 = vector.extract_strided_slice %690 {offsets = [176, 0], sizes = [16, 128], strides = [1, 1]} : vector<240x128xf32> to vector<16x128xf32>
    %746 = vector.extract_strided_slice %39 {offsets = [11, 0], sizes = [1, 128], strides = [1, 1]} : vector<15x128xf32> to vector<1x128xf32>
    %747 = vector.broadcast %746 : vector<1x128xf32> to vector<16x128xf32>
    %748 = arith.mulf %745, %747 : vector<16x128xf32>
    %749 = arith.addf %744, %748 : vector<16x128xf32>
    %750 = vector.extract_strided_slice %690 {offsets = [192, 0], sizes = [16, 128], strides = [1, 1]} : vector<240x128xf32> to vector<16x128xf32>
    %751 = vector.extract_strided_slice %39 {offsets = [12, 0], sizes = [1, 128], strides = [1, 1]} : vector<15x128xf32> to vector<1x128xf32>
    %752 = vector.broadcast %751 : vector<1x128xf32> to vector<16x128xf32>
    %753 = arith.mulf %750, %752 : vector<16x128xf32>
    %754 = arith.addf %749, %753 : vector<16x128xf32>
    %755 = vector.extract_strided_slice %690 {offsets = [208, 0], sizes = [16, 128], strides = [1, 1]} : vector<240x128xf32> to vector<16x128xf32>
    %756 = vector.extract_strided_slice %39 {offsets = [13, 0], sizes = [1, 128], strides = [1, 1]} : vector<15x128xf32> to vector<1x128xf32>
    %757 = vector.broadcast %756 : vector<1x128xf32> to vector<16x128xf32>
    %758 = arith.mulf %755, %757 : vector<16x128xf32>
    %759 = arith.addf %754, %758 : vector<16x128xf32>
    %760 = vector.extract_strided_slice %690 {offsets = [224, 0], sizes = [16, 128], strides = [1, 1]} : vector<240x128xf32> to vector<16x128xf32>
    %761 = vector.extract_strided_slice %39 {offsets = [14, 0], sizes = [1, 128], strides = [1, 1]} : vector<15x128xf32> to vector<1x128xf32>
    %762 = vector.broadcast %761 : vector<1x128xf32> to vector<16x128xf32>
    %763 = arith.mulf %760, %762 : vector<16x128xf32>
    %764 = arith.addf %759, %763 : vector<16x128xf32>
    %c0_172 = arith.constant 0 : index
    %c0_173 = arith.constant 0 : index
    %765 = vector.load %arg51[%c0_172, %c0_173] : memref<128x128xbf16, #tpu.memory_space<vmem>>, vector<128x128xbf16>
    %766 = arith.truncf %764 : vector<16x128xf32> to vector<16x128xbf16>
    %cst_174 = arith.constant dense<0.000000e+00> : vector<16x128xf32>
    %767 = tpu.matmul %766, %765, %cst_174 {dimension_numbers = #tpu.dot_dimension_numbers<[1], [0], [0], [1], [0, 0, 1, 1], [], []>} : vector<16x128xbf16>, vector<128x128xbf16>, vector<16x128xf32> -> vector<16x128xf32>
    %c0_175 = arith.constant 0 : index
    %c0_176 = arith.constant 0 : index
    %768 = vector.load %arg52[%c0_175, %c0_176] : memref<1x128xf32, #tpu.memory_space<vmem>>, vector<1x128xf32>
    %769 = vector.broadcast %768 : vector<1x128xf32> to vector<16x128xf32>
    %770 = arith.addf %767, %769 : vector<16x128xf32>
    %771 = arith.addf %611, %770 : vector<16x128xf32>
    %c0_177 = arith.constant 0 : index
    %c0_178 = arith.constant 0 : index
    %772 = vector.load %arg53[%c0_177, %c0_178] : memref<1x128xf32, #tpu.memory_space<vmem>>, vector<1x128xf32>
    %c0_179 = arith.constant 0 : index
    %c0_180 = arith.constant 0 : index
    %773 = vector.load %arg54[%c0_179, %c0_180] : memref<1x128xf32, #tpu.memory_space<vmem>>, vector<1x128xf32>
    %cst_181 = arith.constant dense<0.000000e+00> : vector<16xf32>
    %774 = vector.multi_reduction <add>, %771, %cst_181 [1] : vector<16x128xf32> to vector<16xf32>
    %775 = vector.shape_cast %774 : vector<16xf32> to vector<16x1xf32>
    %cst_182 = arith.constant 0.0333333351 : f32
    %776 = vector.broadcast %cst_182 : f32 to vector<16x1xf32>
    %777 = arith.mulf %775, %776 : vector<16x1xf32>
    %778 = arith.mulf %771, %771 : vector<16x128xf32>
    %cst_183 = arith.constant dense<0.000000e+00> : vector<16xf32>
    %779 = vector.multi_reduction <add>, %778, %cst_183 [1] : vector<16x128xf32> to vector<16xf32>
    %780 = vector.shape_cast %779 : vector<16xf32> to vector<16x1xf32>
    %cst_184 = arith.constant 0.0333333351 : f32
    %781 = vector.broadcast %cst_184 : f32 to vector<16x1xf32>
    %782 = arith.mulf %780, %781 : vector<16x1xf32>
    %783 = arith.mulf %777, %777 : vector<16x1xf32>
    %784 = arith.subf %782, %783 : vector<16x1xf32>
    %785 = vector.broadcast %777 : vector<16x1xf32> to vector<16x128xf32>
    %786 = arith.subf %771, %785 : vector<16x128xf32>
    %cst_185 = arith.constant 9.99999974E-6 : f32
    %787 = vector.broadcast %cst_185 : f32 to vector<16x1xf32>
    %788 = arith.addf %784, %787 : vector<16x1xf32>
    %789 = math.rsqrt %788 : vector<16x1xf32>
    %790 = vector.broadcast %789 : vector<16x1xf32> to vector<16x128xf32>
    %791 = arith.mulf %786, %790 : vector<16x128xf32>
    %792 = vector.broadcast %772 : vector<1x128xf32> to vector<16x128xf32>
    %793 = arith.mulf %791, %792 : vector<16x128xf32>
    %794 = vector.broadcast %773 : vector<1x128xf32> to vector<16x128xf32>
    %795 = arith.addf %793, %794 : vector<16x128xf32>
    %c0_186 = arith.constant 0 : index
    %c0_187 = arith.constant 0 : index
    %796 = vector.load %arg55[%c0_186, %c0_187] : memref<128x128xbf16, #tpu.memory_space<vmem>>, vector<128x128xbf16>
    %797 = arith.truncf %795 : vector<16x128xf32> to vector<16x128xbf16>
    %cst_188 = arith.constant dense<0.000000e+00> : vector<16x128xf32>
    %798 = tpu.matmul %797, %796, %cst_188 {dimension_numbers = #tpu.dot_dimension_numbers<[1], [0], [0], [1], [0, 0, 1, 1], [], []>} : vector<16x128xbf16>, vector<128x128xbf16>, vector<16x128xf32> -> vector<16x128xf32>
    %c0_189 = arith.constant 0 : index
    %c0_190 = arith.constant 0 : index
    %799 = vector.load %arg56[%c0_189, %c0_190] : memref<1x128xf32, #tpu.memory_space<vmem>>, vector<1x128xf32>
    %800 = vector.broadcast %799 : vector<1x128xf32> to vector<16x128xf32>
    %801 = arith.addf %798, %800 : vector<16x128xf32>
    %cst_191 = arith.constant 0.000000e+00 : f32
    %802 = vector.broadcast %cst_191 : f32 to vector<16x128xf32>
    %803 = arith.maximumf %801, %802 : vector<16x128xf32>
    %c0_192 = arith.constant 0 : index
    %c0_193 = arith.constant 0 : index
    %804 = vector.load %arg57[%c0_192, %c0_193] : memref<128x128xbf16, #tpu.memory_space<vmem>>, vector<128x128xbf16>
    %805 = arith.truncf %803 : vector<16x128xf32> to vector<16x128xbf16>
    %cst_194 = arith.constant dense<0.000000e+00> : vector<16x128xf32>
    %806 = tpu.matmul %805, %804, %cst_194 {dimension_numbers = #tpu.dot_dimension_numbers<[1], [0], [0], [1], [0, 0, 1, 1], [], []>} : vector<16x128xbf16>, vector<128x128xbf16>, vector<16x128xf32> -> vector<16x128xf32>
    %c0_195 = arith.constant 0 : index
    %c0_196 = arith.constant 0 : index
    %807 = vector.load %arg58[%c0_195, %c0_196] : memref<1x128xf32, #tpu.memory_space<vmem>>, vector<1x128xf32>
    %808 = vector.broadcast %807 : vector<1x128xf32> to vector<16x128xf32>
    %809 = arith.addf %806, %808 : vector<16x128xf32>
    %810 = arith.addf %795, %809 : vector<16x128xf32>
    %c0_197 = arith.constant 0 : index
    %c0_198 = arith.constant 0 : index
    %811 = vector.load %arg59[%c0_197, %c0_198] : memref<1x128xf32, #tpu.memory_space<vmem>>, vector<1x128xf32>
    %c0_199 = arith.constant 0 : index
    %c0_200 = arith.constant 0 : index
    %812 = vector.load %arg60[%c0_199, %c0_200] : memref<1x128xf32, #tpu.memory_space<vmem>>, vector<1x128xf32>
    %cst_201 = arith.constant dense<0.000000e+00> : vector<16xf32>
    %813 = vector.multi_reduction <add>, %810, %cst_201 [1] : vector<16x128xf32> to vector<16xf32>
    %814 = vector.shape_cast %813 : vector<16xf32> to vector<16x1xf32>
    %cst_202 = arith.constant 0.0333333351 : f32
    %815 = vector.broadcast %cst_202 : f32 to vector<16x1xf32>
    %816 = arith.mulf %814, %815 : vector<16x1xf32>
    %817 = arith.mulf %810, %810 : vector<16x128xf32>
    %cst_203 = arith.constant dense<0.000000e+00> : vector<16xf32>
    %818 = vector.multi_reduction <add>, %817, %cst_203 [1] : vector<16x128xf32> to vector<16xf32>
    %819 = vector.shape_cast %818 : vector<16xf32> to vector<16x1xf32>
    %cst_204 = arith.constant 0.0333333351 : f32
    %820 = vector.broadcast %cst_204 : f32 to vector<16x1xf32>
    %821 = arith.mulf %819, %820 : vector<16x1xf32>
    %822 = arith.mulf %816, %816 : vector<16x1xf32>
    %823 = arith.subf %821, %822 : vector<16x1xf32>
    %824 = vector.broadcast %816 : vector<16x1xf32> to vector<16x128xf32>
    %825 = arith.subf %810, %824 : vector<16x128xf32>
    %cst_205 = arith.constant 9.99999974E-6 : f32
    %826 = vector.broadcast %cst_205 : f32 to vector<16x1xf32>
    %827 = arith.addf %823, %826 : vector<16x1xf32>
    %828 = math.rsqrt %827 : vector<16x1xf32>
    %829 = vector.broadcast %828 : vector<16x1xf32> to vector<16x128xf32>
    %830 = arith.mulf %825, %829 : vector<16x128xf32>
    %831 = vector.broadcast %811 : vector<1x128xf32> to vector<16x128xf32>
    %832 = arith.mulf %830, %831 : vector<16x128xf32>
    %833 = vector.broadcast %812 : vector<1x128xf32> to vector<16x128xf32>
    %834 = arith.addf %832, %833 : vector<16x128xf32>
    %c0_206 = arith.constant 0 : index
    %c0_207 = arith.constant 0 : index
    %835 = vector.load %arg61[%c0_206, %c0_207] : memref<128x128xbf16, #tpu.memory_space<vmem>>, vector<128x128xbf16>
    %836 = arith.truncf %834 : vector<16x128xf32> to vector<16x128xbf16>
    %cst_208 = arith.constant dense<0.000000e+00> : vector<16x128xf32>
    %837 = tpu.matmul %836, %835, %cst_208 {dimension_numbers = #tpu.dot_dimension_numbers<[1], [0], [0], [1], [0, 0, 1, 1], [], []>} : vector<16x128xbf16>, vector<128x128xbf16>, vector<16x128xf32> -> vector<16x128xf32>
    %c0_209 = arith.constant 0 : index
    %c0_210 = arith.constant 0 : index
    %838 = vector.load %arg62[%c0_209, %c0_210] : memref<1x128xf32, #tpu.memory_space<vmem>>, vector<1x128xf32>
    %839 = vector.broadcast %838 : vector<1x128xf32> to vector<16x128xf32>
    %840 = arith.addf %837, %839 : vector<16x128xf32>
    %c0_211 = arith.constant 0 : index
    %c0_212 = arith.constant 0 : index
    %841 = vector.load %arg63[%c0_211, %c0_212] : memref<16x128xf32, #tpu.memory_space<vmem>>, vector<16x128xf32>
    tpu.vector_store %arg63[%c0_211, %c0_212], %840 {strides = array<i32>} : memref<16x128xf32, #tpu.memory_space<vmem>>, vector<16x128xf32>,
    return
  }
}

</mosaic_0001>

<llo_original>
// kernel: attention_forward.1
$region0: #{attention_forward.1}
  #allocation0 [shape = 'u32[]', space=smem, size = 0x4, offset = 0x4, fixed_abs, tag = 'smem constant byte address 0x4 - core index']
  #allocation1 [shape = 'u32[72,128]{1,0:T(1,128)}', space=vmem, size = 0x9000, scoped, tag = 'internal scratch']
  %s0 = inlined_call_operand.smem [shape: u32[64], index: -1, kind: input, shape index: {}]
  %s1 = sld [smem:[%s0]]
  %s2 = scalar_lea.smem %s0, 1
  %s3 = sld [smem:[%s2]]
  %s4 = scalar_lea.smem %s0, 2
  %s5 = sld [smem:[%s4]]
  %s6 = scalar_lea.smem %s0, 3
  %s7 = sld [smem:[%s6]]
  %s8 = scalar_lea.smem %s0, 4
  %s9 = sld [smem:[%s8]]
  %s10 = scalar_lea.smem %s0, 5
  %s11 = sld [smem:[%s10]]
  %s12 = scalar_lea.smem %s0, 6
  %s13 = sld [smem:[%s12]]
  %s14 = scalar_lea.smem %s0, 7
  %s15 = sld [smem:[%s14]]
  %s16 = scalar_lea.smem %s0, 8
  %s17 = sld [smem:[%s16]]
  %s18 = scalar_lea.smem %s0, 9
  %s19 = sld [smem:[%s18]]
  %s20 = scalar_lea.smem %s0, 10
  %s21 = sld [smem:[%s20]]
  %s22 = scalar_lea.smem %s0, 11
  %s23 = sld [smem:[%s22]]
  %s24 = scalar_lea.smem %s0, 12
  %s25 = sld [smem:[%s24]]
  %s26 = scalar_lea.smem %s0, 13
  %s27 = sld [smem:[%s26]]
  %s28 = scalar_lea.smem %s0, 14
  %s29 = sld [smem:[%s28]]
  %s30 = scalar_lea.smem %s0, 15
  %s31 = sld [smem:[%s30]]
  %s32 = scalar_lea.smem %s0, 16
  %s33 = sld [smem:[%s32]]
  %s34 = scalar_lea.smem %s0, 17
  %s35 = sld [smem:[%s34]]
  %s36 = scalar_lea.smem %s0, 18
  %s37 = sld [smem:[%s36]]
  %s38 = scalar_lea.smem %s0, 19
  %s39 = sld [smem:[%s38]]
  %s40 = scalar_lea.smem %s0, 20
  %s41 = sld [smem:[%s40]]
  %s42 = scalar_lea.smem %s0, 21
  %s43 = sld [smem:[%s42]]
  %s44 = scalar_lea.smem %s0, 22
  %s45 = sld [smem:[%s44]]
  %s46 = scalar_lea.smem %s0, 23
  %s47 = sld [smem:[%s46]]
  %s48 = scalar_lea.smem %s0, 24
  %s49 = sld [smem:[%s48]]
  %s50 = scalar_lea.smem %s0, 25
  %s51 = sld [smem:[%s50]]
  %s52 = scalar_lea.smem %s0, 26
  %s53 = sld [smem:[%s52]]
  %s54 = scalar_lea.smem %s0, 27
  %s55 = sld [smem:[%s54]]
  %s56 = scalar_lea.smem %s0, 28
  %s57 = sld [smem:[%s56]]
  %s58 = scalar_lea.smem %s0, 29
  %s59 = sld [smem:[%s58]]
  %s60 = scalar_lea.smem %s0, 30
  %s61 = sld [smem:[%s60]]
  %s62 = scalar_lea.smem %s0, 31
  %s63 = sld [smem:[%s62]]
  %s64 = scalar_lea.smem %s0, 32
  %s65 = sld [smem:[%s64]]
  %s66 = scalar_lea.smem %s0, 33
  %s67 = sld [smem:[%s66]]
  %s68 = scalar_lea.smem %s0, 34
  %s69 = sld [smem:[%s68]]
  %s70 = scalar_lea.smem %s0, 35
  %s71 = sld [smem:[%s70]]
  %s72 = scalar_lea.smem %s0, 36
  %s73 = sld [smem:[%s72]]
  %s74 = scalar_lea.smem %s0, 37
  %s75 = sld [smem:[%s74]]
  %s76 = scalar_lea.smem %s0, 38
  %s77 = sld [smem:[%s76]]
  %s78 = scalar_lea.smem %s0, 39
  %s79 = sld [smem:[%s78]]
  %s80 = scalar_lea.smem %s0, 40
  %s81 = sld [smem:[%s80]]
  %s82 = scalar_lea.smem %s0, 41
  %s83 = sld [smem:[%s82]]
  %s84 = scalar_lea.smem %s0, 42
  %s85 = sld [smem:[%s84]]
  %s86 = scalar_lea.smem %s0, 43
  %s87 = sld [smem:[%s86]]
  %s88 = scalar_lea.smem %s0, 44
  %s89 = sld [smem:[%s88]]
  %s90 = scalar_lea.smem %s0, 45
  %s91 = sld [smem:[%s90]]
  %s92 = scalar_lea.smem %s0, 46
  %s93 = sld [smem:[%s92]]
  %s94 = scalar_lea.smem %s0, 47
  %s95 = sld [smem:[%s94]]
  %s96 = scalar_lea.smem %s0, 48
  %s97 = sld [smem:[%s96]]
  %s98 = scalar_lea.smem %s0, 49
  %s99 = sld [smem:[%s98]]
  %s100 = scalar_lea.smem %s0, 50
  %s101 = sld [smem:[%s100]]
  %s102 = scalar_lea.smem %s0, 51
  %s103 = sld [smem:[%s102]]
  %s104 = scalar_lea.smem %s0, 52
  %s105 = sld [smem:[%s104]]
  %s106 = scalar_lea.smem %s0, 53
  %s107 = sld [smem:[%s106]]
  %s108 = scalar_lea.smem %s0, 54
  %s109 = sld [smem:[%s108]]
  %s110 = scalar_lea.smem %s0, 55
  %s111 = sld [smem:[%s110]]
  %s112 = scalar_lea.smem %s0, 56
  %s113 = sld [smem:[%s112]]
  %s114 = scalar_lea.smem %s0, 57
  %s115 = sld [smem:[%s114]]
  %s116 = scalar_lea.smem %s0, 58
  %s117 = sld [smem:[%s116]]
  %s118 = scalar_lea.smem %s0, 59
  %s119 = sld [smem:[%s118]]
  %s120 = scalar_lea.smem %s0, 60
  %s121 = sld [smem:[%s120]]
  %s122 = scalar_lea.smem %s0, 61
  %s123 = sld [smem:[%s122]]
  %s124 = scalar_lea.smem %s0, 62
  %s125 = sld [smem:[%s124]]
  %s126 = scalar_lea.smem %s0, 63
  %s127 = sld [smem:[%s126]]
  %s128 = sld [smem:[#allocation0]]
  $region350: #{attention_forward.1} parent=0
    _
  %s130 = ssub.s32 1, %s128
  %s131 = scalar_select 0, %s130, %s128
  $region1: #{attention_forward.1} parent=0
    #allocation2 [shape = 'u8[512]{0}', space=vmem, size = 0x400, scoped, tag = 'input window, operand 25, single buffered']
    #allocation3 [shape = 's32[1]{0}', space=sflag, size = 0x4, scoped, tag = 'scoped memory for attention_forward.1']
    #allocation4 [shape = 'u8[512]{0}', space=vmem, size = 0x400, scoped, tag = 'input window, operand 26, single buffered']
    #allocation5 [shape = 's32[1]{0}', space=sflag, size = 0x4, scoped, tag = 'scoped memory for attention_forward.1']
    #allocation6 [shape = 'u8[512]{0}', space=vmem, size = 0x400, scoped, tag = 'input window, operand 28, single buffered']
    #allocation7 [shape = 'u8[512]{0}', space=vmem, size = 0x400, scoped, tag = 'input window, operand 32, single buffered']
    #allocation8 [shape = 's32[1]{0}', space=sflag, size = 0x4, scoped, tag = 'scoped memory for attention_forward.1']
    #allocation9 [shape = 'u8[512]{0}', space=vmem, size = 0x400, scoped, tag = 'input window, operand 33, single buffered']
    #allocation10 [shape = 'u8[512]{0}', space=vmem, size = 0x400, scoped, tag = 'input window, operand 34, single buffered']
    #allocation11 [shape = 's32[1]{0}', space=sflag, size = 0x4, scoped, tag = 'scoped memory for attention_forward.1']
    #allocation12 [shape = 'u8[512]{0}', space=vmem, size = 0x400, scoped, tag = 'input window, operand 36, single buffered']
    #allocation13 [shape = 'u8[512]{0}', space=vmem, size = 0x400, scoped, tag = 'input window, operand 38, single buffered']
    #allocation14 [shape = 's32[1]{0}', space=sflag, size = 0x4, scoped, tag = 'scoped memory for attention_forward.1']
    #allocation15 [shape = 'u8[512]{0}', space=vmem, size = 0x400, scoped, tag = 'input window, operand 39, single buffered']
    #allocation16 [shape = 'u8[512]{0}', space=vmem, size = 0x400, scoped, tag = 'input window, operand 40, single buffered']
    #allocation17 [shape = 's32[1]{0}', space=sflag, size = 0x4, scoped, tag = 'scoped memory for attention_forward.1']
    #allocation18 [shape = 'u8[512]{0}', space=vmem, size = 0x400, scoped, tag = 'input window, operand 44, single buffered']
    #allocation19 [shape = 'u8[512]{0}', space=vmem, size = 0x400, scoped, tag = 'input window, operand 45, single buffered']
    #allocation20 [shape = 's32[1]{0}', space=sflag, size = 0x4, scoped, tag = 'scoped memory for attention_forward.1']
    #allocation21 [shape = 'u8[512]{0}', space=vmem, size = 0x400, scoped, tag = 'input window, operand 46, single buffered']
    #allocation22 [shape = 'u8[512]{0}', space=vmem, size = 0x400, scoped, tag = 'input window, operand 48, single buffered']
    #allocation23 [shape = 's32[1]{0}', space=sflag, size = 0x4, scoped, tag = 'scoped memory for attention_forward.1']
    #allocation24 [shape = 'u8[512]{0}', space=vmem, size = 0x400, scoped, tag = 'input window, operand 52, single buffered']
    #allocation25 [shape = 'u8[512]{0}', space=vmem, size = 0x400, scoped, tag = 'input window, operand 53, single buffered']
    #allocation26 [shape = 's32[1]{0}', space=sflag, size = 0x4, scoped, tag = 'scoped memory for attention_forward.1']
    #allocation27 [shape = 'u8[512]{0}', space=vmem, size = 0x400, scoped, tag = 'input window, operand 54, single buffered']
    #allocation28 [shape = 'u8[512]{0}', space=vmem, size = 0x400, scoped, tag = 'input window, operand 56, single buffered']
    #allocation29 [shape = 's32[1]{0}', space=sflag, size = 0x4, scoped, tag = 'scoped memory for attention_forward.1']
    #allocation30 [shape = 'u8[512]{0}', space=vmem, size = 0x400, scoped, tag = 'input window, operand 58, single buffered']
    #allocation31 [shape = 'u8[512]{0}', space=vmem, size = 0x400, scoped, tag = 'input window, operand 59, single buffered']
    #allocation32 [shape = 's32[1]{0}', space=sflag, size = 0x4, scoped, tag = 'scoped memory for attention_forward.1']
    #allocation33 [shape = 'u8[512]{0}', space=vmem, size = 0x400, scoped, tag = 'input window, operand 60, single buffered']
    #allocation34 [shape = 'u8[512]{0}', space=vmem, size = 0x400, scoped, tag = 'input window, operand 62, single buffered']
    #allocation35 [shape = 's32[1]{0}', space=sflag, size = 0x4, scoped, tag = 'scoped memory for attention_forward.1']
    %132 = vsyncpa [#allocation3], 0
    %133 = vsyncpa [#allocation5], 0
    %134 = vsyncpa [#allocation8], 0
    %135 = vsyncpa [#allocation11], 0
    %136 = vsyncpa [#allocation14], 0
    %137 = vsyncpa [#allocation17], 0
    %138 = vsyncpa [#allocation20], 0
    %139 = vsyncpa [#allocation23], 0
    %140 = vsyncpa [#allocation26], 0
    %141 = vsyncpa [#allocation29], 0
    %142 = vsyncpa [#allocation32], 0
    %143 = vsyncpa [#allocation35], 0
    // Predicated region
    $region2: #{attention_forward.1} parent=1 // pred_check
      _
    $region3: #{attention_forward.1} parent=1 // pred_check_branch
      %145 = sbr.rel (0) target = $region5
    $region4: #{attention_forward.1} parent=1 // pred_region
      _
    $region5: #{attention_forward.1} parent=1 // pred_fallthru
      _
    // Predicated region
    $region6: #{attention_forward.1} parent=1 // pred_check
      _
    $region7: #{attention_forward.1} parent=1 // pred_check_branch
      %147 = sbr.rel (0) target = $region9
    $region8: #{attention_forward.1} parent=1 // pred_region
      _
    $region9: #{attention_forward.1} parent=1 // pred_fallthru
      _
    // Predicated region
    $region10: #{attention_forward.1} parent=1 // pred_check
      _
    $region11: #{attention_forward.1} parent=1 // pred_check_branch
      %149 = sbr.rel (0) target = $region13
    $region12: #{attention_forward.1} parent=1 // pred_region
      _
    $region13: #{attention_forward.1} parent=1 // pred_fallthru
      _
    // Predicated region
    $region14: #{attention_forward.1} parent=1 // pred_check
      _
    $region15: #{attention_forward.1} parent=1 // pred_check_branch
      %151 = sbr.rel (0) target = $region17
    $region16: #{attention_forward.1} parent=1 // pred_region
      _
    $region17: #{attention_forward.1} parent=1 // pred_fallthru
      _
    // Predicated region
    $region18: #{attention_forward.1} parent=1 // pred_check
      _
    $region19: #{attention_forward.1} parent=1 // pred_check_branch
      %153 = sbr.rel (0) target = $region21
    $region20: #{attention_forward.1} parent=1 // pred_region
      _
    $region21: #{attention_forward.1} parent=1 // pred_fallthru
      _
    // Predicated region
    $region22: #{attention_forward.1} parent=1 // pred_check
      _
    $region23: #{attention_forward.1} parent=1 // pred_check_branch
      %155 = sbr.rel (0) target = $region25
    $region24: #{attention_forward.1} parent=1 // pred_region
      _
    $region25: #{attention_forward.1} parent=1 // pred_fallthru
      _
    // Predicated region
    $region26: #{attention_forward.1} parent=1 // pred_check
      _
    $region27: #{attention_forward.1} parent=1 // pred_check_branch
      %157 = sbr.rel (0) target = $region29
    $region28: #{attention_forward.1} parent=1 // pred_region
      _
    $region29: #{attention_forward.1} parent=1 // pred_fallthru
      _
    // Predicated region
    $region30: #{attention_forward.1} parent=1 // pred_check
      _
    $region31: #{attention_forward.1} parent=1 // pred_check_branch
      %159 = sbr.rel (0) target = $region33
    $region32: #{attention_forward.1} parent=1 // pred_region
      _
    $region33: #{attention_forward.1} parent=1 // pred_fallthru
      _
    // Predicated region
    $region34: #{attention_forward.1} parent=1 // pred_check
      _
    $region35: #{attention_forward.1} parent=1 // pred_check_branch
      %161 = sbr.rel (0) target = $region37
    $region36: #{attention_forward.1} parent=1 // pred_region
      _
    $region37: #{attention_forward.1} parent=1 // pred_fallthru
      _
    // Predicated region
    $region38: #{attention_forward.1} parent=1 // pred_check
      _
    $region39: #{attention_forward.1} parent=1 // pred_check_branch
      %163 = sbr.rel (0) target = $region41
    $region40: #{attention_forward.1} parent=1 // pred_region
      _
    $region41: #{attention_forward.1} parent=1 // pred_fallthru
      _
    // Predicated region
    $region42: #{attention_forward.1} parent=1 // pred_check
      _
    $region43: #{attention_forward.1} parent=1 // pred_check_branch
      %165 = sbr.rel (0) target = $region45
    $region44: #{attention_forward.1} parent=1 // pred_region
      _
    $region45: #{attention_forward.1} parent=1 // pred_fallthru
      _
    // Predicated region
    $region46: #{attention_forward.1} parent=1 // pred_check
      _
    $region47: #{attention_forward.1} parent=1 // pred_check_branch
      %167 = sbr.rel (0) target = $region49
    $region48: #{attention_forward.1} parent=1 // pred_region
      _
    $region49: #{attention_forward.1} parent=1 // pred_fallthru
      _
    // Predicated region
    $region50: #{attention_forward.1} parent=1 // pred_check
      _
    $region51: #{attention_forward.1} parent=1 // pred_check_branch
      %169 = sbr.rel (0) target = $region53
    $region52: #{attention_forward.1} parent=1 // pred_region
      _
    $region53: #{attention_forward.1} parent=1 // pred_fallthru
      _
    // Predicated region
    $region54: #{attention_forward.1} parent=1 // pred_check
      _
    $region55: #{attention_forward.1} parent=1 // pred_check_branch
      %171 = sbr.rel (0) target = $region57
    $region56: #{attention_forward.1} parent=1 // pred_region
      _
    $region57: #{attention_forward.1} parent=1 // pred_fallthru
      _
    // Predicated region
    $region58: #{attention_forward.1} parent=1 // pred_check
      _
    $region59: #{attention_forward.1} parent=1 // pred_check_branch
      %173 = sbr.rel (0) target = $region61
    $region60: #{attention_forward.1} parent=1 // pred_region
      _
    $region61: #{attention_forward.1} parent=1 // pred_fallthru
      _
    // Predicated region
    $region62: #{attention_forward.1} parent=1 // pred_check
      _
    $region63: #{attention_forward.1} parent=1 // pred_check_branch
      %175 = sbr.rel (0) target = $region65
    $region64: #{attention_forward.1} parent=1 // pred_region
      _
    $region65: #{attention_forward.1} parent=1 // pred_fallthru
      _
    // Predicated region
    $region66: #{attention_forward.1} parent=1 // pred_check
      _
    $region67: #{attention_forward.1} parent=1 // pred_check_branch
      %177 = sbr.rel (0) target = $region69
    $region68: #{attention_forward.1} parent=1 // pred_region
      _
    $region69: #{attention_forward.1} parent=1 // pred_fallthru
      _
    // Predicated region
    $region70: #{attention_forward.1} parent=1 // pred_check
      _
    $region71: #{attention_forward.1} parent=1 // pred_check_branch
      %179 = sbr.rel (0) target = $region73
    $region72: #{attention_forward.1} parent=1 // pred_region
      _
    $region73: #{attention_forward.1} parent=1 // pred_fallthru
      _
    // Predicated region
    $region74: #{attention_forward.1} parent=1 // pred_check
      _
    $region75: #{attention_forward.1} parent=1 // pred_check_branch
      %181 = sbr.rel (0) target = $region77
    $region76: #{attention_forward.1} parent=1 // pred_region
      _
    $region77: #{attention_forward.1} parent=1 // pred_fallthru
      _
    // Predicated region
    $region78: #{attention_forward.1} parent=1 // pred_check
      _
    $region79: #{attention_forward.1} parent=1 // pred_check_branch
      %183 = sbr.rel (0) target = $region81
    $region80: #{attention_forward.1} parent=1 // pred_region
      _
    $region81: #{attention_forward.1} parent=1 // pred_fallthru
      _
    // Predicated region
    $region82: #{attention_forward.1} parent=1 // pred_check
      _
    $region83: #{attention_forward.1} parent=1 // pred_check_branch
      %185 = sbr.rel (0) target = $region85
    $region84: #{attention_forward.1} parent=1 // pred_region
      _
    $region85: #{attention_forward.1} parent=1 // pred_fallthru
      _
    // Predicated region
    $region86: #{attention_forward.1} parent=1 // pred_check
      _
    $region87: #{attention_forward.1} parent=1 // pred_check_branch
      %187 = sbr.rel (0) target = $region89
    $region88: #{attention_forward.1} parent=1 // pred_region
      _
    $region89: #{attention_forward.1} parent=1 // pred_fallthru
      _
    // Predicated region
    $region90: #{attention_forward.1} parent=1 // pred_check
      _
    $region91: #{attention_forward.1} parent=1 // pred_check_branch
      %189 = sbr.rel (0) target = $region93
    $region92: #{attention_forward.1} parent=1 // pred_region
      _
    $region93: #{attention_forward.1} parent=1 // pred_fallthru
      _
    // Predicated region
    $region94: #{attention_forward.1} parent=1 // pred_check
      _
    $region95: #{attention_forward.1} parent=1 // pred_check_branch
      %191 = sbr.rel (0) target = $region97
    $region96: #{attention_forward.1} parent=1 // pred_region
      _
    $region97: #{attention_forward.1} parent=1 // pred_fallthru
      _
    // Predicated region
    $region98: #{attention_forward.1} parent=1 // pred_check
      _
    $region99: #{attention_forward.1} parent=1 // pred_check_branch
      %193 = sbr.rel (0) target = $region101
    $region100: #{attention_forward.1} parent=1 // pred_region
      _
    $region101: #{attention_forward.1} parent=1 // pred_fallthru
      _
    // Predicated region
    $region102: #{attention_forward.1} parent=1 // pred_check
      _
    $region103: #{attention_forward.1} parent=1 // pred_check_branch
      %195 = sbr.rel (0) target = $region105
    $region104: #{attention_forward.1} parent=1 // pred_region
      %197 = vsyncadd [#allocation3], 0
      %s199 = sshll.u32 %s51, 4
      %s200 = int_to_ptr.hbm [resolvable:$true] %s199
      %s201 = sshll.u32 [#allocation2], 4
      %s202 = int_to_ptr.vmem [resolvable:$true] %s201
      %204 = dma.hbm_to_vmem [thread:$0]  %s200, 16, %s202, [#allocation3]
    $region105: #{attention_forward.1} parent=1 // pred_fallthru
      _
    // Predicated region
    $region106: #{attention_forward.1} parent=1 // pred_check
      _
    $region107: #{attention_forward.1} parent=1 // pred_check_branch
      %206 = sbr.rel (0) target = $region109
    $region108: #{attention_forward.1} parent=1 // pred_region
      %208 = vsyncadd [#allocation5], 0
      %s210 = sshll.u32 %s53, 4
      %s211 = int_to_ptr.hbm [resolvable:$true] %s210
      %s212 = sshll.u32 [#allocation4], 4
      %s213 = int_to_ptr.vmem [resolvable:$true] %s212
      %215 = dma.hbm_to_vmem [thread:$0]  %s211, 16, %s213, [#allocation5]
    $region109: #{attention_forward.1} parent=1 // pred_fallthru
      _
    // Predicated region
    $region110: #{attention_forward.1} parent=1 // pred_check
      _
    $region111: #{attention_forward.1} parent=1 // pred_check_branch
      %217 = sbr.rel (0) target = $region113
    $region112: #{attention_forward.1} parent=1 // pred_region
      _
    $region113: #{attention_forward.1} parent=1 // pred_fallthru
      _
    // Predicated region
    $region114: #{attention_forward.1} parent=1 // pred_check
      _
    $region115: #{attention_forward.1} parent=1 // pred_check_branch
      %219 = sbr.rel (0) target = $region117
    $region116: #{attention_forward.1} parent=1 // pred_region
      %221 = vsyncadd [#allocation5], 0
      %s223 = sshll.u32 %s57, 4
      %s224 = int_to_ptr.hbm [resolvable:$true] %s223
      %s225 = sshll.u32 [#allocation6], 4
      %s226 = int_to_ptr.vmem [resolvable:$true] %s225
      %228 = dma.hbm_to_vmem [thread:$0]  %s224, 16, %s226, [#allocation5]
    $region117: #{attention_forward.1} parent=1 // pred_fallthru
      _
    // Predicated region
    $region118: #{attention_forward.1} parent=1 // pred_check
      _
    $region119: #{attention_forward.1} parent=1 // pred_check_branch
      %230 = sbr.rel (0) target = $region121
    $region120: #{attention_forward.1} parent=1 // pred_region
      _
    $region121: #{attention_forward.1} parent=1 // pred_fallthru
      _
    // Predicated region
    $region122: #{attention_forward.1} parent=1 // pred_check
      _
    $region123: #{attention_forward.1} parent=1 // pred_check_branch
      %232 = sbr.rel (0) target = $region125
    $region124: #{attention_forward.1} parent=1 // pred_region
      _
    $region125: #{attention_forward.1} parent=1 // pred_fallthru
      _
    // Predicated region
    $region126: #{attention_forward.1} parent=1 // pred_check
      _
    $region127: #{attention_forward.1} parent=1 // pred_check_branch
      %234 = sbr.rel (0) target = $region129
    $region128: #{attention_forward.1} parent=1 // pred_region
      _
    $region129: #{attention_forward.1} parent=1 // pred_fallthru
      _
    // Predicated region
    $region130: #{attention_forward.1} parent=1 // pred_check
      _
    $region131: #{attention_forward.1} parent=1 // pred_check_branch
      %236 = sbr.rel (0) target = $region133
    $region132: #{attention_forward.1} parent=1 // pred_region
      %238 = vsyncadd [#allocation8], 0
      %s240 = sshll.u32 %s65, 4
      %s241 = int_to_ptr.hbm [resolvable:$true] %s240
      %s242 = sshll.u32 [#allocation7], 4
      %s243 = int_to_ptr.vmem [resolvable:$true] %s242
      %245 = dma.hbm_to_vmem [thread:$0]  %s241, 16, %s243, [#allocation8]
    $region133: #{attention_forward.1} parent=1 // pred_fallthru
      _
    // Predicated region
    $region134: #{attention_forward.1} parent=1 // pred_check
      _
    $region135: #{attention_forward.1} parent=1 // pred_check_branch
      %247 = sbr.rel (0) target = $region137
    $region136: #{attention_forward.1} parent=1 // pred_region
      %249 = vsyncadd [#allocation8], 0
      %s251 = sshll.u32 %s67, 4
      %s252 = int_to_ptr.hbm [resolvable:$true] %s251
      %s253 = sshll.u32 [#allocation9], 4
      %s254 = int_to_ptr.vmem [resolvable:$true] %s253
      %256 = dma.hbm_to_vmem [thread:$0]  %s252, 16, %s254, [#allocation8]
    $region137: #{attention_forward.1} parent=1 // pred_fallthru
      _
    // Predicated region
    $region138: #{attention_forward.1} parent=1 // pred_check
      _
    $region139: #{attention_forward.1} parent=1 // pred_check_branch
      %258 = sbr.rel (0) target = $region141
    $region140: #{attention_forward.1} parent=1 // pred_region
      %260 = vsyncadd [#allocation11], 0
      %s262 = sshll.u32 %s69, 4
      %s263 = int_to_ptr.hbm [resolvable:$true] %s262
      %s264 = sshll.u32 [#allocation10], 4
      %s265 = int_to_ptr.vmem [resolvable:$true] %s264
      %267 = dma.hbm_to_vmem [thread:$0]  %s263, 16, %s265, [#allocation11]
    $region141: #{attention_forward.1} parent=1 // pred_fallthru
      _
    // Predicated region
    $region142: #{attention_forward.1} parent=1 // pred_check
      _
    $region143: #{attention_forward.1} parent=1 // pred_check_branch
      %269 = sbr.rel (0) target = $region145
    $region144: #{attention_forward.1} parent=1 // pred_region
      _
    $region145: #{attention_forward.1} parent=1 // pred_fallthru
      _
    // Predicated region
    $region146: #{attention_forward.1} parent=1 // pred_check
      _
    $region147: #{attention_forward.1} parent=1 // pred_check_branch
      %271 = sbr.rel (0) target = $region149
    $region148: #{attention_forward.1} parent=1 // pred_region
      %273 = vsyncadd [#allocation11], 0
      %s275 = sshll.u32 %s73, 4
      %s276 = int_to_ptr.hbm [resolvable:$true] %s275
      %s277 = sshll.u32 [#allocation12], 4
      %s278 = int_to_ptr.vmem [resolvable:$true] %s277
      %280 = dma.hbm_to_vmem [thread:$0]  %s276, 16, %s278, [#allocation11]
    $region149: #{attention_forward.1} parent=1 // pred_fallthru
      _
    // Predicated region
    $region150: #{attention_forward.1} parent=1 // pred_check
      _
    $region151: #{attention_forward.1} parent=1 // pred_check_branch
      %282 = sbr.rel (0) target = $region153
    $region152: #{attention_forward.1} parent=1 // pred_region
      _
    $region153: #{attention_forward.1} parent=1 // pred_fallthru
      _
    // Predicated region
    $region154: #{attention_forward.1} parent=1 // pred_check
      _
    $region155: #{attention_forward.1} parent=1 // pred_check_branch
      %284 = sbr.rel (0) target = $region157
    $region156: #{attention_forward.1} parent=1 // pred_region
      %286 = vsyncadd [#allocation14], 0
      %s288 = sshll.u32 %s77, 4
      %s289 = int_to_ptr.hbm [resolvable:$true] %s288
      %s290 = sshll.u32 [#allocation13], 4
      %s291 = int_to_ptr.vmem [resolvable:$true] %s290
      %293 = dma.hbm_to_vmem [thread:$0]  %s289, 16, %s291, [#allocation14]
    $region157: #{attention_forward.1} parent=1 // pred_fallthru
      _
    // Predicated region
    $region158: #{attention_forward.1} parent=1 // pred_check
      _
    $region159: #{attention_forward.1} parent=1 // pred_check_branch
      %295 = sbr.rel (0) target = $region161
    $region160: #{attention_forward.1} parent=1 // pred_region
      %297 = vsyncadd [#allocation14], 0
      %s299 = sshll.u32 %s79, 4
      %s300 = int_to_ptr.hbm [resolvable:$true] %s299
      %s301 = sshll.u32 [#allocation15], 4
      %s302 = int_to_ptr.vmem [resolvable:$true] %s301
      %304 = dma.hbm_to_vmem [thread:$0]  %s300, 16, %s302, [#allocation14]
    $region161: #{attention_forward.1} parent=1 // pred_fallthru
      _
    // Predicated region
    $region162: #{attention_forward.1} parent=1 // pred_check
      _
    $region163: #{attention_forward.1} parent=1 // pred_check_branch
      %306 = sbr.rel (0) target = $region165
    $region164: #{attention_forward.1} parent=1 // pred_region
      %308 = vsyncadd [#allocation17], 0
      %s310 = sshll.u32 %s81, 4
      %s311 = int_to_ptr.hbm [resolvable:$true] %s310
      %s312 = sshll.u32 [#allocation16], 4
      %s313 = int_to_ptr.vmem [resolvable:$true] %s312
      %315 = dma.hbm_to_vmem [thread:$0]  %s311, 16, %s313, [#allocation17]
    $region165: #{attention_forward.1} parent=1 // pred_fallthru
      _
    // Predicated region
    $region166: #{attention_forward.1} parent=1 // pred_check
      _
    $region167: #{attention_forward.1} parent=1 // pred_check_branch
      %317 = sbr.rel (0) target = $region169
    $region168: #{attention_forward.1} parent=1 // pred_region
      _
    $region169: #{attention_forward.1} parent=1 // pred_fallthru
      _
    // Predicated region
    $region170: #{attention_forward.1} parent=1 // pred_check
      _
    $region171: #{attention_forward.1} parent=1 // pred_check_branch
      %319 = sbr.rel (0) target = $region173
    $region172: #{attention_forward.1} parent=1 // pred_region
      _
    $region173: #{attention_forward.1} parent=1 // pred_fallthru
      _
    // Predicated region
    $region174: #{attention_forward.1} parent=1 // pred_check
      _
    $region175: #{attention_forward.1} parent=1 // pred_check_branch
      %321 = sbr.rel (0) target = $region177
    $region176: #{attention_forward.1} parent=1 // pred_region
      _
    $region177: #{attention_forward.1} parent=1 // pred_fallthru
      _
    // Predicated region
    $region178: #{attention_forward.1} parent=1 // pred_check
      _
    $region179: #{attention_forward.1} parent=1 // pred_check_branch
      %323 = sbr.rel (0) target = $region181
    $region180: #{attention_forward.1} parent=1 // pred_region
      %325 = vsyncadd [#allocation17], 0
      %s327 = sshll.u32 %s89, 4
      %s328 = int_to_ptr.hbm [resolvable:$true] %s327
      %s329 = sshll.u32 [#allocation18], 4
      %s330 = int_to_ptr.vmem [resolvable:$true] %s329
      %332 = dma.hbm_to_vmem [thread:$0]  %s328, 16, %s330, [#allocation17]
    $region181: #{attention_forward.1} parent=1 // pred_fallthru
      _
    // Predicated region
    $region182: #{attention_forward.1} parent=1 // pred_check
      _
    $region183: #{attention_forward.1} parent=1 // pred_check_branch
      %334 = sbr.rel (0) target = $region185
    $region184: #{attention_forward.1} parent=1 // pred_region
      %336 = vsyncadd [#allocation20], 0
      %s338 = sshll.u32 %s91, 4
      %s339 = int_to_ptr.hbm [resolvable:$true] %s338
      %s340 = sshll.u32 [#allocation19], 4
      %s341 = int_to_ptr.vmem [resolvable:$true] %s340
      %343 = dma.hbm_to_vmem [thread:$0]  %s339, 16, %s341, [#allocation20]
    $region185: #{attention_forward.1} parent=1 // pred_fallthru
      _
    // Predicated region
    $region186: #{attention_forward.1} parent=1 // pred_check
      _
    $region187: #{attention_forward.1} parent=1 // pred_check_branch
      %345 = sbr.rel (0) target = $region189
    $region188: #{attention_forward.1} parent=1 // pred_region
      %347 = vsyncadd [#allocation20], 0
      %s349 = sshll.u32 %s93, 4
      %s350 = int_to_ptr.hbm [resolvable:$true] %s349
      %s351 = sshll.u32 [#allocation21], 4
      %s352 = int_to_ptr.vmem [resolvable:$true] %s351
      %354 = dma.hbm_to_vmem [thread:$0]  %s350, 16, %s352, [#allocation20]
    $region189: #{attention_forward.1} parent=1 // pred_fallthru
      _
    // Predicated region
    $region190: #{attention_forward.1} parent=1 // pred_check
      _
    $region191: #{attention_forward.1} parent=1 // pred_check_branch
      %356 = sbr.rel (0) target = $region193
    $region192: #{attention_forward.1} parent=1 // pred_region
      _
    $region193: #{attention_forward.1} parent=1 // pred_fallthru
      _
    // Predicated region
    $region194: #{attention_forward.1} parent=1 // pred_check
      _
    $region195: #{attention_forward.1} parent=1 // pred_check_branch
      %358 = sbr.rel (0) target = $region197
    $region196: #{attention_forward.1} parent=1 // pred_region
      %360 = vsyncadd [#allocation23], 0
      %s362 = sshll.u32 %s97, 4
      %s363 = int_to_ptr.hbm [resolvable:$true] %s362
      %s364 = sshll.u32 [#allocation22], 4
      %s365 = int_to_ptr.vmem [resolvable:$true] %s364
      %367 = dma.hbm_to_vmem [thread:$0]  %s363, 16, %s365, [#allocation23]
    $region197: #{attention_forward.1} parent=1 // pred_fallthru
      _
    // Predicated region
    $region198: #{attention_forward.1} parent=1 // pred_check
      _
    $region199: #{attention_forward.1} parent=1 // pred_check_branch
      %369 = sbr.rel (0) target = $region201
    $region200: #{attention_forward.1} parent=1 // pred_region
      _
    $region201: #{attention_forward.1} parent=1 // pred_fallthru
      _
    // Predicated region
    $region202: #{attention_forward.1} parent=1 // pred_check
      _
    $region203: #{attention_forward.1} parent=1 // pred_check_branch
      %371 = sbr.rel (0) target = $region205
    $region204: #{attention_forward.1} parent=1 // pred_region
      _
    $region205: #{attention_forward.1} parent=1 // pred_fallthru
      _
    // Predicated region
    $region206: #{attention_forward.1} parent=1 // pred_check
      _
    $region207: #{attention_forward.1} parent=1 // pred_check_branch
      %373 = sbr.rel (0) target = $region209
    $region208: #{attention_forward.1} parent=1 // pred_region
      _
    $region209: #{attention_forward.1} parent=1 // pred_fallthru
      _
    // Predicated region
    $region210: #{attention_forward.1} parent=1 // pred_check
      _
    $region211: #{attention_forward.1} parent=1 // pred_check_branch
      %375 = sbr.rel (0) target = $region213
    $region212: #{attention_forward.1} parent=1 // pred_region
      %377 = vsyncadd [#allocation23], 0
      %s379 = sshll.u32 %s105, 4
      %s380 = int_to_ptr.hbm [resolvable:$true] %s379
      %s381 = sshll.u32 [#allocation24], 4
      %s382 = int_to_ptr.vmem [resolvable:$true] %s381
      %384 = dma.hbm_to_vmem [thread:$0]  %s380, 16, %s382, [#allocation23]
    $region213: #{attention_forward.1} parent=1 // pred_fallthru
      _
    // Predicated region
    $region214: #{attention_forward.1} parent=1 // pred_check
      _
    $region215: #{attention_forward.1} parent=1 // pred_check_branch
      %386 = sbr.rel (0) target = $region217
    $region216: #{attention_forward.1} parent=1 // pred_region
      %388 = vsyncadd [#allocation26], 0
      %s390 = sshll.u32 %s107, 4
      %s391 = int_to_ptr.hbm [resolvable:$true] %s390
      %s392 = sshll.u32 [#allocation25], 4
      %s393 = int_to_ptr.vmem [resolvable:$true] %s392
      %395 = dma.hbm_to_vmem [thread:$0]  %s391, 16, %s393, [#allocation26]
    $region217: #{attention_forward.1} parent=1 // pred_fallthru
      _
    // Predicated region
    $region218: #{attention_forward.1} parent=1 // pred_check
      _
    $region219: #{attention_forward.1} parent=1 // pred_check_branch
      %397 = sbr.rel (0) target = $region221
    $region220: #{attention_forward.1} parent=1 // pred_region
      %399 = vsyncadd [#allocation26], 0
      %s401 = sshll.u32 %s109, 4
      %s402 = int_to_ptr.hbm [resolvable:$true] %s401
      %s403 = sshll.u32 [#allocation27], 4
      %s404 = int_to_ptr.vmem [resolvable:$true] %s403
      %406 = dma.hbm_to_vmem [thread:$0]  %s402, 16, %s404, [#allocation26]
    $region221: #{attention_forward.1} parent=1 // pred_fallthru
      _
    // Predicated region
    $region222: #{attention_forward.1} parent=1 // pred_check
      _
    $region223: #{attention_forward.1} parent=1 // pred_check_branch
      %408 = sbr.rel (0) target = $region225
    $region224: #{attention_forward.1} parent=1 // pred_region
      _
    $region225: #{attention_forward.1} parent=1 // pred_fallthru
      _
    // Predicated region
    $region226: #{attention_forward.1} parent=1 // pred_check
      _
    $region227: #{attention_forward.1} parent=1 // pred_check_branch
      %410 = sbr.rel (0) target = $region229
    $region228: #{attention_forward.1} parent=1 // pred_region
      %412 = vsyncadd [#allocation29], 0
      %s414 = sshll.u32 %s113, 4
      %s415 = int_to_ptr.hbm [resolvable:$true] %s414
      %s416 = sshll.u32 [#allocation28], 4
      %s417 = int_to_ptr.vmem [resolvable:$true] %s416
      %419 = dma.hbm_to_vmem [thread:$0]  %s415, 16, %s417, [#allocation29]
    $region229: #{attention_forward.1} parent=1 // pred_fallthru
      _
    // Predicated region
    $region230: #{attention_forward.1} parent=1 // pred_check
      _
    $region231: #{attention_forward.1} parent=1 // pred_check_branch
      %421 = sbr.rel (0) target = $region233
    $region232: #{attention_forward.1} parent=1 // pred_region
      _
    $region233: #{attention_forward.1} parent=1 // pred_fallthru
      _
    // Predicated region
    $region234: #{attention_forward.1} parent=1 // pred_check
      _
    $region235: #{attention_forward.1} parent=1 // pred_check_branch
      %423 = sbr.rel (0) target = $region237
    $region236: #{attention_forward.1} parent=1 // pred_region
      %425 = vsyncadd [#allocation29], 0
      %s427 = sshll.u32 %s117, 4
      %s428 = int_to_ptr.hbm [resolvable:$true] %s427
      %s429 = sshll.u32 [#allocation30], 4
      %s430 = int_to_ptr.vmem [resolvable:$true] %s429
      %432 = dma.hbm_to_vmem [thread:$0]  %s428, 16, %s430, [#allocation29]
    $region237: #{attention_forward.1} parent=1 // pred_fallthru
      _
    // Predicated region
    $region238: #{attention_forward.1} parent=1 // pred_check
      _
    $region239: #{attention_forward.1} parent=1 // pred_check_branch
      %434 = sbr.rel (0) target = $region241
    $region240: #{attention_forward.1} parent=1 // pred_region
      %436 = vsyncadd [#allocation32], 0
      %s438 = sshll.u32 %s119, 4
      %s439 = int_to_ptr.hbm [resolvable:$true] %s438
      %s440 = sshll.u32 [#allocation31], 4
      %s441 = int_to_ptr.vmem [resolvable:$true] %s440
      %443 = dma.hbm_to_vmem [thread:$0]  %s439, 16, %s441, [#allocation32]
    $region241: #{attention_forward.1} parent=1 // pred_fallthru
      _
    // Predicated region
    $region242: #{attention_forward.1} parent=1 // pred_check
      _
    $region243: #{attention_forward.1} parent=1 // pred_check_branch
      %445 = sbr.rel (0) target = $region245
    $region244: #{attention_forward.1} parent=1 // pred_region
      %447 = vsyncadd [#allocation32], 0
      %s449 = sshll.u32 %s121, 4
      %s450 = int_to_ptr.hbm [resolvable:$true] %s449
      %s451 = sshll.u32 [#allocation33], 4
      %s452 = int_to_ptr.vmem [resolvable:$true] %s451
      %454 = dma.hbm_to_vmem [thread:$0]  %s450, 16, %s452, [#allocation32]
    $region245: #{attention_forward.1} parent=1 // pred_fallthru
      _
    // Predicated region
    $region246: #{attention_forward.1} parent=1 // pred_check
      _
    $region247: #{attention_forward.1} parent=1 // pred_check_branch
      %456 = sbr.rel (0) target = $region249
    $region248: #{attention_forward.1} parent=1 // pred_region
      _
    $region249: #{attention_forward.1} parent=1 // pred_fallthru
      _
    // Predicated region
    $region250: #{attention_forward.1} parent=1 // pred_check
      _
    $region251: #{attention_forward.1} parent=1 // pred_check_branch
      %458 = sbr.rel (0) target = $region253
    $region252: #{attention_forward.1} parent=1 // pred_region
      %460 = vsyncadd [#allocation35], 0
      %s462 = sshll.u32 %s125, 4
      %s463 = int_to_ptr.hbm [resolvable:$true] %s462
      %s464 = sshll.u32 [#allocation34], 4
      %s465 = int_to_ptr.vmem [resolvable:$true] %s464
      %467 = dma.hbm_to_vmem [thread:$0]  %s463, 16, %s465, [#allocation35]
    $region253: #{attention_forward.1} parent=1 // pred_fallthru
      _
    // Predicated region
    $region254: #{attention_forward.1} parent=1 // pred_check
      _
    $region255: #{attention_forward.1} parent=1 // pred_check_branch
      %469 = sbr.rel (0) target = $region257
    $region256: #{attention_forward.1} parent=1 // pred_region
      %471 = dma.done [#allocation3], 16
    $region257: #{attention_forward.1} parent=1 // pred_fallthru
      _
    // Predicated region
    $region258: #{attention_forward.1} parent=1 // pred_check
      _
    $region259: #{attention_forward.1} parent=1 // pred_check_branch
      %473 = sbr.rel (0) target = $region261
    $region260: #{attention_forward.1} parent=1 // pred_region
      %475 = dma.done [#allocation5], 16
    $region261: #{attention_forward.1} parent=1 // pred_fallthru
      _
    // Predicated region
    $region262: #{attention_forward.1} parent=1 // pred_check
      _
    $region263: #{attention_forward.1} parent=1 // pred_check_branch
      %477 = sbr.rel (0) target = $region265
    $region264: #{attention_forward.1} parent=1 // pred_region
      %479 = dma.done [#allocation5], 16
    $region265: #{attention_forward.1} parent=1 // pred_fallthru
      _
    // Predicated region
    $region266: #{attention_forward.1} parent=1 // pred_check
      _
    $region267: #{attention_forward.1} parent=1 // pred_check_branch
      %481 = sbr.rel (0) target = $region269
    $region268: #{attention_forward.1} parent=1 // pred_region
      %483 = dma.done [#allocation8], 16
    $region269: #{attention_forward.1} parent=1 // pred_fallthru
      _
    // Predicated region
    $region270: #{attention_forward.1} parent=1 // pred_check
      _
    $region271: #{attention_forward.1} parent=1 // pred_check_branch
      %485 = sbr.rel (0) target = $region273
    $region272: #{attention_forward.1} parent=1 // pred_region
      %487 = dma.done [#allocation8], 16
    $region273: #{attention_forward.1} parent=1 // pred_fallthru
      _
    // Predicated region
    $region274: #{attention_forward.1} parent=1 // pred_check
      _
    $region275: #{attention_forward.1} parent=1 // pred_check_branch
      %489 = sbr.rel (0) target = $region277
    $region276: #{attention_forward.1} parent=1 // pred_region
      %491 = dma.done [#allocation11], 16
    $region277: #{attention_forward.1} parent=1 // pred_fallthru
      _
    // Predicated region
    $region278: #{attention_forward.1} parent=1 // pred_check
      _
    $region279: #{attention_forward.1} parent=1 // pred_check_branch
      %493 = sbr.rel (0) target = $region281
    $region280: #{attention_forward.1} parent=1 // pred_region
      %495 = dma.done [#allocation11], 16
    $region281: #{attention_forward.1} parent=1 // pred_fallthru
      _
    // Predicated region
    $region282: #{attention_forward.1} parent=1 // pred_check
      _
    $region283: #{attention_forward.1} parent=1 // pred_check_branch
      %497 = sbr.rel (0) target = $region285
    $region284: #{attention_forward.1} parent=1 // pred_region
      %499 = dma.done [#allocation14], 16
    $region285: #{attention_forward.1} parent=1 // pred_fallthru
      _
    // Predicated region
    $region286: #{attention_forward.1} parent=1 // pred_check
      _
    $region287: #{attention_forward.1} parent=1 // pred_check_branch
      %501 = sbr.rel (0) target = $region289
    $region288: #{attention_forward.1} parent=1 // pred_region
      %503 = dma.done [#allocation14], 16
    $region289: #{attention_forward.1} parent=1 // pred_fallthru
      _
    // Predicated region
    $region290: #{attention_forward.1} parent=1 // pred_check
      _
    $region291: #{attention_forward.1} parent=1 // pred_check_branch
      %505 = sbr.rel (0) target = $region293
    $region292: #{attention_forward.1} parent=1 // pred_region
      %507 = dma.done [#allocation17], 16
    $region293: #{attention_forward.1} parent=1 // pred_fallthru
      _
    // Predicated region
    $region294: #{attention_forward.1} parent=1 // pred_check
      _
    $region295: #{attention_forward.1} parent=1 // pred_check_branch
      %509 = sbr.rel (0) target = $region297
    $region296: #{attention_forward.1} parent=1 // pred_region
      %511 = dma.done [#allocation17], 16
    $region297: #{attention_forward.1} parent=1 // pred_fallthru
      _
    // Predicated region
    $region298: #{attention_forward.1} parent=1 // pred_check
      _
    $region299: #{attention_forward.1} parent=1 // pred_check_branch
      %513 = sbr.rel (0) target = $region301
    $region300: #{attention_forward.1} parent=1 // pred_region
      %515 = dma.done [#allocation20], 16
    $region301: #{attention_forward.1} parent=1 // pred_fallthru
      _
    // Predicated region
    $region302: #{attention_forward.1} parent=1 // pred_check
      _
    $region303: #{attention_forward.1} parent=1 // pred_check_branch
      %517 = sbr.rel (0) target = $region305
    $region304: #{attention_forward.1} parent=1 // pred_region
      %519 = dma.done [#allocation20], 16
    $region305: #{attention_forward.1} parent=1 // pred_fallthru
      _
    // Predicated region
    $region306: #{attention_forward.1} parent=1 // pred_check
      _
    $region307: #{attention_forward.1} parent=1 // pred_check_branch
      %521 = sbr.rel (0) target = $region309
    $region308: #{attention_forward.1} parent=1 // pred_region
      %523 = dma.done [#allocation23], 16
    $region309: #{attention_forward.1} parent=1 // pred_fallthru
      _
    // Predicated region
    $region310: #{attention_forward.1} parent=1 // pred_check
      _
    $region311: #{attention_forward.1} parent=1 // pred_check_branch
      %525 = sbr.rel (0) target = $region313
    $region312: #{attention_forward.1} parent=1 // pred_region
      %527 = dma.done [#allocation23], 16
    $region313: #{attention_forward.1} parent=1 // pred_fallthru
      _
    // Predicated region
    $region314: #{attention_forward.1} parent=1 // pred_check
      _
    $region315: #{attention_forward.1} parent=1 // pred_check_branch
      %529 = sbr.rel (0) target = $region317
    $region316: #{attention_forward.1} parent=1 // pred_region
      %531 = dma.done [#allocation26], 16
    $region317: #{attention_forward.1} parent=1 // pred_fallthru
      _
    // Predicated region
    $region318: #{attention_forward.1} parent=1 // pred_check
      _
    $region319: #{attention_forward.1} parent=1 // pred_check_branch
      %533 = sbr.rel (0) target = $region321
    $region320: #{attention_forward.1} parent=1 // pred_region
      %535 = dma.done [#allocation26], 16
    $region321: #{attention_forward.1} parent=1 // pred_fallthru
      _
    // Predicated region
    $region322: #{attention_forward.1} parent=1 // pred_check
      _
    $region323: #{attention_forward.1} parent=1 // pred_check_branch
      %537 = sbr.rel (0) target = $region325
    $region324: #{attention_forward.1} parent=1 // pred_region
      %539 = dma.done [#allocation29], 16
    $region325: #{attention_forward.1} parent=1 // pred_fallthru
      _
    // Predicated region
    $region326: #{attention_forward.1} parent=1 // pred_check
      _
    $region327: #{attention_forward.1} parent=1 // pred_check_branch
      %541 = sbr.rel (0) target = $region329
    $region328: #{attention_forward.1} parent=1 // pred_region
      %543 = dma.done [#allocation29], 16
    $region329: #{attention_forward.1} parent=1 // pred_fallthru
      _
    // Predicated region
    $region330: #{attention_forward.1} parent=1 // pred_check
      _
    $region331: #{attention_forward.1} parent=1 // pred_check_branch
      %545 = sbr.rel (0) target = $region333
    $region332: #{attention_forward.1} parent=1 // pred_region
      %547 = dma.done [#allocation32], 16
    $region333: #{attention_forward.1} parent=1 // pred_fallthru
      _
    // Predicated region
    $region334: #{attention_forward.1} parent=1 // pred_check
      _
    $region335: #{attention_forward.1} parent=1 // pred_check_branch
      %549 = sbr.rel (0) target = $region337
    $region336: #{attention_forward.1} parent=1 // pred_region
      %551 = dma.done [#allocation32], 16
    $region337: #{attention_forward.1} parent=1 // pred_fallthru
      _
    // Predicated region
    $region338: #{attention_forward.1} parent=1 // pred_check
      _
    $region339: #{attention_forward.1} parent=1 // pred_check_branch
      %553 = sbr.rel (0) target = $region341
    $region340: #{attention_forward.1} parent=1 // pred_region
      %555 = dma.done [#allocation35], 16
    $region341: #{attention_forward.1} parent=1 // pred_fallthru
      _
    %v557 = vld [vmem:[%s19] sm:$0xff]
    %v558 = vld [vmem:[%s21] sm:$0xff]
    %v559 = vld [vmem:[%s23] sm:$0xf]
    %v560 = vld [vmem:[%s23 + $0x4] sm:$0xf]
    %v561 = vld [vmem:[%s23 + $0x8] sm:$0xf]
    %v562 = vld [vmem:[%s23 + $0xc] sm:$0xf]
    %v563 = vld [vmem:[%s23 + $0x10] sm:$0xf]
    %v564 = vld [vmem:[%s23 + $0x14] sm:$0xf]
    %v565 = vld [vmem:[%s23 + $0x18] sm:$0xf]
    %v566 = vld [vmem:[%s23 + $0x1c] sm:$0xf]
    %v567 = vld [vmem:[%s23 + $0x20] sm:$0xf]
    %v568 = vld [vmem:[%s23 + $0x24] sm:$0xf]
    %v569 = vld [vmem:[%s23 + $0x28] sm:$0xf]
    %v570 = vld [vmem:[%s23 + $0x2c] sm:$0xf]
    %v571 = vld [vmem:[%s23 + $0x30] sm:$0xf]
    %v572 = vld [vmem:[%s23 + $0x34] sm:$0xf]
    %v573 = vld [vmem:[%s23 + $0x38] sm:$0xf]
    %v574 = vld [vmem:[%s23 + $0x3c] sm:$0xf]
    %v575 = vld [vmem:[%s25] sm:$0x1]
    %v576 = vld [vmem:[%s1] sm:$0xf]
    %v577 = vld [vmem:[%s1 + $0x4] sm:$0xf]
    %v578 = vld [vmem:[%s1 + $0x8] sm:$0xf]
    %v579 = vld [vmem:[%s1 + $0xc] sm:$0xf]
    %v580 = vld [vmem:[%s1 + $0x10] sm:$0xf]
    %v581 = vld [vmem:[%s1 + $0x14] sm:$0xf]
    %v582 = vld [vmem:[%s1 + $0x18] sm:$0xf]
    %v583 = vld [vmem:[%s1 + $0x1c] sm:$0xf]
    %v584 = vld [vmem:[%s1 + $0x20] sm:$0xf]
    %v585 = vld [vmem:[%s1 + $0x24] sm:$0xf]
    %v586 = vld [vmem:[%s1 + $0x28] sm:$0xf]
    %v587 = vld [vmem:[%s1 + $0x2c] sm:$0xf]
    %v588 = vld [vmem:[%s1 + $0x30] sm:$0xf]
    %v589 = vld [vmem:[%s1 + $0x34] sm:$0xf]
    %v590 = vld [vmem:[%s1 + $0x38] sm:$0xf]
    %v591 = vld [vmem:[%s1 + $0x3c] sm:$0xf]
    %v592 = vld [vmem:[%s1 + $0x40] sm:$0xf]
    %v593 = vld [vmem:[%s1 + $0x44] sm:$0xf]
    %v594 = vld [vmem:[%s1 + $0x48] sm:$0xf]
    %v595 = vld [vmem:[%s1 + $0x4c] sm:$0xf]
    %v596 = vld [vmem:[%s1 + $0x50] sm:$0xf]
    %v597 = vld [vmem:[%s1 + $0x54] sm:$0xf]
    %v598 = vld [vmem:[%s1 + $0x58] sm:$0xf]
    %v599 = vld [vmem:[%s1 + $0x5c] sm:$0xf]
    %v601 = vunpack.c.l.b16 %v557
    %v602 = vunpack.c.h.b16 %v557
    %v603 = vpack.c.b16 %v601, %v601
    %v604 = vpack.c.b16 %v602, %v602
    %v630 = vunpack.c.l.b16 %v576
    %v631 = vunpack.c.l.b16 %v577
    %v632 = vunpack.c.l.b16 %v578
    %v633 = vunpack.c.l.b16 %v579
    %v634 = vunpack.c.l.b16 %v580
    %v635 = vunpack.c.l.b16 %v581
    %v636 = vunpack.c.l.b16 %v582
    %v637 = vunpack.c.l.b16 %v583
    %v638 = vunpack.c.l.b16 %v584
    %v639 = vunpack.c.l.b16 %v585
    %v640 = vunpack.c.l.b16 %v586
    %v641 = vunpack.c.l.b16 %v587
    %v642 = vunpack.c.l.b16 %v588
    %v643 = vunpack.c.l.b16 %v589
    %v644 = vunpack.c.l.b16 %v590
    %v645 = vunpack.c.l.b16 %v591
    %v646 = vunpack.c.l.b16 %v592
    %v647 = vunpack.c.l.b16 %v593
    %v648 = vunpack.c.l.b16 %v594
    %v649 = vunpack.c.l.b16 %v595
    %v650 = vunpack.c.l.b16 %v596
    %v651 = vunpack.c.l.b16 %v597
    %v652 = vunpack.c.l.b16 %v598
    %v653 = vunpack.c.l.b16 %v599
    %v654 = vpack.c.b16 %v631, %v630
    %v655 = vpack.c.b16 %v633, %v632
    %v656 = vpack.c.b16 %v635, %v634
    %v657 = vpack.c.b16 %v637, %v636
    %v658 = vpack.c.b16 %v639, %v638
    %v659 = vpack.c.b16 %v641, %v640
    %v660 = vpack.c.b16 %v643, %v642
    %v661 = vpack.c.b16 %v645, %v644
    %v662 = vpack.c.b16 %v647, %v646
    %v663 = vpack.c.b16 %v649, %v648
    %v664 = vpack.c.b16 %v651, %v650
    %v665 = vpack.c.b16 %v653, %v652
    %vm678 = vcmask 523264
    %v680 = vsel %vm678, %v604, 0
    %682 = vmatpush.bf16.msra.mxu0 %v661
    %683 = vmatpush.bf16.msra.mxu0 %v660
    %684 = vmatpush.bf16.msra.mxu0 %v659
    %685 = vmatpush.bf16.msra.mxu0 %v658
    %686 = vmatpush.bf16.msra.mxu0 %v657
    %687 = vmatpush.bf16.msra.mxu0 %v656
    %688 = vmatpush.bf16.msra.mxu0 %v655
    %689 = vmatpush.bf16.msra.mxu0 %v654
    %690 = vmatmul.bf16.gmra.mxu0 %v603
    %v691 = vpop.f32.mrf.mxu0
    %v692 = vadd.f32 %v558, %v691
    %v693 = vpop.f32.mrf.mxu0
    %694 = vdwg.mxu0
    %695 = vmatpush.bf16.msra.mxu0 0
    %696 = vmatpush.bf16.msra.mxu0 0
    %697 = vmatpush.bf16.msra.mxu0 0
    %698 = vmatpush.bf16.msra.mxu0 0
    %699 = vmatpush.bf16.msra.mxu0 %v665
    %700 = vmatpush.bf16.msra.mxu0 %v664
    %701 = vmatpush.bf16.msra.mxu0 %v663
    %702 = vmatpush.bf16.msra.mxu0 %v662
    %703 = vmatmul.bf16.gmra.mxu0 %v680
    %v704 = vpop.f32.mrf.mxu0
    %v705 = vadd.f32 %v692, %v704
    %v706 = vpop.f32.mrf.mxu0
    %707 = vdwg.mxu0
    %v708 = vmax.f32 %v705, 0.0
    %v709 = vld [vmem:[%s3] sm:$0xf]
    %v710 = vld [vmem:[%s3 + $0x4] sm:$0xf]
    %v711 = vld [vmem:[%s3 + $0x8] sm:$0xf]
    %v712 = vld [vmem:[%s3 + $0xc] sm:$0xf]
    %v713 = vld [vmem:[%s3 + $0x10] sm:$0x3]
    %v715 = vperm.slane %v575, 0
    %v722 = vunpack.c.l.b16 %v709
    %v723 = vunpack.c.l.b16 %v710
    %v724 = vunpack.c.l.b16 %v711
    %v725 = vunpack.c.l.b16 %v712
    %v726 = vunpack.c.l.b16 %v713
    %v727 = vpack.c.b16 %v723, %v722
    %v728 = vpack.c.b16 %v725, %v724
    %v729 = vpack.c.b16 %v726, %v726
    %v749 = vunpack.c.l.b16 %v559
    %v750 = vunpack.c.l.b16 %v560
    %v751 = vunpack.c.l.b16 %v561
    %v752 = vunpack.c.l.b16 %v562
    %v753 = vunpack.c.l.b16 %v563
    %v754 = vunpack.c.l.b16 %v564
    %v755 = vunpack.c.l.b16 %v565
    %v756 = vunpack.c.l.b16 %v566
    %v757 = vunpack.c.l.b16 %v567
    %v758 = vunpack.c.l.b16 %v568
    %v759 = vunpack.c.l.b16 %v569
    %v760 = vunpack.c.l.b16 %v570
    %v761 = vunpack.c.l.b16 %v571
    %v762 = vunpack.c.l.b16 %v572
    %v763 = vunpack.c.l.b16 %v573
    %v764 = vunpack.c.l.b16 %v574
    %v765 = vpack.c.b16 %v750, %v749
    %v766 = vpack.c.b16 %v752, %v751
    %v767 = vpack.c.b16 %v754, %v753
    %v768 = vpack.c.b16 %v756, %v755
    %v769 = vpack.c.b16 %v758, %v757
    %v770 = vpack.c.b16 %v760, %v759
    %v771 = vpack.c.b16 %v762, %v761
    %v772 = vpack.c.b16 %v764, %v763
    %781 = vmatpush.bf16.msra.mxu0 %v772
    %782 = vmatpush.bf16.msra.mxu0 %v771
    %783 = vmatpush.bf16.msra.mxu0 %v770
    %784 = vmatpush.bf16.msra.mxu0 %v769
    %785 = vmatpush.bf16.msra.mxu0 %v768
    %786 = vmatpush.bf16.msra.mxu0 %v767
    %787 = vmatpush.bf16.msra.mxu0 %v766
    %788 = vmatpush.bf16.msra.mxu0 %v765
    %789 = vmatmul.bf16.gmra.mxu0 %v727
    %v790 = vpop.f32.mrf.mxu0
    %v791 = vadd.f32 %v715, %v790
    %v792 = vpop.f32.mrf.mxu0
    %v793 = vadd.f32 %v715, %v792
    %794 = vmatmul.bf16.gmra.mxu0 %v728
    %v795 = vpop.f32.mrf.mxu0
    %v796 = vadd.f32 %v715, %v795
    %v797 = vpop.f32.mrf.mxu0
    %v798 = vadd.f32 %v715, %v797
    %799 = vmatmul.bf16.gmra.mxu0 %v729
    %v800 = vpop.f32.mrf.mxu0
    %v801 = vadd.f32 %v715, %v800
    %v802 = vpop.f32.mrf.mxu0
    %803 = vdwg.mxu0
    %v804 = vtanh.pop %v791
    %v805 = vtanh.pop %v793
    %v806 = vtanh.pop %v796
    %v807 = vtanh.pop %v798
    %v808 = vtanh.pop %v801
    %s809 = scalar_lea.vmem %s1, 96
    %v810 = vld [vmem:[%s809] sm:$0xf]
    %v811 = vld [vmem:[%s809 + $0x4] sm:$0xf]
    %v812 = vld [vmem:[%s809 + $0x8] sm:$0xf]
    %v813 = vld [vmem:[%s809 + $0xc] sm:$0xf]
    %v814 = vld [vmem:[%s809 + $0x10] sm:$0xf]
    %v815 = vld [vmem:[%s809 + $0x14] sm:$0xf]
    %v816 = vld [vmem:[%s809 + $0x18] sm:$0xf]
    %v817 = vld [vmem:[%s809 + $0x1c] sm:$0xf]
    %v818 = vld [vmem:[%s809 + $0x20] sm:$0xf]
    %v819 = vld [vmem:[%s809 + $0x24] sm:$0xf]
    %v820 = vld [vmem:[%s809 + $0x28] sm:$0xf]
    %v821 = vld [vmem:[%s809 + $0x2c] sm:$0xf]
    %v822 = vld [vmem:[%s809 + $0x30] sm:$0xf]
    %v823 = vld [vmem:[%s809 + $0x34] sm:$0xf]
    %v824 = vld [vmem:[%s809 + $0x38] sm:$0xf]
    %v825 = vld [vmem:[%s809 + $0x3c] sm:$0xf]
    %v826 = vld [vmem:[%s809 + $0x40] sm:$0xf]
    %v827 = vld [vmem:[%s809 + $0x44] sm:$0xf]
    %v828 = vld [vmem:[%s809 + $0x48] sm:$0xf]
    %v829 = vld [vmem:[%s809 + $0x4c] sm:$0xf]
    %v830 = vld [vmem:[%s809 + $0x50] sm:$0xf]
    %v831 = vld [vmem:[%s809 + $0x54] sm:$0xf]
    %v832 = vld [vmem:[%s809 + $0x58] sm:$0xf]
    %v833 = vld [vmem:[%s809 + $0x5c] sm:$0xf]
    %v858 = vunpack.c.l.b16 %v810
    %v859 = vunpack.c.l.b16 %v811
    %v860 = vunpack.c.l.b16 %v812
    %v861 = vunpack.c.l.b16 %v813
    %v862 = vunpack.c.l.b16 %v814
    %v863 = vunpack.c.l.b16 %v815
    %v864 = vunpack.c.l.b16 %v816
    %v865 = vunpack.c.l.b16 %v817
    %v866 = vunpack.c.l.b16 %v818
    %v867 = vunpack.c.l.b16 %v819
    %v868 = vunpack.c.l.b16 %v820
    %v869 = vunpack.c.l.b16 %v821
    %v870 = vunpack.c.l.b16 %v822
    %v871 = vunpack.c.l.b16 %v823
    %v872 = vunpack.c.l.b16 %v824
    %v873 = vunpack.c.l.b16 %v825
    %v874 = vunpack.c.l.b16 %v826
    %v875 = vunpack.c.l.b16 %v827
    %v876 = vunpack.c.l.b16 %v828
    %v877 = vunpack.c.l.b16 %v829
    %v878 = vunpack.c.l.b16 %v830
    %v879 = vunpack.c.l.b16 %v831
    %v880 = vunpack.c.l.b16 %v832
    %v881 = vunpack.c.l.b16 %v833
    %v882 = vpack.c.b16 %v859, %v858
    %v883 = vpack.c.b16 %v861, %v860
    %v884 = vpack.c.b16 %v863, %v862
    %v885 = vpack.c.b16 %v865, %v864
    %v886 = vpack.c.b16 %v867, %v866
    %v887 = vpack.c.b16 %v869, %v868
    %v888 = vpack.c.b16 %v871, %v870
    %v889 = vpack.c.b16 %v873, %v872
    %v890 = vpack.c.b16 %v875, %v874
    %v891 = vpack.c.b16 %v877, %v876
    %v892 = vpack.c.b16 %v879, %v878
    %v893 = vpack.c.b16 %v881, %v880
    %906 = vmatpush.bf16.msra.mxu0 %v889
    %907 = vmatpush.bf16.msra.mxu0 %v888
    %908 = vmatpush.bf16.msra.mxu0 %v887
    %909 = vmatpush.bf16.msra.mxu0 %v886
    %910 = vmatpush.bf16.msra.mxu0 %v885
    %911 = vmatpush.bf16.msra.mxu0 %v884
    %912 = vmatpush.bf16.msra.mxu0 %v883
    %913 = vmatpush.bf16.msra.mxu0 %v882
    %914 = vmatmul.bf16.gmra.mxu0 %v603
    %v915 = vpop.f32.mrf.mxu0
    %v916 = vadd.f32 %v558, %v915
    %v917 = vpop.f32.mrf.mxu0
    %918 = vdwg.mxu0
    %919 = vmatpush.bf16.msra.mxu0 0
    %920 = vmatpush.bf16.msra.mxu0 0
    %921 = vmatpush.bf16.msra.mxu0 0
    %922 = vmatpush.bf16.msra.mxu0 0
    %923 = vmatpush.bf16.msra.mxu0 %v893
    %924 = vmatpush.bf16.msra.mxu0 %v892
    %925 = vmatpush.bf16.msra.mxu0 %v891
    %926 = vmatpush.bf16.msra.mxu0 %v890
    %927 = vmatmul.bf16.gmra.mxu0 %v680
    %v928 = vpop.f32.mrf.mxu0
    %v929 = vadd.f32 %v916, %v928
    %v930 = vpop.f32.mrf.mxu0
    %931 = vdwg.mxu0
    %v932 = vmax.f32 %v929, 0.0
    %s933 = scalar_lea.vmem %s3, 20
    %v934 = vld [vmem:[%s933] sm:$0xf]
    %v935 = vld [vmem:[%s933 + $0x4] sm:$0xf]
    %v936 = vld [vmem:[%s933 + $0x8] sm:$0xf]
    %v937 = vld [vmem:[%s933 + $0xc] sm:$0xf]
    %v938 = vld [vmem:[%s933 + $0x10] sm:$0x3]
    %v944 = vunpack.c.l.b16 %v934
    %v945 = vunpack.c.l.b16 %v935
    %v946 = vunpack.c.l.b16 %v936
    %v947 = vunpack.c.l.b16 %v937
    %v948 = vunpack.c.l.b16 %v938
    %v949 = vpack.c.b16 %v945, %v944
    %v950 = vpack.c.b16 %v947, %v946
    %v951 = vpack.c.b16 %v948, %v948
    %955 = vmatpush.bf16.msra.mxu0 %v772
    %956 = vmatpush.bf16.msra.mxu0 %v771
    %957 = vmatpush.bf16.msra.mxu0 %v770
    %958 = vmatpush.bf16.msra.mxu0 %v769
    %959 = vmatpush.bf16.msra.mxu0 %v768
    %960 = vmatpush.bf16.msra.mxu0 %v767
    %961 = vmatpush.bf16.msra.mxu0 %v766
    %962 = vmatpush.bf16.msra.mxu0 %v765
    %963 = vmatmul.bf16.gmra.mxu0 %v949
    %v964 = vpop.f32.mrf.mxu0
    %v965 = vadd.f32 %v715, %v964
    %v966 = vpop.f32.mrf.mxu0
    %v967 = vadd.f32 %v715, %v966
    %968 = vmatmul.bf16.gmra.mxu0 %v950
    %v969 = vpop.f32.mrf.mxu0
    %v970 = vadd.f32 %v715, %v969
    %v971 = vpop.f32.mrf.mxu0
    %v972 = vadd.f32 %v715, %v971
    %973 = vmatmul.bf16.gmra.mxu0 %v951
    %v974 = vpop.f32.mrf.mxu0
    %v975 = vadd.f32 %v715, %v974
    %v976 = vpop.f32.mrf.mxu0
    %977 = vdwg.mxu0
    %v978 = vtanh.pop %v965
    %v979 = vtanh.pop %v967
    %v980 = vtanh.pop %v970
    %v981 = vtanh.pop %v972
    %v982 = vtanh.pop %v975
    %vm983 = vcmask 1043456
    %v984 = vsel %vm983, %v808, 0.0
    %v985 = vsel %vm983, %v982, 0.0
    %v986 = vld [vmem:[%s27] sm:$0xf]
    %v987 = vld [vmem:[%s27 + $0x4] sm:$0xf]
    %v988 = vld [vmem:[%s27 + $0x8] sm:$0xf]
    %v989 = vld [vmem:[%s27 + $0xc] sm:$0xf]
    %v990 = vld [vmem:[%s27 + $0x10] sm:$0xf]
    %v991 = vld [vmem:[%s27 + $0x14] sm:$0xf]
    %v992 = vld [vmem:[%s27 + $0x18] sm:$0xf]
    %v993 = vld [vmem:[%s27 + $0x1c] sm:$0xf]
    %v994 = vld [vmem:[%s27 + $0x20] sm:$0xf]
    %v995 = vld [vmem:[%s27 + $0x24] sm:$0xf]
    %v996 = vld [vmem:[%s27 + $0x28] sm:$0xf]
    %v997 = vld [vmem:[%s27 + $0x2c] sm:$0xf]
    %v998 = vld [vmem:[%s27 + $0x30] sm:$0xf]
    %v999 = vld [vmem:[%s27 + $0x34] sm:$0xf]
    %v1000 = vld [vmem:[%s27 + $0x38] sm:$0xf]
    %v1001 = vld [vmem:[%s27 + $0x3c] sm:$0xf]
    %v1002 = vpack.c.bf16 %v804, %v708
    %v1003 = vpack.c.bf16 %v806, %v805
    %v1004 = vpack.c.bf16 %v984, %v807
    %v1005 = vpack.c.bf16 %v978, %v932
    %v1006 = vpack.c.bf16 %v980, %v979
    %v1007 = vpack.c.bf16 %v985, %v981
    %v1008 = vld [vmem:[%s29] sm:$0x1]
    %v1010 = vperm.slane %v1008, 0
    %v1028 = vunpack.c.l.b16 %v986
    %v1029 = vunpack.c.l.b16 %v987
    %v1030 = vunpack.c.l.b16 %v988
    %v1031 = vunpack.c.l.b16 %v989
    %v1032 = vunpack.c.l.b16 %v990
    %v1033 = vunpack.c.l.b16 %v991
    %v1034 = vunpack.c.l.b16 %v992
    %v1035 = vunpack.c.l.b16 %v993
    %v1036 = vunpack.c.l.b16 %v994
    %v1037 = vunpack.c.l.b16 %v995
    %v1038 = vunpack.c.l.b16 %v996
    %v1039 = vunpack.c.l.b16 %v997
    %v1040 = vunpack.c.l.b16 %v998
    %v1041 = vunpack.c.l.b16 %v999
    %v1042 = vunpack.c.l.b16 %v1000
    %v1043 = vunpack.c.l.b16 %v1001
    %v1044 = vpack.c.b16 %v1029, %v1028
    %v1045 = vpack.c.b16 %v1031, %v1030
    %v1046 = vpack.c.b16 %v1033, %v1032
    %v1047 = vpack.c.b16 %v1035, %v1034
    %v1048 = vpack.c.b16 %v1037, %v1036
    %v1049 = vpack.c.b16 %v1039, %v1038
    %v1050 = vpack.c.b16 %v1041, %v1040
    %v1051 = vpack.c.b16 %v1043, %v1042
    %1060 = vmatpush.bf16.msra.mxu0 %v1051
    %1061 = vmatpush.bf16.msra.mxu0 %v1050
    %1062 = vmatpush.bf16.msra.mxu0 %v1049
    %1063 = vmatpush.bf16.msra.mxu0 %v1048
    %1064 = vmatpush.bf16.msra.mxu0 %v1047
    %1065 = vmatpush.bf16.msra.mxu0 %v1046
    %1066 = vmatpush.bf16.msra.mxu0 %v1045
    %1067 = vmatpush.bf16.msra.mxu0 %v1044
    %1068 = vmatmul.bf16.gmra.mxu0 %v1002
    %v1069 = vpop.f32.mrf.mxu0
    %v1070 = vadd.f32 %v1010, %v1069
    %v1071 = vpop.f32.mrf.mxu0
    %v1072 = vadd.f32 %v1010, %v1071
    %1073 = vmatmul.bf16.gmra.mxu0 %v1003
    %v1074 = vpop.f32.mrf.mxu0
    %v1075 = vadd.f32 %v1010, %v1074
    %v1076 = vpop.f32.mrf.mxu0
    %v1077 = vadd.f32 %v1010, %v1076
    %1078 = vmatmul.bf16.gmra.mxu0 %v1004
    %v1079 = vpop.f32.mrf.mxu0
    %v1080 = vadd.f32 %v1010, %v1079
    %v1081 = vpop.f32.mrf.mxu0
    %v1082 = vadd.f32 %v1010, %v1081
    %1083 = vmatmul.bf16.gmra.mxu0 %v1005
    %v1084 = vpop.f32.mrf.mxu0
    %v1085 = vadd.f32 %v1010, %v1084
    %v1086 = vpop.f32.mrf.mxu0
    %v1087 = vadd.f32 %v1010, %v1086
    %1088 = vmatmul.bf16.gmra.mxu0 %v1006
    %v1089 = vpop.f32.mrf.mxu0
    %v1090 = vadd.f32 %v1010, %v1089
    %v1091 = vpop.f32.mrf.mxu0
    %v1092 = vadd.f32 %v1010, %v1091
    %1093 = vmatmul.bf16.gmra.mxu0 %v1007
    %v1094 = vpop.f32.mrf.mxu0
    %v1095 = vadd.f32 %v1010, %v1094
    %v1096 = vpop.f32.mrf.mxu0
    %v1097 = vadd.f32 %v1010, %v1096
    %1098 = vdwg.mxu0
    %v1099 = vtanh.pop %v1070
    %v1100 = vtanh.pop %v1072
    %v1101 = vtanh.pop %v1075
    %v1102 = vtanh.pop %v1077
    %v1103 = vtanh.pop %v1080
    %v1104 = vtanh.pop %v1082
    %v1105 = vtanh.pop %v1085
    %v1106 = vtanh.pop %v1087
    %v1107 = vtanh.pop %v1090
    %v1108 = vtanh.pop %v1092
    %v1109 = vtanh.pop %v1095
    %v1110 = vtanh.pop %v1097
    %v1111 = vld [vmem:[%s9] sm:$0xff]
    %v1112 = vld [vmem:[%s11] sm:$0xff]
    %v1113 = vld [vmem:[%s11 + $0x8] sm:$0x7f]
    %v1114 = vld [vmem:[%s13] sm:$0xff]
    %v1115 = vld [vmem:[%s13 + $0x8] sm:$0xff]
    %v1116 = vld [vmem:[%s13 + $0x10] sm:$0xff]
    %v1117 = vld [vmem:[%s13 + $0x18] sm:$0xff]
    %v1118 = vld [vmem:[%s13 + $0x20] sm:$0xff]
    %v1119 = vld [vmem:[%s13 + $0x28] sm:$0xff]
    %v1120 = vld [vmem:[%s13 + $0x30] sm:$0xff]
    %v1121 = vld [vmem:[%s13 + $0x38] sm:$0xff]
    %v1122 = vld [vmem:[%s13 + $0x40] sm:$0xff]
    %v1123 = vld [vmem:[%s13 + $0x48] sm:$0xff]
    %v1124 = vld [vmem:[%s13 + $0x50] sm:$0xff]
    %v1125 = vld [vmem:[%s13 + $0x58] sm:$0xff]
    %v1126 = vld [vmem:[%s15] sm:$0xff]
    %v1127 = vld [vmem:[%s15 + $0x8] sm:$0xff]
    %v1128 = vld [vmem:[%s7] sm:$0x1]
    %v1130 = vperm.slane %v1128, 0
    %v1132 = vadd.f32 %v1126, %v1130
    %v1133 = vadd.f32 %v1127, %v1130
    %v1134 = vld [vmem:[%s17] sm:$0xff]
    %v1135 = vld [vmem:[%s17 + $0x8] sm:$0xff]
    %v1136 = vld [vmem:[%s31] sm:$0xff]
    %v1137 = vld [vmem:[%s31 + $0x8] sm:$0xf]
    %v1138 = vld [vmem:[%s31 + $0xc] sm:$0xff]
    %v1139 = vld [vmem:[%s31 + $0x14] sm:$0xf]
    %v1140 = vld [vmem:[%s31 + $0x18] sm:$0xff]
    %v1141 = vld [vmem:[%s31 + $0x20] sm:$0xf]
    %v1142 = vld [vmem:[%s31 + $0x24] sm:$0xff]
    %v1143 = vld [vmem:[%s31 + $0x2c] sm:$0xf]
    %v1144 = vld [vmem:[%s31 + $0x30] sm:$0xff]
    %v1145 = vld [vmem:[%s31 + $0x38] sm:$0xf]
    %v1146 = vld [vmem:[%s31 + $0x3c] sm:$0xff]
    %v1147 = vld [vmem:[%s31 + $0x44] sm:$0xf]
    %v1148 = vld [vmem:[%s31 + $0x48] sm:$0xff]
    %v1149 = vld [vmem:[%s31 + $0x50] sm:$0xf]
    %v1150 = vld [vmem:[%s31 + $0x54] sm:$0xff]
    %v1151 = vld [vmem:[%s31 + $0x5c] sm:$0xf]
    %v1152 = vld [vmem:[%s31 + $0x60] sm:$0xff]
    %v1153 = vld [vmem:[%s31 + $0x68] sm:$0xf]
    %v1154 = vld [vmem:[%s31 + $0x6c] sm:$0xff]
    %v1155 = vld [vmem:[%s31 + $0x74] sm:$0xf]
    %v1156 = vld [vmem:[%s31 + $0x78] sm:$0xff]
    %v1157 = vld [vmem:[%s31 + $0x80] sm:$0xf]
    %v1158 = vld [vmem:[%s31 + $0x84] sm:$0xff]
    %v1159 = vld [vmem:[%s31 + $0x8c] sm:$0xf]
    %v1160 = vld [vmem:[%s31 + $0x90] sm:$0xff]
    %v1161 = vld [vmem:[%s31 + $0x98] sm:$0xf]
    %v1162 = vld [vmem:[%s31 + $0x9c] sm:$0xff]
    %v1163 = vld [vmem:[%s31 + $0xa4] sm:$0xf]
    %v1164 = vld [vmem:[%s31 + $0xa8] sm:$0xff]
    %v1165 = vld [vmem:[%s31 + $0xb0] sm:$0xf]
    %v1166 = vld [vmem:[%s31 + $0xb4] sm:$0xff]
    %v1167 = vld [vmem:[%s31 + $0xbc] sm:$0xf]
    %v1168 = vpack.c.bf16 %v1100, %v1099
    %v1169 = vpack.c.bf16 %v1102, %v1101
    %v1170 = vpack.c.bf16 %v1104, %v1103
    %v1171 = vpack.c.bf16 %v1106, %v1105
    %v1172 = vpack.c.bf16 %v1108, %v1107
    %v1173 = vpack.c.bf16 %v1110, %v1109
    %v1174 = vld [vmem:[%s33] sm:$0x7]
    %v1176 = vperm.slane %v1174, 0
    %v1177 = vperm.slane %v1174, 1
    %v1178 = vperm.slane %v1174, 2
    %v1214 = vunpack.c.l.b16 %v1136
    %v1215 = vunpack.c.h.b16 %v1136
    %v1216 = vunpack.c.l.b16 %v1137
    %v1217 = vunpack.c.l.b16 %v1138
    %v1218 = vunpack.c.h.b16 %v1138
    %v1219 = vunpack.c.l.b16 %v1139
    %v1220 = vunpack.c.l.b16 %v1140
    %v1221 = vunpack.c.h.b16 %v1140
    %v1222 = vunpack.c.l.b16 %v1141
    %v1223 = vunpack.c.l.b16 %v1142
    %v1224 = vunpack.c.h.b16 %v1142
    %v1225 = vunpack.c.l.b16 %v1143
    %v1226 = vunpack.c.l.b16 %v1144
    %v1227 = vunpack.c.h.b16 %v1144
    %v1228 = vunpack.c.l.b16 %v1145
    %v1229 = vunpack.c.l.b16 %v1146
    %v1230 = vunpack.c.h.b16 %v1146
    %v1231 = vunpack.c.l.b16 %v1147
    %v1232 = vunpack.c.l.b16 %v1148
    %v1233 = vunpack.c.h.b16 %v1148
    %v1234 = vunpack.c.l.b16 %v1149
    %v1235 = vunpack.c.l.b16 %v1150
    %v1236 = vunpack.c.h.b16 %v1150
    %v1237 = vunpack.c.l.b16 %v1151
    %v1238 = vunpack.c.l.b16 %v1152
    %v1239 = vunpack.c.h.b16 %v1152
    %v1240 = vunpack.c.l.b16 %v1153
    %v1241 = vunpack.c.l.b16 %v1154
    %v1242 = vunpack.c.h.b16 %v1154
    %v1243 = vunpack.c.l.b16 %v1155
    %v1244 = vunpack.c.l.b16 %v1156
    %v1245 = vunpack.c.h.b16 %v1156
    %v1246 = vunpack.c.l.b16 %v1157
    %v1247 = vunpack.c.l.b16 %v1158
    %v1248 = vunpack.c.h.b16 %v1158
    %v1249 = vunpack.c.l.b16 %v1159
    %v1250 = vunpack.c.l.b16 %v1160
    %v1251 = vunpack.c.h.b16 %v1160
    %v1252 = vunpack.c.l.b16 %v1161
    %v1253 = vunpack.c.l.b16 %v1162
    %v1254 = vunpack.c.h.b16 %v1162
    %v1255 = vunpack.c.l.b16 %v1163
    %v1256 = vunpack.c.l.b16 %v1164
    %v1257 = vunpack.c.h.b16 %v1164
    %v1258 = vunpack.c.l.b16 %v1165
    %v1259 = vunpack.c.l.b16 %v1166
    %v1260 = vunpack.c.h.b16 %v1166
    %v1261 = vunpack.c.l.b16 %v1167
    %v1262 = vpack.c.b16 %v1217, %v1214
    %v1263 = vpack.c.b16 %v1218, %v1215
    %v1264 = vpack.c.b16 %v1219, %v1216
    %v1265 = vpack.c.b16 %v1223, %v1220
    %v1266 = vpack.c.b16 %v1224, %v1221
    %v1267 = vpack.c.b16 %v1225, %v1222
    %v1268 = vpack.c.b16 %v1229, %v1226
    %v1269 = vpack.c.b16 %v1230, %v1227
    %v1270 = vpack.c.b16 %v1231, %v1228
    %v1271 = vpack.c.b16 %v1235, %v1232
    %v1272 = vpack.c.b16 %v1236, %v1233
    %v1273 = vpack.c.b16 %v1237, %v1234
    %v1274 = vpack.c.b16 %v1241, %v1238
    %v1275 = vpack.c.b16 %v1242, %v1239
    %v1276 = vpack.c.b16 %v1243, %v1240
    %v1277 = vpack.c.b16 %v1247, %v1244
    %v1278 = vpack.c.b16 %v1248, %v1245
    %v1279 = vpack.c.b16 %v1249, %v1246
    %v1280 = vpack.c.b16 %v1253, %v1250
    %v1281 = vpack.c.b16 %v1254, %v1251
    %v1282 = vpack.c.b16 %v1255, %v1252
    %v1283 = vpack.c.b16 %v1259, %v1256
    %v1284 = vpack.c.b16 %v1260, %v1257
    %v1285 = vpack.c.b16 %v1261, %v1258
    %1310 = vmatpush.bf16.msra.mxu0 %v1283
    %1311 = vmatpush.bf16.msra.mxu0 %v1280
    %1312 = vmatpush.bf16.msra.mxu0 %v1277
    %1313 = vmatpush.bf16.msra.mxu0 %v1274
    %1314 = vmatpush.bf16.msra.mxu0 %v1271
    %1315 = vmatpush.bf16.msra.mxu0 %v1268
    %1316 = vmatpush.bf16.msra.mxu0 %v1265
    %1317 = vmatpush.bf16.msra.mxu0 %v1262
    %1318 = vmatmul.bf16.gmra.mxu0 %v1168
    %v1319 = vpop.f32.mrf.mxu0
    %v1320 = vadd.f32 %v1176, %v1319
    %v1321 = vpop.f32.mrf.mxu0
    %v1322 = vadd.f32 %v1176, %v1321
    %1323 = vmatmul.bf16.gmra.mxu0 %v1169
    %v1324 = vpop.f32.mrf.mxu0
    %v1325 = vadd.f32 %v1176, %v1324
    %v1326 = vpop.f32.mrf.mxu0
    %v1327 = vadd.f32 %v1176, %v1326
    %1328 = vmatmul.bf16.gmra.mxu0 %v1170
    %v1329 = vpop.f32.mrf.mxu0
    %v1330 = vadd.f32 %v1176, %v1329
    %v1331 = vpop.f32.mrf.mxu0
    %v1332 = vadd.f32 %v1176, %v1331
    %1333 = vmatmul.bf16.gmra.mxu0 %v1171
    %v1334 = vpop.f32.mrf.mxu0
    %v1335 = vadd.f32 %v1176, %v1334
    %v1336 = vpop.f32.mrf.mxu0
    %v1337 = vadd.f32 %v1176, %v1336
    %1338 = vmatmul.bf16.gmra.mxu0 %v1172
    %v1339 = vpop.f32.mrf.mxu0
    %v1340 = vadd.f32 %v1176, %v1339
    %v1341 = vpop.f32.mrf.mxu0
    %v1342 = vadd.f32 %v1176, %v1341
    %1343 = vmatmul.bf16.gmra.mxu0 %v1173
    %v1344 = vpop.f32.mrf.mxu0
    %v1345 = vadd.f32 %v1176, %v1344
    %v1346 = vpop.f32.mrf.mxu0
    %v1347 = vadd.f32 %v1176, %v1346
    %1348 = vdwg.mxu0
    %1349 = vmatpush.bf16.msra.mxu0 %v1284
    %1350 = vmatpush.bf16.msra.mxu0 %v1281
    %1351 = vmatpush.bf16.msra.mxu0 %v1278
    %1352 = vmatpush.bf16.msra.mxu0 %v1275
    %1353 = vmatpush.bf16.msra.mxu0 %v1272
    %1354 = vmatpush.bf16.msra.mxu0 %v1269
    %1355 = vmatpush.bf16.msra.mxu0 %v1266
    %1356 = vmatpush.bf16.msra.mxu0 %v1263
    %1357 = vmatmul.bf16.gmra.mxu0 %v1168
    %v1358 = vpop.f32.mrf.mxu0
    %v1359 = vadd.f32 %v1177, %v1358
    %v1360 = vpop.f32.mrf.mxu0
    %v1361 = vadd.f32 %v1177, %v1360
    %1362 = vmatmul.bf16.gmra.mxu0 %v1169
    %v1363 = vpop.f32.mrf.mxu0
    %v1364 = vadd.f32 %v1177, %v1363
    %v1365 = vpop.f32.mrf.mxu0
    %v1366 = vadd.f32 %v1177, %v1365
    %1367 = vmatmul.bf16.gmra.mxu0 %v1170
    %v1368 = vpop.f32.mrf.mxu0
    %v1369 = vadd.f32 %v1177, %v1368
    %v1370 = vpop.f32.mrf.mxu0
    %v1371 = vadd.f32 %v1177, %v1370
    %1372 = vmatmul.bf16.gmra.mxu0 %v1171
    %v1373 = vpop.f32.mrf.mxu0
    %v1374 = vadd.f32 %v1177, %v1373
    %v1375 = vpop.f32.mrf.mxu0
    %v1376 = vadd.f32 %v1177, %v1375
    %1377 = vmatmul.bf16.gmra.mxu0 %v1172
    %v1378 = vpop.f32.mrf.mxu0
    %v1379 = vadd.f32 %v1177, %v1378
    %v1380 = vpop.f32.mrf.mxu0
    %v1381 = vadd.f32 %v1177, %v1380
    %1382 = vmatmul.bf16.gmra.mxu0 %v1173
    %v1383 = vpop.f32.mrf.mxu0
    %v1384 = vadd.f32 %v1177, %v1383
    %v1385 = vpop.f32.mrf.mxu0
    %v1386 = vadd.f32 %v1177, %v1385
    %1387 = vdwg.mxu0
    %1388 = vmatpush.bf16.msra.mxu0 %v1285
    %1389 = vmatpush.bf16.msra.mxu0 %v1282
    %1390 = vmatpush.bf16.msra.mxu0 %v1279
    %1391 = vmatpush.bf16.msra.mxu0 %v1276
    %1392 = vmatpush.bf16.msra.mxu0 %v1273
    %1393 = vmatpush.bf16.msra.mxu0 %v1270
    %1394 = vmatpush.bf16.msra.mxu0 %v1267
    %1395 = vmatpush.bf16.msra.mxu0 %v1264
    %1396 = vmatmul.bf16.gmra.mxu0 %v1168
    %v1397 = vpop.f32.mrf.mxu0
    %v1398 = vadd.f32 %v1178, %v1397
    %v1399 = vpop.f32.mrf.mxu0
    %v1400 = vadd.f32 %v1178, %v1399
    %1401 = vmatmul.bf16.gmra.mxu0 %v1169
    %v1402 = vpop.f32.mrf.mxu0
    %v1403 = vadd.f32 %v1178, %v1402
    %v1404 = vpop.f32.mrf.mxu0
    %v1405 = vadd.f32 %v1178, %v1404
    %1406 = vmatmul.bf16.gmra.mxu0 %v1170
    %v1407 = vpop.f32.mrf.mxu0
    %v1408 = vadd.f32 %v1178, %v1407
    %v1409 = vpop.f32.mrf.mxu0
    %v1410 = vadd.f32 %v1178, %v1409
    %1411 = vmatmul.bf16.gmra.mxu0 %v1171
    %v1412 = vpop.f32.mrf.mxu0
    %v1413 = vadd.f32 %v1178, %v1412
    %v1414 = vpop.f32.mrf.mxu0
    %v1415 = vadd.f32 %v1178, %v1414
    %1416 = vmatmul.bf16.gmra.mxu0 %v1172
    %v1417 = vpop.f32.mrf.mxu0
    %v1418 = vadd.f32 %v1178, %v1417
    %v1419 = vpop.f32.mrf.mxu0
    %v1420 = vadd.f32 %v1178, %v1419
    %1421 = vmatmul.bf16.gmra.mxu0 %v1173
    %v1422 = vpop.f32.mrf.mxu0
    %v1423 = vadd.f32 %v1178, %v1422
    %v1424 = vpop.f32.mrf.mxu0
    %v1425 = vadd.f32 %v1178, %v1424
    %1426 = vdwg.mxu0
    %v1427 = vperm.slane %v1111, 0
    %v1428 = vmul.f32 %v1320, %v1427
    %v1429 = vmul.f32 %v1322, %v1427
    %v1430 = vmul.f32 %v1325, %v1427
    %v1431 = vmul.f32 %v1327, %v1427
    %v1432 = vmul.f32 %v1330, %v1427
    %v1433 = vmul.f32 %v1332, %v1427
    %v1434 = vmul.f32 %v1335, %v1427
    %v1435 = vmul.f32 %v1337, %v1427
    %v1436 = vmul.f32 %v1340, %v1427
    %v1437 = vmul.f32 %v1342, %v1427
    %v1438 = vmul.f32 %v1345, %v1427
    %v1439 = vmul.f32 %v1347, %v1427
    %v1440 = vperm.slane %v1111, 1
    %v1441 = vmul.f32 %v1320, %v1440
    %v1442 = vmul.f32 %v1322, %v1440
    %v1443 = vmul.f32 %v1325, %v1440
    %v1444 = vmul.f32 %v1327, %v1440
    %v1445 = vmul.f32 %v1330, %v1440
    %v1446 = vmul.f32 %v1332, %v1440
    %v1447 = vmul.f32 %v1335, %v1440
    %v1448 = vmul.f32 %v1337, %v1440
    %v1449 = vmul.f32 %v1340, %v1440
    %v1450 = vmul.f32 %v1342, %v1440
    %v1451 = vmul.f32 %v1345, %v1440
    %v1452 = vmul.f32 %v1347, %v1440
    %v1453 = vperm.slane %v1111, 2
    %v1454 = vmul.f32 %v1320, %v1453
    %v1455 = vmul.f32 %v1322, %v1453
    %v1456 = vmul.f32 %v1325, %v1453
    %v1457 = vmul.f32 %v1327, %v1453
    %v1458 = vmul.f32 %v1330, %v1453
    %v1459 = vmul.f32 %v1332, %v1453
    %v1460 = vmul.f32 %v1335, %v1453
    %v1461 = vmul.f32 %v1337, %v1453
    %v1462 = vmul.f32 %v1340, %v1453
    %v1463 = vmul.f32 %v1342, %v1453
    %v1464 = vmul.f32 %v1345, %v1453
    %v1465 = vmul.f32 %v1347, %v1453
    %v1466 = vperm.slane %v1111, 3
    %v1467 = vmul.f32 %v1320, %v1466
    %v1468 = vmul.f32 %v1322, %v1466
    %v1469 = vmul.f32 %v1325, %v1466
    %v1470 = vmul.f32 %v1327, %v1466
    %v1471 = vmul.f32 %v1330, %v1466
    %v1472 = vmul.f32 %v1332, %v1466
    %v1473 = vmul.f32 %v1335, %v1466
    %v1474 = vmul.f32 %v1337, %v1466
    %v1475 = vmul.f32 %v1340, %v1466
    %v1476 = vmul.f32 %v1342, %v1466
    %v1477 = vmul.f32 %v1345, %v1466
    %v1478 = vmul.f32 %v1347, %v1466
    %v1479 = vperm.slane %v1111, 4
    %v1480 = vmul.f32 %v1320, %v1479
    %v1481 = vmul.f32 %v1322, %v1479
    %v1482 = vmul.f32 %v1325, %v1479
    %v1483 = vmul.f32 %v1327, %v1479
    %v1484 = vmul.f32 %v1330, %v1479
    %v1485 = vmul.f32 %v1332, %v1479
    %v1486 = vmul.f32 %v1335, %v1479
    %v1487 = vmul.f32 %v1337, %v1479
    %v1488 = vmul.f32 %v1340, %v1479
    %v1489 = vmul.f32 %v1342, %v1479
    %v1490 = vmul.f32 %v1345, %v1479
    %v1491 = vmul.f32 %v1347, %v1479
    %v1492 = vperm.slane %v1111, 5
    %v1493 = vmul.f32 %v1320, %v1492
    %v1494 = vmul.f32 %v1322, %v1492
    %v1495 = vmul.f32 %v1325, %v1492
    %v1496 = vmul.f32 %v1327, %v1492
    %v1497 = vmul.f32 %v1330, %v1492
    %v1498 = vmul.f32 %v1332, %v1492
    %v1499 = vmul.f32 %v1335, %v1492
    %v1500 = vmul.f32 %v1337, %v1492
    %v1501 = vmul.f32 %v1340, %v1492
    %v1502 = vmul.f32 %v1342, %v1492
    %v1503 = vmul.f32 %v1345, %v1492
    %v1504 = vmul.f32 %v1347, %v1492
    %v1505 = vperm.slane %v1111, 6
    %v1506 = vmul.f32 %v1320, %v1505
    %v1507 = vmul.f32 %v1322, %v1505
    %v1508 = vmul.f32 %v1325, %v1505
    %v1509 = vmul.f32 %v1327, %v1505
    %v1510 = vmul.f32 %v1330, %v1505
    %v1511 = vmul.f32 %v1332, %v1505
    %v1512 = vmul.f32 %v1335, %v1505
    %v1513 = vmul.f32 %v1337, %v1505
    %v1514 = vmul.f32 %v1340, %v1505
    %v1515 = vmul.f32 %v1342, %v1505
    %v1516 = vmul.f32 %v1345, %v1505
    %v1517 = vmul.f32 %v1347, %v1505
    %v1518 = vperm.slane %v1111, 7
    %v1519 = vmul.f32 %v1320, %v1518
    %v1520 = vmul.f32 %v1322, %v1518
    %v1521 = vmul.f32 %v1325, %v1518
    %v1522 = vmul.f32 %v1327, %v1518
    %v1523 = vmul.f32 %v1330, %v1518
    %v1524 = vmul.f32 %v1332, %v1518
    %v1525 = vmul.f32 %v1335, %v1518
    %v1526 = vmul.f32 %v1337, %v1518
    %v1527 = vmul.f32 %v1340, %v1518
    %v1528 = vmul.f32 %v1342, %v1518
    %v1529 = vmul.f32 %v1345, %v1518
    %v1530 = vmul.f32 %v1347, %v1518
    %v1531 = vpack.c.bf16 %v1429, %v1428
    %v1532 = vpack.c.bf16 %v1431, %v1430
    %v1533 = vpack.c.bf16 %v1433, %v1432
    %v1534 = vpack.c.bf16 %v1435, %v1434
    %v1535 = vpack.c.bf16 %v1437, %v1436
    %v1536 = vpack.c.bf16 %v1439, %v1438
    %v1537 = vpack.c.bf16 %v1442, %v1441
    %v1538 = vpack.c.bf16 %v1444, %v1443
    %v1539 = vpack.c.bf16 %v1446, %v1445
    %v1540 = vpack.c.bf16 %v1448, %v1447
    %v1541 = vpack.c.bf16 %v1450, %v1449
    %v1542 = vpack.c.bf16 %v1452, %v1451
    %v1543 = vpack.c.bf16 %v1455, %v1454
    %v1544 = vpack.c.bf16 %v1457, %v1456
    %v1545 = vpack.c.bf16 %v1459, %v1458
    %v1546 = vpack.c.bf16 %v1461, %v1460
    %v1547 = vpack.c.bf16 %v1463, %v1462
    %v1548 = vpack.c.bf16 %v1465, %v1464
    %v1549 = vpack.c.bf16 %v1468, %v1467
    %v1550 = vpack.c.bf16 %v1470, %v1469
    %v1551 = vpack.c.bf16 %v1472, %v1471
    %v1552 = vpack.c.bf16 %v1474, %v1473
    %v1553 = vpack.c.bf16 %v1476, %v1475
    %v1554 = vpack.c.bf16 %v1478, %v1477
    %v1555 = vpack.c.bf16 %v1481, %v1480
    %v1556 = vpack.c.bf16 %v1483, %v1482
    %v1557 = vpack.c.bf16 %v1485, %v1484
    %v1558 = vpack.c.bf16 %v1487, %v1486
    %v1559 = vpack.c.bf16 %v1489, %v1488
    %v1560 = vpack.c.bf16 %v1491, %v1490
    %v1561 = vpack.c.bf16 %v1494, %v1493
    %v1562 = vpack.c.bf16 %v1496, %v1495
    %v1563 = vpack.c.bf16 %v1498, %v1497
    %v1564 = vpack.c.bf16 %v1500, %v1499
    %v1565 = vpack.c.bf16 %v1502, %v1501
    %v1566 = vpack.c.bf16 %v1504, %v1503
    %v1567 = vpack.c.bf16 %v1507, %v1506
    %v1568 = vpack.c.bf16 %v1509, %v1508
    %v1569 = vpack.c.bf16 %v1511, %v1510
    %v1570 = vpack.c.bf16 %v1513, %v1512
    %v1571 = vpack.c.bf16 %v1515, %v1514
    %v1572 = vpack.c.bf16 %v1517, %v1516
    %v1573 = vpack.c.bf16 %v1520, %v1519
    %v1574 = vpack.c.bf16 %v1522, %v1521
    %v1575 = vpack.c.bf16 %v1524, %v1523
    %v1576 = vpack.c.bf16 %v1526, %v1525
    %v1577 = vpack.c.bf16 %v1528, %v1527
    %v1578 = vpack.c.bf16 %v1530, %v1529
    %1579 = vxpose.xlu0.b32.start [1/16] %v1359, 128
    %1580 = vxpose.xlu0.b32.cont [2/16] %v1361, 128
    %1581 = vxpose.xlu0.b32.cont [3/16] %v1364, 128
    %1582 = vxpose.xlu0.b32.cont [4/16] %v1366, 128
    %1583 = vxpose.xlu0.b32.cont [5/16] %v1369, 128
    %1584 = vxpose.xlu0.b32.cont [6/16] %v1371, 128
    %1585 = vxpose.xlu0.b32.cont [7/16] %v1374, 128
    %1586 = vxpose.xlu0.b32.cont [8/16] %v1376, 128
    %1587 = vxpose.xlu0.b32.cont [9/16] %v1379, 128
    %1588 = vxpose.xlu0.b32.cont [10/16] %v1381, 128
    %1589 = vxpose.xlu0.b32.cont [11/16] %v1384, 128
    %1590 = vxpose.xlu0.b32.cont [12/16] %v1386, 128
    %1591 = vxpose.xlu0.b32.cont [13/16] 0.0, 128
    %1592 = vxpose.xlu0.b32.cont [14/16] 0.0, 128
    %1593 = vxpose.xlu0.b32.cont [15/16] 0.0, 128
    %1594 = vxpose.xlu0.b32.end [16/16] 0.0, 128
    %v1595 = vpop.trf.xlu0
    %v1596 = vpop.trf.xlu0
    %v1597 = vpop.trf.xlu0
    %v1598 = vpop.trf.xlu0
    %v1599 = vpop.trf.xlu0
    %v1600 = vpop.trf.xlu0
    %v1601 = vpop.trf.xlu0
    %v1602 = vpop.trf.xlu0
    %v1603 = vpop.trf.xlu0
    %v1604 = vpop.trf.xlu0
    %v1605 = vpop.trf.xlu0
    %v1606 = vpop.trf.xlu0
    %v1607 = vpop.trf.xlu0
    %v1608 = vpop.trf.xlu0
    %v1609 = vpop.trf.xlu0
    %v1610 = vpop.trf.xlu0
    %v1611 = vpack.c.bf16 %v1596, %v1595
    %v1612 = vpack.c.bf16 %v1598, %v1597
    %v1613 = vpack.c.bf16 %v1600, %v1599
    %v1614 = vpack.c.bf16 %v1602, %v1601
    %v1615 = vpack.c.bf16 %v1604, %v1603
    %v1616 = vpack.c.bf16 %v1606, %v1605
    %v1617 = vpack.c.bf16 %v1608, %v1607
    %v1618 = vpack.c.bf16 %v1610, %v1609
    %1619 = vmatpush.bf16.msra.mxu0 %v1618
    %1620 = vmatpush.bf16.msra.mxu0 %v1617
    %1621 = vmatpush.bf16.msra.mxu0 %v1616
    %1622 = vmatpush.bf16.msra.mxu0 %v1615
    %1623 = vmatpush.bf16.msra.mxu0 %v1614
    %1624 = vmatpush.bf16.msra.mxu0 %v1613
    %1625 = vmatpush.bf16.msra.mxu0 %v1612
    %1626 = vmatpush.bf16.msra.mxu0 %v1611
    %1627 = vmatmul.bf16.gmra.mxu0 %v1531
    %v1628 = vpop.f32.mrf.mxu0
    %v1629 = vadd.f32 %v1114, %v1628
    %v1630 = vpop.f32.mrf.mxu0
    %v1631 = vadd.f32 %v1115, %v1630
    %1632 = vmatmul.bf16.gmra.mxu0 %v1532
    %v1633 = vpop.f32.mrf.mxu0
    %v1634 = vadd.f32 %v1116, %v1633
    %v1635 = vpop.f32.mrf.mxu0
    %v1636 = vadd.f32 %v1117, %v1635
    %1637 = vmatmul.bf16.gmra.mxu0 %v1533
    %v1638 = vpop.f32.mrf.mxu0
    %v1639 = vadd.f32 %v1118, %v1638
    %v1640 = vpop.f32.mrf.mxu0
    %v1641 = vadd.f32 %v1119, %v1640
    %1642 = vmatmul.bf16.gmra.mxu0 %v1534
    %v1643 = vpop.f32.mrf.mxu0
    %v1644 = vadd.f32 %v1120, %v1643
    %v1645 = vpop.f32.mrf.mxu0
    %v1646 = vadd.f32 %v1121, %v1645
    %1647 = vmatmul.bf16.gmra.mxu0 %v1535
    %v1648 = vpop.f32.mrf.mxu0
    %v1649 = vadd.f32 %v1122, %v1648
    %v1650 = vpop.f32.mrf.mxu0
    %v1651 = vadd.f32 %v1123, %v1650
    %1652 = vmatmul.bf16.gmra.mxu0 %v1536
    %v1653 = vpop.f32.mrf.mxu0
    %v1654 = vadd.f32 %v1124, %v1653
    %v1655 = vpop.f32.mrf.mxu0
    %v1656 = vadd.f32 %v1125, %v1655
    %1657 = vmatmul.bf16.gmra.mxu0 %v1537
    %v1658 = vpop.f32.mrf.mxu0
    %v1659 = vadd.f32 %v1114, %v1658
    %v1660 = vpop.f32.mrf.mxu0
    %v1661 = vadd.f32 %v1115, %v1660
    %1662 = vmatmul.bf16.gmra.mxu0 %v1538
    %v1663 = vpop.f32.mrf.mxu0
    %v1664 = vadd.f32 %v1116, %v1663
    %v1665 = vpop.f32.mrf.mxu0
    %v1666 = vadd.f32 %v1117, %v1665
    %1667 = vmatmul.bf16.gmra.mxu0 %v1539
    %v1668 = vpop.f32.mrf.mxu0
    %v1669 = vadd.f32 %v1118, %v1668
    %v1670 = vpop.f32.mrf.mxu0
    %v1671 = vadd.f32 %v1119, %v1670
    %1672 = vmatmul.bf16.gmra.mxu0 %v1540
    %v1673 = vpop.f32.mrf.mxu0
    %v1674 = vadd.f32 %v1120, %v1673
    %v1675 = vpop.f32.mrf.mxu0
    %v1676 = vadd.f32 %v1121, %v1675
    %1677 = vmatmul.bf16.gmra.mxu0 %v1541
    %v1678 = vpop.f32.mrf.mxu0
    %v1679 = vadd.f32 %v1122, %v1678
    %v1680 = vpop.f32.mrf.mxu0
    %v1681 = vadd.f32 %v1123, %v1680
    %1682 = vmatmul.bf16.gmra.mxu0 %v1542
    %v1683 = vpop.f32.mrf.mxu0
    %v1684 = vadd.f32 %v1124, %v1683
    %v1685 = vpop.f32.mrf.mxu0
    %v1686 = vadd.f32 %v1125, %v1685
    %1687 = vmatmul.bf16.gmra.mxu0 %v1543
    %v1688 = vpop.f32.mrf.mxu0
    %v1689 = vadd.f32 %v1114, %v1688
    %v1690 = vpop.f32.mrf.mxu0
    %v1691 = vadd.f32 %v1115, %v1690
    %1692 = vmatmul.bf16.gmra.mxu0 %v1544
    %v1693 = vpop.f32.mrf.mxu0
    %v1694 = vadd.f32 %v1116, %v1693
    %v1695 = vpop.f32.mrf.mxu0
    %v1696 = vadd.f32 %v1117, %v1695
    %1697 = vmatmul.bf16.gmra.mxu0 %v1545
    %v1698 = vpop.f32.mrf.mxu0
    %v1699 = vadd.f32 %v1118, %v1698
    %v1700 = vpop.f32.mrf.mxu0
    %v1701 = vadd.f32 %v1119, %v1700
    %1702 = vmatmul.bf16.gmra.mxu0 %v1546
    %v1703 = vpop.f32.mrf.mxu0
    %v1704 = vadd.f32 %v1120, %v1703
    %v1705 = vpop.f32.mrf.mxu0
    %v1706 = vadd.f32 %v1121, %v1705
    %1707 = vmatmul.bf16.gmra.mxu0 %v1547
    %v1708 = vpop.f32.mrf.mxu0
    %v1709 = vadd.f32 %v1122, %v1708
    %v1710 = vpop.f32.mrf.mxu0
    %v1711 = vadd.f32 %v1123, %v1710
    %1712 = vmatmul.bf16.gmra.mxu0 %v1548
    %v1713 = vpop.f32.mrf.mxu0
    %v1714 = vadd.f32 %v1124, %v1713
    %v1715 = vpop.f32.mrf.mxu0
    %v1716 = vadd.f32 %v1125, %v1715
    %1717 = vmatmul.bf16.gmra.mxu0 %v1549
    %v1718 = vpop.f32.mrf.mxu0
    %v1719 = vadd.f32 %v1114, %v1718
    %v1720 = vpop.f32.mrf.mxu0
    %v1721 = vadd.f32 %v1115, %v1720
    %1722 = vmatmul.bf16.gmra.mxu0 %v1550
    %v1723 = vpop.f32.mrf.mxu0
    %v1724 = vadd.f32 %v1116, %v1723
    %v1725 = vpop.f32.mrf.mxu0
    %v1726 = vadd.f32 %v1117, %v1725
    %1727 = vmatmul.bf16.gmra.mxu0 %v1551
    %v1728 = vpop.f32.mrf.mxu0
    %v1729 = vadd.f32 %v1118, %v1728
    %v1730 = vpop.f32.mrf.mxu0
    %v1731 = vadd.f32 %v1119, %v1730
    %1732 = vmatmul.bf16.gmra.mxu0 %v1552
    %v1733 = vpop.f32.mrf.mxu0
    %v1734 = vadd.f32 %v1120, %v1733
    %v1735 = vpop.f32.mrf.mxu0
    %v1736 = vadd.f32 %v1121, %v1735
    %1737 = vmatmul.bf16.gmra.mxu0 %v1553
    %v1738 = vpop.f32.mrf.mxu0
    %v1739 = vadd.f32 %v1122, %v1738
    %v1740 = vpop.f32.mrf.mxu0
    %v1741 = vadd.f32 %v1123, %v1740
    %1742 = vmatmul.bf16.gmra.mxu0 %v1554
    %v1743 = vpop.f32.mrf.mxu0
    %v1744 = vadd.f32 %v1124, %v1743
    %v1745 = vpop.f32.mrf.mxu0
    %v1746 = vadd.f32 %v1125, %v1745
    %1747 = vmatmul.bf16.gmra.mxu0 %v1555
    %v1748 = vpop.f32.mrf.mxu0
    %v1749 = vadd.f32 %v1114, %v1748
    %v1750 = vpop.f32.mrf.mxu0
    %v1751 = vadd.f32 %v1115, %v1750
    %1752 = vmatmul.bf16.gmra.mxu0 %v1556
    %v1753 = vpop.f32.mrf.mxu0
    %v1754 = vadd.f32 %v1116, %v1753
    %v1755 = vpop.f32.mrf.mxu0
    %v1756 = vadd.f32 %v1117, %v1755
    %1757 = vmatmul.bf16.gmra.mxu0 %v1557
    %v1758 = vpop.f32.mrf.mxu0
    %v1759 = vadd.f32 %v1118, %v1758
    %v1760 = vpop.f32.mrf.mxu0
    %v1761 = vadd.f32 %v1119, %v1760
    %1762 = vmatmul.bf16.gmra.mxu0 %v1558
    %v1763 = vpop.f32.mrf.mxu0
    %v1764 = vadd.f32 %v1120, %v1763
    %v1765 = vpop.f32.mrf.mxu0
    %v1766 = vadd.f32 %v1121, %v1765
    %1767 = vmatmul.bf16.gmra.mxu0 %v1559
    %v1768 = vpop.f32.mrf.mxu0
    %v1769 = vadd.f32 %v1122, %v1768
    %v1770 = vpop.f32.mrf.mxu0
    %v1771 = vadd.f32 %v1123, %v1770
    %1772 = vmatmul.bf16.gmra.mxu0 %v1560
    %v1773 = vpop.f32.mrf.mxu0
    %v1774 = vadd.f32 %v1124, %v1773
    %v1775 = vpop.f32.mrf.mxu0
    %v1776 = vadd.f32 %v1125, %v1775
    %1777 = vmatmul.bf16.gmra.mxu0 %v1561
    %v1778 = vpop.f32.mrf.mxu0
    %v1779 = vadd.f32 %v1114, %v1778
    %v1780 = vpop.f32.mrf.mxu0
    %v1781 = vadd.f32 %v1115, %v1780
    %1782 = vmatmul.bf16.gmra.mxu0 %v1562
    %v1783 = vpop.f32.mrf.mxu0
    %v1784 = vadd.f32 %v1116, %v1783
    %v1785 = vpop.f32.mrf.mxu0
    %v1786 = vadd.f32 %v1117, %v1785
    %1787 = vmatmul.bf16.gmra.mxu0 %v1563
    %v1788 = vpop.f32.mrf.mxu0
    %v1789 = vadd.f32 %v1118, %v1788
    %v1790 = vpop.f32.mrf.mxu0
    %v1791 = vadd.f32 %v1119, %v1790
    %1792 = vmatmul.bf16.gmra.mxu0 %v1564
    %v1793 = vpop.f32.mrf.mxu0
    %v1794 = vadd.f32 %v1120, %v1793
    %v1795 = vpop.f32.mrf.mxu0
    %v1796 = vadd.f32 %v1121, %v1795
    %1797 = vmatmul.bf16.gmra.mxu0 %v1565
    %v1798 = vpop.f32.mrf.mxu0
    %v1799 = vadd.f32 %v1122, %v1798
    %v1800 = vpop.f32.mrf.mxu0
    %v1801 = vadd.f32 %v1123, %v1800
    %1802 = vmatmul.bf16.gmra.mxu0 %v1566
    %v1803 = vpop.f32.mrf.mxu0
    %v1804 = vadd.f32 %v1124, %v1803
    %v1805 = vpop.f32.mrf.mxu0
    %v1806 = vadd.f32 %v1125, %v1805
    %1807 = vmatmul.bf16.gmra.mxu0 %v1567
    %v1808 = vpop.f32.mrf.mxu0
    %v1809 = vadd.f32 %v1114, %v1808
    %v1810 = vpop.f32.mrf.mxu0
    %v1811 = vadd.f32 %v1115, %v1810
    %1812 = vmatmul.bf16.gmra.mxu0 %v1568
    %v1813 = vpop.f32.mrf.mxu0
    %v1814 = vadd.f32 %v1116, %v1813
    %v1815 = vpop.f32.mrf.mxu0
    %v1816 = vadd.f32 %v1117, %v1815
    %1817 = vmatmul.bf16.gmra.mxu0 %v1569
    %v1818 = vpop.f32.mrf.mxu0
    %v1819 = vadd.f32 %v1118, %v1818
    %v1820 = vpop.f32.mrf.mxu0
    %v1821 = vadd.f32 %v1119, %v1820
    %1822 = vmatmul.bf16.gmra.mxu0 %v1570
    %v1823 = vpop.f32.mrf.mxu0
    %v1824 = vadd.f32 %v1120, %v1823
    %v1825 = vpop.f32.mrf.mxu0
    %v1826 = vadd.f32 %v1121, %v1825
    %1827 = vmatmul.bf16.gmra.mxu0 %v1571
    %v1828 = vpop.f32.mrf.mxu0
    %v1829 = vadd.f32 %v1122, %v1828
    %v1830 = vpop.f32.mrf.mxu0
    %v1831 = vadd.f32 %v1123, %v1830
    %1832 = vmatmul.bf16.gmra.mxu0 %v1572
    %v1833 = vpop.f32.mrf.mxu0
    %v1834 = vadd.f32 %v1124, %v1833
    %v1835 = vpop.f32.mrf.mxu0
    %v1836 = vadd.f32 %v1125, %v1835
    %1837 = vmatmul.bf16.gmra.mxu0 %v1573
    %v1838 = vpop.f32.mrf.mxu0
    %v1839 = vadd.f32 %v1114, %v1838
    %v1840 = vpop.f32.mrf.mxu0
    %v1841 = vadd.f32 %v1115, %v1840
    %1842 = vmatmul.bf16.gmra.mxu0 %v1574
    %v1843 = vpop.f32.mrf.mxu0
    %v1844 = vadd.f32 %v1116, %v1843
    %v1845 = vpop.f32.mrf.mxu0
    %v1846 = vadd.f32 %v1117, %v1845
    %1847 = vmatmul.bf16.gmra.mxu0 %v1575
    %v1848 = vpop.f32.mrf.mxu0
    %v1849 = vadd.f32 %v1118, %v1848
    %v1850 = vpop.f32.mrf.mxu0
    %v1851 = vadd.f32 %v1119, %v1850
    %1852 = vmatmul.bf16.gmra.mxu0 %v1576
    %v1853 = vpop.f32.mrf.mxu0
    %v1854 = vadd.f32 %v1120, %v1853
    %v1855 = vpop.f32.mrf.mxu0
    %v1856 = vadd.f32 %v1121, %v1855
    %1857 = vmatmul.bf16.gmra.mxu0 %v1577
    %v1858 = vpop.f32.mrf.mxu0
    %v1859 = vadd.f32 %v1122, %v1858
    %v1860 = vpop.f32.mrf.mxu0
    %v1861 = vadd.f32 %v1123, %v1860
    %1862 = vmatmul.bf16.gmra.mxu0 %v1578
    %v1863 = vpop.f32.mrf.mxu0
    %v1864 = vadd.f32 %v1124, %v1863
    %v1865 = vpop.f32.mrf.mxu0
    %v1866 = vadd.f32 %v1125, %v1865
    %1867 = vdwg.mxu0
    %vm1868 = vcmask 785408
    %v1869 = vsel %vm1868, %v1629, -inf
    %1870 = vmax.xlane.f32.xlu0 %v1869
    %v1871 = vpop.xlane.xlu0 %1870
    %v1872 = vsel %vm1868, %v1631, -inf
    %1873 = vmax.xlane.f32.xlu0 %v1872
    %v1874 = vpop.xlane.xlu0 %1873
    %v1875 = vsel %vm1868, %v1634, -inf
    %1876 = vmax.xlane.f32.xlu0 %v1875
    %v1877 = vpop.xlane.xlu0 %1876
    %v1878 = vsel %vm1868, %v1636, -inf
    %1879 = vmax.xlane.f32.xlu0 %v1878
    %v1880 = vpop.xlane.xlu0 %1879
    %v1881 = vsel %vm1868, %v1639, -inf
    %1882 = vmax.xlane.f32.xlu0 %v1881
    %v1883 = vpop.xlane.xlu0 %1882
    %v1884 = vsel %vm1868, %v1641, -inf
    %1885 = vmax.xlane.f32.xlu0 %v1884
    %v1886 = vpop.xlane.xlu0 %1885
    %v1887 = vsel %vm1868, %v1644, -inf
    %1888 = vmax.xlane.f32.xlu0 %v1887
    %v1889 = vpop.xlane.xlu0 %1888
    %v1890 = vsel %vm1868, %v1646, -inf
    %1891 = vmax.xlane.f32.xlu0 %v1890
    %v1892 = vpop.xlane.xlu0 %1891
    %v1893 = vsel %vm1868, %v1649, -inf
    %1894 = vmax.xlane.f32.xlu0 %v1893
    %v1895 = vpop.xlane.xlu0 %1894
    %v1896 = vsel %vm1868, %v1651, -inf
    %1897 = vmax.xlane.f32.xlu0 %v1896
    %v1898 = vpop.xlane.xlu0 %1897
    %v1899 = vsel %vm1868, %v1654, -inf
    %1900 = vmax.xlane.f32.xlu0 %v1899
    %v1901 = vpop.xlane.xlu0 %1900
    %v1902 = vsel %vm1868, %v1656, -inf
    %1903 = vmax.xlane.f32.xlu0 %v1902
    %v1904 = vpop.xlane.xlu0 %1903
    %v1905 = vsel %vm1868, %v1659, -inf
    %1906 = vmax.xlane.f32.xlu0 %v1905
    %v1907 = vpop.xlane.xlu0 %1906
    %v1908 = vsel %vm1868, %v1661, -inf
    %1909 = vmax.xlane.f32.xlu0 %v1908
    %v1910 = vpop.xlane.xlu0 %1909
    %v1911 = vsel %vm1868, %v1664, -inf
    %1912 = vmax.xlane.f32.xlu0 %v1911
    %v1913 = vpop.xlane.xlu0 %1912
    %v1914 = vsel %vm1868, %v1666, -inf
    %1915 = vmax.xlane.f32.xlu0 %v1914
    %v1916 = vpop.xlane.xlu0 %1915
    %v1917 = vsel %vm1868, %v1669, -inf
    %1918 = vmax.xlane.f32.xlu0 %v1917
    %v1919 = vpop.xlane.xlu0 %1918
    %v1920 = vsel %vm1868, %v1671, -inf
    %1921 = vmax.xlane.f32.xlu0 %v1920
    %v1922 = vpop.xlane.xlu0 %1921
    %v1923 = vsel %vm1868, %v1674, -inf
    %1924 = vmax.xlane.f32.xlu0 %v1923
    %v1925 = vpop.xlane.xlu0 %1924
    %v1926 = vsel %vm1868, %v1676, -inf
    %1927 = vmax.xlane.f32.xlu0 %v1926
    %v1928 = vpop.xlane.xlu0 %1927
    %v1929 = vsel %vm1868, %v1679, -inf
    %1930 = vmax.xlane.f32.xlu0 %v1929
    %v1931 = vpop.xlane.xlu0 %1930
    %v1932 = vsel %vm1868, %v1681, -inf
    %1933 = vmax.xlane.f32.xlu0 %v1932
    %v1934 = vpop.xlane.xlu0 %1933
    %v1935 = vsel %vm1868, %v1684, -inf
    %1936 = vmax.xlane.f32.xlu0 %v1935
    %v1937 = vpop.xlane.xlu0 %1936
    %v1938 = vsel %vm1868, %v1686, -inf
    %1939 = vmax.xlane.f32.xlu0 %v1938
    %v1940 = vpop.xlane.xlu0 %1939
    %v1941 = vsel %vm1868, %v1689, -inf
    %1942 = vmax.xlane.f32.xlu0 %v1941
    %v1943 = vpop.xlane.xlu0 %1942
    %v1944 = vsel %vm1868, %v1691, -inf
    %1945 = vmax.xlane.f32.xlu0 %v1944
    %v1946 = vpop.xlane.xlu0 %1945
    %v1947 = vsel %vm1868, %v1694, -inf
    %1948 = vmax.xlane.f32.xlu0 %v1947
    %v1949 = vpop.xlane.xlu0 %1948
    %v1950 = vsel %vm1868, %v1696, -inf
    %1951 = vmax.xlane.f32.xlu0 %v1950
    %v1952 = vpop.xlane.xlu0 %1951
    %v1953 = vsel %vm1868, %v1699, -inf
    %1954 = vmax.xlane.f32.xlu0 %v1953
    %v1955 = vpop.xlane.xlu0 %1954
    %v1956 = vsel %vm1868, %v1701, -inf
    %1957 = vmax.xlane.f32.xlu0 %v1956
    %v1958 = vpop.xlane.xlu0 %1957
    %v1959 = vsel %vm1868, %v1704, -inf
    %1960 = vmax.xlane.f32.xlu0 %v1959
    %v1961 = vpop.xlane.xlu0 %1960
    %v1962 = vsel %vm1868, %v1706, -inf
    %1963 = vmax.xlane.f32.xlu0 %v1962
    %v1964 = vpop.xlane.xlu0 %1963
    %v1965 = vsel %vm1868, %v1709, -inf
    %1966 = vmax.xlane.f32.xlu0 %v1965
    %v1967 = vpop.xlane.xlu0 %1966
    %v1968 = vsel %vm1868, %v1711, -inf
    %1969 = vmax.xlane.f32.xlu0 %v1968
    %v1970 = vpop.xlane.xlu0 %1969
    %v1971 = vsel %vm1868, %v1714, -inf
    %1972 = vmax.xlane.f32.xlu0 %v1971
    %v1973 = vpop.xlane.xlu0 %1972
    %v1974 = vsel %vm1868, %v1716, -inf
    %1975 = vmax.xlane.f32.xlu0 %v1974
    %v1976 = vpop.xlane.xlu0 %1975
    %v1977 = vsel %vm1868, %v1719, -inf
    %1978 = vmax.xlane.f32.xlu0 %v1977
    %v1979 = vpop.xlane.xlu0 %1978
    %v1980 = vsel %vm1868, %v1721, -inf
    %1981 = vmax.xlane.f32.xlu0 %v1980
    %v1982 = vpop.xlane.xlu0 %1981
    %v1983 = vsel %vm1868, %v1724, -inf
    %1984 = vmax.xlane.f32.xlu0 %v1983
    %v1985 = vpop.xlane.xlu0 %1984
    %v1986 = vsel %vm1868, %v1726, -inf
    %1987 = vmax.xlane.f32.xlu0 %v1986
    %v1988 = vpop.xlane.xlu0 %1987
    %v1989 = vsel %vm1868, %v1729, -inf
    %1990 = vmax.xlane.f32.xlu0 %v1989
    %v1991 = vpop.xlane.xlu0 %1990
    %v1992 = vsel %vm1868, %v1731, -inf
    %1993 = vmax.xlane.f32.xlu0 %v1992
    %v1994 = vpop.xlane.xlu0 %1993
    %v1995 = vsel %vm1868, %v1734, -inf
    %1996 = vmax.xlane.f32.xlu0 %v1995
    %v1997 = vpop.xlane.xlu0 %1996
    %v1998 = vsel %vm1868, %v1736, -inf
    %1999 = vmax.xlane.f32.xlu0 %v1998
    %v2000 = vpop.xlane.xlu0 %1999
    %v2001 = vsel %vm1868, %v1739, -inf
    %2002 = vmax.xlane.f32.xlu0 %v2001
    %v2003 = vpop.xlane.xlu0 %2002
    %v2004 = vsel %vm1868, %v1741, -inf
    %2005 = vmax.xlane.f32.xlu0 %v2004
    %v2006 = vpop.xlane.xlu0 %2005
    %v2007 = vsel %vm1868, %v1744, -inf
    %2008 = vmax.xlane.f32.xlu0 %v2007
    %v2009 = vpop.xlane.xlu0 %2008
    %v2010 = vsel %vm1868, %v1746, -inf
    %2011 = vmax.xlane.f32.xlu0 %v2010
    %v2012 = vpop.xlane.xlu0 %2011
    %v2013 = vsel %vm1868, %v1749, -inf
    %2014 = vmax.xlane.f32.xlu0 %v2013
    %v2015 = vpop.xlane.xlu0 %2014
    %v2016 = vsel %vm1868, %v1751, -inf
    %2017 = vmax.xlane.f32.xlu0 %v2016
    %v2018 = vpop.xlane.xlu0 %2017
    %v2019 = vsel %vm1868, %v1754, -inf
    %2020 = vmax.xlane.f32.xlu0 %v2019
    %v2021 = vpop.xlane.xlu0 %2020
    %v2022 = vsel %vm1868, %v1756, -inf
    %2023 = vmax.xlane.f32.xlu0 %v2022
    %v2024 = vpop.xlane.xlu0 %2023
    %v2025 = vsel %vm1868, %v1759, -inf
    %2026 = vmax.xlane.f32.xlu0 %v2025
    %v2027 = vpop.xlane.xlu0 %2026
    %v2028 = vsel %vm1868, %v1761, -inf
    %2029 = vmax.xlane.f32.xlu0 %v2028
    %v2030 = vpop.xlane.xlu0 %2029
    %v2031 = vsel %vm1868, %v1764, -inf
    %2032 = vmax.xlane.f32.xlu0 %v2031
    %v2033 = vpop.xlane.xlu0 %2032
    %v2034 = vsel %vm1868, %v1766, -inf
    %2035 = vmax.xlane.f32.xlu0 %v2034
    %v2036 = vpop.xlane.xlu0 %2035
    %v2037 = vsel %vm1868, %v1769, -inf
    %2038 = vmax.xlane.f32.xlu0 %v2037
    %v2039 = vpop.xlane.xlu0 %2038
    %v2040 = vsel %vm1868, %v1771, -inf
    %2041 = vmax.xlane.f32.xlu0 %v2040
    %v2042 = vpop.xlane.xlu0 %2041
    %v2043 = vsel %vm1868, %v1774, -inf
    %2044 = vmax.xlane.f32.xlu0 %v2043
    %v2045 = vpop.xlane.xlu0 %2044
    %v2046 = vsel %vm1868, %v1776, -inf
    %2047 = vmax.xlane.f32.xlu0 %v2046
    %v2048 = vpop.xlane.xlu0 %2047
    %v2049 = vsel %vm1868, %v1779, -inf
    %2050 = vmax.xlane.f32.xlu0 %v2049
    %v2051 = vpop.xlane.xlu0 %2050
    %v2052 = vsel %vm1868, %v1781, -inf
    %2053 = vmax.xlane.f32.xlu0 %v2052
    %v2054 = vpop.xlane.xlu0 %2053
    %v2055 = vsel %vm1868, %v1784, -inf
    %2056 = vmax.xlane.f32.xlu0 %v2055
    %v2057 = vpop.xlane.xlu0 %2056
    %v2058 = vsel %vm1868, %v1786, -inf
    %2059 = vmax.xlane.f32.xlu0 %v2058
    %v2060 = vpop.xlane.xlu0 %2059
    %v2061 = vsel %vm1868, %v1789, -inf
    %2062 = vmax.xlane.f32.xlu0 %v2061
    %v2063 = vpop.xlane.xlu0 %2062
    %v2064 = vsel %vm1868, %v1791, -inf
    %2065 = vmax.xlane.f32.xlu0 %v2064
    %v2066 = vpop.xlane.xlu0 %2065
    %v2067 = vsel %vm1868, %v1794, -inf
    %2068 = vmax.xlane.f32.xlu0 %v2067
    %v2069 = vpop.xlane.xlu0 %2068
    %v2070 = vsel %vm1868, %v1796, -inf
    %2071 = vmax.xlane.f32.xlu0 %v2070
    %v2072 = vpop.xlane.xlu0 %2071
    %v2073 = vsel %vm1868, %v1799, -inf
    %2074 = vmax.xlane.f32.xlu0 %v2073
    %v2075 = vpop.xlane.xlu0 %2074
    %v2076 = vsel %vm1868, %v1801, -inf
    %2077 = vmax.xlane.f32.xlu0 %v2076
    %v2078 = vpop.xlane.xlu0 %2077
    %v2079 = vsel %vm1868, %v1804, -inf
    %2080 = vmax.xlane.f32.xlu0 %v2079
    %v2081 = vpop.xlane.xlu0 %2080
    %v2082 = vsel %vm1868, %v1806, -inf
    %2083 = vmax.xlane.f32.xlu0 %v2082
    %v2084 = vpop.xlane.xlu0 %2083
    %v2085 = vsel %vm1868, %v1809, -inf
    %2086 = vmax.xlane.f32.xlu0 %v2085
    %v2087 = vpop.xlane.xlu0 %2086
    %v2088 = vsel %vm1868, %v1811, -inf
    %2089 = vmax.xlane.f32.xlu0 %v2088
    %v2090 = vpop.xlane.xlu0 %2089
    %v2091 = vsel %vm1868, %v1814, -inf
    %2092 = vmax.xlane.f32.xlu0 %v2091
    %v2093 = vpop.xlane.xlu0 %2092
    %v2094 = vsel %vm1868, %v1816, -inf
    %2095 = vmax.xlane.f32.xlu0 %v2094
    %v2096 = vpop.xlane.xlu0 %2095
    %v2097 = vsel %vm1868, %v1819, -inf
    %2098 = vmax.xlane.f32.xlu0 %v2097
    %v2099 = vpop.xlane.xlu0 %2098
    %v2100 = vsel %vm1868, %v1821, -inf
    %2101 = vmax.xlane.f32.xlu0 %v2100
    %v2102 = vpop.xlane.xlu0 %2101
    %v2103 = vsel %vm1868, %v1824, -inf
    %2104 = vmax.xlane.f32.xlu0 %v2103
    %v2105 = vpop.xlane.xlu0 %2104
    %v2106 = vsel %vm1868, %v1826, -inf
    %2107 = vmax.xlane.f32.xlu0 %v2106
    %v2108 = vpop.xlane.xlu0 %2107
    %v2109 = vsel %vm1868, %v1829, -inf
    %2110 = vmax.xlane.f32.xlu0 %v2109
    %v2111 = vpop.xlane.xlu0 %2110
    %v2112 = vsel %vm1868, %v1831, -inf
    %2113 = vmax.xlane.f32.xlu0 %v2112
    %v2114 = vpop.xlane.xlu0 %2113
    %v2115 = vsel %vm1868, %v1834, -inf
    %2116 = vmax.xlane.f32.xlu0 %v2115
    %v2117 = vpop.xlane.xlu0 %2116
    %v2118 = vsel %vm1868, %v1836, -inf
    %2119 = vmax.xlane.f32.xlu0 %v2118
    %v2120 = vpop.xlane.xlu0 %2119
    %v2121 = vsel %vm1868, %v1839, -inf
    %2122 = vmax.xlane.f32.xlu0 %v2121
    %v2123 = vpop.xlane.xlu0 %2122
    %v2124 = vsel %vm1868, %v1841, -inf
    %2125 = vmax.xlane.f32.xlu0 %v2124
    %v2126 = vpop.xlane.xlu0 %2125
    %v2127 = vsel %vm1868, %v1844, -inf
    %2128 = vmax.xlane.f32.xlu0 %v2127
    %v2129 = vpop.xlane.xlu0 %2128
    %v2130 = vsel %vm1868, %v1846, -inf
    %2131 = vmax.xlane.f32.xlu0 %v2130
    %v2132 = vpop.xlane.xlu0 %2131
    %v2133 = vsel %vm1868, %v1849, -inf
    %2134 = vmax.xlane.f32.xlu0 %v2133
    %v2135 = vpop.xlane.xlu0 %2134
    %v2136 = vsel %vm1868, %v1851, -inf
    %2137 = vmax.xlane.f32.xlu0 %v2136
    %v2138 = vpop.xlane.xlu0 %2137
    %v2139 = vsel %vm1868, %v1854, -inf
    %2140 = vmax.xlane.f32.xlu0 %v2139
    %v2141 = vpop.xlane.xlu0 %2140
    %v2142 = vsel %vm1868, %v1856, -inf
    %2143 = vmax.xlane.f32.xlu0 %v2142
    %v2144 = vpop.xlane.xlu0 %2143
    %v2145 = vsel %vm1868, %v1859, -inf
    %2146 = vmax.xlane.f32.xlu0 %v2145
    %v2147 = vpop.xlane.xlu0 %2146
    %v2148 = vsel %vm1868, %v1861, -inf
    %2149 = vmax.xlane.f32.xlu0 %v2148
    %v2150 = vpop.xlane.xlu0 %2149
    %v2151 = vsel %vm1868, %v1864, -inf
    %2152 = vmax.xlane.f32.xlu0 %v2151
    %v2153 = vpop.xlane.xlu0 %2152
    %v2154 = vsel %vm1868, %v1866, -inf
    %2155 = vmax.xlane.f32.xlu0 %v2154
    %v2156 = vpop.xlane.xlu0 %2155
    %v2157 = vsub.f32 %v1629, %v1871
    %v2158 = vsub.f32 %v1631, %v1874
    %v2159 = vsub.f32 %v1634, %v1877
    %v2160 = vsub.f32 %v1636, %v1880
    %v2161 = vsub.f32 %v1639, %v1883
    %v2162 = vsub.f32 %v1641, %v1886
    %v2163 = vsub.f32 %v1644, %v1889
    %v2164 = vsub.f32 %v1646, %v1892
    %v2165 = vsub.f32 %v1649, %v1895
    %v2166 = vsub.f32 %v1651, %v1898
    %v2167 = vsub.f32 %v1654, %v1901
    %v2168 = vsub.f32 %v1656, %v1904
    %v2169 = vsub.f32 %v1659, %v1907
    %v2170 = vsub.f32 %v1661, %v1910
    %v2171 = vsub.f32 %v1664, %v1913
    %v2172 = vsub.f32 %v1666, %v1916
    %v2173 = vsub.f32 %v1669, %v1919
    %v2174 = vsub.f32 %v1671, %v1922
    %v2175 = vsub.f32 %v1674, %v1925
    %v2176 = vsub.f32 %v1676, %v1928
    %v2177 = vsub.f32 %v1679, %v1931
    %v2178 = vsub.f32 %v1681, %v1934
    %v2179 = vsub.f32 %v1684, %v1937
    %v2180 = vsub.f32 %v1686, %v1940
    %v2181 = vsub.f32 %v1689, %v1943
    %v2182 = vsub.f32 %v1691, %v1946
    %v2183 = vsub.f32 %v1694, %v1949
    %v2184 = vsub.f32 %v1696, %v1952
    %v2185 = vsub.f32 %v1699, %v1955
    %v2186 = vsub.f32 %v1701, %v1958
    %v2187 = vsub.f32 %v1704, %v1961
    %v2188 = vsub.f32 %v1706, %v1964
    %v2189 = vsub.f32 %v1709, %v1967
    %v2190 = vsub.f32 %v1711, %v1970
    %v2191 = vsub.f32 %v1714, %v1973
    %v2192 = vsub.f32 %v1716, %v1976
    %v2193 = vsub.f32 %v1719, %v1979
    %v2194 = vsub.f32 %v1721, %v1982
    %v2195 = vsub.f32 %v1724, %v1985
    %v2196 = vsub.f32 %v1726, %v1988
    %v2197 = vsub.f32 %v1729, %v1991
    %v2198 = vsub.f32 %v1731, %v1994
    %v2199 = vsub.f32 %v1734, %v1997
    %v2200 = vsub.f32 %v1736, %v2000
    %v2201 = vsub.f32 %v1739, %v2003
    %v2202 = vsub.f32 %v1741, %v2006
    %v2203 = vsub.f32 %v1744, %v2009
    %v2204 = vsub.f32 %v1746, %v2012
    %v2205 = vsub.f32 %v1749, %v2015
    %v2206 = vsub.f32 %v1751, %v2018
    %v2207 = vsub.f32 %v1754, %v2021
    %v2208 = vsub.f32 %v1756, %v2024
    %v2209 = vsub.f32 %v1759, %v2027
    %v2210 = vsub.f32 %v1761, %v2030
    %v2211 = vsub.f32 %v1764, %v2033
    %v2212 = vsub.f32 %v1766, %v2036
    %v2213 = vsub.f32 %v1769, %v2039
    %v2214 = vsub.f32 %v1771, %v2042
    %v2215 = vsub.f32 %v1774, %v2045
    %v2216 = vsub.f32 %v1776, %v2048
    %v2217 = vsub.f32 %v1779, %v2051
    %v2218 = vsub.f32 %v1781, %v2054
    %v2219 = vsub.f32 %v1784, %v2057
    %v2220 = vsub.f32 %v1786, %v2060
    %v2221 = vsub.f32 %v1789, %v2063
    %v2222 = vsub.f32 %v1791, %v2066
    %v2223 = vsub.f32 %v1794, %v2069
    %v2224 = vsub.f32 %v1796, %v2072
    %v2225 = vsub.f32 %v1799, %v2075
    %v2226 = vsub.f32 %v1801, %v2078
    %v2227 = vsub.f32 %v1804, %v2081
    %v2228 = vsub.f32 %v1806, %v2084
    %v2229 = vsub.f32 %v1809, %v2087
    %v2230 = vsub.f32 %v1811, %v2090
    %v2231 = vsub.f32 %v1814, %v2093
    %v2232 = vsub.f32 %v1816, %v2096
    %v2233 = vsub.f32 %v1819, %v2099
    %v2234 = vsub.f32 %v1821, %v2102
    %v2235 = vsub.f32 %v1824, %v2105
    %v2236 = vsub.f32 %v1826, %v2108
    %v2237 = vsub.f32 %v1829, %v2111
    %v2238 = vsub.f32 %v1831, %v2114
    %v2239 = vsub.f32 %v1834, %v2117
    %v2240 = vsub.f32 %v1836, %v2120
    %v2241 = vsub.f32 %v1839, %v2123
    %v2242 = vsub.f32 %v1841, %v2126
    %v2243 = vsub.f32 %v1844, %v2129
    %v2244 = vsub.f32 %v1846, %v2132
    %v2245 = vsub.f32 %v1849, %v2135
    %v2246 = vsub.f32 %v1851, %v2138
    %v2247 = vsub.f32 %v1854, %v2141
    %v2248 = vsub.f32 %v1856, %v2144
    %v2249 = vsub.f32 %v1859, %v2147
    %v2250 = vsub.f32 %v1861, %v2150
    %v2251 = vsub.f32 %v1864, %v2153
    %v2252 = vsub.f32 %v1866, %v2156
    %v2253 = vmul.f32 %v2157, 1.442695
    %v2254 = vpow.pop %v2253
    %v2255 = vmul.f32 %v2158, 1.442695
    %v2256 = vpow.pop %v2255
    %v2257 = vmul.f32 %v2159, 1.442695
    %v2258 = vpow.pop %v2257
    %v2259 = vmul.f32 %v2160, 1.442695
    %v2260 = vpow.pop %v2259
    %v2261 = vmul.f32 %v2161, 1.442695
    %v2262 = vpow.pop %v2261
    %v2263 = vmul.f32 %v2162, 1.442695
    %v2264 = vpow.pop %v2263
    %v2265 = vmul.f32 %v2163, 1.442695
    %v2266 = vpow.pop %v2265
    %v2267 = vmul.f32 %v2164, 1.442695
    %v2268 = vpow.pop %v2267
    %v2269 = vmul.f32 %v2165, 1.442695
    %v2270 = vpow.pop %v2269
    %v2271 = vmul.f32 %v2166, 1.442695
    %v2272 = vpow.pop %v2271
    %v2273 = vmul.f32 %v2167, 1.442695
    %v2274 = vpow.pop %v2273
    %v2275 = vmul.f32 %v2168, 1.442695
    %v2276 = vpow.pop %v2275
    %v2277 = vmul.f32 %v2169, 1.442695
    %v2278 = vpow.pop %v2277
    %v2279 = vmul.f32 %v2170, 1.442695
    %v2280 = vpow.pop %v2279
    %v2281 = vmul.f32 %v2171, 1.442695
    %v2282 = vpow.pop %v2281
    %v2283 = vmul.f32 %v2172, 1.442695
    %v2284 = vpow.pop %v2283
    %v2285 = vmul.f32 %v2173, 1.442695
    %v2286 = vpow.pop %v2285
    %v2287 = vmul.f32 %v2174, 1.442695
    %v2288 = vpow.pop %v2287
    %v2289 = vmul.f32 %v2175, 1.442695
    %v2290 = vpow.pop %v2289
    %v2291 = vmul.f32 %v2176, 1.442695
    %v2292 = vpow.pop %v2291
    %v2293 = vmul.f32 %v2177, 1.442695
    %v2294 = vpow.pop %v2293
    %v2295 = vmul.f32 %v2178, 1.442695
    %v2296 = vpow.pop %v2295
    %v2297 = vmul.f32 %v2179, 1.442695
    %v2298 = vpow.pop %v2297
    %v2299 = vmul.f32 %v2180, 1.442695
    %v2300 = vpow.pop %v2299
    %v2301 = vmul.f32 %v2181, 1.442695
    %v2302 = vpow.pop %v2301
    %v2303 = vmul.f32 %v2182, 1.442695
    %v2304 = vpow.pop %v2303
    %v2305 = vmul.f32 %v2183, 1.442695
    %v2306 = vpow.pop %v2305
    %v2307 = vmul.f32 %v2184, 1.442695
    %v2308 = vpow.pop %v2307
    %v2309 = vmul.f32 %v2185, 1.442695
    %v2310 = vpow.pop %v2309
    %v2311 = vmul.f32 %v2186, 1.442695
    %v2312 = vpow.pop %v2311
    %v2313 = vmul.f32 %v2187, 1.442695
    %v2314 = vpow.pop %v2313
    %v2315 = vmul.f32 %v2188, 1.442695
    %v2316 = vpow.pop %v2315
    %v2317 = vmul.f32 %v2189, 1.442695
    %v2318 = vpow.pop %v2317
    %v2319 = vmul.f32 %v2190, 1.442695
    %v2320 = vpow.pop %v2319
    %v2321 = vmul.f32 %v2191, 1.442695
    %v2322 = vpow.pop %v2321
    %v2323 = vmul.f32 %v2192, 1.442695
    %v2324 = vpow.pop %v2323
    %v2325 = vmul.f32 %v2193, 1.442695
    %v2326 = vpow.pop %v2325
    %v2327 = vmul.f32 %v2194, 1.442695
    %v2328 = vpow.pop %v2327
    %v2329 = vmul.f32 %v2195, 1.442695
    %v2330 = vpow.pop %v2329
    %v2331 = vmul.f32 %v2196, 1.442695
    %v2332 = vpow.pop %v2331
    %v2333 = vmul.f32 %v2197, 1.442695
    %v2334 = vpow.pop %v2333
    %v2335 = vmul.f32 %v2198, 1.442695
    %v2336 = vpow.pop %v2335
    %v2337 = vmul.f32 %v2199, 1.442695
    %v2338 = vpow.pop %v2337
    %v2339 = vmul.f32 %v2200, 1.442695
    %v2340 = vpow.pop %v2339
    %v2341 = vmul.f32 %v2201, 1.442695
    %v2342 = vpow.pop %v2341
    %v2343 = vmul.f32 %v2202, 1.442695
    %v2344 = vpow.pop %v2343
    %v2345 = vmul.f32 %v2203, 1.442695
    %v2346 = vpow.pop %v2345
    %v2347 = vmul.f32 %v2204, 1.442695
    %v2348 = vpow.pop %v2347
    %v2349 = vmul.f32 %v2205, 1.442695
    %v2350 = vpow.pop %v2349
    %v2351 = vmul.f32 %v2206, 1.442695
    %v2352 = vpow.pop %v2351
    %v2353 = vmul.f32 %v2207, 1.442695
    %v2354 = vpow.pop %v2353
    %v2355 = vmul.f32 %v2208, 1.442695
    %v2356 = vpow.pop %v2355
    %v2357 = vmul.f32 %v2209, 1.442695
    %v2358 = vpow.pop %v2357
    %v2359 = vmul.f32 %v2210, 1.442695
    %v2360 = vpow.pop %v2359
    %v2361 = vmul.f32 %v2211, 1.442695
    %v2362 = vpow.pop %v2361
    %v2363 = vmul.f32 %v2212, 1.442695
    %v2364 = vpow.pop %v2363
    %v2365 = vmul.f32 %v2213, 1.442695
    %v2366 = vpow.pop %v2365
    %v2367 = vmul.f32 %v2214, 1.442695
    %v2368 = vpow.pop %v2367
    %v2369 = vmul.f32 %v2215, 1.442695
    %v2370 = vpow.pop %v2369
    %v2371 = vmul.f32 %v2216, 1.442695
    %v2372 = vpow.pop %v2371
    %v2373 = vmul.f32 %v2217, 1.442695
    %v2374 = vpow.pop %v2373
    %v2375 = vmul.f32 %v2218, 1.442695
    %v2376 = vpow.pop %v2375
    %v2377 = vmul.f32 %v2219, 1.442695
    %v2378 = vpow.pop %v2377
    %v2379 = vmul.f32 %v2220, 1.442695
    %v2380 = vpow.pop %v2379
    %v2381 = vmul.f32 %v2221, 1.442695
    %v2382 = vpow.pop %v2381
    %v2383 = vmul.f32 %v2222, 1.442695
    %v2384 = vpow.pop %v2383
    %v2385 = vmul.f32 %v2223, 1.442695
    %v2386 = vpow.pop %v2385
    %v2387 = vmul.f32 %v2224, 1.442695
    %v2388 = vpow.pop %v2387
    %v2389 = vmul.f32 %v2225, 1.442695
    %v2390 = vpow.pop %v2389
    %v2391 = vmul.f32 %v2226, 1.442695
    %v2392 = vpow.pop %v2391
    %v2393 = vmul.f32 %v2227, 1.442695
    %v2394 = vpow.pop %v2393
    %v2395 = vmul.f32 %v2228, 1.442695
    %v2396 = vpow.pop %v2395
    %v2397 = vmul.f32 %v2229, 1.442695
    %v2398 = vpow.pop %v2397
    %v2399 = vmul.f32 %v2230, 1.442695
    %v2400 = vpow.pop %v2399
    %v2401 = vmul.f32 %v2231, 1.442695
    %v2402 = vpow.pop %v2401
    %v2403 = vmul.f32 %v2232, 1.442695
    %v2404 = vpow.pop %v2403
    %v2405 = vmul.f32 %v2233, 1.442695
    %v2406 = vpow.pop %v2405
    %v2407 = vmul.f32 %v2234, 1.442695
    %v2408 = vpow.pop %v2407
    %v2409 = vmul.f32 %v2235, 1.442695
    %v2410 = vpow.pop %v2409
    %v2411 = vmul.f32 %v2236, 1.442695
    %v2412 = vpow.pop %v2411
    %v2413 = vmul.f32 %v2237, 1.442695
    %v2414 = vpow.pop %v2413
    %v2415 = vmul.f32 %v2238, 1.442695
    %v2416 = vpow.pop %v2415
    %v2417 = vmul.f32 %v2239, 1.442695
    %v2418 = vpow.pop %v2417
    %v2419 = vmul.f32 %v2240, 1.442695
    %v2420 = vpow.pop %v2419
    %v2421 = vmul.f32 %v2241, 1.442695
    %v2422 = vpow.pop %v2421
    %v2423 = vmul.f32 %v2242, 1.442695
    %v2424 = vpow.pop %v2423
    %v2425 = vmul.f32 %v2243, 1.442695
    %v2426 = vpow.pop %v2425
    %v2427 = vmul.f32 %v2244, 1.442695
    %v2428 = vpow.pop %v2427
    %v2429 = vmul.f32 %v2245, 1.442695
    %v2430 = vpow.pop %v2429
    %v2431 = vmul.f32 %v2246, 1.442695
    %v2432 = vpow.pop %v2431
    %v2433 = vmul.f32 %v2247, 1.442695
    %v2434 = vpow.pop %v2433
    %v2435 = vmul.f32 %v2248, 1.442695
    %v2436 = vpow.pop %v2435
    %v2437 = vmul.f32 %v2249, 1.442695
    %v2438 = vpow.pop %v2437
    %v2439 = vmul.f32 %v2250, 1.442695
    %v2440 = vpow.pop %v2439
    %v2441 = vmul.f32 %v2251, 1.442695
    %v2442 = vpow.pop %v2441
    %v2443 = vmul.f32 %v2252, 1.442695
    %v2444 = vpow.pop %v2443
    %v2445 = vsel %vm1868, %v2254, 0.0
    %2446 = vadd.xlane.f32.xlu0 %v2445
    %v2447 = vpop.xlane.xlu0 %2446
    %v2448 = vsel %vm1868, %v2256, 0.0
    %2449 = vadd.xlane.f32.xlu0 %v2448
    %v2450 = vpop.xlane.xlu0 %2449
    %v2451 = vsel %vm1868, %v2258, 0.0
    %2452 = vadd.xlane.f32.xlu0 %v2451
    %v2453 = vpop.xlane.xlu0 %2452
    %v2454 = vsel %vm1868, %v2260, 0.0
    %2455 = vadd.xlane.f32.xlu0 %v2454
    %v2456 = vpop.xlane.xlu0 %2455
    %v2457 = vsel %vm1868, %v2262, 0.0
    %2458 = vadd.xlane.f32.xlu0 %v2457
    %v2459 = vpop.xlane.xlu0 %2458
    %v2460 = vsel %vm1868, %v2264, 0.0
    %2461 = vadd.xlane.f32.xlu0 %v2460
    %v2462 = vpop.xlane.xlu0 %2461
    %v2463 = vsel %vm1868, %v2266, 0.0
    %2464 = vadd.xlane.f32.xlu0 %v2463
    %v2465 = vpop.xlane.xlu0 %2464
    %v2466 = vsel %vm1868, %v2268, 0.0
    %2467 = vadd.xlane.f32.xlu0 %v2466
    %v2468 = vpop.xlane.xlu0 %2467
    %v2469 = vsel %vm1868, %v2270, 0.0
    %2470 = vadd.xlane.f32.xlu0 %v2469
    %v2471 = vpop.xlane.xlu0 %2470
    %v2472 = vsel %vm1868, %v2272, 0.0
    %2473 = vadd.xlane.f32.xlu0 %v2472
    %v2474 = vpop.xlane.xlu0 %2473
    %v2475 = vsel %vm1868, %v2274, 0.0
    %2476 = vadd.xlane.f32.xlu0 %v2475
    %v2477 = vpop.xlane.xlu0 %2476
    %v2478 = vsel %vm1868, %v2276, 0.0
    %2479 = vadd.xlane.f32.xlu0 %v2478
    %v2480 = vpop.xlane.xlu0 %2479
    %v2481 = vsel %vm1868, %v2278, 0.0
    %2482 = vadd.xlane.f32.xlu0 %v2481
    %v2483 = vpop.xlane.xlu0 %2482
    %v2484 = vsel %vm1868, %v2280, 0.0
    %2485 = vadd.xlane.f32.xlu0 %v2484
    %v2486 = vpop.xlane.xlu0 %2485
    %v2487 = vsel %vm1868, %v2282, 0.0
    %2488 = vadd.xlane.f32.xlu0 %v2487
    %v2489 = vpop.xlane.xlu0 %2488
    %v2490 = vsel %vm1868, %v2284, 0.0
    %2491 = vadd.xlane.f32.xlu0 %v2490
    %v2492 = vpop.xlane.xlu0 %2491
    %v2493 = vsel %vm1868, %v2286, 0.0
    %2494 = vadd.xlane.f32.xlu0 %v2493
    %v2495 = vpop.xlane.xlu0 %2494
    %v2496 = vsel %vm1868, %v2288, 0.0
    %2497 = vadd.xlane.f32.xlu0 %v2496
    %v2498 = vpop.xlane.xlu0 %2497
    %v2499 = vsel %vm1868, %v2290, 0.0
    %2500 = vadd.xlane.f32.xlu0 %v2499
    %v2501 = vpop.xlane.xlu0 %2500
    %v2502 = vsel %vm1868, %v2292, 0.0
    %2503 = vadd.xlane.f32.xlu0 %v2502
    %v2504 = vpop.xlane.xlu0 %2503
    %v2505 = vsel %vm1868, %v2294, 0.0
    %2506 = vadd.xlane.f32.xlu0 %v2505
    %v2507 = vpop.xlane.xlu0 %2506
    %v2508 = vsel %vm1868, %v2296, 0.0
    %2509 = vadd.xlane.f32.xlu0 %v2508
    %v2510 = vpop.xlane.xlu0 %2509
    %v2511 = vsel %vm1868, %v2298, 0.0
    %2512 = vadd.xlane.f32.xlu0 %v2511
    %v2513 = vpop.xlane.xlu0 %2512
    %v2514 = vsel %vm1868, %v2300, 0.0
    %2515 = vadd.xlane.f32.xlu0 %v2514
    %v2516 = vpop.xlane.xlu0 %2515
    %v2517 = vsel %vm1868, %v2302, 0.0
    %2518 = vadd.xlane.f32.xlu0 %v2517
    %v2519 = vpop.xlane.xlu0 %2518
    %v2520 = vsel %vm1868, %v2304, 0.0
    %2521 = vadd.xlane.f32.xlu0 %v2520
    %v2522 = vpop.xlane.xlu0 %2521
    %v2523 = vsel %vm1868, %v2306, 0.0
    %2524 = vadd.xlane.f32.xlu0 %v2523
    %v2525 = vpop.xlane.xlu0 %2524
    %v2526 = vsel %vm1868, %v2308, 0.0
    %2527 = vadd.xlane.f32.xlu0 %v2526
    %v2528 = vpop.xlane.xlu0 %2527
    %v2529 = vsel %vm1868, %v2310, 0.0
    %2530 = vadd.xlane.f32.xlu0 %v2529
    %v2531 = vpop.xlane.xlu0 %2530
    %v2532 = vsel %vm1868, %v2312, 0.0
    %2533 = vadd.xlane.f32.xlu0 %v2532
    %v2534 = vpop.xlane.xlu0 %2533
    %v2535 = vsel %vm1868, %v2314, 0.0
    %2536 = vadd.xlane.f32.xlu0 %v2535
    %v2537 = vpop.xlane.xlu0 %2536
    %v2538 = vsel %vm1868, %v2316, 0.0
    %2539 = vadd.xlane.f32.xlu0 %v2538
    %v2540 = vpop.xlane.xlu0 %2539
    %v2541 = vsel %vm1868, %v2318, 0.0
    %2542 = vadd.xlane.f32.xlu0 %v2541
    %v2543 = vpop.xlane.xlu0 %2542
    %v2544 = vsel %vm1868, %v2320, 0.0
    %2545 = vadd.xlane.f32.xlu0 %v2544
    %v2546 = vpop.xlane.xlu0 %2545
    %v2547 = vsel %vm1868, %v2322, 0.0
    %2548 = vadd.xlane.f32.xlu0 %v2547
    %v2549 = vpop.xlane.xlu0 %2548
    %v2550 = vsel %vm1868, %v2324, 0.0
    %2551 = vadd.xlane.f32.xlu0 %v2550
    %v2552 = vpop.xlane.xlu0 %2551
    %v2553 = vsel %vm1868, %v2326, 0.0
    %2554 = vadd.xlane.f32.xlu0 %v2553
    %v2555 = vpop.xlane.xlu0 %2554
    %v2556 = vsel %vm1868, %v2328, 0.0
    %2557 = vadd.xlane.f32.xlu0 %v2556
    %v2558 = vpop.xlane.xlu0 %2557
    %v2559 = vsel %vm1868, %v2330, 0.0
    %2560 = vadd.xlane.f32.xlu0 %v2559
    %v2561 = vpop.xlane.xlu0 %2560
    %v2562 = vsel %vm1868, %v2332, 0.0
    %2563 = vadd.xlane.f32.xlu0 %v2562
    %v2564 = vpop.xlane.xlu0 %2563
    %v2565 = vsel %vm1868, %v2334, 0.0
    %2566 = vadd.xlane.f32.xlu0 %v2565
    %v2567 = vpop.xlane.xlu0 %2566
    %v2568 = vsel %vm1868, %v2336, 0.0
    %2569 = vadd.xlane.f32.xlu0 %v2568
    %v2570 = vpop.xlane.xlu0 %2569
    %v2571 = vsel %vm1868, %v2338, 0.0
    %2572 = vadd.xlane.f32.xlu0 %v2571
    %v2573 = vpop.xlane.xlu0 %2572
    %v2574 = vsel %vm1868, %v2340, 0.0
    %2575 = vadd.xlane.f32.xlu0 %v2574
    %v2576 = vpop.xlane.xlu0 %2575
    %v2577 = vsel %vm1868, %v2342, 0.0
    %2578 = vadd.xlane.f32.xlu0 %v2577
    %v2579 = vpop.xlane.xlu0 %2578
    %v2580 = vsel %vm1868, %v2344, 0.0
    %2581 = vadd.xlane.f32.xlu0 %v2580
    %v2582 = vpop.xlane.xlu0 %2581
    %v2583 = vsel %vm1868, %v2346, 0.0
    %2584 = vadd.xlane.f32.xlu0 %v2583
    %v2585 = vpop.xlane.xlu0 %2584
    %v2586 = vsel %vm1868, %v2348, 0.0
    %2587 = vadd.xlane.f32.xlu0 %v2586
    %v2588 = vpop.xlane.xlu0 %2587
    %v2589 = vsel %vm1868, %v2350, 0.0
    %2590 = vadd.xlane.f32.xlu0 %v2589
    %v2591 = vpop.xlane.xlu0 %2590
    %v2592 = vsel %vm1868, %v2352, 0.0
    %2593 = vadd.xlane.f32.xlu0 %v2592
    %v2594 = vpop.xlane.xlu0 %2593
    %v2595 = vsel %vm1868, %v2354, 0.0
    %2596 = vadd.xlane.f32.xlu0 %v2595
    %v2597 = vpop.xlane.xlu0 %2596
    %v2598 = vsel %vm1868, %v2356, 0.0
    %2599 = vadd.xlane.f32.xlu0 %v2598
    %v2600 = vpop.xlane.xlu0 %2599
    %v2601 = vsel %vm1868, %v2358, 0.0
    %2602 = vadd.xlane.f32.xlu0 %v2601
    %v2603 = vpop.xlane.xlu0 %2602
    %v2604 = vsel %vm1868, %v2360, 0.0
    %2605 = vadd.xlane.f32.xlu0 %v2604
    %v2606 = vpop.xlane.xlu0 %2605
    %v2607 = vsel %vm1868, %v2362, 0.0
    %2608 = vadd.xlane.f32.xlu0 %v2607
    %v2609 = vpop.xlane.xlu0 %2608
    %v2610 = vsel %vm1868, %v2364, 0.0
    %2611 = vadd.xlane.f32.xlu0 %v2610
    %v2612 = vpop.xlane.xlu0 %2611
    %v2613 = vsel %vm1868, %v2366, 0.0
    %2614 = vadd.xlane.f32.xlu0 %v2613
    %v2615 = vpop.xlane.xlu0 %2614
    %v2616 = vsel %vm1868, %v2368, 0.0
    %2617 = vadd.xlane.f32.xlu0 %v2616
    %v2618 = vpop.xlane.xlu0 %2617
    %v2619 = vsel %vm1868, %v2370, 0.0
    %2620 = vadd.xlane.f32.xlu0 %v2619
    %v2621 = vpop.xlane.xlu0 %2620
    %v2622 = vsel %vm1868, %v2372, 0.0
    %2623 = vadd.xlane.f32.xlu0 %v2622
    %v2624 = vpop.xlane.xlu0 %2623
    %v2625 = vsel %vm1868, %v2374, 0.0
    %2626 = vadd.xlane.f32.xlu0 %v2625
    %v2627 = vpop.xlane.xlu0 %2626
    %v2628 = vsel %vm1868, %v2376, 0.0
    %2629 = vadd.xlane.f32.xlu0 %v2628
    %v2630 = vpop.xlane.xlu0 %2629
    %v2631 = vsel %vm1868, %v2378, 0.0
    %2632 = vadd.xlane.f32.xlu0 %v2631
    %v2633 = vpop.xlane.xlu0 %2632
    %v2634 = vsel %vm1868, %v2380, 0.0
    %2635 = vadd.xlane.f32.xlu0 %v2634
    %v2636 = vpop.xlane.xlu0 %2635
    %v2637 = vsel %vm1868, %v2382, 0.0
    %2638 = vadd.xlane.f32.xlu0 %v2637
    %v2639 = vpop.xlane.xlu0 %2638
    %v2640 = vsel %vm1868, %v2384, 0.0
    %2641 = vadd.xlane.f32.xlu0 %v2640
    %v2642 = vpop.xlane.xlu0 %2641
    %v2643 = vsel %vm1868, %v2386, 0.0
    %2644 = vadd.xlane.f32.xlu0 %v2643
    %v2645 = vpop.xlane.xlu0 %2644
    %v2646 = vsel %vm1868, %v2388, 0.0
    %2647 = vadd.xlane.f32.xlu0 %v2646
    %v2648 = vpop.xlane.xlu0 %2647
    %v2649 = vsel %vm1868, %v2390, 0.0
    %2650 = vadd.xlane.f32.xlu0 %v2649
    %v2651 = vpop.xlane.xlu0 %2650
    %v2652 = vsel %vm1868, %v2392, 0.0
    %2653 = vadd.xlane.f32.xlu0 %v2652
    %v2654 = vpop.xlane.xlu0 %2653
    %v2655 = vsel %vm1868, %v2394, 0.0
    %2656 = vadd.xlane.f32.xlu0 %v2655
    %v2657 = vpop.xlane.xlu0 %2656
    %v2658 = vsel %vm1868, %v2396, 0.0
    %2659 = vadd.xlane.f32.xlu0 %v2658
    %v2660 = vpop.xlane.xlu0 %2659
    %v2661 = vsel %vm1868, %v2398, 0.0
    %2662 = vadd.xlane.f32.xlu0 %v2661
    %v2663 = vpop.xlane.xlu0 %2662
    %v2664 = vsel %vm1868, %v2400, 0.0
    %2665 = vadd.xlane.f32.xlu0 %v2664
    %v2666 = vpop.xlane.xlu0 %2665
    %v2667 = vsel %vm1868, %v2402, 0.0
    %2668 = vadd.xlane.f32.xlu0 %v2667
    %v2669 = vpop.xlane.xlu0 %2668
    %v2670 = vsel %vm1868, %v2404, 0.0
    %2671 = vadd.xlane.f32.xlu0 %v2670
    %v2672 = vpop.xlane.xlu0 %2671
    %v2673 = vsel %vm1868, %v2406, 0.0
    %2674 = vadd.xlane.f32.xlu0 %v2673
    %v2675 = vpop.xlane.xlu0 %2674
    %v2676 = vsel %vm1868, %v2408, 0.0
    %2677 = vadd.xlane.f32.xlu0 %v2676
    %v2678 = vpop.xlane.xlu0 %2677
    %v2679 = vsel %vm1868, %v2410, 0.0
    %2680 = vadd.xlane.f32.xlu0 %v2679
    %v2681 = vpop.xlane.xlu0 %2680
    %v2682 = vsel %vm1868, %v2412, 0.0
    %2683 = vadd.xlane.f32.xlu0 %v2682
    %v2684 = vpop.xlane.xlu0 %2683
    %v2685 = vsel %vm1868, %v2414, 0.0
    %2686 = vadd.xlane.f32.xlu0 %v2685
    %v2687 = vpop.xlane.xlu0 %2686
    %v2688 = vsel %vm1868, %v2416, 0.0
    %2689 = vadd.xlane.f32.xlu0 %v2688
    %v2690 = vpop.xlane.xlu0 %2689
    %v2691 = vsel %vm1868, %v2418, 0.0
    %2692 = vadd.xlane.f32.xlu0 %v2691
    %v2693 = vpop.xlane.xlu0 %2692
    %v2694 = vsel %vm1868, %v2420, 0.0
    %2695 = vadd.xlane.f32.xlu0 %v2694
    %v2696 = vpop.xlane.xlu0 %2695
    %v2697 = vsel %vm1868, %v2422, 0.0
    %2698 = vadd.xlane.f32.xlu0 %v2697
    %v2699 = vpop.xlane.xlu0 %2698
    %v2700 = vsel %vm1868, %v2424, 0.0
    %2701 = vadd.xlane.f32.xlu0 %v2700
    %v2702 = vpop.xlane.xlu0 %2701
    %v2703 = vsel %vm1868, %v2426, 0.0
    %2704 = vadd.xlane.f32.xlu0 %v2703
    %v2705 = vpop.xlane.xlu0 %2704
    %v2706 = vsel %vm1868, %v2428, 0.0
    %2707 = vadd.xlane.f32.xlu0 %v2706
    %v2708 = vpop.xlane.xlu0 %2707
    %v2709 = vsel %vm1868, %v2430, 0.0
    %2710 = vadd.xlane.f32.xlu0 %v2709
    %v2711 = vpop.xlane.xlu0 %2710
    %v2712 = vsel %vm1868, %v2432, 0.0
    %2713 = vadd.xlane.f32.xlu0 %v2712
    %v2714 = vpop.xlane.xlu0 %2713
    %v2715 = vsel %vm1868, %v2434, 0.0
    %2716 = vadd.xlane.f32.xlu0 %v2715
    %v2717 = vpop.xlane.xlu0 %2716
    %v2718 = vsel %vm1868, %v2436, 0.0
    %2719 = vadd.xlane.f32.xlu0 %v2718
    %v2720 = vpop.xlane.xlu0 %2719
    %v2721 = vsel %vm1868, %v2438, 0.0
    %2722 = vadd.xlane.f32.xlu0 %v2721
    %v2723 = vpop.xlane.xlu0 %2722
    %v2724 = vsel %vm1868, %v2440, 0.0
    %2725 = vadd.xlane.f32.xlu0 %v2724
    %v2726 = vpop.xlane.xlu0 %2725
    %v2727 = vsel %vm1868, %v2442, 0.0
    %2728 = vadd.xlane.f32.xlu0 %v2727
    %v2729 = vpop.xlane.xlu0 %2728
    %v2730 = vsel %vm1868, %v2444, 0.0
    %2731 = vadd.xlane.f32.xlu0 %v2730
    %v2732 = vpop.xlane.xlu0 %2731
    %v2733 = vrcp.pop %v2447
    %v2734 = vrcp.pop %v2450
    %v2735 = vrcp.pop %v2453
    %v2736 = vrcp.pop %v2456
    %v2737 = vrcp.pop %v2459
    %v2738 = vrcp.pop %v2462
    %v2739 = vrcp.pop %v2465
    %v2740 = vrcp.pop %v2468
    %v2741 = vrcp.pop %v2471
    %v2742 = vrcp.pop %v2474
    %v2743 = vrcp.pop %v2477
    %v2744 = vrcp.pop %v2480
    %v2745 = vrcp.pop %v2483
    %v2746 = vrcp.pop %v2486
    %v2747 = vrcp.pop %v2489
    %v2748 = vrcp.pop %v2492
    %v2749 = vrcp.pop %v2495
    %v2750 = vrcp.pop %v2498
    %v2751 = vrcp.pop %v2501
    %v2752 = vrcp.pop %v2504
    %v2753 = vrcp.pop %v2507
    %v2754 = vrcp.pop %v2510
    %v2755 = vrcp.pop %v2513
    %v2756 = vrcp.pop %v2516
    %v2757 = vrcp.pop %v2519
    %v2758 = vrcp.pop %v2522
    %v2759 = vrcp.pop %v2525
    %v2760 = vrcp.pop %v2528
    %v2761 = vrcp.pop %v2531
    %v2762 = vrcp.pop %v2534
    %v2763 = vrcp.pop %v2537
    %v2764 = vrcp.pop %v2540
    %v2765 = vrcp.pop %v2543
    %v2766 = vrcp.pop %v2546
    %v2767 = vrcp.pop %v2549
    %v2768 = vrcp.pop %v2552
    %v2769 = vrcp.pop %v2555
    %v2770 = vrcp.pop %v2558
    %v2771 = vrcp.pop %v2561
    %v2772 = vrcp.pop %v2564
    %v2773 = vrcp.pop %v2567
    %v2774 = vrcp.pop %v2570
    %v2775 = vrcp.pop %v2573
    %v2776 = vrcp.pop %v2576
    %v2777 = vrcp.pop %v2579
    %v2778 = vrcp.pop %v2582
    %v2779 = vrcp.pop %v2585
    %v2780 = vrcp.pop %v2588
    %v2781 = vrcp.pop %v2591
    %v2782 = vrcp.pop %v2594
    %v2783 = vrcp.pop %v2597
    %v2784 = vrcp.pop %v2600
    %v2785 = vrcp.pop %v2603
    %v2786 = vrcp.pop %v2606
    %v2787 = vrcp.pop %v2609
    %v2788 = vrcp.pop %v2612
    %v2789 = vrcp.pop %v2615
    %v2790 = vrcp.pop %v2618
    %v2791 = vrcp.pop %v2621
    %v2792 = vrcp.pop %v2624
    %v2793 = vrcp.pop %v2627
    %v2794 = vrcp.pop %v2630
    %v2795 = vrcp.pop %v2633
    %v2796 = vrcp.pop %v2636
    %v2797 = vrcp.pop %v2639
    %v2798 = vrcp.pop %v2642
    %v2799 = vrcp.pop %v2645
    %v2800 = vrcp.pop %v2648
    %v2801 = vrcp.pop %v2651
    %v2802 = vrcp.pop %v2654
    %v2803 = vrcp.pop %v2657
    %v2804 = vrcp.pop %v2660
    %v2805 = vrcp.pop %v2663
    %v2806 = vrcp.pop %v2666
    %v2807 = vrcp.pop %v2669
    %v2808 = vrcp.pop %v2672
    %v2809 = vrcp.pop %v2675
    %v2810 = vrcp.pop %v2678
    %v2811 = vrcp.pop %v2681
    %v2812 = vrcp.pop %v2684
    %v2813 = vrcp.pop %v2687
    %v2814 = vrcp.pop %v2690
    %v2815 = vrcp.pop %v2693
    %v2816 = vrcp.pop %v2696
    %v2817 = vrcp.pop %v2699
    %v2818 = vrcp.pop %v2702
    %v2819 = vrcp.pop %v2705
    %v2820 = vrcp.pop %v2708
    %v2821 = vrcp.pop %v2711
    %v2822 = vrcp.pop %v2714
    %v2823 = vrcp.pop %v2717
    %v2824 = vrcp.pop %v2720
    %v2825 = vrcp.pop %v2723
    %v2826 = vrcp.pop %v2726
    %v2827 = vrcp.pop %v2729
    %v2828 = vrcp.pop %v2732
    %v2829 = vmul.f32 %v2254, %v2733
    %v2830 = vmul.f32 %v2256, %v2734
    %v2831 = vmul.f32 %v2258, %v2735
    %v2832 = vmul.f32 %v2260, %v2736
    %v2833 = vmul.f32 %v2262, %v2737
    %v2834 = vmul.f32 %v2264, %v2738
    %v2835 = vmul.f32 %v2266, %v2739
    %v2836 = vmul.f32 %v2268, %v2740
    %v2837 = vmul.f32 %v2270, %v2741
    %v2838 = vmul.f32 %v2272, %v2742
    %v2839 = vmul.f32 %v2274, %v2743
    %v2840 = vmul.f32 %v2276, %v2744
    %v2841 = vmul.f32 %v2278, %v2745
    %v2842 = vmul.f32 %v2280, %v2746
    %v2843 = vmul.f32 %v2282, %v2747
    %v2844 = vmul.f32 %v2284, %v2748
    %v2845 = vmul.f32 %v2286, %v2749
    %v2846 = vmul.f32 %v2288, %v2750
    %v2847 = vmul.f32 %v2290, %v2751
    %v2848 = vmul.f32 %v2292, %v2752
    %v2849 = vmul.f32 %v2294, %v2753
    %v2850 = vmul.f32 %v2296, %v2754
    %v2851 = vmul.f32 %v2298, %v2755
    %v2852 = vmul.f32 %v2300, %v2756
    %v2853 = vmul.f32 %v2302, %v2757
    %v2854 = vmul.f32 %v2304, %v2758
    %v2855 = vmul.f32 %v2306, %v2759
    %v2856 = vmul.f32 %v2308, %v2760
    %v2857 = vmul.f32 %v2310, %v2761
    %v2858 = vmul.f32 %v2312, %v2762
    %v2859 = vmul.f32 %v2314, %v2763
    %v2860 = vmul.f32 %v2316, %v2764
    %v2861 = vmul.f32 %v2318, %v2765
    %v2862 = vmul.f32 %v2320, %v2766
    %v2863 = vmul.f32 %v2322, %v2767
    %v2864 = vmul.f32 %v2324, %v2768
    %v2865 = vmul.f32 %v2326, %v2769
    %v2866 = vmul.f32 %v2328, %v2770
    %v2867 = vmul.f32 %v2330, %v2771
    %v2868 = vmul.f32 %v2332, %v2772
    %v2869 = vmul.f32 %v2334, %v2773
    %v2870 = vmul.f32 %v2336, %v2774
    %v2871 = vmul.f32 %v2338, %v2775
    %v2872 = vmul.f32 %v2340, %v2776
    %v2873 = vmul.f32 %v2342, %v2777
    %v2874 = vmul.f32 %v2344, %v2778
    %v2875 = vmul.f32 %v2346, %v2779
    %v2876 = vmul.f32 %v2348, %v2780
    %v2877 = vmul.f32 %v2350, %v2781
    %v2878 = vmul.f32 %v2352, %v2782
    %v2879 = vmul.f32 %v2354, %v2783
    %v2880 = vmul.f32 %v2356, %v2784
    %v2881 = vmul.f32 %v2358, %v2785
    %v2882 = vmul.f32 %v2360, %v2786
    %v2883 = vmul.f32 %v2362, %v2787
    %v2884 = vmul.f32 %v2364, %v2788
    %v2885 = vmul.f32 %v2366, %v2789
    %v2886 = vmul.f32 %v2368, %v2790
    %v2887 = vmul.f32 %v2370, %v2791
    %v2888 = vmul.f32 %v2372, %v2792
    %v2889 = vmul.f32 %v2374, %v2793
    %v2890 = vmul.f32 %v2376, %v2794
    %v2891 = vmul.f32 %v2378, %v2795
    %v2892 = vmul.f32 %v2380, %v2796
    %v2893 = vmul.f32 %v2382, %v2797
    %v2894 = vmul.f32 %v2384, %v2798
    %v2895 = vmul.f32 %v2386, %v2799
    %v2896 = vmul.f32 %v2388, %v2800
    %v2897 = vmul.f32 %v2390, %v2801
    %v2898 = vmul.f32 %v2392, %v2802
    %v2899 = vmul.f32 %v2394, %v2803
    %v2900 = vmul.f32 %v2396, %v2804
    %v2901 = vmul.f32 %v2398, %v2805
    %v2902 = vmul.f32 %v2400, %v2806
    %v2903 = vmul.f32 %v2402, %v2807
    %v2904 = vmul.f32 %v2404, %v2808
    %v2905 = vmul.f32 %v2406, %v2809
    %v2906 = vmul.f32 %v2408, %v2810
    %v2907 = vmul.f32 %v2410, %v2811
    %v2908 = vmul.f32 %v2412, %v2812
    %v2909 = vmul.f32 %v2414, %v2813
    %v2910 = vmul.f32 %v2416, %v2814
    %v2911 = vmul.f32 %v2418, %v2815
    %v2912 = vmul.f32 %v2420, %v2816
    %v2913 = vmul.f32 %v2422, %v2817
    %v2914 = vmul.f32 %v2424, %v2818
    %v2915 = vmul.f32 %v2426, %v2819
    %v2916 = vmul.f32 %v2428, %v2820
    %v2917 = vmul.f32 %v2430, %v2821
    %v2918 = vmul.f32 %v2432, %v2822
    %v2919 = vmul.f32 %v2434, %v2823
    %v2920 = vmul.f32 %v2436, %v2824
    %v2921 = vmul.f32 %v2438, %v2825
    %v2922 = vmul.f32 %v2440, %v2826
    %v2923 = vmul.f32 %v2442, %v2827
    %v2924 = vmul.f32 %v2444, %v2828
    %v2925 = vpack.c.bf16 %v2830, %v2829
    %v2926 = vpack.c.bf16 %v2832, %v2831
    %v2927 = vpack.c.bf16 %v2834, %v2833
    %v2928 = vpack.c.bf16 %v2836, %v2835
    %v2929 = vpack.c.bf16 %v2838, %v2837
    %v2930 = vpack.c.bf16 %v2840, %v2839
    %v2931 = vpack.c.bf16 %v2842, %v2841
    %v2932 = vpack.c.bf16 %v2844, %v2843
    %v2933 = vpack.c.bf16 %v2846, %v2845
    %v2934 = vpack.c.bf16 %v2848, %v2847
    %v2935 = vpack.c.bf16 %v2850, %v2849
    %v2936 = vpack.c.bf16 %v2852, %v2851
    %v2937 = vpack.c.bf16 %v2854, %v2853
    %v2938 = vpack.c.bf16 %v2856, %v2855
    %v2939 = vpack.c.bf16 %v2858, %v2857
    %v2940 = vpack.c.bf16 %v2860, %v2859
    %v2941 = vpack.c.bf16 %v2862, %v2861
    %v2942 = vpack.c.bf16 %v2864, %v2863
    %v2943 = vpack.c.bf16 %v2866, %v2865
    %v2944 = vpack.c.bf16 %v2868, %v2867
    %v2945 = vpack.c.bf16 %v2870, %v2869
    %v2946 = vpack.c.bf16 %v2872, %v2871
    %v2947 = vpack.c.bf16 %v2874, %v2873
    %v2948 = vpack.c.bf16 %v2876, %v2875
    %v2949 = vpack.c.bf16 %v2878, %v2877
    %v2950 = vpack.c.bf16 %v2880, %v2879
    %v2951 = vpack.c.bf16 %v2882, %v2881
    %v2952 = vpack.c.bf16 %v2884, %v2883
    %v2953 = vpack.c.bf16 %v2886, %v2885
    %v2954 = vpack.c.bf16 %v2888, %v2887
    %v2955 = vpack.c.bf16 %v2890, %v2889
    %v2956 = vpack.c.bf16 %v2892, %v2891
    %v2957 = vpack.c.bf16 %v2894, %v2893
    %v2958 = vpack.c.bf16 %v2896, %v2895
    %v2959 = vpack.c.bf16 %v2898, %v2897
    %v2960 = vpack.c.bf16 %v2900, %v2899
    %v2961 = vpack.c.bf16 %v2902, %v2901
    %v2962 = vpack.c.bf16 %v2904, %v2903
    %v2963 = vpack.c.bf16 %v2906, %v2905
    %v2964 = vpack.c.bf16 %v2908, %v2907
    %v2965 = vpack.c.bf16 %v2910, %v2909
    %v2966 = vpack.c.bf16 %v2912, %v2911
    %v2967 = vpack.c.bf16 %v2914, %v2913
    %v2968 = vpack.c.bf16 %v2916, %v2915
    %v2969 = vpack.c.bf16 %v2918, %v2917
    %v2970 = vpack.c.bf16 %v2920, %v2919
    %v2971 = vpack.c.bf16 %v2922, %v2921
    %v2972 = vpack.c.bf16 %v2924, %v2923
    %v2973 = vpack.c.bf16 %v1400, %v1398
    %v2974 = vpack.c.bf16 %v1405, %v1403
    %v2975 = vpack.c.bf16 %v1410, %v1408
    %v2976 = vpack.c.bf16 %v1415, %v1413
    %v2977 = vpack.c.bf16 %v1420, %v1418
    %v2978 = vpack.c.bf16 %v1425, %v1423
    %v2980 = vsel %vm1868, %v2925, 0
    %v2983 = vsel %vm1868, %v2926, 0
    %v2986 = vsel %vm1868, %v2927, 0
    %v2989 = vsel %vm1868, %v2928, 0
    %v2992 = vsel %vm1868, %v2929, 0
    %v2995 = vsel %vm1868, %v2930, 0
    %v2998 = vsel %vm1868, %v2931, 0
    %v3001 = vsel %vm1868, %v2932, 0
    %v3004 = vsel %vm1868, %v2933, 0
    %v3007 = vsel %vm1868, %v2934, 0
    %v3010 = vsel %vm1868, %v2935, 0
    %v3013 = vsel %vm1868, %v2936, 0
    %v3016 = vsel %vm1868, %v2937, 0
    %v3019 = vsel %vm1868, %v2938, 0
    %v3022 = vsel %vm1868, %v2939, 0
    %v3025 = vsel %vm1868, %v2940, 0
    %v3028 = vsel %vm1868, %v2941, 0
    %v3031 = vsel %vm1868, %v2942, 0
    %v3034 = vsel %vm1868, %v2943, 0
    %v3037 = vsel %vm1868, %v2944, 0
    %v3040 = vsel %vm1868, %v2945, 0
    %v3043 = vsel %vm1868, %v2946, 0
    %v3046 = vsel %vm1868, %v2947, 0
    %v3049 = vsel %vm1868, %v2948, 0
    %v3052 = vsel %vm1868, %v2949, 0
    %v3055 = vsel %vm1868, %v2950, 0
    %v3058 = vsel %vm1868, %v2951, 0
    %v3061 = vsel %vm1868, %v2952, 0
    %v3064 = vsel %vm1868, %v2953, 0
    %v3067 = vsel %vm1868, %v2954, 0
    %v3070 = vsel %vm1868, %v2955, 0
    %v3073 = vsel %vm1868, %v2956, 0
    %v3076 = vsel %vm1868, %v2957, 0
    %v3079 = vsel %vm1868, %v2958, 0
    %v3082 = vsel %vm1868, %v2959, 0
    %v3085 = vsel %vm1868, %v2960, 0
    %v3088 = vsel %vm1868, %v2961, 0
    %v3091 = vsel %vm1868, %v2962, 0
    %v3094 = vsel %vm1868, %v2963, 0
    %v3097 = vsel %vm1868, %v2964, 0
    %v3100 = vsel %vm1868, %v2965, 0
    %v3103 = vsel %vm1868, %v2966, 0
    %v3106 = vsel %vm1868, %v2967, 0
    %v3109 = vsel %vm1868, %v2968, 0
    %v3112 = vsel %vm1868, %v2969, 0
    %v3115 = vsel %vm1868, %v2970, 0
    %v3118 = vsel %vm1868, %v2971, 0
    %v3121 = vsel %vm1868, %v2972, 0
    %3123 = vmatpush.bf16.msra.mxu0 0
    %3124 = vmatpush.bf16.msra.mxu0 0
    %3125 = vmatpush.bf16.msra.mxu0 %v2978
    %3126 = vmatpush.bf16.msra.mxu0 %v2977
    %3127 = vmatpush.bf16.msra.mxu0 %v2976
    %3128 = vmatpush.bf16.msra.mxu0 %v2975
    %3129 = vmatpush.bf16.msra.mxu0 %v2974
    %3130 = vmatpush.bf16.msra.mxu0 %v2973
    %3131 = vmatmul.bf16.gmra.mxu0 %v2980
    %v3132 = vpop.f32.mrf.mxu0
    %v3133 = vadd.f32 0.0, %v3132
    %v3134 = vpop.f32.mrf.mxu0
    %v3135 = vadd.f32 0.0, %v3134
    %3136 = vmatmul.bf16.gmra.mxu0 %v2983
    %v3137 = vpop.f32.mrf.mxu0
    %v3138 = vadd.f32 0.0, %v3137
    %v3139 = vpop.f32.mrf.mxu0
    %v3140 = vadd.f32 0.0, %v3139
    %3141 = vmatmul.bf16.gmra.mxu0 %v2986
    %v3142 = vpop.f32.mrf.mxu0
    %v3143 = vadd.f32 0.0, %v3142
    %v3144 = vpop.f32.mrf.mxu0
    %v3145 = vadd.f32 0.0, %v3144
    %3146 = vmatmul.bf16.gmra.mxu0 %v2989
    %v3147 = vpop.f32.mrf.mxu0
    %v3148 = vadd.f32 0.0, %v3147
    %v3149 = vpop.f32.mrf.mxu0
    %v3150 = vadd.f32 0.0, %v3149
    %3151 = vmatmul.bf16.gmra.mxu0 %v2992
    %v3152 = vpop.f32.mrf.mxu0
    %v3153 = vadd.f32 0.0, %v3152
    %v3154 = vpop.f32.mrf.mxu0
    %v3155 = vadd.f32 0.0, %v3154
    %3156 = vmatmul.bf16.gmra.mxu0 %v2995
    %v3157 = vpop.f32.mrf.mxu0
    %v3158 = vadd.f32 0.0, %v3157
    %v3159 = vpop.f32.mrf.mxu0
    %v3160 = vadd.f32 0.0, %v3159
    %3161 = vmatmul.bf16.gmra.mxu0 %v2998
    %v3162 = vpop.f32.mrf.mxu0
    %v3163 = vadd.f32 0.0, %v3162
    %v3164 = vpop.f32.mrf.mxu0
    %v3165 = vadd.f32 0.0, %v3164
    %3166 = vmatmul.bf16.gmra.mxu0 %v3001
    %v3167 = vpop.f32.mrf.mxu0
    %v3168 = vadd.f32 0.0, %v3167
    %v3169 = vpop.f32.mrf.mxu0
    %v3170 = vadd.f32 0.0, %v3169
    %3171 = vmatmul.bf16.gmra.mxu0 %v3004
    %v3172 = vpop.f32.mrf.mxu0
    %v3173 = vadd.f32 0.0, %v3172
    %v3174 = vpop.f32.mrf.mxu0
    %v3175 = vadd.f32 0.0, %v3174
    %3176 = vmatmul.bf16.gmra.mxu0 %v3007
    %v3177 = vpop.f32.mrf.mxu0
    %v3178 = vadd.f32 0.0, %v3177
    %v3179 = vpop.f32.mrf.mxu0
    %v3180 = vadd.f32 0.0, %v3179
    %3181 = vmatmul.bf16.gmra.mxu0 %v3010
    %v3182 = vpop.f32.mrf.mxu0
    %v3183 = vadd.f32 0.0, %v3182
    %v3184 = vpop.f32.mrf.mxu0
    %v3185 = vadd.f32 0.0, %v3184
    %3186 = vmatmul.bf16.gmra.mxu0 %v3013
    %v3187 = vpop.f32.mrf.mxu0
    %v3188 = vadd.f32 0.0, %v3187
    %v3189 = vpop.f32.mrf.mxu0
    %v3190 = vadd.f32 0.0, %v3189
    %3191 = vmatmul.bf16.gmra.mxu0 %v3016
    %v3192 = vpop.f32.mrf.mxu0
    %v3193 = vadd.f32 0.0, %v3192
    %v3194 = vpop.f32.mrf.mxu0
    %v3195 = vadd.f32 0.0, %v3194
    %3196 = vmatmul.bf16.gmra.mxu0 %v3019
    %v3197 = vpop.f32.mrf.mxu0
    %v3198 = vadd.f32 0.0, %v3197
    %v3199 = vpop.f32.mrf.mxu0
    %v3200 = vadd.f32 0.0, %v3199
    %3201 = vmatmul.bf16.gmra.mxu0 %v3022
    %v3202 = vpop.f32.mrf.mxu0
    %v3203 = vadd.f32 0.0, %v3202
    %v3204 = vpop.f32.mrf.mxu0
    %v3205 = vadd.f32 0.0, %v3204
    %3206 = vmatmul.bf16.gmra.mxu0 %v3025
    %v3207 = vpop.f32.mrf.mxu0
    %v3208 = vadd.f32 0.0, %v3207
    %v3209 = vpop.f32.mrf.mxu0
    %v3210 = vadd.f32 0.0, %v3209
    %3211 = vmatmul.bf16.gmra.mxu0 %v3028
    %v3212 = vpop.f32.mrf.mxu0
    %v3213 = vadd.f32 0.0, %v3212
    %v3214 = vpop.f32.mrf.mxu0
    %v3215 = vadd.f32 0.0, %v3214
    %3216 = vmatmul.bf16.gmra.mxu0 %v3031
    %v3217 = vpop.f32.mrf.mxu0
    %v3218 = vadd.f32 0.0, %v3217
    %v3219 = vpop.f32.mrf.mxu0
    %v3220 = vadd.f32 0.0, %v3219
    %3221 = vmatmul.bf16.gmra.mxu0 %v3034
    %v3222 = vpop.f32.mrf.mxu0
    %v3223 = vadd.f32 0.0, %v3222
    %v3224 = vpop.f32.mrf.mxu0
    %v3225 = vadd.f32 0.0, %v3224
    %3226 = vmatmul.bf16.gmra.mxu0 %v3037
    %v3227 = vpop.f32.mrf.mxu0
    %v3228 = vadd.f32 0.0, %v3227
    %v3229 = vpop.f32.mrf.mxu0
    %v3230 = vadd.f32 0.0, %v3229
    %3231 = vmatmul.bf16.gmra.mxu0 %v3040
    %v3232 = vpop.f32.mrf.mxu0
    %v3233 = vadd.f32 0.0, %v3232
    %v3234 = vpop.f32.mrf.mxu0
    %v3235 = vadd.f32 0.0, %v3234
    %3236 = vmatmul.bf16.gmra.mxu0 %v3043
    %v3237 = vpop.f32.mrf.mxu0
    %v3238 = vadd.f32 0.0, %v3237
    %v3239 = vpop.f32.mrf.mxu0
    %v3240 = vadd.f32 0.0, %v3239
    %3241 = vmatmul.bf16.gmra.mxu0 %v3046
    %v3242 = vpop.f32.mrf.mxu0
    %v3243 = vadd.f32 0.0, %v3242
    %v3244 = vpop.f32.mrf.mxu0
    %v3245 = vadd.f32 0.0, %v3244
    %3246 = vmatmul.bf16.gmra.mxu0 %v3049
    %v3247 = vpop.f32.mrf.mxu0
    %v3248 = vadd.f32 0.0, %v3247
    %v3249 = vpop.f32.mrf.mxu0
    %v3250 = vadd.f32 0.0, %v3249
    %3251 = vmatmul.bf16.gmra.mxu0 %v3052
    %v3252 = vpop.f32.mrf.mxu0
    %v3253 = vadd.f32 0.0, %v3252
    %v3254 = vpop.f32.mrf.mxu0
    %v3255 = vadd.f32 0.0, %v3254
    %3256 = vmatmul.bf16.gmra.mxu0 %v3055
    %v3257 = vpop.f32.mrf.mxu0
    %v3258 = vadd.f32 0.0, %v3257
    %v3259 = vpop.f32.mrf.mxu0
    %v3260 = vadd.f32 0.0, %v3259
    %3261 = vmatmul.bf16.gmra.mxu0 %v3058
    %v3262 = vpop.f32.mrf.mxu0
    %v3263 = vadd.f32 0.0, %v3262
    %v3264 = vpop.f32.mrf.mxu0
    %v3265 = vadd.f32 0.0, %v3264
    %3266 = vmatmul.bf16.gmra.mxu0 %v3061
    %v3267 = vpop.f32.mrf.mxu0
    %v3268 = vadd.f32 0.0, %v3267
    %v3269 = vpop.f32.mrf.mxu0
    %v3270 = vadd.f32 0.0, %v3269
    %3271 = vmatmul.bf16.gmra.mxu0 %v3064
    %v3272 = vpop.f32.mrf.mxu0
    %v3273 = vadd.f32 0.0, %v3272
    %v3274 = vpop.f32.mrf.mxu0
    %v3275 = vadd.f32 0.0, %v3274
    %3276 = vmatmul.bf16.gmra.mxu0 %v3067
    %v3277 = vpop.f32.mrf.mxu0
    %v3278 = vadd.f32 0.0, %v3277
    %v3279 = vpop.f32.mrf.mxu0
    %v3280 = vadd.f32 0.0, %v3279
    %3281 = vmatmul.bf16.gmra.mxu0 %v3070
    %v3282 = vpop.f32.mrf.mxu0
    %v3283 = vadd.f32 0.0, %v3282
    %v3284 = vpop.f32.mrf.mxu0
    %v3285 = vadd.f32 0.0, %v3284
    %3286 = vmatmul.bf16.gmra.mxu0 %v3073
    %v3287 = vpop.f32.mrf.mxu0
    %v3288 = vadd.f32 0.0, %v3287
    %v3289 = vpop.f32.mrf.mxu0
    %v3290 = vadd.f32 0.0, %v3289
    %3291 = vmatmul.bf16.gmra.mxu0 %v3076
    %v3292 = vpop.f32.mrf.mxu0
    %v3293 = vadd.f32 0.0, %v3292
    %v3294 = vpop.f32.mrf.mxu0
    %v3295 = vadd.f32 0.0, %v3294
    %3296 = vmatmul.bf16.gmra.mxu0 %v3079
    %v3297 = vpop.f32.mrf.mxu0
    %v3298 = vadd.f32 0.0, %v3297
    %v3299 = vpop.f32.mrf.mxu0
    %v3300 = vadd.f32 0.0, %v3299
    %3301 = vmatmul.bf16.gmra.mxu0 %v3082
    %v3302 = vpop.f32.mrf.mxu0
    %v3303 = vadd.f32 0.0, %v3302
    %v3304 = vpop.f32.mrf.mxu0
    %v3305 = vadd.f32 0.0, %v3304
    %3306 = vmatmul.bf16.gmra.mxu0 %v3085
    %v3307 = vpop.f32.mrf.mxu0
    %v3308 = vadd.f32 0.0, %v3307
    %v3309 = vpop.f32.mrf.mxu0
    %v3310 = vadd.f32 0.0, %v3309
    %3311 = vmatmul.bf16.gmra.mxu0 %v3088
    %v3312 = vpop.f32.mrf.mxu0
    %v3313 = vadd.f32 0.0, %v3312
    %v3314 = vpop.f32.mrf.mxu0
    %v3315 = vadd.f32 0.0, %v3314
    %3316 = vmatmul.bf16.gmra.mxu0 %v3091
    %v3317 = vpop.f32.mrf.mxu0
    %v3318 = vadd.f32 0.0, %v3317
    %v3319 = vpop.f32.mrf.mxu0
    %v3320 = vadd.f32 0.0, %v3319
    %3321 = vmatmul.bf16.gmra.mxu0 %v3094
    %v3322 = vpop.f32.mrf.mxu0
    %v3323 = vadd.f32 0.0, %v3322
    %v3324 = vpop.f32.mrf.mxu0
    %v3325 = vadd.f32 0.0, %v3324
    %3326 = vmatmul.bf16.gmra.mxu0 %v3097
    %v3327 = vpop.f32.mrf.mxu0
    %v3328 = vadd.f32 0.0, %v3327
    %v3329 = vpop.f32.mrf.mxu0
    %v3330 = vadd.f32 0.0, %v3329
    %3331 = vmatmul.bf16.gmra.mxu0 %v3100
    %v3332 = vpop.f32.mrf.mxu0
    %v3333 = vadd.f32 0.0, %v3332
    %v3334 = vpop.f32.mrf.mxu0
    %v3335 = vadd.f32 0.0, %v3334
    %3336 = vmatmul.bf16.gmra.mxu0 %v3103
    %v3337 = vpop.f32.mrf.mxu0
    %v3338 = vadd.f32 0.0, %v3337
    %v3339 = vpop.f32.mrf.mxu0
    %v3340 = vadd.f32 0.0, %v3339
    %3341 = vmatmul.bf16.gmra.mxu0 %v3106
    %v3342 = vpop.f32.mrf.mxu0
    %v3343 = vadd.f32 0.0, %v3342
    %v3344 = vpop.f32.mrf.mxu0
    %v3345 = vadd.f32 0.0, %v3344
    %3346 = vmatmul.bf16.gmra.mxu0 %v3109
    %v3347 = vpop.f32.mrf.mxu0
    %v3348 = vadd.f32 0.0, %v3347
    %v3349 = vpop.f32.mrf.mxu0
    %v3350 = vadd.f32 0.0, %v3349
    %3351 = vmatmul.bf16.gmra.mxu0 %v3112
    %v3352 = vpop.f32.mrf.mxu0
    %v3353 = vadd.f32 0.0, %v3352
    %v3354 = vpop.f32.mrf.mxu0
    %v3355 = vadd.f32 0.0, %v3354
    %3356 = vmatmul.bf16.gmra.mxu0 %v3115
    %v3357 = vpop.f32.mrf.mxu0
    %v3358 = vadd.f32 0.0, %v3357
    %v3359 = vpop.f32.mrf.mxu0
    %v3360 = vadd.f32 0.0, %v3359
    %3361 = vmatmul.bf16.gmra.mxu0 %v3118
    %v3362 = vpop.f32.mrf.mxu0
    %v3363 = vadd.f32 0.0, %v3362
    %v3364 = vpop.f32.mrf.mxu0
    %v3365 = vadd.f32 0.0, %v3364
    %3366 = vmatmul.bf16.gmra.mxu0 %v3121
    %v3367 = vpop.f32.mrf.mxu0
    %v3368 = vadd.f32 0.0, %v3367
    %v3369 = vpop.f32.mrf.mxu0
    %v3370 = vadd.f32 0.0, %v3369
    %3371 = vdwg.mxu0
    %v3372 = vmul.f32 %v3133, %v1427
    %v3373 = vmul.f32 %v3135, %v1427
    %v3374 = vmul.f32 %v3138, %v1427
    %v3375 = vmul.f32 %v3140, %v1427
    %v3376 = vmul.f32 %v3143, %v1427
    %v3377 = vmul.f32 %v3145, %v1427
    %v3378 = vmul.f32 %v3148, %v1427
    %v3379 = vmul.f32 %v3150, %v1427
    %v3380 = vmul.f32 %v3153, %v1427
    %v3381 = vmul.f32 %v3155, %v1427
    %v3382 = vmul.f32 %v3158, %v1427
    %v3383 = vmul.f32 %v3160, %v1427
    %v3384 = vmul.f32 %v3163, %v1440
    %v3385 = vmul.f32 %v3165, %v1440
    %v3386 = vmul.f32 %v3168, %v1440
    %v3387 = vmul.f32 %v3170, %v1440
    %v3388 = vmul.f32 %v3173, %v1440
    %v3389 = vmul.f32 %v3175, %v1440
    %v3390 = vmul.f32 %v3178, %v1440
    %v3391 = vmul.f32 %v3180, %v1440
    %v3392 = vmul.f32 %v3183, %v1440
    %v3393 = vmul.f32 %v3185, %v1440
    %v3394 = vmul.f32 %v3188, %v1440
    %v3395 = vmul.f32 %v3190, %v1440
    %v3396 = vadd.f32 %v3372, %v3384
    %v3397 = vadd.f32 %v3373, %v3385
    %v3398 = vadd.f32 %v3374, %v3386
    %v3399 = vadd.f32 %v3375, %v3387
    %v3400 = vadd.f32 %v3376, %v3388
    %v3401 = vadd.f32 %v3377, %v3389
    %v3402 = vadd.f32 %v3378, %v3390
    %v3403 = vadd.f32 %v3379, %v3391
    %v3404 = vadd.f32 %v3380, %v3392
    %v3405 = vadd.f32 %v3381, %v3393
    %v3406 = vadd.f32 %v3382, %v3394
    %v3407 = vadd.f32 %v3383, %v3395
    %v3408 = vmul.f32 %v3193, %v1453
    %v3409 = vmul.f32 %v3195, %v1453
    %v3410 = vmul.f32 %v3198, %v1453
    %v3411 = vmul.f32 %v3200, %v1453
    %v3412 = vmul.f32 %v3203, %v1453
    %v3413 = vmul.f32 %v3205, %v1453
    %v3414 = vmul.f32 %v3208, %v1453
    %v3415 = vmul.f32 %v3210, %v1453
    %v3416 = vmul.f32 %v3213, %v1453
    %v3417 = vmul.f32 %v3215, %v1453
    %v3418 = vmul.f32 %v3218, %v1453
    %v3419 = vmul.f32 %v3220, %v1453
    %v3420 = vadd.f32 %v3396, %v3408
    %v3421 = vadd.f32 %v3397, %v3409
    %v3422 = vadd.f32 %v3398, %v3410
    %v3423 = vadd.f32 %v3399, %v3411
    %v3424 = vadd.f32 %v3400, %v3412
    %v3425 = vadd.f32 %v3401, %v3413
    %v3426 = vadd.f32 %v3402, %v3414
    %v3427 = vadd.f32 %v3403, %v3415
    %v3428 = vadd.f32 %v3404, %v3416
    %v3429 = vadd.f32 %v3405, %v3417
    %v3430 = vadd.f32 %v3406, %v3418
    %v3431 = vadd.f32 %v3407, %v3419
    %v3432 = vmul.f32 %v3223, %v1466
    %v3433 = vmul.f32 %v3225, %v1466
    %v3434 = vmul.f32 %v3228, %v1466
    %v3435 = vmul.f32 %v3230, %v1466
    %v3436 = vmul.f32 %v3233, %v1466
    %v3437 = vmul.f32 %v3235, %v1466
    %v3438 = vmul.f32 %v3238, %v1466
    %v3439 = vmul.f32 %v3240, %v1466
    %v3440 = vmul.f32 %v3243, %v1466
    %v3441 = vmul.f32 %v3245, %v1466
    %v3442 = vmul.f32 %v3248, %v1466
    %v3443 = vmul.f32 %v3250, %v1466
    %v3444 = vadd.f32 %v3420, %v3432
    %v3445 = vadd.f32 %v3421, %v3433
    %v3446 = vadd.f32 %v3422, %v3434
    %v3447 = vadd.f32 %v3423, %v3435
    %v3448 = vadd.f32 %v3424, %v3436
    %v3449 = vadd.f32 %v3425, %v3437
    %v3450 = vadd.f32 %v3426, %v3438
    %v3451 = vadd.f32 %v3427, %v3439
    %v3452 = vadd.f32 %v3428, %v3440
    %v3453 = vadd.f32 %v3429, %v3441
    %v3454 = vadd.f32 %v3430, %v3442
    %v3455 = vadd.f32 %v3431, %v3443
    %v3456 = vmul.f32 %v3253, %v1479
    %v3457 = vmul.f32 %v3255, %v1479
    %v3458 = vmul.f32 %v3258, %v1479
    %v3459 = vmul.f32 %v3260, %v1479
    %v3460 = vmul.f32 %v3263, %v1479
    %v3461 = vmul.f32 %v3265, %v1479
    %v3462 = vmul.f32 %v3268, %v1479
    %v3463 = vmul.f32 %v3270, %v1479
    %v3464 = vmul.f32 %v3273, %v1479
    %v3465 = vmul.f32 %v3275, %v1479
    %v3466 = vmul.f32 %v3278, %v1479
    %v3467 = vmul.f32 %v3280, %v1479
    %v3468 = vadd.f32 %v3444, %v3456
    %v3469 = vadd.f32 %v3445, %v3457
    %v3470 = vadd.f32 %v3446, %v3458
    %v3471 = vadd.f32 %v3447, %v3459
    %v3472 = vadd.f32 %v3448, %v3460
    %v3473 = vadd.f32 %v3449, %v3461
    %v3474 = vadd.f32 %v3450, %v3462
    %v3475 = vadd.f32 %v3451, %v3463
    %v3476 = vadd.f32 %v3452, %v3464
    %v3477 = vadd.f32 %v3453, %v3465
    %v3478 = vadd.f32 %v3454, %v3466
    %v3479 = vadd.f32 %v3455, %v3467
    %v3480 = vmul.f32 %v3283, %v1492
    %v3481 = vmul.f32 %v3285, %v1492
    %v3482 = vmul.f32 %v3288, %v1492
    %v3483 = vmul.f32 %v3290, %v1492
    %v3484 = vmul.f32 %v3293, %v1492
    %v3485 = vmul.f32 %v3295, %v1492
    %v3486 = vmul.f32 %v3298, %v1492
    %v3487 = vmul.f32 %v3300, %v1492
    %v3488 = vmul.f32 %v3303, %v1492
    %v3489 = vmul.f32 %v3305, %v1492
    %v3490 = vmul.f32 %v3308, %v1492
    %v3491 = vmul.f32 %v3310, %v1492
    %v3492 = vadd.f32 %v3468, %v3480
    %v3493 = vadd.f32 %v3469, %v3481
    %v3494 = vadd.f32 %v3470, %v3482
    %v3495 = vadd.f32 %v3471, %v3483
    %v3496 = vadd.f32 %v3472, %v3484
    %v3497 = vadd.f32 %v3473, %v3485
    %v3498 = vadd.f32 %v3474, %v3486
    %v3499 = vadd.f32 %v3475, %v3487
    %v3500 = vadd.f32 %v3476, %v3488
    %v3501 = vadd.f32 %v3477, %v3489
    %v3502 = vadd.f32 %v3478, %v3490
    %v3503 = vadd.f32 %v3479, %v3491
    %v3504 = vmul.f32 %v3313, %v1505
    %v3505 = vmul.f32 %v3315, %v1505
    %v3506 = vmul.f32 %v3318, %v1505
    %v3507 = vmul.f32 %v3320, %v1505
    %v3508 = vmul.f32 %v3323, %v1505
    %v3509 = vmul.f32 %v3325, %v1505
    %v3510 = vmul.f32 %v3328, %v1505
    %v3511 = vmul.f32 %v3330, %v1505
    %v3512 = vmul.f32 %v3333, %v1505
    %v3513 = vmul.f32 %v3335, %v1505
    %v3514 = vmul.f32 %v3338, %v1505
    %v3515 = vmul.f32 %v3340, %v1505
    %v3516 = vadd.f32 %v3492, %v3504
    %v3517 = vadd.f32 %v3493, %v3505
    %v3518 = vadd.f32 %v3494, %v3506
    %v3519 = vadd.f32 %v3495, %v3507
    %v3520 = vadd.f32 %v3496, %v3508
    %v3521 = vadd.f32 %v3497, %v3509
    %v3522 = vadd.f32 %v3498, %v3510
    %v3523 = vadd.f32 %v3499, %v3511
    %v3524 = vadd.f32 %v3500, %v3512
    %v3525 = vadd.f32 %v3501, %v3513
    %v3526 = vadd.f32 %v3502, %v3514
    %v3527 = vadd.f32 %v3503, %v3515
    %v3528 = vmul.f32 %v3343, %v1518
    %v3529 = vmul.f32 %v3345, %v1518
    %v3530 = vmul.f32 %v3348, %v1518
    %v3531 = vmul.f32 %v3350, %v1518
    %v3532 = vmul.f32 %v3353, %v1518
    %v3533 = vmul.f32 %v3355, %v1518
    %v3534 = vmul.f32 %v3358, %v1518
    %v3535 = vmul.f32 %v3360, %v1518
    %v3536 = vmul.f32 %v3363, %v1518
    %v3537 = vmul.f32 %v3365, %v1518
    %v3538 = vmul.f32 %v3368, %v1518
    %v3539 = vmul.f32 %v3370, %v1518
    %v3540 = vadd.f32 %v3516, %v3528
    %v3541 = vadd.f32 %v3517, %v3529
    %v3542 = vadd.f32 %v3518, %v3530
    %v3543 = vadd.f32 %v3519, %v3531
    %v3544 = vadd.f32 %v3520, %v3532
    %v3545 = vadd.f32 %v3521, %v3533
    %v3546 = vadd.f32 %v3522, %v3534
    %v3547 = vadd.f32 %v3523, %v3535
    %v3548 = vadd.f32 %v3524, %v3536
    %v3549 = vadd.f32 %v3525, %v3537
    %v3550 = vadd.f32 %v3526, %v3538
    %v3551 = vadd.f32 %v3527, %v3539
    %v3552 = vld [vmem:[%s35] sm:$0xf]
    %v3553 = vld [vmem:[%s35 + $0x4] sm:$0xf]
    %v3554 = vld [vmem:[%s35 + $0x8] sm:$0xf]
    %v3555 = vld [vmem:[%s35 + $0xc] sm:$0xf]
    %v3556 = vld [vmem:[%s35 + $0x10] sm:$0xf]
    %v3557 = vld [vmem:[%s35 + $0x14] sm:$0xf]
    %v3558 = vld [vmem:[%s35 + $0x18] sm:$0xf]
    %v3559 = vld [vmem:[%s35 + $0x1c] sm:$0xf]
    %v3560 = vld [vmem:[%s35 + $0x20] sm:$0xf]
    %v3561 = vld [vmem:[%s35 + $0x24] sm:$0xf]
    %v3562 = vld [vmem:[%s35 + $0x28] sm:$0xf]
    %v3563 = vld [vmem:[%s35 + $0x2c] sm:$0xf]
    %v3564 = vld [vmem:[%s35 + $0x30] sm:$0xf]
    %v3565 = vld [vmem:[%s35 + $0x34] sm:$0xf]
    %v3566 = vld [vmem:[%s35 + $0x38] sm:$0xf]
    %v3567 = vld [vmem:[%s35 + $0x3c] sm:$0xf]
    %v3568 = vpack.c.bf16 %v3541, %v3540
    %v3569 = vpack.c.bf16 %v3543, %v3542
    %v3570 = vpack.c.bf16 %v3545, %v3544
    %v3571 = vpack.c.bf16 %v3547, %v3546
    %v3572 = vpack.c.bf16 %v3549, %v3548
    %v3573 = vpack.c.bf16 %v3551, %v3550
    %v3574 = vld [vmem:[%s37] sm:$0x1]
    %v3576 = vperm.slane %v3574, 0
    %v3594 = vunpack.c.l.b16 %v3552
    %v3595 = vunpack.c.l.b16 %v3553
    %v3596 = vunpack.c.l.b16 %v3554
    %v3597 = vunpack.c.l.b16 %v3555
    %v3598 = vunpack.c.l.b16 %v3556
    %v3599 = vunpack.c.l.b16 %v3557
    %v3600 = vunpack.c.l.b16 %v3558
    %v3601 = vunpack.c.l.b16 %v3559
    %v3602 = vunpack.c.l.b16 %v3560
    %v3603 = vunpack.c.l.b16 %v3561
    %v3604 = vunpack.c.l.b16 %v3562
    %v3605 = vunpack.c.l.b16 %v3563
    %v3606 = vunpack.c.l.b16 %v3564
    %v3607 = vunpack.c.l.b16 %v3565
    %v3608 = vunpack.c.l.b16 %v3566
    %v3609 = vunpack.c.l.b16 %v3567
    %v3610 = vpack.c.b16 %v3595, %v3594
    %v3611 = vpack.c.b16 %v3597, %v3596
    %v3612 = vpack.c.b16 %v3599, %v3598
    %v3613 = vpack.c.b16 %v3601, %v3600
    %v3614 = vpack.c.b16 %v3603, %v3602
    %v3615 = vpack.c.b16 %v3605, %v3604
    %v3616 = vpack.c.b16 %v3607, %v3606
    %v3617 = vpack.c.b16 %v3609, %v3608
    %3626 = vmatpush.bf16.msra.mxu0 %v3617
    %3627 = vmatpush.bf16.msra.mxu0 %v3616
    %3628 = vmatpush.bf16.msra.mxu0 %v3615
    %3629 = vmatpush.bf16.msra.mxu0 %v3614
    %3630 = vmatpush.bf16.msra.mxu0 %v3613
    %3631 = vmatpush.bf16.msra.mxu0 %v3612
    %3632 = vmatpush.bf16.msra.mxu0 %v3611
    %3633 = vmatpush.bf16.msra.mxu0 %v3610
    %3634 = vmatmul.bf16.gmra.mxu0 %v3568
    %v3635 = vpop.f32.mrf.mxu0
    %v3636 = vadd.f32 %v3576, %v3635
    %v3637 = vpop.f32.mrf.mxu0
    %v3638 = vadd.f32 %v3576, %v3637
    %3639 = vmatmul.bf16.gmra.mxu0 %v3569
    %v3640 = vpop.f32.mrf.mxu0
    %v3641 = vadd.f32 %v3576, %v3640
    %v3642 = vpop.f32.mrf.mxu0
    %v3643 = vadd.f32 %v3576, %v3642
    %3644 = vmatmul.bf16.gmra.mxu0 %v3570
    %v3645 = vpop.f32.mrf.mxu0
    %v3646 = vadd.f32 %v3576, %v3645
    %v3647 = vpop.f32.mrf.mxu0
    %v3648 = vadd.f32 %v3576, %v3647
    %3649 = vmatmul.bf16.gmra.mxu0 %v3571
    %v3650 = vpop.f32.mrf.mxu0
    %v3651 = vadd.f32 %v3576, %v3650
    %v3652 = vpop.f32.mrf.mxu0
    %v3653 = vadd.f32 %v3576, %v3652
    %3654 = vmatmul.bf16.gmra.mxu0 %v3572
    %v3655 = vpop.f32.mrf.mxu0
    %v3656 = vadd.f32 %v3576, %v3655
    %v3657 = vpop.f32.mrf.mxu0
    %v3658 = vadd.f32 %v3576, %v3657
    %3659 = vmatmul.bf16.gmra.mxu0 %v3573
    %v3660 = vpop.f32.mrf.mxu0
    %v3661 = vadd.f32 %v3576, %v3660
    %v3662 = vpop.f32.mrf.mxu0
    %v3663 = vadd.f32 %v3576, %v3662
    %3664 = vdwg.mxu0
    %v3665 = vadd.f32 %v1099, %v3636
    %v3666 = vadd.f32 %v1100, %v3638
    %v3667 = vadd.f32 %v1101, %v3641
    %v3668 = vadd.f32 %v1102, %v3643
    %v3669 = vadd.f32 %v1103, %v3646
    %v3670 = vadd.f32 %v1104, %v3648
    %v3671 = vadd.f32 %v1105, %v3651
    %v3672 = vadd.f32 %v1106, %v3653
    %v3673 = vadd.f32 %v1107, %v3656
    %v3674 = vadd.f32 %v1108, %v3658
    %v3675 = vadd.f32 %v1109, %v3661
    %v3676 = vadd.f32 %v1110, %v3663
    %v3677 = vld [vmem:[%s39] sm:$0x1]
    %v3678 = vld [vmem:[%s41] sm:$0x1]
    %3679 = vadd.xlane.f32.xlu0 %v3665
    %v3680 = vpop.xlane.xlu0 %3679
    %3681 = vadd.xlane.f32.xlu0 %v3666
    %v3682 = vpop.xlane.xlu0 %3681
    %3683 = vadd.xlane.f32.xlu0 %v3667
    %v3684 = vpop.xlane.xlu0 %3683
    %3685 = vadd.xlane.f32.xlu0 %v3668
    %v3686 = vpop.xlane.xlu0 %3685
    %3687 = vadd.xlane.f32.xlu0 %v3669
    %v3688 = vpop.xlane.xlu0 %3687
    %3689 = vadd.xlane.f32.xlu0 %v3670
    %v3690 = vpop.xlane.xlu0 %3689
    %3691 = vadd.xlane.f32.xlu0 %v3671
    %v3692 = vpop.xlane.xlu0 %3691
    %3693 = vadd.xlane.f32.xlu0 %v3672
    %v3694 = vpop.xlane.xlu0 %3693
    %3695 = vadd.xlane.f32.xlu0 %v3673
    %v3696 = vpop.xlane.xlu0 %3695
    %3697 = vadd.xlane.f32.xlu0 %v3674
    %v3698 = vpop.xlane.xlu0 %3697
    %3699 = vadd.xlane.f32.xlu0 %v3675
    %v3700 = vpop.xlane.xlu0 %3699
    %3701 = vadd.xlane.f32.xlu0 %v3676
    %v3702 = vpop.xlane.xlu0 %3701
    %v3703 = vmul.f32 %v3680, 0.03125
    %v3704 = vmul.f32 %v3682, 0.03125
    %v3705 = vmul.f32 %v3684, 0.03125
    %v3706 = vmul.f32 %v3686, 0.03125
    %v3707 = vmul.f32 %v3688, 0.03125
    %v3708 = vmul.f32 %v3690, 0.03125
    %v3709 = vmul.f32 %v3692, 0.03125
    %v3710 = vmul.f32 %v3694, 0.03125
    %v3711 = vmul.f32 %v3696, 0.03125
    %v3712 = vmul.f32 %v3698, 0.03125
    %v3713 = vmul.f32 %v3700, 0.03125
    %v3714 = vmul.f32 %v3702, 0.03125
    %v3715 = vmul.f32 %v3665, %v3665
    %v3716 = vmul.f32 %v3666, %v3666
    %v3717 = vmul.f32 %v3667, %v3667
    %v3718 = vmul.f32 %v3668, %v3668
    %v3719 = vmul.f32 %v3669, %v3669
    %v3720 = vmul.f32 %v3670, %v3670
    %v3721 = vmul.f32 %v3671, %v3671
    %v3722 = vmul.f32 %v3672, %v3672
    %v3723 = vmul.f32 %v3673, %v3673
    %v3724 = vmul.f32 %v3674, %v3674
    %v3725 = vmul.f32 %v3675, %v3675
    %v3726 = vmul.f32 %v3676, %v3676
    %3727 = vadd.xlane.f32.xlu0 %v3715
    %v3728 = vpop.xlane.xlu0 %3727
    %3729 = vadd.xlane.f32.xlu0 %v3716
    %v3730 = vpop.xlane.xlu0 %3729
    %3731 = vadd.xlane.f32.xlu0 %v3717
    %v3732 = vpop.xlane.xlu0 %3731
    %3733 = vadd.xlane.f32.xlu0 %v3718
    %v3734 = vpop.xlane.xlu0 %3733
    %3735 = vadd.xlane.f32.xlu0 %v3719
    %v3736 = vpop.xlane.xlu0 %3735
    %3737 = vadd.xlane.f32.xlu0 %v3720
    %v3738 = vpop.xlane.xlu0 %3737
    %3739 = vadd.xlane.f32.xlu0 %v3721
    %v3740 = vpop.xlane.xlu0 %3739
    %3741 = vadd.xlane.f32.xlu0 %v3722
    %v3742 = vpop.xlane.xlu0 %3741
    %3743 = vadd.xlane.f32.xlu0 %v3723
    %v3744 = vpop.xlane.xlu0 %3743
    %3745 = vadd.xlane.f32.xlu0 %v3724
    %v3746 = vpop.xlane.xlu0 %3745
    %3747 = vadd.xlane.f32.xlu0 %v3725
    %v3748 = vpop.xlane.xlu0 %3747
    %3749 = vadd.xlane.f32.xlu0 %v3726
    %v3750 = vpop.xlane.xlu0 %3749
    %v3751 = vmul.f32 %v3728, 0.03125
    %v3752 = vmul.f32 %v3730, 0.03125
    %v3753 = vmul.f32 %v3732, 0.03125
    %v3754 = vmul.f32 %v3734, 0.03125
    %v3755 = vmul.f32 %v3736, 0.03125
    %v3756 = vmul.f32 %v3738, 0.03125
    %v3757 = vmul.f32 %v3740, 0.03125
    %v3758 = vmul.f32 %v3742, 0.03125
    %v3759 = vmul.f32 %v3744, 0.03125
    %v3760 = vmul.f32 %v3746, 0.03125
    %v3761 = vmul.f32 %v3748, 0.03125
    %v3762 = vmul.f32 %v3750, 0.03125
    %v3763 = vmul.f32 %v3703, %v3703
    %v3764 = vmul.f32 %v3704, %v3704
    %v3765 = vmul.f32 %v3705, %v3705
    %v3766 = vmul.f32 %v3706, %v3706
    %v3767 = vmul.f32 %v3707, %v3707
    %v3768 = vmul.f32 %v3708, %v3708
    %v3769 = vmul.f32 %v3709, %v3709
    %v3770 = vmul.f32 %v3710, %v3710
    %v3771 = vmul.f32 %v3711, %v3711
    %v3772 = vmul.f32 %v3712, %v3712
    %v3773 = vmul.f32 %v3713, %v3713
    %v3774 = vmul.f32 %v3714, %v3714
    %v3775 = vsub.f32 %v3751, %v3763
    %v3776 = vsub.f32 %v3752, %v3764
    %v3777 = vsub.f32 %v3753, %v3765
    %v3778 = vsub.f32 %v3754, %v3766
    %v3779 = vsub.f32 %v3755, %v3767
    %v3780 = vsub.f32 %v3756, %v3768
    %v3781 = vsub.f32 %v3757, %v3769
    %v3782 = vsub.f32 %v3758, %v3770
    %v3783 = vsub.f32 %v3759, %v3771
    %v3784 = vsub.f32 %v3760, %v3772
    %v3785 = vsub.f32 %v3761, %v3773
    %v3786 = vsub.f32 %v3762, %v3774
    %v3787 = vsub.f32 %v3665, %v3703
    %v3788 = vsub.f32 %v3666, %v3704
    %v3789 = vsub.f32 %v3667, %v3705
    %v3790 = vsub.f32 %v3668, %v3706
    %v3791 = vsub.f32 %v3669, %v3707
    %v3792 = vsub.f32 %v3670, %v3708
    %v3793 = vsub.f32 %v3671, %v3709
    %v3794 = vsub.f32 %v3672, %v3710
    %v3795 = vsub.f32 %v3673, %v3711
    %v3796 = vsub.f32 %v3674, %v3712
    %v3797 = vsub.f32 %v3675, %v3713
    %v3798 = vsub.f32 %v3676, %v3714
    %v3799 = vadd.f32 %v3775, 1e-05
    %v3800 = vadd.f32 %v3776, 1e-05
    %v3801 = vadd.f32 %v3777, 1e-05
    %v3802 = vadd.f32 %v3778, 1e-05
    %v3803 = vadd.f32 %v3779, 1e-05
    %v3804 = vadd.f32 %v3780, 1e-05
    %v3805 = vadd.f32 %v3781, 1e-05
    %v3806 = vadd.f32 %v3782, 1e-05
    %v3807 = vadd.f32 %v3783, 1e-05
    %v3808 = vadd.f32 %v3784, 1e-05
    %v3809 = vadd.f32 %v3785, 1e-05
    %v3810 = vadd.f32 %v3786, 1e-05
    %v3811 = vrsqrt.pop %v3799
    %v3812 = vmul.f32 %v3811, %v3799
    %v3813 = vmul.f32 %v3812, %v3811
    %v3814 = vmul.f32 0.5, %v3813
    %v3815 = vsub.f32 1.5, %v3814
    %v3816 = vmul.f32 %v3811, %v3815
    %vm3817 = vweird.f32 %v3799
    %vm3818 = vweird.f32 %v3811
    %vm3819 = vmor %vm3817, %vm3818
    %v3820 = vsel %vm3819, %v3811, %v3816
    %v3821 = vrsqrt.pop %v3800
    %v3822 = vmul.f32 %v3821, %v3800
    %v3823 = vmul.f32 %v3822, %v3821
    %v3824 = vmul.f32 0.5, %v3823
    %v3825 = vsub.f32 1.5, %v3824
    %v3826 = vmul.f32 %v3821, %v3825
    %vm3827 = vweird.f32 %v3800
    %vm3828 = vweird.f32 %v3821
    %vm3829 = vmor %vm3827, %vm3828
    %v3830 = vsel %vm3829, %v3821, %v3826
    %v3831 = vrsqrt.pop %v3801
    %v3832 = vmul.f32 %v3831, %v3801
    %v3833 = vmul.f32 %v3832, %v3831
    %v3834 = vmul.f32 0.5, %v3833
    %v3835 = vsub.f32 1.5, %v3834
    %v3836 = vmul.f32 %v3831, %v3835
    %vm3837 = vweird.f32 %v3801
    %vm3838 = vweird.f32 %v3831
    %vm3839 = vmor %vm3837, %vm3838
    %v3840 = vsel %vm3839, %v3831, %v3836
    %v3841 = vrsqrt.pop %v3802
    %v3842 = vmul.f32 %v3841, %v3802
    %v3843 = vmul.f32 %v3842, %v3841
    %v3844 = vmul.f32 0.5, %v3843
    %v3845 = vsub.f32 1.5, %v3844
    %v3846 = vmul.f32 %v3841, %v3845
    %vm3847 = vweird.f32 %v3802
    %vm3848 = vweird.f32 %v3841
    %vm3849 = vmor %vm3847, %vm3848
    %v3850 = vsel %vm3849, %v3841, %v3846
    %v3851 = vrsqrt.pop %v3803
    %v3852 = vmul.f32 %v3851, %v3803
    %v3853 = vmul.f32 %v3852, %v3851
    %v3854 = vmul.f32 0.5, %v3853
    %v3855 = vsub.f32 1.5, %v3854
    %v3856 = vmul.f32 %v3851, %v3855
    %vm3857 = vweird.f32 %v3803
    %vm3858 = vweird.f32 %v3851
    %vm3859 = vmor %vm3857, %vm3858
    %v3860 = vsel %vm3859, %v3851, %v3856
    %v3861 = vrsqrt.pop %v3804
    %v3862 = vmul.f32 %v3861, %v3804
    %v3863 = vmul.f32 %v3862, %v3861
    %v3864 = vmul.f32 0.5, %v3863
    %v3865 = vsub.f32 1.5, %v3864
    %v3866 = vmul.f32 %v3861, %v3865
    %vm3867 = vweird.f32 %v3804
    %vm3868 = vweird.f32 %v3861
    %vm3869 = vmor %vm3867, %vm3868
    %v3870 = vsel %vm3869, %v3861, %v3866
    %v3871 = vrsqrt.pop %v3805
    %v3872 = vmul.f32 %v3871, %v3805
    %v3873 = vmul.f32 %v3872, %v3871
    %v3874 = vmul.f32 0.5, %v3873
    %v3875 = vsub.f32 1.5, %v3874
    %v3876 = vmul.f32 %v3871, %v3875
    %vm3877 = vweird.f32 %v3805
    %vm3878 = vweird.f32 %v3871
    %vm3879 = vmor %vm3877, %vm3878
    %v3880 = vsel %vm3879, %v3871, %v3876
    %v3881 = vrsqrt.pop %v3806
    %v3882 = vmul.f32 %v3881, %v3806
    %v3883 = vmul.f32 %v3882, %v3881
    %v3884 = vmul.f32 0.5, %v3883
    %v3885 = vsub.f32 1.5, %v3884
    %v3886 = vmul.f32 %v3881, %v3885
    %vm3887 = vweird.f32 %v3806
    %vm3888 = vweird.f32 %v3881
    %vm3889 = vmor %vm3887, %vm3888
    %v3890 = vsel %vm3889, %v3881, %v3886
    %v3891 = vrsqrt.pop %v3807
    %v3892 = vmul.f32 %v3891, %v3807
    %v3893 = vmul.f32 %v3892, %v3891
    %v3894 = vmul.f32 0.5, %v3893
    %v3895 = vsub.f32 1.5, %v3894
    %v3896 = vmul.f32 %v3891, %v3895
    %vm3897 = vweird.f32 %v3807
    %vm3898 = vweird.f32 %v3891
    %vm3899 = vmor %vm3897, %vm3898
    %v3900 = vsel %vm3899, %v3891, %v3896
    %v3901 = vrsqrt.pop %v3808
    %v3902 = vmul.f32 %v3901, %v3808
    %v3903 = vmul.f32 %v3902, %v3901
    %v3904 = vmul.f32 0.5, %v3903
    %v3905 = vsub.f32 1.5, %v3904
    %v3906 = vmul.f32 %v3901, %v3905
    %vm3907 = vweird.f32 %v3808
    %vm3908 = vweird.f32 %v3901
    %vm3909 = vmor %vm3907, %vm3908
    %v3910 = vsel %vm3909, %v3901, %v3906
    %v3911 = vrsqrt.pop %v3809
    %v3912 = vmul.f32 %v3911, %v3809
    %v3913 = vmul.f32 %v3912, %v3911
    %v3914 = vmul.f32 0.5, %v3913
    %v3915 = vsub.f32 1.5, %v3914
    %v3916 = vmul.f32 %v3911, %v3915
    %vm3917 = vweird.f32 %v3809
    %vm3918 = vweird.f32 %v3911
    %vm3919 = vmor %vm3917, %vm3918
    %v3920 = vsel %vm3919, %v3911, %v3916
    %v3921 = vrsqrt.pop %v3810
    %v3922 = vmul.f32 %v3921, %v3810
    %v3923 = vmul.f32 %v3922, %v3921
    %v3924 = vmul.f32 0.5, %v3923
    %v3925 = vsub.f32 1.5, %v3924
    %v3926 = vmul.f32 %v3921, %v3925
    %vm3927 = vweird.f32 %v3810
    %vm3928 = vweird.f32 %v3921
    %vm3929 = vmor %vm3927, %vm3928
    %v3930 = vsel %vm3929, %v3921, %v3926
    %v3931 = vmul.f32 %v3787, %v3820
    %v3932 = vmul.f32 %v3788, %v3830
    %v3933 = vmul.f32 %v3789, %v3840
    %v3934 = vmul.f32 %v3790, %v3850
    %v3935 = vmul.f32 %v3791, %v3860
    %v3936 = vmul.f32 %v3792, %v3870
    %v3937 = vmul.f32 %v3793, %v3880
    %v3938 = vmul.f32 %v3794, %v3890
    %v3939 = vmul.f32 %v3795, %v3900
    %v3940 = vmul.f32 %v3796, %v3910
    %v3941 = vmul.f32 %v3797, %v3920
    %v3942 = vmul.f32 %v3798, %v3930
    %v3944 = vperm.slane %v3677, 0
    %v3946 = vmul.f32 %v3931, %v3944
    %v3947 = vmul.f32 %v3932, %v3944
    %v3948 = vmul.f32 %v3933, %v3944
    %v3949 = vmul.f32 %v3934, %v3944
    %v3950 = vmul.f32 %v3935, %v3944
    %v3951 = vmul.f32 %v3936, %v3944
    %v3952 = vmul.f32 %v3937, %v3944
    %v3953 = vmul.f32 %v3938, %v3944
    %v3954 = vmul.f32 %v3939, %v3944
    %v3955 = vmul.f32 %v3940, %v3944
    %v3956 = vmul.f32 %v3941, %v3944
    %v3957 = vmul.f32 %v3942, %v3944
    %v3959 = vperm.slane %v3678, 0
    %v3961 = vadd.f32 %v3946, %v3959
    %v3962 = vadd.f32 %v3947, %v3959
    %v3963 = vadd.f32 %v3948, %v3959
    %v3964 = vadd.f32 %v3949, %v3959
    %v3965 = vadd.f32 %v3950, %v3959
    %v3966 = vadd.f32 %v3951, %v3959
    %v3967 = vadd.f32 %v3952, %v3959
    %v3968 = vadd.f32 %v3953, %v3959
    %v3969 = vadd.f32 %v3954, %v3959
    %v3970 = vadd.f32 %v3955, %v3959
    %v3971 = vadd.f32 %v3956, %v3959
    %v3972 = vadd.f32 %v3957, %v3959
    %v3973 = vld [vmem:[%s43] sm:$0xf]
    %v3974 = vld [vmem:[%s43 + $0x4] sm:$0xf]
    %v3975 = vld [vmem:[%s43 + $0x8] sm:$0xf]
    %v3976 = vld [vmem:[%s43 + $0xc] sm:$0xf]
    %v3977 = vld [vmem:[%s43 + $0x10] sm:$0xf]
    %v3978 = vld [vmem:[%s43 + $0x14] sm:$0xf]
    %v3979 = vld [vmem:[%s43 + $0x18] sm:$0xf]
    %v3980 = vld [vmem:[%s43 + $0x1c] sm:$0xf]
    %v3981 = vld [vmem:[%s43 + $0x20] sm:$0xf]
    %v3982 = vld [vmem:[%s43 + $0x24] sm:$0xf]
    %v3983 = vld [vmem:[%s43 + $0x28] sm:$0xf]
    %v3984 = vld [vmem:[%s43 + $0x2c] sm:$0xf]
    %v3985 = vld [vmem:[%s43 + $0x30] sm:$0xf]
    %v3986 = vld [vmem:[%s43 + $0x34] sm:$0xf]
    %v3987 = vld [vmem:[%s43 + $0x38] sm:$0xf]
    %v3988 = vld [vmem:[%s43 + $0x3c] sm:$0xf]
    %v3989 = vpack.c.bf16 %v3962, %v3961
    %v3990 = vpack.c.bf16 %v3964, %v3963
    %v3991 = vpack.c.bf16 %v3966, %v3965
    %v3992 = vpack.c.bf16 %v3968, %v3967
    %v3993 = vpack.c.bf16 %v3970, %v3969
    %v3994 = vpack.c.bf16 %v3972, %v3971
    %v3995 = vld [vmem:[%s45] sm:$0x1]
    %v3997 = vperm.slane %v3995, 0
    %v4015 = vunpack.c.l.b16 %v3973
    %v4016 = vunpack.c.l.b16 %v3974
    %v4017 = vunpack.c.l.b16 %v3975
    %v4018 = vunpack.c.l.b16 %v3976
    %v4019 = vunpack.c.l.b16 %v3977
    %v4020 = vunpack.c.l.b16 %v3978
    %v4021 = vunpack.c.l.b16 %v3979
    %v4022 = vunpack.c.l.b16 %v3980
    %v4023 = vunpack.c.l.b16 %v3981
    %v4024 = vunpack.c.l.b16 %v3982
    %v4025 = vunpack.c.l.b16 %v3983
    %v4026 = vunpack.c.l.b16 %v3984
    %v4027 = vunpack.c.l.b16 %v3985
    %v4028 = vunpack.c.l.b16 %v3986
    %v4029 = vunpack.c.l.b16 %v3987
    %v4030 = vunpack.c.l.b16 %v3988
    %v4031 = vpack.c.b16 %v4016, %v4015
    %v4032 = vpack.c.b16 %v4018, %v4017
    %v4033 = vpack.c.b16 %v4020, %v4019
    %v4034 = vpack.c.b16 %v4022, %v4021
    %v4035 = vpack.c.b16 %v4024, %v4023
    %v4036 = vpack.c.b16 %v4026, %v4025
    %v4037 = vpack.c.b16 %v4028, %v4027
    %v4038 = vpack.c.b16 %v4030, %v4029
    %4047 = vmatpush.bf16.msra.mxu0 %v4038
    %4048 = vmatpush.bf16.msra.mxu0 %v4037
    %4049 = vmatpush.bf16.msra.mxu0 %v4036
    %4050 = vmatpush.bf16.msra.mxu0 %v4035
    %4051 = vmatpush.bf16.msra.mxu0 %v4034
    %4052 = vmatpush.bf16.msra.mxu0 %v4033
    %4053 = vmatpush.bf16.msra.mxu0 %v4032
    %4054 = vmatpush.bf16.msra.mxu0 %v4031
    %4055 = vmatmul.bf16.gmra.mxu0 %v3989
    %v4056 = vpop.f32.mrf.mxu0
    %v4057 = vadd.f32 %v3997, %v4056
    %v4058 = vpop.f32.mrf.mxu0
    %v4059 = vadd.f32 %v3997, %v4058
    %4060 = vmatmul.bf16.gmra.mxu0 %v3990
    %v4061 = vpop.f32.mrf.mxu0
    %v4062 = vadd.f32 %v3997, %v4061
    %v4063 = vpop.f32.mrf.mxu0
    %v4064 = vadd.f32 %v3997, %v4063
    %4065 = vmatmul.bf16.gmra.mxu0 %v3991
    %v4066 = vpop.f32.mrf.mxu0
    %v4067 = vadd.f32 %v3997, %v4066
    %v4068 = vpop.f32.mrf.mxu0
    %v4069 = vadd.f32 %v3997, %v4068
    %4070 = vmatmul.bf16.gmra.mxu0 %v3992
    %v4071 = vpop.f32.mrf.mxu0
    %v4072 = vadd.f32 %v3997, %v4071
    %v4073 = vpop.f32.mrf.mxu0
    %v4074 = vadd.f32 %v3997, %v4073
    %4075 = vmatmul.bf16.gmra.mxu0 %v3993
    %v4076 = vpop.f32.mrf.mxu0
    %v4077 = vadd.f32 %v3997, %v4076
    %v4078 = vpop.f32.mrf.mxu0
    %v4079 = vadd.f32 %v3997, %v4078
    %4080 = vmatmul.bf16.gmra.mxu0 %v3994
    %v4081 = vpop.f32.mrf.mxu0
    %v4082 = vadd.f32 %v3997, %v4081
    %v4083 = vpop.f32.mrf.mxu0
    %v4084 = vadd.f32 %v3997, %v4083
    %4085 = vdwg.mxu0
    %v4086 = vmax.f32 %v4057, 0.0
    %v4087 = vmax.f32 %v4059, 0.0
    %v4088 = vmax.f32 %v4062, 0.0
    %v4089 = vmax.f32 %v4064, 0.0
    %v4090 = vmax.f32 %v4067, 0.0
    %v4091 = vmax.f32 %v4069, 0.0
    %v4092 = vmax.f32 %v4072, 0.0
    %v4093 = vmax.f32 %v4074, 0.0
    %v4094 = vmax.f32 %v4077, 0.0
    %v4095 = vmax.f32 %v4079, 0.0
    %v4096 = vmax.f32 %v4082, 0.0
    %v4097 = vmax.f32 %v4084, 0.0
    %v4098 = vld [vmem:[%s47] sm:$0xf]
    %v4099 = vld [vmem:[%s47 + $0x4] sm:$0xf]
    %v4100 = vld [vmem:[%s47 + $0x8] sm:$0xf]
    %v4101 = vld [vmem:[%s47 + $0xc] sm:$0xf]
    %v4102 = vld [vmem:[%s47 + $0x10] sm:$0xf]
    %v4103 = vld [vmem:[%s47 + $0x14] sm:$0xf]
    %v4104 = vld [vmem:[%s47 + $0x18] sm:$0xf]
    %v4105 = vld [vmem:[%s47 + $0x1c] sm:$0xf]
    %v4106 = vld [vmem:[%s47 + $0x20] sm:$0xf]
    %v4107 = vld [vmem:[%s47 + $0x24] sm:$0xf]
    %v4108 = vld [vmem:[%s47 + $0x28] sm:$0xf]
    %v4109 = vld [vmem:[%s47 + $0x2c] sm:$0xf]
    %v4110 = vld [vmem:[%s47 + $0x30] sm:$0xf]
    %v4111 = vld [vmem:[%s47 + $0x34] sm:$0xf]
    %v4112 = vld [vmem:[%s47 + $0x38] sm:$0xf]
    %v4113 = vld [vmem:[%s47 + $0x3c] sm:$0xf]
    %v4114 = vpack.c.bf16 %v4087, %v4086
    %v4115 = vpack.c.bf16 %v4089, %v4088
    %v4116 = vpack.c.bf16 %v4091, %v4090
    %v4117 = vpack.c.bf16 %v4093, %v4092
    %v4118 = vpack.c.bf16 %v4095, %v4094
    %v4119 = vpack.c.bf16 %v4097, %v4096
    %v4120 = vld [vmem:[%s49] sm:$0x1]
    %v4122 = vperm.slane %v4120, 0
    %v4140 = vunpack.c.l.b16 %v4098
    %v4141 = vunpack.c.l.b16 %v4099
    %v4142 = vunpack.c.l.b16 %v4100
    %v4143 = vunpack.c.l.b16 %v4101
    %v4144 = vunpack.c.l.b16 %v4102
    %v4145 = vunpack.c.l.b16 %v4103
    %v4146 = vunpack.c.l.b16 %v4104
    %v4147 = vunpack.c.l.b16 %v4105
    %v4148 = vunpack.c.l.b16 %v4106
    %v4149 = vunpack.c.l.b16 %v4107
    %v4150 = vunpack.c.l.b16 %v4108
    %v4151 = vunpack.c.l.b16 %v4109
    %v4152 = vunpack.c.l.b16 %v4110
    %v4153 = vunpack.c.l.b16 %v4111
    %v4154 = vunpack.c.l.b16 %v4112
    %v4155 = vunpack.c.l.b16 %v4113
    %v4156 = vpack.c.b16 %v4141, %v4140
    %v4157 = vpack.c.b16 %v4143, %v4142
    %v4158 = vpack.c.b16 %v4145, %v4144
    %v4159 = vpack.c.b16 %v4147, %v4146
    %v4160 = vpack.c.b16 %v4149, %v4148
    %v4161 = vpack.c.b16 %v4151, %v4150
    %v4162 = vpack.c.b16 %v4153, %v4152
    %v4163 = vpack.c.b16 %v4155, %v4154
    %4172 = vmatpush.bf16.msra.mxu0 %v4163
    %4173 = vmatpush.bf16.msra.mxu0 %v4162
    %4174 = vmatpush.bf16.msra.mxu0 %v4161
    %4175 = vmatpush.bf16.msra.mxu0 %v4160
    %4176 = vmatpush.bf16.msra.mxu0 %v4159
    %4177 = vmatpush.bf16.msra.mxu0 %v4158
    %4178 = vmatpush.bf16.msra.mxu0 %v4157
    %4179 = vmatpush.bf16.msra.mxu0 %v4156
    %4180 = vmatmul.bf16.gmra.mxu0 %v4114
    %v4181 = vpop.f32.mrf.mxu0
    %v4182 = vadd.f32 %v4122, %v4181
    %v4183 = vpop.f32.mrf.mxu0
    %v4184 = vadd.f32 %v4122, %v4183
    %4185 = vmatmul.bf16.gmra.mxu0 %v4115
    %v4186 = vpop.f32.mrf.mxu0
    %v4187 = vadd.f32 %v4122, %v4186
    %v4188 = vpop.f32.mrf.mxu0
    %v4189 = vadd.f32 %v4122, %v4188
    %4190 = vmatmul.bf16.gmra.mxu0 %v4116
    %v4191 = vpop.f32.mrf.mxu0
    %v4192 = vadd.f32 %v4122, %v4191
    %v4193 = vpop.f32.mrf.mxu0
    %v4194 = vadd.f32 %v4122, %v4193
    %4195 = vmatmul.bf16.gmra.mxu0 %v4117
    %v4196 = vpop.f32.mrf.mxu0
    %v4197 = vadd.f32 %v4122, %v4196
    %v4198 = vpop.f32.mrf.mxu0
    %v4199 = vadd.f32 %v4122, %v4198
    %4200 = vmatmul.bf16.gmra.mxu0 %v4118
    %v4201 = vpop.f32.mrf.mxu0
    %v4202 = vadd.f32 %v4122, %v4201
    %v4203 = vpop.f32.mrf.mxu0
    %v4204 = vadd.f32 %v4122, %v4203
    %4205 = vmatmul.bf16.gmra.mxu0 %v4119
    %v4206 = vpop.f32.mrf.mxu0
    %v4207 = vadd.f32 %v4122, %v4206
    %v4208 = vpop.f32.mrf.mxu0
    %v4209 = vadd.f32 %v4122, %v4208
    %4210 = vdwg.mxu0
    %v4211 = vadd.f32 %v3961, %v4182
    %v4212 = vadd.f32 %v3962, %v4184
    %v4213 = vadd.f32 %v3963, %v4187
    %v4214 = vadd.f32 %v3964, %v4189
    %v4215 = vadd.f32 %v3965, %v4192
    %v4216 = vadd.f32 %v3966, %v4194
    %v4217 = vadd.f32 %v3967, %v4197
    %v4218 = vadd.f32 %v3968, %v4199
    %v4219 = vadd.f32 %v3969, %v4202
    %v4220 = vadd.f32 %v3970, %v4204
    %v4221 = vadd.f32 %v3971, %v4207
    %v4222 = vadd.f32 %v3972, %v4209
    %v4223 = vld [vmem:[#allocation2] sm:$0x1]
    %v4224 = vld [vmem:[#allocation4] sm:$0x1]
    %4225 = vadd.xlane.f32.xlu0 %v4211
    %v4226 = vpop.xlane.xlu0 %4225
    %4227 = vadd.xlane.f32.xlu0 %v4212
    %v4228 = vpop.xlane.xlu0 %4227
    %4229 = vadd.xlane.f32.xlu0 %v4213
    %v4230 = vpop.xlane.xlu0 %4229
    %4231 = vadd.xlane.f32.xlu0 %v4214
    %v4232 = vpop.xlane.xlu0 %4231
    %4233 = vadd.xlane.f32.xlu0 %v4215
    %v4234 = vpop.xlane.xlu0 %4233
    %4235 = vadd.xlane.f32.xlu0 %v4216
    %v4236 = vpop.xlane.xlu0 %4235
    %4237 = vadd.xlane.f32.xlu0 %v4217
    %v4238 = vpop.xlane.xlu0 %4237
    %4239 = vadd.xlane.f32.xlu0 %v4218
    %v4240 = vpop.xlane.xlu0 %4239
    %4241 = vadd.xlane.f32.xlu0 %v4219
    %v4242 = vpop.xlane.xlu0 %4241
    %4243 = vadd.xlane.f32.xlu0 %v4220
    %v4244 = vpop.xlane.xlu0 %4243
    %4245 = vadd.xlane.f32.xlu0 %v4221
    %v4246 = vpop.xlane.xlu0 %4245
    %4247 = vadd.xlane.f32.xlu0 %v4222
    %v4248 = vpop.xlane.xlu0 %4247
    %v4249 = vmul.f32 %v4226, 0.03125
    %v4250 = vmul.f32 %v4228, 0.03125
    %v4251 = vmul.f32 %v4230, 0.03125
    %v4252 = vmul.f32 %v4232, 0.03125
    %v4253 = vmul.f32 %v4234, 0.03125
    %v4254 = vmul.f32 %v4236, 0.03125
    %v4255 = vmul.f32 %v4238, 0.03125
    %v4256 = vmul.f32 %v4240, 0.03125
    %v4257 = vmul.f32 %v4242, 0.03125
    %v4258 = vmul.f32 %v4244, 0.03125
    %v4259 = vmul.f32 %v4246, 0.03125
    %v4260 = vmul.f32 %v4248, 0.03125
    %v4261 = vmul.f32 %v4211, %v4211
    %v4262 = vmul.f32 %v4212, %v4212
    %v4263 = vmul.f32 %v4213, %v4213
    %v4264 = vmul.f32 %v4214, %v4214
    %v4265 = vmul.f32 %v4215, %v4215
    %v4266 = vmul.f32 %v4216, %v4216
    %v4267 = vmul.f32 %v4217, %v4217
    %v4268 = vmul.f32 %v4218, %v4218
    %v4269 = vmul.f32 %v4219, %v4219
    %v4270 = vmul.f32 %v4220, %v4220
    %v4271 = vmul.f32 %v4221, %v4221
    %v4272 = vmul.f32 %v4222, %v4222
    %4273 = vadd.xlane.f32.xlu0 %v4261
    %v4274 = vpop.xlane.xlu0 %4273
    %4275 = vadd.xlane.f32.xlu0 %v4262
    %v4276 = vpop.xlane.xlu0 %4275
    %4277 = vadd.xlane.f32.xlu0 %v4263
    %v4278 = vpop.xlane.xlu0 %4277
    %4279 = vadd.xlane.f32.xlu0 %v4264
    %v4280 = vpop.xlane.xlu0 %4279
    %4281 = vadd.xlane.f32.xlu0 %v4265
    %v4282 = vpop.xlane.xlu0 %4281
    %4283 = vadd.xlane.f32.xlu0 %v4266
    %v4284 = vpop.xlane.xlu0 %4283
    %4285 = vadd.xlane.f32.xlu0 %v4267
    %v4286 = vpop.xlane.xlu0 %4285
    %4287 = vadd.xlane.f32.xlu0 %v4268
    %v4288 = vpop.xlane.xlu0 %4287
    %4289 = vadd.xlane.f32.xlu0 %v4269
    %v4290 = vpop.xlane.xlu0 %4289
    %4291 = vadd.xlane.f32.xlu0 %v4270
    %v4292 = vpop.xlane.xlu0 %4291
    %4293 = vadd.xlane.f32.xlu0 %v4271
    %v4294 = vpop.xlane.xlu0 %4293
    %4295 = vadd.xlane.f32.xlu0 %v4272
    %v4296 = vpop.xlane.xlu0 %4295
    %v4297 = vmul.f32 %v4274, 0.03125
    %v4298 = vmul.f32 %v4276, 0.03125
    %v4299 = vmul.f32 %v4278, 0.03125
    %v4300 = vmul.f32 %v4280, 0.03125
    %v4301 = vmul.f32 %v4282, 0.03125
    %v4302 = vmul.f32 %v4284, 0.03125
    %v4303 = vmul.f32 %v4286, 0.03125
    %v4304 = vmul.f32 %v4288, 0.03125
    %v4305 = vmul.f32 %v4290, 0.03125
    %v4306 = vmul.f32 %v4292, 0.03125
    %v4307 = vmul.f32 %v4294, 0.03125
    %v4308 = vmul.f32 %v4296, 0.03125
    %v4309 = vmul.f32 %v4249, %v4249
    %v4310 = vmul.f32 %v4250, %v4250
    %v4311 = vmul.f32 %v4251, %v4251
    %v4312 = vmul.f32 %v4252, %v4252
    %v4313 = vmul.f32 %v4253, %v4253
    %v4314 = vmul.f32 %v4254, %v4254
    %v4315 = vmul.f32 %v4255, %v4255
    %v4316 = vmul.f32 %v4256, %v4256
    %v4317 = vmul.f32 %v4257, %v4257
    %v4318 = vmul.f32 %v4258, %v4258
    %v4319 = vmul.f32 %v4259, %v4259
    %v4320 = vmul.f32 %v4260, %v4260
    %v4321 = vsub.f32 %v4297, %v4309
    %v4322 = vsub.f32 %v4298, %v4310
    %v4323 = vsub.f32 %v4299, %v4311
    %v4324 = vsub.f32 %v4300, %v4312
    %v4325 = vsub.f32 %v4301, %v4313
    %v4326 = vsub.f32 %v4302, %v4314
    %v4327 = vsub.f32 %v4303, %v4315
    %v4328 = vsub.f32 %v4304, %v4316
    %v4329 = vsub.f32 %v4305, %v4317
    %v4330 = vsub.f32 %v4306, %v4318
    %v4331 = vsub.f32 %v4307, %v4319
    %v4332 = vsub.f32 %v4308, %v4320
    %v4333 = vsub.f32 %v4211, %v4249
    %v4334 = vsub.f32 %v4212, %v4250
    %v4335 = vsub.f32 %v4213, %v4251
    %v4336 = vsub.f32 %v4214, %v4252
    %v4337 = vsub.f32 %v4215, %v4253
    %v4338 = vsub.f32 %v4216, %v4254
    %v4339 = vsub.f32 %v4217, %v4255
    %v4340 = vsub.f32 %v4218, %v4256
    %v4341 = vsub.f32 %v4219, %v4257
    %v4342 = vsub.f32 %v4220, %v4258
    %v4343 = vsub.f32 %v4221, %v4259
    %v4344 = vsub.f32 %v4222, %v4260
    %v4345 = vadd.f32 %v4321, 1e-05
    %v4346 = vadd.f32 %v4322, 1e-05
    %v4347 = vadd.f32 %v4323, 1e-05
    %v4348 = vadd.f32 %v4324, 1e-05
    %v4349 = vadd.f32 %v4325, 1e-05
    %v4350 = vadd.f32 %v4326, 1e-05
    %v4351 = vadd.f32 %v4327, 1e-05
    %v4352 = vadd.f32 %v4328, 1e-05
    %v4353 = vadd.f32 %v4329, 1e-05
    %v4354 = vadd.f32 %v4330, 1e-05
    %v4355 = vadd.f32 %v4331, 1e-05
    %v4356 = vadd.f32 %v4332, 1e-05
    %v4357 = vrsqrt.pop %v4345
    %v4358 = vmul.f32 %v4357, %v4345
    %v4359 = vmul.f32 %v4358, %v4357
    %v4360 = vmul.f32 0.5, %v4359
    %v4361 = vsub.f32 1.5, %v4360
    %v4362 = vmul.f32 %v4357, %v4361
    %vm4363 = vweird.f32 %v4345
    %vm4364 = vweird.f32 %v4357
    %vm4365 = vmor %vm4363, %vm4364
    %v4366 = vsel %vm4365, %v4357, %v4362
    %v4367 = vrsqrt.pop %v4346
    %v4368 = vmul.f32 %v4367, %v4346
    %v4369 = vmul.f32 %v4368, %v4367
    %v4370 = vmul.f32 0.5, %v4369
    %v4371 = vsub.f32 1.5, %v4370
    %v4372 = vmul.f32 %v4367, %v4371
    %vm4373 = vweird.f32 %v4346
    %vm4374 = vweird.f32 %v4367
    %vm4375 = vmor %vm4373, %vm4374
    %v4376 = vsel %vm4375, %v4367, %v4372
    %v4377 = vrsqrt.pop %v4347
    %v4378 = vmul.f32 %v4377, %v4347
    %v4379 = vmul.f32 %v4378, %v4377
    %v4380 = vmul.f32 0.5, %v4379
    %v4381 = vsub.f32 1.5, %v4380
    %v4382 = vmul.f32 %v4377, %v4381
    %vm4383 = vweird.f32 %v4347
    %vm4384 = vweird.f32 %v4377
    %vm4385 = vmor %vm4383, %vm4384
    %v4386 = vsel %vm4385, %v4377, %v4382
    %v4387 = vrsqrt.pop %v4348
    %v4388 = vmul.f32 %v4387, %v4348
    %v4389 = vmul.f32 %v4388, %v4387
    %v4390 = vmul.f32 0.5, %v4389
    %v4391 = vsub.f32 1.5, %v4390
    %v4392 = vmul.f32 %v4387, %v4391
    %vm4393 = vweird.f32 %v4348
    %vm4394 = vweird.f32 %v4387
    %vm4395 = vmor %vm4393, %vm4394
    %v4396 = vsel %vm4395, %v4387, %v4392
    %v4397 = vrsqrt.pop %v4349
    %v4398 = vmul.f32 %v4397, %v4349
    %v4399 = vmul.f32 %v4398, %v4397
    %v4400 = vmul.f32 0.5, %v4399
    %v4401 = vsub.f32 1.5, %v4400
    %v4402 = vmul.f32 %v4397, %v4401
    %vm4403 = vweird.f32 %v4349
    %vm4404 = vweird.f32 %v4397
    %vm4405 = vmor %vm4403, %vm4404
    %v4406 = vsel %vm4405, %v4397, %v4402
    %v4407 = vrsqrt.pop %v4350
    %v4408 = vmul.f32 %v4407, %v4350
    %v4409 = vmul.f32 %v4408, %v4407
    %v4410 = vmul.f32 0.5, %v4409
    %v4411 = vsub.f32 1.5, %v4410
    %v4412 = vmul.f32 %v4407, %v4411
    %vm4413 = vweird.f32 %v4350
    %vm4414 = vweird.f32 %v4407
    %vm4415 = vmor %vm4413, %vm4414
    %v4416 = vsel %vm4415, %v4407, %v4412
    %v4417 = vrsqrt.pop %v4351
    %v4418 = vmul.f32 %v4417, %v4351
    %v4419 = vmul.f32 %v4418, %v4417
    %v4420 = vmul.f32 0.5, %v4419
    %v4421 = vsub.f32 1.5, %v4420
    %v4422 = vmul.f32 %v4417, %v4421
    %vm4423 = vweird.f32 %v4351
    %vm4424 = vweird.f32 %v4417
    %vm4425 = vmor %vm4423, %vm4424
    %v4426 = vsel %vm4425, %v4417, %v4422
    %v4427 = vrsqrt.pop %v4352
    %v4428 = vmul.f32 %v4427, %v4352
    %v4429 = vmul.f32 %v4428, %v4427
    %v4430 = vmul.f32 0.5, %v4429
    %v4431 = vsub.f32 1.5, %v4430
    %v4432 = vmul.f32 %v4427, %v4431
    %vm4433 = vweird.f32 %v4352
    %vm4434 = vweird.f32 %v4427
    %vm4435 = vmor %vm4433, %vm4434
    %v4436 = vsel %vm4435, %v4427, %v4432
    %v4437 = vrsqrt.pop %v4353
    %v4438 = vmul.f32 %v4437, %v4353
    %v4439 = vmul.f32 %v4438, %v4437
    %v4440 = vmul.f32 0.5, %v4439
    %v4441 = vsub.f32 1.5, %v4440
    %v4442 = vmul.f32 %v4437, %v4441
    %vm4443 = vweird.f32 %v4353
    %vm4444 = vweird.f32 %v4437
    %vm4445 = vmor %vm4443, %vm4444
    %v4446 = vsel %vm4445, %v4437, %v4442
    %v4447 = vrsqrt.pop %v4354
    %v4448 = vmul.f32 %v4447, %v4354
    %v4449 = vmul.f32 %v4448, %v4447
    %v4450 = vmul.f32 0.5, %v4449
    %v4451 = vsub.f32 1.5, %v4450
    %v4452 = vmul.f32 %v4447, %v4451
    %vm4453 = vweird.f32 %v4354
    %vm4454 = vweird.f32 %v4447
    %vm4455 = vmor %vm4453, %vm4454
    %v4456 = vsel %vm4455, %v4447, %v4452
    %v4457 = vrsqrt.pop %v4355
    %v4458 = vmul.f32 %v4457, %v4355
    %v4459 = vmul.f32 %v4458, %v4457
    %v4460 = vmul.f32 0.5, %v4459
    %v4461 = vsub.f32 1.5, %v4460
    %v4462 = vmul.f32 %v4457, %v4461
    %vm4463 = vweird.f32 %v4355
    %vm4464 = vweird.f32 %v4457
    %vm4465 = vmor %vm4463, %vm4464
    %v4466 = vsel %vm4465, %v4457, %v4462
    %v4467 = vrsqrt.pop %v4356
    %v4468 = vmul.f32 %v4467, %v4356
    %v4469 = vmul.f32 %v4468, %v4467
    %v4470 = vmul.f32 0.5, %v4469
    %v4471 = vsub.f32 1.5, %v4470
    %v4472 = vmul.f32 %v4467, %v4471
    %vm4473 = vweird.f32 %v4356
    %vm4474 = vweird.f32 %v4467
    %vm4475 = vmor %vm4473, %vm4474
    %v4476 = vsel %vm4475, %v4467, %v4472
    %v4477 = vmul.f32 %v4333, %v4366
    %v4478 = vmul.f32 %v4334, %v4376
    %v4479 = vmul.f32 %v4335, %v4386
    %v4480 = vmul.f32 %v4336, %v4396
    %v4481 = vmul.f32 %v4337, %v4406
    %v4482 = vmul.f32 %v4338, %v4416
    %v4483 = vmul.f32 %v4339, %v4426
    %v4484 = vmul.f32 %v4340, %v4436
    %v4485 = vmul.f32 %v4341, %v4446
    %v4486 = vmul.f32 %v4342, %v4456
    %v4487 = vmul.f32 %v4343, %v4466
    %v4488 = vmul.f32 %v4344, %v4476
    %v4490 = vperm.slane %v4223, 0
    %v4492 = vmul.f32 %v4477, %v4490
    %v4493 = vmul.f32 %v4478, %v4490
    %v4494 = vmul.f32 %v4479, %v4490
    %v4495 = vmul.f32 %v4480, %v4490
    %v4496 = vmul.f32 %v4481, %v4490
    %v4497 = vmul.f32 %v4482, %v4490
    %v4498 = vmul.f32 %v4483, %v4490
    %v4499 = vmul.f32 %v4484, %v4490
    %v4500 = vmul.f32 %v4485, %v4490
    %v4501 = vmul.f32 %v4486, %v4490
    %v4502 = vmul.f32 %v4487, %v4490
    %v4503 = vmul.f32 %v4488, %v4490
    %v4505 = vperm.slane %v4224, 0
    %v4507 = vadd.f32 %v4492, %v4505
    %v4508 = vadd.f32 %v4493, %v4505
    %v4509 = vadd.f32 %v4494, %v4505
    %v4510 = vadd.f32 %v4495, %v4505
    %v4511 = vadd.f32 %v4496, %v4505
    %v4512 = vadd.f32 %v4497, %v4505
    %v4513 = vadd.f32 %v4498, %v4505
    %v4514 = vadd.f32 %v4499, %v4505
    %v4515 = vadd.f32 %v4500, %v4505
    %v4516 = vadd.f32 %v4501, %v4505
    %v4517 = vadd.f32 %v4502, %v4505
    %v4518 = vadd.f32 %v4503, %v4505
    %v4519 = vld [vmem:[%s55] sm:$0xf]
    %v4520 = vld [vmem:[%s55 + $0x4] sm:$0xf]
    %v4521 = vld [vmem:[%s55 + $0x8] sm:$0xf]
    %v4522 = vld [vmem:[%s55 + $0xc] sm:$0xf]
    %v4523 = vld [vmem:[%s55 + $0x10] sm:$0xf]
    %v4524 = vld [vmem:[%s55 + $0x14] sm:$0xf]
    %v4525 = vld [vmem:[%s55 + $0x18] sm:$0xf]
    %v4526 = vld [vmem:[%s55 + $0x1c] sm:$0xf]
    %v4527 = vld [vmem:[%s55 + $0x20] sm:$0xf]
    %v4528 = vld [vmem:[%s55 + $0x24] sm:$0xf]
    %v4529 = vld [vmem:[%s55 + $0x28] sm:$0xf]
    %v4530 = vld [vmem:[%s55 + $0x2c] sm:$0xf]
    %v4531 = vld [vmem:[%s55 + $0x30] sm:$0xf]
    %v4532 = vld [vmem:[%s55 + $0x34] sm:$0xf]
    %v4533 = vld [vmem:[%s55 + $0x38] sm:$0xf]
    %v4534 = vld [vmem:[%s55 + $0x3c] sm:$0xf]
    %v4535 = vpack.c.bf16 %v4508, %v4507
    %v4536 = vpack.c.bf16 %v4510, %v4509
    %v4537 = vpack.c.bf16 %v4512, %v4511
    %v4538 = vpack.c.bf16 %v4514, %v4513
    %v4539 = vpack.c.bf16 %v4516, %v4515
    %v4540 = vpack.c.bf16 %v4518, %v4517
    %v4541 = vld [vmem:[#allocation6] sm:$0x1]
    %v4543 = vperm.slane %v4541, 0
    %v4561 = vunpack.c.l.b16 %v4519
    %v4562 = vunpack.c.l.b16 %v4520
    %v4563 = vunpack.c.l.b16 %v4521
    %v4564 = vunpack.c.l.b16 %v4522
    %v4565 = vunpack.c.l.b16 %v4523
    %v4566 = vunpack.c.l.b16 %v4524
    %v4567 = vunpack.c.l.b16 %v4525
    %v4568 = vunpack.c.l.b16 %v4526
    %v4569 = vunpack.c.l.b16 %v4527
    %v4570 = vunpack.c.l.b16 %v4528
    %v4571 = vunpack.c.l.b16 %v4529
    %v4572 = vunpack.c.l.b16 %v4530
    %v4573 = vunpack.c.l.b16 %v4531
    %v4574 = vunpack.c.l.b16 %v4532
    %v4575 = vunpack.c.l.b16 %v4533
    %v4576 = vunpack.c.l.b16 %v4534
    %v4577 = vpack.c.b16 %v4562, %v4561
    %v4578 = vpack.c.b16 %v4564, %v4563
    %v4579 = vpack.c.b16 %v4566, %v4565
    %v4580 = vpack.c.b16 %v4568, %v4567
    %v4581 = vpack.c.b16 %v4570, %v4569
    %v4582 = vpack.c.b16 %v4572, %v4571
    %v4583 = vpack.c.b16 %v4574, %v4573
    %v4584 = vpack.c.b16 %v4576, %v4575
    %4593 = vmatpush.bf16.msra.mxu0 %v4584
    %4594 = vmatpush.bf16.msra.mxu0 %v4583
    %4595 = vmatpush.bf16.msra.mxu0 %v4582
    %4596 = vmatpush.bf16.msra.mxu0 %v4581
    %4597 = vmatpush.bf16.msra.mxu0 %v4580
    %4598 = vmatpush.bf16.msra.mxu0 %v4579
    %4599 = vmatpush.bf16.msra.mxu0 %v4578
    %4600 = vmatpush.bf16.msra.mxu0 %v4577
    %4601 = vmatmul.bf16.gmra.mxu0 %v4535
    %v4602 = vpop.f32.mrf.mxu0
    %v4603 = vadd.f32 %v4543, %v4602
    %v4604 = vpop.f32.mrf.mxu0
    %v4605 = vadd.f32 %v4543, %v4604
    %4606 = vmatmul.bf16.gmra.mxu0 %v4536
    %v4607 = vpop.f32.mrf.mxu0
    %v4608 = vadd.f32 %v4543, %v4607
    %v4609 = vpop.f32.mrf.mxu0
    %v4610 = vadd.f32 %v4543, %v4609
    %4611 = vmatmul.bf16.gmra.mxu0 %v4537
    %v4612 = vpop.f32.mrf.mxu0
    %v4613 = vadd.f32 %v4543, %v4612
    %v4614 = vpop.f32.mrf.mxu0
    %v4615 = vadd.f32 %v4543, %v4614
    %4616 = vmatmul.bf16.gmra.mxu0 %v4538
    %v4617 = vpop.f32.mrf.mxu0
    %v4618 = vadd.f32 %v4543, %v4617
    %v4619 = vpop.f32.mrf.mxu0
    %v4620 = vadd.f32 %v4543, %v4619
    %4621 = vmatmul.bf16.gmra.mxu0 %v4539
    %v4622 = vpop.f32.mrf.mxu0
    %v4623 = vadd.f32 %v4543, %v4622
    %v4624 = vpop.f32.mrf.mxu0
    %v4625 = vadd.f32 %v4543, %v4624
    %4626 = vmatmul.bf16.gmra.mxu0 %v4540
    %v4627 = vpop.f32.mrf.mxu0
    %v4628 = vadd.f32 %v4543, %v4627
    %v4629 = vpop.f32.mrf.mxu0
    %v4630 = vadd.f32 %v4543, %v4629
    %4631 = vdwg.mxu0
    %v4632 = vld [vmem:[%s5] sm:$0xff]
    %v4633 = vld [vmem:[%s5 + $0x8] sm:$0xff]
    %v4634 = vld [vmem:[%s59] sm:$0xff]
    %v4635 = vld [vmem:[%s59 + $0x8] sm:$0xf]
    %v4636 = vld [vmem:[%s59 + $0xc] sm:$0xff]
    %v4637 = vld [vmem:[%s59 + $0x14] sm:$0xf]
    %v4638 = vld [vmem:[%s59 + $0x18] sm:$0xff]
    %v4639 = vld [vmem:[%s59 + $0x20] sm:$0xf]
    %v4640 = vld [vmem:[%s59 + $0x24] sm:$0xff]
    %v4641 = vld [vmem:[%s59 + $0x2c] sm:$0xf]
    %v4642 = vld [vmem:[%s59 + $0x30] sm:$0xff]
    %v4643 = vld [vmem:[%s59 + $0x38] sm:$0xf]
    %v4644 = vld [vmem:[%s59 + $0x3c] sm:$0xff]
    %v4645 = vld [vmem:[%s59 + $0x44] sm:$0xf]
    %v4646 = vld [vmem:[%s59 + $0x48] sm:$0xff]
    %v4647 = vld [vmem:[%s59 + $0x50] sm:$0xf]
    %v4648 = vld [vmem:[%s59 + $0x54] sm:$0xff]
    %v4649 = vld [vmem:[%s59 + $0x5c] sm:$0xf]
    %v4650 = vld [vmem:[%s59 + $0x60] sm:$0xff]
    %v4651 = vld [vmem:[%s59 + $0x68] sm:$0xf]
    %v4652 = vld [vmem:[%s59 + $0x6c] sm:$0xff]
    %v4653 = vld [vmem:[%s59 + $0x74] sm:$0xf]
    %v4654 = vld [vmem:[%s59 + $0x78] sm:$0xff]
    %v4655 = vld [vmem:[%s59 + $0x80] sm:$0xf]
    %v4656 = vld [vmem:[%s59 + $0x84] sm:$0xff]
    %v4657 = vld [vmem:[%s59 + $0x8c] sm:$0xf]
    %v4658 = vld [vmem:[%s59 + $0x90] sm:$0xff]
    %v4659 = vld [vmem:[%s59 + $0x98] sm:$0xf]
    %v4660 = vld [vmem:[%s59 + $0x9c] sm:$0xff]
    %v4661 = vld [vmem:[%s59 + $0xa4] sm:$0xf]
    %v4662 = vld [vmem:[%s59 + $0xa8] sm:$0xff]
    %v4663 = vld [vmem:[%s59 + $0xb0] sm:$0xf]
    %v4664 = vld [vmem:[%s59 + $0xb4] sm:$0xff]
    %v4665 = vld [vmem:[%s59 + $0xbc] sm:$0xf]
    %v4666 = vpack.c.bf16 %v4633, %v4632
    %v4667 = vld [vmem:[%s61] sm:$0x7]
    %v4669 = vperm.slane %v4667, 0
    %v4670 = vperm.slane %v4667, 1
    %v4671 = vperm.slane %v4667, 2
    %v4707 = vunpack.c.l.b16 %v4634
    %v4708 = vunpack.c.h.b16 %v4634
    %v4709 = vunpack.c.l.b16 %v4635
    %v4710 = vunpack.c.l.b16 %v4636
    %v4711 = vunpack.c.h.b16 %v4636
    %v4712 = vunpack.c.l.b16 %v4637
    %v4713 = vunpack.c.l.b16 %v4638
    %v4714 = vunpack.c.h.b16 %v4638
    %v4715 = vunpack.c.l.b16 %v4639
    %v4716 = vunpack.c.l.b16 %v4640
    %v4717 = vunpack.c.h.b16 %v4640
    %v4718 = vunpack.c.l.b16 %v4641
    %v4719 = vunpack.c.l.b16 %v4642
    %v4720 = vunpack.c.h.b16 %v4642
    %v4721 = vunpack.c.l.b16 %v4643
    %v4722 = vunpack.c.l.b16 %v4644
    %v4723 = vunpack.c.h.b16 %v4644
    %v4724 = vunpack.c.l.b16 %v4645
    %v4725 = vunpack.c.l.b16 %v4646
    %v4726 = vunpack.c.h.b16 %v4646
    %v4727 = vunpack.c.l.b16 %v4647
    %v4728 = vunpack.c.l.b16 %v4648
    %v4729 = vunpack.c.h.b16 %v4648
    %v4730 = vunpack.c.l.b16 %v4649
    %v4731 = vunpack.c.l.b16 %v4650
    %v4732 = vunpack.c.h.b16 %v4650
    %v4733 = vunpack.c.l.b16 %v4651
    %v4734 = vunpack.c.l.b16 %v4652
    %v4735 = vunpack.c.h.b16 %v4652
    %v4736 = vunpack.c.l.b16 %v4653
    %v4737 = vunpack.c.l.b16 %v4654
    %v4738 = vunpack.c.h.b16 %v4654
    %v4739 = vunpack.c.l.b16 %v4655
    %v4740 = vunpack.c.l.b16 %v4656
    %v4741 = vunpack.c.h.b16 %v4656
    %v4742 = vunpack.c.l.b16 %v4657
    %v4743 = vunpack.c.l.b16 %v4658
    %v4744 = vunpack.c.h.b16 %v4658
    %v4745 = vunpack.c.l.b16 %v4659
    %v4746 = vunpack.c.l.b16 %v4660
    %v4747 = vunpack.c.h.b16 %v4660
    %v4748 = vunpack.c.l.b16 %v4661
    %v4749 = vunpack.c.l.b16 %v4662
    %v4750 = vunpack.c.h.b16 %v4662
    %v4751 = vunpack.c.l.b16 %v4663
    %v4752 = vunpack.c.l.b16 %v4664
    %v4753 = vunpack.c.h.b16 %v4664
    %v4754 = vunpack.c.l.b16 %v4665
    %v4755 = vpack.c.b16 %v4710, %v4707
    %v4756 = vpack.c.b16 %v4711, %v4708
    %v4757 = vpack.c.b16 %v4712, %v4709
    %v4758 = vpack.c.b16 %v4716, %v4713
    %v4759 = vpack.c.b16 %v4717, %v4714
    %v4760 = vpack.c.b16 %v4718, %v4715
    %v4761 = vpack.c.b16 %v4722, %v4719
    %v4762 = vpack.c.b16 %v4723, %v4720
    %v4763 = vpack.c.b16 %v4724, %v4721
    %v4764 = vpack.c.b16 %v4728, %v4725
    %v4765 = vpack.c.b16 %v4729, %v4726
    %v4766 = vpack.c.b16 %v4730, %v4727
    %v4767 = vpack.c.b16 %v4734, %v4731
    %v4768 = vpack.c.b16 %v4735, %v4732
    %v4769 = vpack.c.b16 %v4736, %v4733
    %v4770 = vpack.c.b16 %v4740, %v4737
    %v4771 = vpack.c.b16 %v4741, %v4738
    %v4772 = vpack.c.b16 %v4742, %v4739
    %v4773 = vpack.c.b16 %v4746, %v4743
    %v4774 = vpack.c.b16 %v4747, %v4744
    %v4775 = vpack.c.b16 %v4748, %v4745
    %v4776 = vpack.c.b16 %v4752, %v4749
    %v4777 = vpack.c.b16 %v4753, %v4750
    %v4778 = vpack.c.b16 %v4754, %v4751
    %4803 = vmatpush.bf16.msra.mxu0 %v4776
    %4804 = vmatpush.bf16.msra.mxu0 %v4773
    %4805 = vmatpush.bf16.msra.mxu0 %v4770
    %4806 = vmatpush.bf16.msra.mxu0 %v4767
    %4807 = vmatpush.bf16.msra.mxu0 %v4764
    %4808 = vmatpush.bf16.msra.mxu0 %v4761
    %4809 = vmatpush.bf16.msra.mxu0 %v4758
    %4810 = vmatpush.bf16.msra.mxu0 %v4755
    %4811 = vmatmul.bf16.gmra.mxu0 %v4666
    %v4812 = vpop.f32.mrf.mxu0
    %v4813 = vadd.f32 %v4669, %v4812
    %v4814 = vpop.f32.mrf.mxu0
    %v4815 = vadd.f32 %v4669, %v4814
    %4816 = vdwg.mxu0
    %4817 = vmatpush.bf16.msra.mxu0 %v4777
    %4818 = vmatpush.bf16.msra.mxu0 %v4774
    %4819 = vmatpush.bf16.msra.mxu0 %v4771
    %4820 = vmatpush.bf16.msra.mxu0 %v4768
    %4821 = vmatpush.bf16.msra.mxu0 %v4765
    %4822 = vmatpush.bf16.msra.mxu0 %v4762
    %4823 = vmatpush.bf16.msra.mxu0 %v4759
    %4824 = vmatpush.bf16.msra.mxu0 %v4756
    %4825 = vmatmul.bf16.gmra.mxu0 %v4666
    %v4826 = vpop.f32.mrf.mxu0
    %v4827 = vadd.f32 %v4670, %v4826
    %v4828 = vpop.f32.mrf.mxu0
    %v4829 = vadd.f32 %v4670, %v4828
    %4830 = vdwg.mxu0
    %4831 = vmatpush.bf16.msra.mxu0 %v4778
    %4832 = vmatpush.bf16.msra.mxu0 %v4775
    %4833 = vmatpush.bf16.msra.mxu0 %v4772
    %4834 = vmatpush.bf16.msra.mxu0 %v4769
    %4835 = vmatpush.bf16.msra.mxu0 %v4766
    %4836 = vmatpush.bf16.msra.mxu0 %v4763
    %4837 = vmatpush.bf16.msra.mxu0 %v4760
    %4838 = vmatpush.bf16.msra.mxu0 %v4757
    %4839 = vmatmul.bf16.gmra.mxu0 %v4666
    %v4840 = vpop.f32.mrf.mxu0
    %v4841 = vadd.f32 %v4671, %v4840
    %v4842 = vpop.f32.mrf.mxu0
    %v4843 = vadd.f32 %v4671, %v4842
    %4844 = vdwg.mxu0
    %v4845 = vperm.slane %v1112, 0
    %v4846 = vmul.f32 %v4813, %v4845
    %v4847 = vmul.f32 %v4815, %v4845
    %v4848 = vperm.slane %v1112, 1
    %v4849 = vmul.f32 %v4813, %v4848
    %v4850 = vmul.f32 %v4815, %v4848
    %v4851 = vperm.slane %v1112, 2
    %v4852 = vmul.f32 %v4813, %v4851
    %v4853 = vmul.f32 %v4815, %v4851
    %v4854 = vperm.slane %v1112, 3
    %v4855 = vmul.f32 %v4813, %v4854
    %v4856 = vmul.f32 %v4815, %v4854
    %v4857 = vperm.slane %v1112, 4
    %v4858 = vmul.f32 %v4813, %v4857
    %v4859 = vmul.f32 %v4815, %v4857
    %v4860 = vperm.slane %v1112, 5
    %v4861 = vmul.f32 %v4813, %v4860
    %v4862 = vmul.f32 %v4815, %v4860
    %v4863 = vperm.slane %v1112, 6
    %v4864 = vmul.f32 %v4813, %v4863
    %v4865 = vmul.f32 %v4815, %v4863
    %v4866 = vperm.slane %v1112, 7
    %v4867 = vmul.f32 %v4813, %v4866
    %v4868 = vmul.f32 %v4815, %v4866
    %v4869 = vperm.slane %v1113, 0
    %v4870 = vmul.f32 %v4813, %v4869
    %v4871 = vmul.f32 %v4815, %v4869
    %v4872 = vperm.slane %v1113, 1
    %v4873 = vmul.f32 %v4813, %v4872
    %v4874 = vmul.f32 %v4815, %v4872
    %v4875 = vperm.slane %v1113, 2
    %v4876 = vmul.f32 %v4813, %v4875
    %v4877 = vmul.f32 %v4815, %v4875
    %v4878 = vperm.slane %v1113, 3
    %v4879 = vmul.f32 %v4813, %v4878
    %v4880 = vmul.f32 %v4815, %v4878
    %v4881 = vperm.slane %v1113, 4
    %v4882 = vmul.f32 %v4813, %v4881
    %v4883 = vmul.f32 %v4815, %v4881
    %v4884 = vperm.slane %v1113, 5
    %v4885 = vmul.f32 %v4813, %v4884
    %v4886 = vmul.f32 %v4815, %v4884
    %v4887 = vperm.slane %v1113, 6
    %v4888 = vmul.f32 %v4813, %v4887
    %v4889 = vmul.f32 %v4815, %v4887
    %v4890 = vpack.c.bf16 %v4847, %v4846
    %v4891 = vpack.c.bf16 %v4850, %v4849
    %v4892 = vpack.c.bf16 %v4853, %v4852
    %v4893 = vpack.c.bf16 %v4856, %v4855
    %v4894 = vpack.c.bf16 %v4859, %v4858
    %v4895 = vpack.c.bf16 %v4862, %v4861
    %v4896 = vpack.c.bf16 %v4865, %v4864
    %v4897 = vpack.c.bf16 %v4868, %v4867
    %v4898 = vpack.c.bf16 %v4871, %v4870
    %v4899 = vpack.c.bf16 %v4874, %v4873
    %v4900 = vpack.c.bf16 %v4877, %v4876
    %v4901 = vpack.c.bf16 %v4880, %v4879
    %v4902 = vpack.c.bf16 %v4883, %v4882
    %v4903 = vpack.c.bf16 %v4886, %v4885
    %v4904 = vpack.c.bf16 %v4889, %v4888
    %4905 = vxpose.xlu0.b32.start [1/16] %v4827, 128
    %4906 = vxpose.xlu0.b32.cont [2/16] %v4829, 128
    %4907 = vxpose.xlu0.b32.cont [3/16] 0.0, 128
    %4908 = vxpose.xlu0.b32.cont [4/16] 0.0, 128
    %4909 = vxpose.xlu0.b32.cont [5/16] 0.0, 128
    %4910 = vxpose.xlu0.b32.cont [6/16] 0.0, 128
    %4911 = vxpose.xlu0.b32.cont [7/16] 0.0, 128
    %4912 = vxpose.xlu0.b32.cont [8/16] 0.0, 128
    %4913 = vxpose.xlu0.b32.cont [9/16] 0.0, 128
    %4914 = vxpose.xlu0.b32.cont [10/16] 0.0, 128
    %4915 = vxpose.xlu0.b32.cont [11/16] 0.0, 128
    %4916 = vxpose.xlu0.b32.cont [12/16] 0.0, 128
    %4917 = vxpose.xlu0.b32.cont [13/16] 0.0, 128
    %4918 = vxpose.xlu0.b32.cont [14/16] 0.0, 128
    %4919 = vxpose.xlu0.b32.cont [15/16] 0.0, 128
    %4920 = vxpose.xlu0.b32.end [16/16] 0.0, 128
    %v4921 = vpop.trf.xlu0
    %v4922 = vpop.trf.xlu0
    %v4923 = vpop.trf.xlu0
    %v4924 = vpop.trf.xlu0
    %v4925 = vpop.trf.xlu0
    %v4926 = vpop.trf.xlu0
    %v4927 = vpop.trf.xlu0
    %v4928 = vpop.trf.xlu0
    %v4929 = vpop.trf.xlu0
    %v4930 = vpop.trf.xlu0
    %v4931 = vpop.trf.xlu0
    %v4932 = vpop.trf.xlu0
    %v4933 = vpop.trf.xlu0
    %v4934 = vpop.trf.xlu0
    %v4935 = vpop.trf.xlu0
    %v4936 = vpop.trf.xlu0
    %v4937 = vpack.c.bf16 %v4922, %v4921
    %v4938 = vpack.c.bf16 %v4924, %v4923
    %v4939 = vpack.c.bf16 %v4926, %v4925
    %v4940 = vpack.c.bf16 %v4928, %v4927
    %v4941 = vpack.c.bf16 %v4930, %v4929
    %v4942 = vpack.c.bf16 %v4932, %v4931
    %v4943 = vpack.c.bf16 %v4934, %v4933
    %v4944 = vpack.c.bf16 %v4936, %v4935
    %4945 = vmatpush.bf16.msra.mxu0 %v4944
    %4946 = vmatpush.bf16.msra.mxu0 %v4943
    %4947 = vmatpush.bf16.msra.mxu0 %v4942
    %4948 = vmatpush.bf16.msra.mxu0 %v4941
    %4949 = vmatpush.bf16.msra.mxu0 %v4940
    %4950 = vmatpush.bf16.msra.mxu0 %v4939
    %4951 = vmatpush.bf16.msra.mxu0 %v4938
    %4952 = vmatpush.bf16.msra.mxu0 %v4937
    %4953 = vmatmul.bf16.gmra.mxu0 %v4890
    %v4954 = vpop.f32.mrf.mxu0
    %v4955 = vadd.f32 %v1132, %v4954
    %v4956 = vpop.f32.mrf.mxu0
    %v4957 = vadd.f32 %v1133, %v4956
    %4958 = vmatmul.bf16.gmra.mxu0 %v4891
    %v4959 = vpop.f32.mrf.mxu0
    %v4960 = vadd.f32 %v1132, %v4959
    %v4961 = vpop.f32.mrf.mxu0
    %v4962 = vadd.f32 %v1133, %v4961
    %4963 = vmatmul.bf16.gmra.mxu0 %v4892
    %v4964 = vpop.f32.mrf.mxu0
    %v4965 = vadd.f32 %v1132, %v4964
    %v4966 = vpop.f32.mrf.mxu0
    %v4967 = vadd.f32 %v1133, %v4966
    %4968 = vmatmul.bf16.gmra.mxu0 %v4893
    %v4969 = vpop.f32.mrf.mxu0
    %v4970 = vadd.f32 %v1132, %v4969
    %v4971 = vpop.f32.mrf.mxu0
    %v4972 = vadd.f32 %v1133, %v4971
    %4973 = vmatmul.bf16.gmra.mxu0 %v4894
    %v4974 = vpop.f32.mrf.mxu0
    %v4975 = vadd.f32 %v1132, %v4974
    %v4976 = vpop.f32.mrf.mxu0
    %v4977 = vadd.f32 %v1133, %v4976
    %4978 = vmatmul.bf16.gmra.mxu0 %v4895
    %v4979 = vpop.f32.mrf.mxu0
    %v4980 = vadd.f32 %v1132, %v4979
    %v4981 = vpop.f32.mrf.mxu0
    %v4982 = vadd.f32 %v1133, %v4981
    %4983 = vmatmul.bf16.gmra.mxu0 %v4896
    %v4984 = vpop.f32.mrf.mxu0
    %v4985 = vadd.f32 %v1132, %v4984
    %v4986 = vpop.f32.mrf.mxu0
    %v4987 = vadd.f32 %v1133, %v4986
    %4988 = vmatmul.bf16.gmra.mxu0 %v4897
    %v4989 = vpop.f32.mrf.mxu0
    %v4990 = vadd.f32 %v1132, %v4989
    %v4991 = vpop.f32.mrf.mxu0
    %v4992 = vadd.f32 %v1133, %v4991
    %4993 = vmatmul.bf16.gmra.mxu0 %v4898
    %v4994 = vpop.f32.mrf.mxu0
    %v4995 = vadd.f32 %v1132, %v4994
    %v4996 = vpop.f32.mrf.mxu0
    %v4997 = vadd.f32 %v1133, %v4996
    %4998 = vmatmul.bf16.gmra.mxu0 %v4899
    %v4999 = vpop.f32.mrf.mxu0
    %v5000 = vadd.f32 %v1132, %v4999
    %v5001 = vpop.f32.mrf.mxu0
    %v5002 = vadd.f32 %v1133, %v5001
    %5003 = vmatmul.bf16.gmra.mxu0 %v4900
    %v5004 = vpop.f32.mrf.mxu0
    %v5005 = vadd.f32 %v1132, %v5004
    %v5006 = vpop.f32.mrf.mxu0
    %v5007 = vadd.f32 %v1133, %v5006
    %5008 = vmatmul.bf16.gmra.mxu0 %v4901
    %v5009 = vpop.f32.mrf.mxu0
    %v5010 = vadd.f32 %v1132, %v5009
    %v5011 = vpop.f32.mrf.mxu0
    %v5012 = vadd.f32 %v1133, %v5011
    %5013 = vmatmul.bf16.gmra.mxu0 %v4902
    %v5014 = vpop.f32.mrf.mxu0
    %v5015 = vadd.f32 %v1132, %v5014
    %v5016 = vpop.f32.mrf.mxu0
    %v5017 = vadd.f32 %v1133, %v5016
    %5018 = vmatmul.bf16.gmra.mxu0 %v4903
    %v5019 = vpop.f32.mrf.mxu0
    %v5020 = vadd.f32 %v1132, %v5019
    %v5021 = vpop.f32.mrf.mxu0
    %v5022 = vadd.f32 %v1133, %v5021
    %5023 = vmatmul.bf16.gmra.mxu0 %v4904
    %v5024 = vpop.f32.mrf.mxu0
    %v5025 = vadd.f32 %v1132, %v5024
    %v5026 = vpop.f32.mrf.mxu0
    %v5027 = vadd.f32 %v1133, %v5026
    %5028 = vdwg.mxu0
    %vm5029 = vcmask 130048
    %v5030 = vsel %vm5029, %v4955, -inf
    %5031 = vmax.xlane.f32.xlu0 %v5030
    %v5032 = vpop.xlane.xlu0 %5031
    %v5033 = vsel %vm5029, %v4957, -inf
    %5034 = vmax.xlane.f32.xlu0 %v5033
    %v5035 = vpop.xlane.xlu0 %5034
    %v5036 = vsel %vm5029, %v4960, -inf
    %5037 = vmax.xlane.f32.xlu0 %v5036
    %v5038 = vpop.xlane.xlu0 %5037
    %v5039 = vsel %vm5029, %v4962, -inf
    %5040 = vmax.xlane.f32.xlu0 %v5039
    %v5041 = vpop.xlane.xlu0 %5040
    %v5042 = vsel %vm5029, %v4965, -inf
    %5043 = vmax.xlane.f32.xlu0 %v5042
    %v5044 = vpop.xlane.xlu0 %5043
    %v5045 = vsel %vm5029, %v4967, -inf
    %5046 = vmax.xlane.f32.xlu0 %v5045
    %v5047 = vpop.xlane.xlu0 %5046
    %v5048 = vsel %vm5029, %v4970, -inf
    %5049 = vmax.xlane.f32.xlu0 %v5048
    %v5050 = vpop.xlane.xlu0 %5049
    %v5051 = vsel %vm5029, %v4972, -inf
    %5052 = vmax.xlane.f32.xlu0 %v5051
    %v5053 = vpop.xlane.xlu0 %5052
    %v5054 = vsel %vm5029, %v4975, -inf
    %5055 = vmax.xlane.f32.xlu0 %v5054
    %v5056 = vpop.xlane.xlu0 %5055
    %v5057 = vsel %vm5029, %v4977, -inf
    %5058 = vmax.xlane.f32.xlu0 %v5057
    %v5059 = vpop.xlane.xlu0 %5058
    %v5060 = vsel %vm5029, %v4980, -inf
    %5061 = vmax.xlane.f32.xlu0 %v5060
    %v5062 = vpop.xlane.xlu0 %5061
    %v5063 = vsel %vm5029, %v4982, -inf
    %5064 = vmax.xlane.f32.xlu0 %v5063
    %v5065 = vpop.xlane.xlu0 %5064
    %v5066 = vsel %vm5029, %v4985, -inf
    %5067 = vmax.xlane.f32.xlu0 %v5066
    %v5068 = vpop.xlane.xlu0 %5067
    %v5069 = vsel %vm5029, %v4987, -inf
    %5070 = vmax.xlane.f32.xlu0 %v5069
    %v5071 = vpop.xlane.xlu0 %5070
    %v5072 = vsel %vm5029, %v4990, -inf
    %5073 = vmax.xlane.f32.xlu0 %v5072
    %v5074 = vpop.xlane.xlu0 %5073
    %v5075 = vsel %vm5029, %v4992, -inf
    %5076 = vmax.xlane.f32.xlu0 %v5075
    %v5077 = vpop.xlane.xlu0 %5076
    %v5078 = vsel %vm5029, %v4995, -inf
    %5079 = vmax.xlane.f32.xlu0 %v5078
    %v5080 = vpop.xlane.xlu0 %5079
    %v5081 = vsel %vm5029, %v4997, -inf
    %5082 = vmax.xlane.f32.xlu0 %v5081
    %v5083 = vpop.xlane.xlu0 %5082
    %v5084 = vsel %vm5029, %v5000, -inf
    %5085 = vmax.xlane.f32.xlu0 %v5084
    %v5086 = vpop.xlane.xlu0 %5085
    %v5087 = vsel %vm5029, %v5002, -inf
    %5088 = vmax.xlane.f32.xlu0 %v5087
    %v5089 = vpop.xlane.xlu0 %5088
    %v5090 = vsel %vm5029, %v5005, -inf
    %5091 = vmax.xlane.f32.xlu0 %v5090
    %v5092 = vpop.xlane.xlu0 %5091
    %v5093 = vsel %vm5029, %v5007, -inf
    %5094 = vmax.xlane.f32.xlu0 %v5093
    %v5095 = vpop.xlane.xlu0 %5094
    %v5096 = vsel %vm5029, %v5010, -inf
    %5097 = vmax.xlane.f32.xlu0 %v5096
    %v5098 = vpop.xlane.xlu0 %5097
    %v5099 = vsel %vm5029, %v5012, -inf
    %5100 = vmax.xlane.f32.xlu0 %v5099
    %v5101 = vpop.xlane.xlu0 %5100
    %v5102 = vsel %vm5029, %v5015, -inf
    %5103 = vmax.xlane.f32.xlu0 %v5102
    %v5104 = vpop.xlane.xlu0 %5103
    %v5105 = vsel %vm5029, %v5017, -inf
    %5106 = vmax.xlane.f32.xlu0 %v5105
    %v5107 = vpop.xlane.xlu0 %5106
    %v5108 = vsel %vm5029, %v5020, -inf
    %5109 = vmax.xlane.f32.xlu0 %v5108
    %v5110 = vpop.xlane.xlu0 %5109
    %v5111 = vsel %vm5029, %v5022, -inf
    %5112 = vmax.xlane.f32.xlu0 %v5111
    %v5113 = vpop.xlane.xlu0 %5112
    %v5114 = vsel %vm5029, %v5025, -inf
    %5115 = vmax.xlane.f32.xlu0 %v5114
    %v5116 = vpop.xlane.xlu0 %5115
    %v5117 = vsel %vm5029, %v5027, -inf
    %5118 = vmax.xlane.f32.xlu0 %v5117
    %v5119 = vpop.xlane.xlu0 %5118
    %v5120 = vsub.f32 %v4955, %v5032
    %v5121 = vsub.f32 %v4957, %v5035
    %v5122 = vsub.f32 %v4960, %v5038
    %v5123 = vsub.f32 %v4962, %v5041
    %v5124 = vsub.f32 %v4965, %v5044
    %v5125 = vsub.f32 %v4967, %v5047
    %v5126 = vsub.f32 %v4970, %v5050
    %v5127 = vsub.f32 %v4972, %v5053
    %v5128 = vsub.f32 %v4975, %v5056
    %v5129 = vsub.f32 %v4977, %v5059
    %v5130 = vsub.f32 %v4980, %v5062
    %v5131 = vsub.f32 %v4982, %v5065
    %v5132 = vsub.f32 %v4985, %v5068
    %v5133 = vsub.f32 %v4987, %v5071
    %v5134 = vsub.f32 %v4990, %v5074
    %v5135 = vsub.f32 %v4992, %v5077
    %v5136 = vsub.f32 %v4995, %v5080
    %v5137 = vsub.f32 %v4997, %v5083
    %v5138 = vsub.f32 %v5000, %v5086
    %v5139 = vsub.f32 %v5002, %v5089
    %v5140 = vsub.f32 %v5005, %v5092
    %v5141 = vsub.f32 %v5007, %v5095
    %v5142 = vsub.f32 %v5010, %v5098
    %v5143 = vsub.f32 %v5012, %v5101
    %v5144 = vsub.f32 %v5015, %v5104
    %v5145 = vsub.f32 %v5017, %v5107
    %v5146 = vsub.f32 %v5020, %v5110
    %v5147 = vsub.f32 %v5022, %v5113
    %v5148 = vsub.f32 %v5025, %v5116
    %v5149 = vsub.f32 %v5027, %v5119
    %v5150 = vmul.f32 %v5120, 1.442695
    %v5151 = vpow.pop %v5150
    %v5152 = vmul.f32 %v5121, 1.442695
    %v5153 = vpow.pop %v5152
    %v5154 = vmul.f32 %v5122, 1.442695
    %v5155 = vpow.pop %v5154
    %v5156 = vmul.f32 %v5123, 1.442695
    %v5157 = vpow.pop %v5156
    %v5158 = vmul.f32 %v5124, 1.442695
    %v5159 = vpow.pop %v5158
    %v5160 = vmul.f32 %v5125, 1.442695
    %v5161 = vpow.pop %v5160
    %v5162 = vmul.f32 %v5126, 1.442695
    %v5163 = vpow.pop %v5162
    %v5164 = vmul.f32 %v5127, 1.442695
    %v5165 = vpow.pop %v5164
    %v5166 = vmul.f32 %v5128, 1.442695
    %v5167 = vpow.pop %v5166
    %v5168 = vmul.f32 %v5129, 1.442695
    %v5169 = vpow.pop %v5168
    %v5170 = vmul.f32 %v5130, 1.442695
    %v5171 = vpow.pop %v5170
    %v5172 = vmul.f32 %v5131, 1.442695
    %v5173 = vpow.pop %v5172
    %v5174 = vmul.f32 %v5132, 1.442695
    %v5175 = vpow.pop %v5174
    %v5176 = vmul.f32 %v5133, 1.442695
    %v5177 = vpow.pop %v5176
    %v5178 = vmul.f32 %v5134, 1.442695
    %v5179 = vpow.pop %v5178
    %v5180 = vmul.f32 %v5135, 1.442695
    %v5181 = vpow.pop %v5180
    %v5182 = vmul.f32 %v5136, 1.442695
    %v5183 = vpow.pop %v5182
    %v5184 = vmul.f32 %v5137, 1.442695
    %v5185 = vpow.pop %v5184
    %v5186 = vmul.f32 %v5138, 1.442695
    %v5187 = vpow.pop %v5186
    %v5188 = vmul.f32 %v5139, 1.442695
    %v5189 = vpow.pop %v5188
    %v5190 = vmul.f32 %v5140, 1.442695
    %v5191 = vpow.pop %v5190
    %v5192 = vmul.f32 %v5141, 1.442695
    %v5193 = vpow.pop %v5192
    %v5194 = vmul.f32 %v5142, 1.442695
    %v5195 = vpow.pop %v5194
    %v5196 = vmul.f32 %v5143, 1.442695
    %v5197 = vpow.pop %v5196
    %v5198 = vmul.f32 %v5144, 1.442695
    %v5199 = vpow.pop %v5198
    %v5200 = vmul.f32 %v5145, 1.442695
    %v5201 = vpow.pop %v5200
    %v5202 = vmul.f32 %v5146, 1.442695
    %v5203 = vpow.pop %v5202
    %v5204 = vmul.f32 %v5147, 1.442695
    %v5205 = vpow.pop %v5204
    %v5206 = vmul.f32 %v5148, 1.442695
    %v5207 = vpow.pop %v5206
    %v5208 = vmul.f32 %v5149, 1.442695
    %v5209 = vpow.pop %v5208
    %v5210 = vsel %vm5029, %v5151, 0.0
    %5211 = vadd.xlane.f32.xlu0 %v5210
    %v5212 = vpop.xlane.xlu0 %5211
    %v5213 = vsel %vm5029, %v5153, 0.0
    %5214 = vadd.xlane.f32.xlu0 %v5213
    %v5215 = vpop.xlane.xlu0 %5214
    %v5216 = vsel %vm5029, %v5155, 0.0
    %5217 = vadd.xlane.f32.xlu0 %v5216
    %v5218 = vpop.xlane.xlu0 %5217
    %v5219 = vsel %vm5029, %v5157, 0.0
    %5220 = vadd.xlane.f32.xlu0 %v5219
    %v5221 = vpop.xlane.xlu0 %5220
    %v5222 = vsel %vm5029, %v5159, 0.0
    %5223 = vadd.xlane.f32.xlu0 %v5222
    %v5224 = vpop.xlane.xlu0 %5223
    %v5225 = vsel %vm5029, %v5161, 0.0
    %5226 = vadd.xlane.f32.xlu0 %v5225
    %v5227 = vpop.xlane.xlu0 %5226
    %v5228 = vsel %vm5029, %v5163, 0.0
    %5229 = vadd.xlane.f32.xlu0 %v5228
    %v5230 = vpop.xlane.xlu0 %5229
    %v5231 = vsel %vm5029, %v5165, 0.0
    %5232 = vadd.xlane.f32.xlu0 %v5231
    %v5233 = vpop.xlane.xlu0 %5232
    %v5234 = vsel %vm5029, %v5167, 0.0
    %5235 = vadd.xlane.f32.xlu0 %v5234
    %v5236 = vpop.xlane.xlu0 %5235
    %v5237 = vsel %vm5029, %v5169, 0.0
    %5238 = vadd.xlane.f32.xlu0 %v5237
    %v5239 = vpop.xlane.xlu0 %5238
    %v5240 = vsel %vm5029, %v5171, 0.0
    %5241 = vadd.xlane.f32.xlu0 %v5240
    %v5242 = vpop.xlane.xlu0 %5241
    %v5243 = vsel %vm5029, %v5173, 0.0
    %5244 = vadd.xlane.f32.xlu0 %v5243
    %v5245 = vpop.xlane.xlu0 %5244
    %v5246 = vsel %vm5029, %v5175, 0.0
    %5247 = vadd.xlane.f32.xlu0 %v5246
    %v5248 = vpop.xlane.xlu0 %5247
    %v5249 = vsel %vm5029, %v5177, 0.0
    %5250 = vadd.xlane.f32.xlu0 %v5249
    %v5251 = vpop.xlane.xlu0 %5250
    %v5252 = vsel %vm5029, %v5179, 0.0
    %5253 = vadd.xlane.f32.xlu0 %v5252
    %v5254 = vpop.xlane.xlu0 %5253
    %v5255 = vsel %vm5029, %v5181, 0.0
    %5256 = vadd.xlane.f32.xlu0 %v5255
    %v5257 = vpop.xlane.xlu0 %5256
    %v5258 = vsel %vm5029, %v5183, 0.0
    %5259 = vadd.xlane.f32.xlu0 %v5258
    %v5260 = vpop.xlane.xlu0 %5259
    %v5261 = vsel %vm5029, %v5185, 0.0
    %5262 = vadd.xlane.f32.xlu0 %v5261
    %v5263 = vpop.xlane.xlu0 %5262
    %v5264 = vsel %vm5029, %v5187, 0.0
    %5265 = vadd.xlane.f32.xlu0 %v5264
    %v5266 = vpop.xlane.xlu0 %5265
    %v5267 = vsel %vm5029, %v5189, 0.0
    %5268 = vadd.xlane.f32.xlu0 %v5267
    %v5269 = vpop.xlane.xlu0 %5268
    %v5270 = vsel %vm5029, %v5191, 0.0
    %5271 = vadd.xlane.f32.xlu0 %v5270
    %v5272 = vpop.xlane.xlu0 %5271
    %v5273 = vsel %vm5029, %v5193, 0.0
    %5274 = vadd.xlane.f32.xlu0 %v5273
    %v5275 = vpop.xlane.xlu0 %5274
    %v5276 = vsel %vm5029, %v5195, 0.0
    %5277 = vadd.xlane.f32.xlu0 %v5276
    %v5278 = vpop.xlane.xlu0 %5277
    %v5279 = vsel %vm5029, %v5197, 0.0
    %5280 = vadd.xlane.f32.xlu0 %v5279
    %v5281 = vpop.xlane.xlu0 %5280
    %v5282 = vsel %vm5029, %v5199, 0.0
    %5283 = vadd.xlane.f32.xlu0 %v5282
    %v5284 = vpop.xlane.xlu0 %5283
    %v5285 = vsel %vm5029, %v5201, 0.0
    %5286 = vadd.xlane.f32.xlu0 %v5285
    %v5287 = vpop.xlane.xlu0 %5286
    %v5288 = vsel %vm5029, %v5203, 0.0
    %5289 = vadd.xlane.f32.xlu0 %v5288
    %v5290 = vpop.xlane.xlu0 %5289
    %v5291 = vsel %vm5029, %v5205, 0.0
    %5292 = vadd.xlane.f32.xlu0 %v5291
    %v5293 = vpop.xlane.xlu0 %5292
    %v5294 = vsel %vm5029, %v5207, 0.0
    %5295 = vadd.xlane.f32.xlu0 %v5294
    %v5296 = vpop.xlane.xlu0 %5295
    %v5297 = vsel %vm5029, %v5209, 0.0
    %5298 = vadd.xlane.f32.xlu0 %v5297
    %v5299 = vpop.xlane.xlu0 %5298
    %v5300 = vrcp.pop %v5212
    %v5301 = vrcp.pop %v5215
    %v5302 = vrcp.pop %v5218
    %v5303 = vrcp.pop %v5221
    %v5304 = vrcp.pop %v5224
    %v5305 = vrcp.pop %v5227
    %v5306 = vrcp.pop %v5230
    %v5307 = vrcp.pop %v5233
    %v5308 = vrcp.pop %v5236
    %v5309 = vrcp.pop %v5239
    %v5310 = vrcp.pop %v5242
    %v5311 = vrcp.pop %v5245
    %v5312 = vrcp.pop %v5248
    %v5313 = vrcp.pop %v5251
    %v5314 = vrcp.pop %v5254
    %v5315 = vrcp.pop %v5257
    %v5316 = vrcp.pop %v5260
    %v5317 = vrcp.pop %v5263
    %v5318 = vrcp.pop %v5266
    %v5319 = vrcp.pop %v5269
    %v5320 = vrcp.pop %v5272
    %v5321 = vrcp.pop %v5275
    %v5322 = vrcp.pop %v5278
    %v5323 = vrcp.pop %v5281
    %v5324 = vrcp.pop %v5284
    %v5325 = vrcp.pop %v5287
    %v5326 = vrcp.pop %v5290
    %v5327 = vrcp.pop %v5293
    %v5328 = vrcp.pop %v5296
    %v5329 = vrcp.pop %v5299
    %v5330 = vmul.f32 %v5151, %v5300
    %v5331 = vmul.f32 %v5153, %v5301
    %v5332 = vmul.f32 %v5155, %v5302
    %v5333 = vmul.f32 %v5157, %v5303
    %v5334 = vmul.f32 %v5159, %v5304
    %v5335 = vmul.f32 %v5161, %v5305
    %v5336 = vmul.f32 %v5163, %v5306
    %v5337 = vmul.f32 %v5165, %v5307
    %v5338 = vmul.f32 %v5167, %v5308
    %v5339 = vmul.f32 %v5169, %v5309
    %v5340 = vmul.f32 %v5171, %v5310
    %v5341 = vmul.f32 %v5173, %v5311
    %v5342 = vmul.f32 %v5175, %v5312
    %v5343 = vmul.f32 %v5177, %v5313
    %v5344 = vmul.f32 %v5179, %v5314
    %v5345 = vmul.f32 %v5181, %v5315
    %v5346 = vmul.f32 %v5183, %v5316
    %v5347 = vmul.f32 %v5185, %v5317
    %v5348 = vmul.f32 %v5187, %v5318
    %v5349 = vmul.f32 %v5189, %v5319
    %v5350 = vmul.f32 %v5191, %v5320
    %v5351 = vmul.f32 %v5193, %v5321
    %v5352 = vmul.f32 %v5195, %v5322
    %v5353 = vmul.f32 %v5197, %v5323
    %v5354 = vmul.f32 %v5199, %v5324
    %v5355 = vmul.f32 %v5201, %v5325
    %v5356 = vmul.f32 %v5203, %v5326
    %v5357 = vmul.f32 %v5205, %v5327
    %v5358 = vmul.f32 %v5207, %v5328
    %v5359 = vmul.f32 %v5209, %v5329
    %v5360 = vpack.c.bf16 %v5331, %v5330
    %v5361 = vpack.c.bf16 %v5333, %v5332
    %v5362 = vpack.c.bf16 %v5335, %v5334
    %v5363 = vpack.c.bf16 %v5337, %v5336
    %v5364 = vpack.c.bf16 %v5339, %v5338
    %v5365 = vpack.c.bf16 %v5341, %v5340
    %v5366 = vpack.c.bf16 %v5343, %v5342
    %v5367 = vpack.c.bf16 %v5345, %v5344
    %v5368 = vpack.c.bf16 %v5347, %v5346
    %v5369 = vpack.c.bf16 %v5349, %v5348
    %v5370 = vpack.c.bf16 %v5351, %v5350
    %v5371 = vpack.c.bf16 %v5353, %v5352
    %v5372 = vpack.c.bf16 %v5355, %v5354
    %v5373 = vpack.c.bf16 %v5357, %v5356
    %v5374 = vpack.c.bf16 %v5359, %v5358
    %v5375 = vpack.c.bf16 %v4843, %v4841
    %v5377 = vsel %vm5029, %v5360, 0
    %v5380 = vsel %vm5029, %v5361, 0
    %v5383 = vsel %vm5029, %v5362, 0
    %v5386 = vsel %vm5029, %v5363, 0
    %v5389 = vsel %vm5029, %v5364, 0
    %v5392 = vsel %vm5029, %v5365, 0
    %v5395 = vsel %vm5029, %v5366, 0
    %v5398 = vsel %vm5029, %v5367, 0
    %v5401 = vsel %vm5029, %v5368, 0
    %v5404 = vsel %vm5029, %v5369, 0
    %v5407 = vsel %vm5029, %v5370, 0
    %v5410 = vsel %vm5029, %v5371, 0
    %v5413 = vsel %vm5029, %v5372, 0
    %v5416 = vsel %vm5029, %v5373, 0
    %v5419 = vsel %vm5029, %v5374, 0
    %5421 = vmatpush.bf16.msra.mxu0 0
    %5422 = vmatpush.bf16.msra.mxu0 0
    %5423 = vmatpush.bf16.msra.mxu0 0
    %5424 = vmatpush.bf16.msra.mxu0 0
    %5425 = vmatpush.bf16.msra.mxu0 0
    %5426 = vmatpush.bf16.msra.mxu0 0
    %5427 = vmatpush.bf16.msra.mxu0 0
    %5428 = vmatpush.bf16.msra.mxu0 %v5375
    %5429 = vmatmul.bf16.gmra.mxu0 %v5377
    %v5430 = vpop.f32.mrf.mxu0
    %v5431 = vadd.f32 0.0, %v5430
    %v5432 = vpop.f32.mrf.mxu0
    %v5433 = vadd.f32 0.0, %v5432
    %5434 = vmatmul.bf16.gmra.mxu0 %v5380
    %v5435 = vpop.f32.mrf.mxu0
    %v5436 = vadd.f32 0.0, %v5435
    %v5437 = vpop.f32.mrf.mxu0
    %v5438 = vadd.f32 0.0, %v5437
    %5439 = vmatmul.bf16.gmra.mxu0 %v5383
    %v5440 = vpop.f32.mrf.mxu0
    %v5441 = vadd.f32 0.0, %v5440
    %v5442 = vpop.f32.mrf.mxu0
    %v5443 = vadd.f32 0.0, %v5442
    %5444 = vmatmul.bf16.gmra.mxu0 %v5386
    %v5445 = vpop.f32.mrf.mxu0
    %v5446 = vadd.f32 0.0, %v5445
    %v5447 = vpop.f32.mrf.mxu0
    %v5448 = vadd.f32 0.0, %v5447
    %5449 = vmatmul.bf16.gmra.mxu0 %v5389
    %v5450 = vpop.f32.mrf.mxu0
    %v5451 = vadd.f32 0.0, %v5450
    %v5452 = vpop.f32.mrf.mxu0
    %v5453 = vadd.f32 0.0, %v5452
    %5454 = vmatmul.bf16.gmra.mxu0 %v5392
    %v5455 = vpop.f32.mrf.mxu0
    %v5456 = vadd.f32 0.0, %v5455
    %v5457 = vpop.f32.mrf.mxu0
    %v5458 = vadd.f32 0.0, %v5457
    %5459 = vmatmul.bf16.gmra.mxu0 %v5395
    %v5460 = vpop.f32.mrf.mxu0
    %v5461 = vadd.f32 0.0, %v5460
    %v5462 = vpop.f32.mrf.mxu0
    %v5463 = vadd.f32 0.0, %v5462
    %5464 = vmatmul.bf16.gmra.mxu0 %v5398
    %v5465 = vpop.f32.mrf.mxu0
    %v5466 = vadd.f32 0.0, %v5465
    %v5467 = vpop.f32.mrf.mxu0
    %v5468 = vadd.f32 0.0, %v5467
    %5469 = vmatmul.bf16.gmra.mxu0 %v5401
    %v5470 = vpop.f32.mrf.mxu0
    %v5471 = vadd.f32 0.0, %v5470
    %v5472 = vpop.f32.mrf.mxu0
    %v5473 = vadd.f32 0.0, %v5472
    %5474 = vmatmul.bf16.gmra.mxu0 %v5404
    %v5475 = vpop.f32.mrf.mxu0
    %v5476 = vadd.f32 0.0, %v5475
    %v5477 = vpop.f32.mrf.mxu0
    %v5478 = vadd.f32 0.0, %v5477
    %5479 = vmatmul.bf16.gmra.mxu0 %v5407
    %v5480 = vpop.f32.mrf.mxu0
    %v5481 = vadd.f32 0.0, %v5480
    %v5482 = vpop.f32.mrf.mxu0
    %v5483 = vadd.f32 0.0, %v5482
    %5484 = vmatmul.bf16.gmra.mxu0 %v5410
    %v5485 = vpop.f32.mrf.mxu0
    %v5486 = vadd.f32 0.0, %v5485
    %v5487 = vpop.f32.mrf.mxu0
    %v5488 = vadd.f32 0.0, %v5487
    %5489 = vmatmul.bf16.gmra.mxu0 %v5413
    %v5490 = vpop.f32.mrf.mxu0
    %v5491 = vadd.f32 0.0, %v5490
    %v5492 = vpop.f32.mrf.mxu0
    %v5493 = vadd.f32 0.0, %v5492
    %5494 = vmatmul.bf16.gmra.mxu0 %v5416
    %v5495 = vpop.f32.mrf.mxu0
    %v5496 = vadd.f32 0.0, %v5495
    %v5497 = vpop.f32.mrf.mxu0
    %v5498 = vadd.f32 0.0, %v5497
    %5499 = vmatmul.bf16.gmra.mxu0 %v5419
    %v5500 = vpop.f32.mrf.mxu0
    %v5501 = vadd.f32 0.0, %v5500
    %v5502 = vpop.f32.mrf.mxu0
    %v5503 = vadd.f32 0.0, %v5502
    %5504 = vdwg.mxu0
    %v5505 = vmul.f32 %v5431, %v4845
    %v5506 = vmul.f32 %v5433, %v4845
    %v5507 = vmul.f32 %v5436, %v4848
    %v5508 = vmul.f32 %v5438, %v4848
    %v5509 = vadd.f32 %v5505, %v5507
    %v5510 = vadd.f32 %v5506, %v5508
    %v5511 = vmul.f32 %v5441, %v4851
    %v5512 = vmul.f32 %v5443, %v4851
    %v5513 = vadd.f32 %v5509, %v5511
    %v5514 = vadd.f32 %v5510, %v5512
    %v5515 = vmul.f32 %v5446, %v4854
    %v5516 = vmul.f32 %v5448, %v4854
    %v5517 = vadd.f32 %v5513, %v5515
    %v5518 = vadd.f32 %v5514, %v5516
    %v5519 = vmul.f32 %v5451, %v4857
    %v5520 = vmul.f32 %v5453, %v4857
    %v5521 = vadd.f32 %v5517, %v5519
    %v5522 = vadd.f32 %v5518, %v5520
    %v5523 = vmul.f32 %v5456, %v4860
    %v5524 = vmul.f32 %v5458, %v4860
    %v5525 = vadd.f32 %v5521, %v5523
    %v5526 = vadd.f32 %v5522, %v5524
    %v5527 = vmul.f32 %v5461, %v4863
    %v5528 = vmul.f32 %v5463, %v4863
    %v5529 = vadd.f32 %v5525, %v5527
    %v5530 = vadd.f32 %v5526, %v5528
    %v5531 = vmul.f32 %v5466, %v4866
    %v5532 = vmul.f32 %v5468, %v4866
    %v5533 = vadd.f32 %v5529, %v5531
    %v5534 = vadd.f32 %v5530, %v5532
    %v5535 = vmul.f32 %v5471, %v4869
    %v5536 = vmul.f32 %v5473, %v4869
    %v5537 = vadd.f32 %v5533, %v5535
    %v5538 = vadd.f32 %v5534, %v5536
    %v5539 = vmul.f32 %v5476, %v4872
    %v5540 = vmul.f32 %v5478, %v4872
    %v5541 = vadd.f32 %v5537, %v5539
    %v5542 = vadd.f32 %v5538, %v5540
    %v5543 = vmul.f32 %v5481, %v4875
    %v5544 = vmul.f32 %v5483, %v4875
    %v5545 = vadd.f32 %v5541, %v5543
    %v5546 = vadd.f32 %v5542, %v5544
    %v5547 = vmul.f32 %v5486, %v4878
    %v5548 = vmul.f32 %v5488, %v4878
    %v5549 = vadd.f32 %v5545, %v5547
    %v5550 = vadd.f32 %v5546, %v5548
    %v5551 = vmul.f32 %v5491, %v4881
    %v5552 = vmul.f32 %v5493, %v4881
    %v5553 = vadd.f32 %v5549, %v5551
    %v5554 = vadd.f32 %v5550, %v5552
    %v5555 = vmul.f32 %v5496, %v4884
    %v5556 = vmul.f32 %v5498, %v4884
    %v5557 = vadd.f32 %v5553, %v5555
    %v5558 = vadd.f32 %v5554, %v5556
    %v5559 = vmul.f32 %v5501, %v4887
    %v5560 = vmul.f32 %v5503, %v4887
    %v5561 = vadd.f32 %v5557, %v5559
    %v5562 = vadd.f32 %v5558, %v5560
    %v5563 = vld [vmem:[%s63] sm:$0xf]
    %v5564 = vld [vmem:[%s63 + $0x4] sm:$0xf]
    %v5565 = vld [vmem:[%s63 + $0x8] sm:$0xf]
    %v5566 = vld [vmem:[%s63 + $0xc] sm:$0xf]
    %v5567 = vld [vmem:[%s63 + $0x10] sm:$0xf]
    %v5568 = vld [vmem:[%s63 + $0x14] sm:$0xf]
    %v5569 = vld [vmem:[%s63 + $0x18] sm:$0xf]
    %v5570 = vld [vmem:[%s63 + $0x1c] sm:$0xf]
    %v5571 = vld [vmem:[%s63 + $0x20] sm:$0xf]
    %v5572 = vld [vmem:[%s63 + $0x24] sm:$0xf]
    %v5573 = vld [vmem:[%s63 + $0x28] sm:$0xf]
    %v5574 = vld [vmem:[%s63 + $0x2c] sm:$0xf]
    %v5575 = vld [vmem:[%s63 + $0x30] sm:$0xf]
    %v5576 = vld [vmem:[%s63 + $0x34] sm:$0xf]
    %v5577 = vld [vmem:[%s63 + $0x38] sm:$0xf]
    %v5578 = vld [vmem:[%s63 + $0x3c] sm:$0xf]
    %v5579 = vpack.c.bf16 %v5562, %v5561
    %v5580 = vld [vmem:[#allocation7] sm:$0x1]
    %v5582 = vperm.slane %v5580, 0
    %v5600 = vunpack.c.l.b16 %v5563
    %v5601 = vunpack.c.l.b16 %v5564
    %v5602 = vunpack.c.l.b16 %v5565
    %v5603 = vunpack.c.l.b16 %v5566
    %v5604 = vunpack.c.l.b16 %v5567
    %v5605 = vunpack.c.l.b16 %v5568
    %v5606 = vunpack.c.l.b16 %v5569
    %v5607 = vunpack.c.l.b16 %v5570
    %v5608 = vunpack.c.l.b16 %v5571
    %v5609 = vunpack.c.l.b16 %v5572
    %v5610 = vunpack.c.l.b16 %v5573
    %v5611 = vunpack.c.l.b16 %v5574
    %v5612 = vunpack.c.l.b16 %v5575
    %v5613 = vunpack.c.l.b16 %v5576
    %v5614 = vunpack.c.l.b16 %v5577
    %v5615 = vunpack.c.l.b16 %v5578
    %v5616 = vpack.c.b16 %v5601, %v5600
    %v5617 = vpack.c.b16 %v5603, %v5602
    %v5618 = vpack.c.b16 %v5605, %v5604
    %v5619 = vpack.c.b16 %v5607, %v5606
    %v5620 = vpack.c.b16 %v5609, %v5608
    %v5621 = vpack.c.b16 %v5611, %v5610
    %v5622 = vpack.c.b16 %v5613, %v5612
    %v5623 = vpack.c.b16 %v5615, %v5614
    %5632 = vmatpush.bf16.msra.mxu0 %v5623
    %5633 = vmatpush.bf16.msra.mxu0 %v5622
    %5634 = vmatpush.bf16.msra.mxu0 %v5621
    %5635 = vmatpush.bf16.msra.mxu0 %v5620
    %5636 = vmatpush.bf16.msra.mxu0 %v5619
    %5637 = vmatpush.bf16.msra.mxu0 %v5618
    %5638 = vmatpush.bf16.msra.mxu0 %v5617
    %5639 = vmatpush.bf16.msra.mxu0 %v5616
    %5640 = vmatmul.bf16.gmra.mxu0 %v5579
    %v5641 = vpop.f32.mrf.mxu0
    %v5642 = vadd.f32 %v5582, %v5641
    %v5643 = vpop.f32.mrf.mxu0
    %v5644 = vadd.f32 %v5582, %v5643
    %5645 = vdwg.mxu0
    %v5646 = vadd.f32 %v4632, %v5642
    %v5647 = vadd.f32 %v4633, %v5644
    %v5648 = vld [vmem:[#allocation9] sm:$0x1]
    %v5649 = vld [vmem:[#allocation10] sm:$0x1]
    %5650 = vadd.xlane.f32.xlu0 %v5646
    %v5651 = vpop.xlane.xlu0 %5650
    %5652 = vadd.xlane.f32.xlu0 %v5647
    %v5653 = vpop.xlane.xlu0 %5652
    %v5654 = vmul.f32 %v5651, 0.033333335
    %v5655 = vmul.f32 %v5653, 0.033333335
    %v5656 = vmul.f32 %v5646, %v5646
    %v5657 = vmul.f32 %v5647, %v5647
    %5658 = vadd.xlane.f32.xlu0 %v5656
    %v5659 = vpop.xlane.xlu0 %5658
    %5660 = vadd.xlane.f32.xlu0 %v5657
    %v5661 = vpop.xlane.xlu0 %5660
    %v5662 = vmul.f32 %v5659, 0.033333335
    %v5663 = vmul.f32 %v5661, 0.033333335
    %v5664 = vmul.f32 %v5654, %v5654
    %v5665 = vmul.f32 %v5655, %v5655
    %v5666 = vsub.f32 %v5662, %v5664
    %v5667 = vsub.f32 %v5663, %v5665
    %v5668 = vsub.f32 %v5646, %v5654
    %v5669 = vsub.f32 %v5647, %v5655
    %v5670 = vadd.f32 %v5666, 1e-05
    %v5671 = vadd.f32 %v5667, 1e-05
    %v5672 = vrsqrt.pop %v5670
    %v5673 = vmul.f32 %v5672, %v5670
    %v5674 = vmul.f32 %v5673, %v5672
    %v5675 = vmul.f32 0.5, %v5674
    %v5676 = vsub.f32 1.5, %v5675
    %v5677 = vmul.f32 %v5672, %v5676
    %vm5678 = vweird.f32 %v5670
    %vm5679 = vweird.f32 %v5672
    %vm5680 = vmor %vm5678, %vm5679
    %v5681 = vsel %vm5680, %v5672, %v5677
    %v5682 = vrsqrt.pop %v5671
    %v5683 = vmul.f32 %v5682, %v5671
    %v5684 = vmul.f32 %v5683, %v5682
    %v5685 = vmul.f32 0.5, %v5684
    %v5686 = vsub.f32 1.5, %v5685
    %v5687 = vmul.f32 %v5682, %v5686
    %vm5688 = vweird.f32 %v5671
    %vm5689 = vweird.f32 %v5682
    %vm5690 = vmor %vm5688, %vm5689
    %v5691 = vsel %vm5690, %v5682, %v5687
    %v5692 = vmul.f32 %v5668, %v5681
    %v5693 = vmul.f32 %v5669, %v5691
    %v5695 = vperm.slane %v5648, 0
    %v5697 = vmul.f32 %v5692, %v5695
    %v5698 = vmul.f32 %v5693, %v5695
    %v5700 = vperm.slane %v5649, 0
    %v5702 = vadd.f32 %v5697, %v5700
    %v5703 = vadd.f32 %v5698, %v5700
    %v5704 = vld [vmem:[%s71] sm:$0xf]
    %v5705 = vld [vmem:[%s71 + $0x4] sm:$0xf]
    %v5706 = vld [vmem:[%s71 + $0x8] sm:$0xf]
    %v5707 = vld [vmem:[%s71 + $0xc] sm:$0xf]
    %v5708 = vld [vmem:[%s71 + $0x10] sm:$0xf]
    %v5709 = vld [vmem:[%s71 + $0x14] sm:$0xf]
    %v5710 = vld [vmem:[%s71 + $0x18] sm:$0xf]
    %v5711 = vld [vmem:[%s71 + $0x1c] sm:$0xf]
    %v5712 = vld [vmem:[%s71 + $0x20] sm:$0xf]
    %v5713 = vld [vmem:[%s71 + $0x24] sm:$0xf]
    %v5714 = vld [vmem:[%s71 + $0x28] sm:$0xf]
    %v5715 = vld [vmem:[%s71 + $0x2c] sm:$0xf]
    %v5716 = vld [vmem:[%s71 + $0x30] sm:$0xf]
    %v5717 = vld [vmem:[%s71 + $0x34] sm:$0xf]
    %v5718 = vld [vmem:[%s71 + $0x38] sm:$0xf]
    %v5719 = vld [vmem:[%s71 + $0x3c] sm:$0xf]
    %v5720 = vpack.c.bf16 %v5703, %v5702
    %v5721 = vld [vmem:[#allocation12] sm:$0x1]
    %v5723 = vperm.slane %v5721, 0
    %v5741 = vunpack.c.l.b16 %v5704
    %v5742 = vunpack.c.l.b16 %v5705
    %v5743 = vunpack.c.l.b16 %v5706
    %v5744 = vunpack.c.l.b16 %v5707
    %v5745 = vunpack.c.l.b16 %v5708
    %v5746 = vunpack.c.l.b16 %v5709
    %v5747 = vunpack.c.l.b16 %v5710
    %v5748 = vunpack.c.l.b16 %v5711
    %v5749 = vunpack.c.l.b16 %v5712
    %v5750 = vunpack.c.l.b16 %v5713
    %v5751 = vunpack.c.l.b16 %v5714
    %v5752 = vunpack.c.l.b16 %v5715
    %v5753 = vunpack.c.l.b16 %v5716
    %v5754 = vunpack.c.l.b16 %v5717
    %v5755 = vunpack.c.l.b16 %v5718
    %v5756 = vunpack.c.l.b16 %v5719
    %v5757 = vpack.c.b16 %v5742, %v5741
    %v5758 = vpack.c.b16 %v5744, %v5743
    %v5759 = vpack.c.b16 %v5746, %v5745
    %v5760 = vpack.c.b16 %v5748, %v5747
    %v5761 = vpack.c.b16 %v5750, %v5749
    %v5762 = vpack.c.b16 %v5752, %v5751
    %v5763 = vpack.c.b16 %v5754, %v5753
    %v5764 = vpack.c.b16 %v5756, %v5755
    %5773 = vmatpush.bf16.msra.mxu0 %v5764
    %5774 = vmatpush.bf16.msra.mxu0 %v5763
    %5775 = vmatpush.bf16.msra.mxu0 %v5762
    %5776 = vmatpush.bf16.msra.mxu0 %v5761
    %5777 = vmatpush.bf16.msra.mxu0 %v5760
    %5778 = vmatpush.bf16.msra.mxu0 %v5759
    %5779 = vmatpush.bf16.msra.mxu0 %v5758
    %5780 = vmatpush.bf16.msra.mxu0 %v5757
    %5781 = vmatmul.bf16.gmra.mxu0 %v5720
    %v5782 = vpop.f32.mrf.mxu0
    %v5783 = vadd.f32 %v5723, %v5782
    %v5784 = vpop.f32.mrf.mxu0
    %v5785 = vadd.f32 %v5723, %v5784
    %5786 = vdwg.mxu0
    %v5787 = vmax.f32 %v5783, 0.0
    %v5788 = vmax.f32 %v5785, 0.0
    %v5789 = vld [vmem:[%s75] sm:$0xf]
    %v5790 = vld [vmem:[%s75 + $0x4] sm:$0xf]
    %v5791 = vld [vmem:[%s75 + $0x8] sm:$0xf]
    %v5792 = vld [vmem:[%s75 + $0xc] sm:$0xf]
    %v5793 = vld [vmem:[%s75 + $0x10] sm:$0xf]
    %v5794 = vld [vmem:[%s75 + $0x14] sm:$0xf]
    %v5795 = vld [vmem:[%s75 + $0x18] sm:$0xf]
    %v5796 = vld [vmem:[%s75 + $0x1c] sm:$0xf]
    %v5797 = vld [vmem:[%s75 + $0x20] sm:$0xf]
    %v5798 = vld [vmem:[%s75 + $0x24] sm:$0xf]
    %v5799 = vld [vmem:[%s75 + $0x28] sm:$0xf]
    %v5800 = vld [vmem:[%s75 + $0x2c] sm:$0xf]
    %v5801 = vld [vmem:[%s75 + $0x30] sm:$0xf]
    %v5802 = vld [vmem:[%s75 + $0x34] sm:$0xf]
    %v5803 = vld [vmem:[%s75 + $0x38] sm:$0xf]
    %v5804 = vld [vmem:[%s75 + $0x3c] sm:$0xf]
    %v5805 = vpack.c.bf16 %v5788, %v5787
    %v5806 = vld [vmem:[#allocation13] sm:$0x1]
    %v5808 = vperm.slane %v5806, 0
    %v5826 = vunpack.c.l.b16 %v5789
    %v5827 = vunpack.c.l.b16 %v5790
    %v5828 = vunpack.c.l.b16 %v5791
    %v5829 = vunpack.c.l.b16 %v5792
    %v5830 = vunpack.c.l.b16 %v5793
    %v5831 = vunpack.c.l.b16 %v5794
    %v5832 = vunpack.c.l.b16 %v5795
    %v5833 = vunpack.c.l.b16 %v5796
    %v5834 = vunpack.c.l.b16 %v5797
    %v5835 = vunpack.c.l.b16 %v5798
    %v5836 = vunpack.c.l.b16 %v5799
    %v5837 = vunpack.c.l.b16 %v5800
    %v5838 = vunpack.c.l.b16 %v5801
    %v5839 = vunpack.c.l.b16 %v5802
    %v5840 = vunpack.c.l.b16 %v5803
    %v5841 = vunpack.c.l.b16 %v5804
    %v5842 = vpack.c.b16 %v5827, %v5826
    %v5843 = vpack.c.b16 %v5829, %v5828
    %v5844 = vpack.c.b16 %v5831, %v5830
    %v5845 = vpack.c.b16 %v5833, %v5832
    %v5846 = vpack.c.b16 %v5835, %v5834
    %v5847 = vpack.c.b16 %v5837, %v5836
    %v5848 = vpack.c.b16 %v5839, %v5838
    %v5849 = vpack.c.b16 %v5841, %v5840
    %5858 = vmatpush.bf16.msra.mxu0 %v5849
    %5859 = vmatpush.bf16.msra.mxu0 %v5848
    %5860 = vmatpush.bf16.msra.mxu0 %v5847
    %5861 = vmatpush.bf16.msra.mxu0 %v5846
    %5862 = vmatpush.bf16.msra.mxu0 %v5845
    %5863 = vmatpush.bf16.msra.mxu0 %v5844
    %5864 = vmatpush.bf16.msra.mxu0 %v5843
    %5865 = vmatpush.bf16.msra.mxu0 %v5842
    %5866 = vmatmul.bf16.gmra.mxu0 %v5805
    %v5867 = vpop.f32.mrf.mxu0
    %v5868 = vadd.f32 %v5808, %v5867
    %v5869 = vpop.f32.mrf.mxu0
    %v5870 = vadd.f32 %v5808, %v5869
    %5871 = vdwg.mxu0
    %v5872 = vadd.f32 %v5702, %v5868
    %v5873 = vadd.f32 %v5703, %v5870
    %v5874 = vld [vmem:[#allocation15] sm:$0x1]
    %v5875 = vld [vmem:[#allocation16] sm:$0x1]
    %5876 = vadd.xlane.f32.xlu0 %v5872
    %v5877 = vpop.xlane.xlu0 %5876
    %5878 = vadd.xlane.f32.xlu0 %v5873
    %v5879 = vpop.xlane.xlu0 %5878
    %v5880 = vmul.f32 %v5877, 0.033333335
    %v5881 = vmul.f32 %v5879, 0.033333335
    %v5882 = vmul.f32 %v5872, %v5872
    %v5883 = vmul.f32 %v5873, %v5873
    %5884 = vadd.xlane.f32.xlu0 %v5882
    %v5885 = vpop.xlane.xlu0 %5884
    %5886 = vadd.xlane.f32.xlu0 %v5883
    %v5887 = vpop.xlane.xlu0 %5886
    %v5888 = vmul.f32 %v5885, 0.033333335
    %v5889 = vmul.f32 %v5887, 0.033333335
    %v5890 = vmul.f32 %v5880, %v5880
    %v5891 = vmul.f32 %v5881, %v5881
    %v5892 = vsub.f32 %v5888, %v5890
    %v5893 = vsub.f32 %v5889, %v5891
    %v5894 = vsub.f32 %v5872, %v5880
    %v5895 = vsub.f32 %v5873, %v5881
    %v5896 = vadd.f32 %v5892, 1e-05
    %v5897 = vadd.f32 %v5893, 1e-05
    %v5898 = vrsqrt.pop %v5896
    %v5899 = vmul.f32 %v5898, %v5896
    %v5900 = vmul.f32 %v5899, %v5898
    %v5901 = vmul.f32 0.5, %v5900
    %v5902 = vsub.f32 1.5, %v5901
    %v5903 = vmul.f32 %v5898, %v5902
    %vm5904 = vweird.f32 %v5896
    %vm5905 = vweird.f32 %v5898
    %vm5906 = vmor %vm5904, %vm5905
    %v5907 = vsel %vm5906, %v5898, %v5903
    %v5908 = vrsqrt.pop %v5897
    %v5909 = vmul.f32 %v5908, %v5897
    %v5910 = vmul.f32 %v5909, %v5908
    %v5911 = vmul.f32 0.5, %v5910
    %v5912 = vsub.f32 1.5, %v5911
    %v5913 = vmul.f32 %v5908, %v5912
    %vm5914 = vweird.f32 %v5897
    %vm5915 = vweird.f32 %v5908
    %vm5916 = vmor %vm5914, %vm5915
    %v5917 = vsel %vm5916, %v5908, %v5913
    %v5918 = vmul.f32 %v5894, %v5907
    %v5919 = vmul.f32 %v5895, %v5917
    %v5921 = vperm.slane %v5874, 0
    %v5923 = vmul.f32 %v5918, %v5921
    %v5924 = vmul.f32 %v5919, %v5921
    %v5926 = vperm.slane %v5875, 0
    %v5928 = vadd.f32 %v5923, %v5926
    %v5929 = vadd.f32 %v5924, %v5926
    %v5930 = vld [vmem:[%s83] sm:$0xff]
    %v5931 = vld [vmem:[%s83 + $0x8] sm:$0xf]
    %v5932 = vld [vmem:[%s83 + $0xc] sm:$0xff]
    %v5933 = vld [vmem:[%s83 + $0x14] sm:$0xf]
    %v5934 = vld [vmem:[%s83 + $0x18] sm:$0xff]
    %v5935 = vld [vmem:[%s83 + $0x20] sm:$0xf]
    %v5936 = vld [vmem:[%s83 + $0x24] sm:$0xff]
    %v5937 = vld [vmem:[%s83 + $0x2c] sm:$0xf]
    %v5938 = vld [vmem:[%s83 + $0x30] sm:$0xff]
    %v5939 = vld [vmem:[%s83 + $0x38] sm:$0xf]
    %v5940 = vld [vmem:[%s83 + $0x3c] sm:$0xff]
    %v5941 = vld [vmem:[%s83 + $0x44] sm:$0xf]
    %v5942 = vld [vmem:[%s83 + $0x48] sm:$0xff]
    %v5943 = vld [vmem:[%s83 + $0x50] sm:$0xf]
    %v5944 = vld [vmem:[%s83 + $0x54] sm:$0xff]
    %v5945 = vld [vmem:[%s83 + $0x5c] sm:$0xf]
    %v5946 = vld [vmem:[%s83 + $0x60] sm:$0xff]
    %v5947 = vld [vmem:[%s83 + $0x68] sm:$0xf]
    %v5948 = vld [vmem:[%s83 + $0x6c] sm:$0xff]
    %v5949 = vld [vmem:[%s83 + $0x74] sm:$0xf]
    %v5950 = vld [vmem:[%s83 + $0x78] sm:$0xff]
    %v5951 = vld [vmem:[%s83 + $0x80] sm:$0xf]
    %v5952 = vld [vmem:[%s83 + $0x84] sm:$0xff]
    %v5953 = vld [vmem:[%s83 + $0x8c] sm:$0xf]
    %v5954 = vld [vmem:[%s83 + $0x90] sm:$0xff]
    %v5955 = vld [vmem:[%s83 + $0x98] sm:$0xf]
    %v5956 = vld [vmem:[%s83 + $0x9c] sm:$0xff]
    %v5957 = vld [vmem:[%s83 + $0xa4] sm:$0xf]
    %v5958 = vld [vmem:[%s83 + $0xa8] sm:$0xff]
    %v5959 = vld [vmem:[%s83 + $0xb0] sm:$0xf]
    %v5960 = vld [vmem:[%s83 + $0xb4] sm:$0xff]
    %v5961 = vld [vmem:[%s83 + $0xbc] sm:$0xf]
    %v5962 = vpack.c.bf16 %v5929, %v5928
    %v5963 = vld [vmem:[%s85] sm:$0x7]
    %v5965 = vperm.slane %v5963, 0
    %v5966 = vperm.slane %v5963, 1
    %v5967 = vperm.slane %v5963, 2
    %v6003 = vunpack.c.l.b16 %v5930
    %v6004 = vunpack.c.h.b16 %v5930
    %v6005 = vunpack.c.l.b16 %v5931
    %v6006 = vunpack.c.l.b16 %v5932
    %v6007 = vunpack.c.h.b16 %v5932
    %v6008 = vunpack.c.l.b16 %v5933
    %v6009 = vunpack.c.l.b16 %v5934
    %v6010 = vunpack.c.h.b16 %v5934
    %v6011 = vunpack.c.l.b16 %v5935
    %v6012 = vunpack.c.l.b16 %v5936
    %v6013 = vunpack.c.h.b16 %v5936
    %v6014 = vunpack.c.l.b16 %v5937
    %v6015 = vunpack.c.l.b16 %v5938
    %v6016 = vunpack.c.h.b16 %v5938
    %v6017 = vunpack.c.l.b16 %v5939
    %v6018 = vunpack.c.l.b16 %v5940
    %v6019 = vunpack.c.h.b16 %v5940
    %v6020 = vunpack.c.l.b16 %v5941
    %v6021 = vunpack.c.l.b16 %v5942
    %v6022 = vunpack.c.h.b16 %v5942
    %v6023 = vunpack.c.l.b16 %v5943
    %v6024 = vunpack.c.l.b16 %v5944
    %v6025 = vunpack.c.h.b16 %v5944
    %v6026 = vunpack.c.l.b16 %v5945
    %v6027 = vunpack.c.l.b16 %v5946
    %v6028 = vunpack.c.h.b16 %v5946
    %v6029 = vunpack.c.l.b16 %v5947
    %v6030 = vunpack.c.l.b16 %v5948
    %v6031 = vunpack.c.h.b16 %v5948
    %v6032 = vunpack.c.l.b16 %v5949
    %v6033 = vunpack.c.l.b16 %v5950
    %v6034 = vunpack.c.h.b16 %v5950
    %v6035 = vunpack.c.l.b16 %v5951
    %v6036 = vunpack.c.l.b16 %v5952
    %v6037 = vunpack.c.h.b16 %v5952
    %v6038 = vunpack.c.l.b16 %v5953
    %v6039 = vunpack.c.l.b16 %v5954
    %v6040 = vunpack.c.h.b16 %v5954
    %v6041 = vunpack.c.l.b16 %v5955
    %v6042 = vunpack.c.l.b16 %v5956
    %v6043 = vunpack.c.h.b16 %v5956
    %v6044 = vunpack.c.l.b16 %v5957
    %v6045 = vunpack.c.l.b16 %v5958
    %v6046 = vunpack.c.h.b16 %v5958
    %v6047 = vunpack.c.l.b16 %v5959
    %v6048 = vunpack.c.l.b16 %v5960
    %v6049 = vunpack.c.h.b16 %v5960
    %v6050 = vunpack.c.l.b16 %v5961
    %v6051 = vpack.c.b16 %v6006, %v6003
    %v6052 = vpack.c.b16 %v6007, %v6004
    %v6053 = vpack.c.b16 %v6008, %v6005
    %v6054 = vpack.c.b16 %v6012, %v6009
    %v6055 = vpack.c.b16 %v6013, %v6010
    %v6056 = vpack.c.b16 %v6014, %v6011
    %v6057 = vpack.c.b16 %v6018, %v6015
    %v6058 = vpack.c.b16 %v6019, %v6016
    %v6059 = vpack.c.b16 %v6020, %v6017
    %v6060 = vpack.c.b16 %v6024, %v6021
    %v6061 = vpack.c.b16 %v6025, %v6022
    %v6062 = vpack.c.b16 %v6026, %v6023
    %v6063 = vpack.c.b16 %v6030, %v6027
    %v6064 = vpack.c.b16 %v6031, %v6028
    %v6065 = vpack.c.b16 %v6032, %v6029
    %v6066 = vpack.c.b16 %v6036, %v6033
    %v6067 = vpack.c.b16 %v6037, %v6034
    %v6068 = vpack.c.b16 %v6038, %v6035
    %v6069 = vpack.c.b16 %v6042, %v6039
    %v6070 = vpack.c.b16 %v6043, %v6040
    %v6071 = vpack.c.b16 %v6044, %v6041
    %v6072 = vpack.c.b16 %v6048, %v6045
    %v6073 = vpack.c.b16 %v6049, %v6046
    %v6074 = vpack.c.b16 %v6050, %v6047
    %6099 = vmatpush.bf16.msra.mxu0 %v6072
    %6100 = vmatpush.bf16.msra.mxu0 %v6069
    %6101 = vmatpush.bf16.msra.mxu0 %v6066
    %6102 = vmatpush.bf16.msra.mxu0 %v6063
    %6103 = vmatpush.bf16.msra.mxu0 %v6060
    %6104 = vmatpush.bf16.msra.mxu0 %v6057
    %6105 = vmatpush.bf16.msra.mxu0 %v6054
    %6106 = vmatpush.bf16.msra.mxu0 %v6051
    %6107 = vmatmul.bf16.gmra.mxu0 %v5962
    %v6108 = vpop.f32.mrf.mxu0
    %v6109 = vadd.f32 %v5965, %v6108
    %v6110 = vpop.f32.mrf.mxu0
    %v6111 = vadd.f32 %v5965, %v6110
    %6112 = vdwg.mxu0
    %6113 = vmatpush.bf16.msra.mxu0 %v6073
    %6114 = vmatpush.bf16.msra.mxu0 %v6070
    %6115 = vmatpush.bf16.msra.mxu0 %v6067
    %6116 = vmatpush.bf16.msra.mxu0 %v6064
    %6117 = vmatpush.bf16.msra.mxu0 %v6061
    %6118 = vmatpush.bf16.msra.mxu0 %v6058
    %6119 = vmatpush.bf16.msra.mxu0 %v6055
    %6120 = vmatpush.bf16.msra.mxu0 %v6052
    %6121 = vmatmul.bf16.gmra.mxu0 %v5962
    %v6122 = vpop.f32.mrf.mxu0
    %v6123 = vadd.f32 %v5966, %v6122
    %v6124 = vpop.f32.mrf.mxu0
    %v6125 = vadd.f32 %v5966, %v6124
    %6126 = vdwg.mxu0
    %6127 = vmatpush.bf16.msra.mxu0 %v6074
    %6128 = vmatpush.bf16.msra.mxu0 %v6071
    %6129 = vmatpush.bf16.msra.mxu0 %v6068
    %6130 = vmatpush.bf16.msra.mxu0 %v6065
    %6131 = vmatpush.bf16.msra.mxu0 %v6062
    %6132 = vmatpush.bf16.msra.mxu0 %v6059
    %6133 = vmatpush.bf16.msra.mxu0 %v6056
    %6134 = vmatpush.bf16.msra.mxu0 %v6053
    %6135 = vmatmul.bf16.gmra.mxu0 %v5962
    %v6136 = vpop.f32.mrf.mxu0
    %v6137 = vadd.f32 %v5967, %v6136
    %v6138 = vpop.f32.mrf.mxu0
    %v6139 = vadd.f32 %v5967, %v6138
    %6140 = vdwg.mxu0
    %v6141 = vmul.f32 %v6109, %v4845
    %v6142 = vmul.f32 %v6111, %v4845
    %v6143 = vmul.f32 %v6109, %v4848
    %v6144 = vmul.f32 %v6111, %v4848
    %v6145 = vmul.f32 %v6109, %v4851
    %v6146 = vmul.f32 %v6111, %v4851
    %v6147 = vmul.f32 %v6109, %v4854
    %v6148 = vmul.f32 %v6111, %v4854
    %v6149 = vmul.f32 %v6109, %v4857
    %v6150 = vmul.f32 %v6111, %v4857
    %v6151 = vmul.f32 %v6109, %v4860
    %v6152 = vmul.f32 %v6111, %v4860
    %v6153 = vmul.f32 %v6109, %v4863
    %v6154 = vmul.f32 %v6111, %v4863
    %v6155 = vmul.f32 %v6109, %v4866
    %v6156 = vmul.f32 %v6111, %v4866
    %v6157 = vmul.f32 %v6109, %v4869
    %v6158 = vmul.f32 %v6111, %v4869
    %v6159 = vmul.f32 %v6109, %v4872
    %v6160 = vmul.f32 %v6111, %v4872
    %v6161 = vmul.f32 %v6109, %v4875
    %v6162 = vmul.f32 %v6111, %v4875
    %v6163 = vmul.f32 %v6109, %v4878
    %v6164 = vmul.f32 %v6111, %v4878
    %v6165 = vmul.f32 %v6109, %v4881
    %v6166 = vmul.f32 %v6111, %v4881
    %v6167 = vmul.f32 %v6109, %v4884
    %v6168 = vmul.f32 %v6111, %v4884
    %v6169 = vmul.f32 %v6109, %v4887
    %v6170 = vmul.f32 %v6111, %v4887
    %v6171 = vpack.c.bf16 %v6142, %v6141
    %v6172 = vpack.c.bf16 %v6144, %v6143
    %v6173 = vpack.c.bf16 %v6146, %v6145
    %v6174 = vpack.c.bf16 %v6148, %v6147
    %v6175 = vpack.c.bf16 %v6150, %v6149
    %v6176 = vpack.c.bf16 %v6152, %v6151
    %v6177 = vpack.c.bf16 %v6154, %v6153
    %v6178 = vpack.c.bf16 %v6156, %v6155
    %v6179 = vpack.c.bf16 %v6158, %v6157
    %v6180 = vpack.c.bf16 %v6160, %v6159
    %v6181 = vpack.c.bf16 %v6162, %v6161
    %v6182 = vpack.c.bf16 %v6164, %v6163
    %v6183 = vpack.c.bf16 %v6166, %v6165
    %v6184 = vpack.c.bf16 %v6168, %v6167
    %v6185 = vpack.c.bf16 %v6170, %v6169
    %6186 = vxpose.xlu0.b32.start [1/16] %v6123, 128
    %6187 = vxpose.xlu0.b32.cont [2/16] %v6125, 128
    %6188 = vxpose.xlu0.b32.cont [3/16] 0.0, 128
    %6189 = vxpose.xlu0.b32.cont [4/16] 0.0, 128
    %6190 = vxpose.xlu0.b32.cont [5/16] 0.0, 128
    %6191 = vxpose.xlu0.b32.cont [6/16] 0.0, 128
    %6192 = vxpose.xlu0.b32.cont [7/16] 0.0, 128
    %6193 = vxpose.xlu0.b32.cont [8/16] 0.0, 128
    %6194 = vxpose.xlu0.b32.cont [9/16] 0.0, 128
    %6195 = vxpose.xlu0.b32.cont [10/16] 0.0, 128
    %6196 = vxpose.xlu0.b32.cont [11/16] 0.0, 128
    %6197 = vxpose.xlu0.b32.cont [12/16] 0.0, 128
    %6198 = vxpose.xlu0.b32.cont [13/16] 0.0, 128
    %6199 = vxpose.xlu0.b32.cont [14/16] 0.0, 128
    %6200 = vxpose.xlu0.b32.cont [15/16] 0.0, 128
    %6201 = vxpose.xlu0.b32.end [16/16] 0.0, 128
    %v6202 = vpop.trf.xlu0
    %v6203 = vpop.trf.xlu0
    %v6204 = vpop.trf.xlu0
    %v6205 = vpop.trf.xlu0
    %v6206 = vpop.trf.xlu0
    %v6207 = vpop.trf.xlu0
    %v6208 = vpop.trf.xlu0
    %v6209 = vpop.trf.xlu0
    %v6210 = vpop.trf.xlu0
    %v6211 = vpop.trf.xlu0
    %v6212 = vpop.trf.xlu0
    %v6213 = vpop.trf.xlu0
    %v6214 = vpop.trf.xlu0
    %v6215 = vpop.trf.xlu0
    %v6216 = vpop.trf.xlu0
    %v6217 = vpop.trf.xlu0
    %v6218 = vpack.c.bf16 %v6203, %v6202
    %v6219 = vpack.c.bf16 %v6205, %v6204
    %v6220 = vpack.c.bf16 %v6207, %v6206
    %v6221 = vpack.c.bf16 %v6209, %v6208
    %v6222 = vpack.c.bf16 %v6211, %v6210
    %v6223 = vpack.c.bf16 %v6213, %v6212
    %v6224 = vpack.c.bf16 %v6215, %v6214
    %v6225 = vpack.c.bf16 %v6217, %v6216
    %6226 = vmatpush.bf16.msra.mxu0 %v6225
    %6227 = vmatpush.bf16.msra.mxu0 %v6224
    %6228 = vmatpush.bf16.msra.mxu0 %v6223
    %6229 = vmatpush.bf16.msra.mxu0 %v6222
    %6230 = vmatpush.bf16.msra.mxu0 %v6221
    %6231 = vmatpush.bf16.msra.mxu0 %v6220
    %6232 = vmatpush.bf16.msra.mxu0 %v6219
    %6233 = vmatpush.bf16.msra.mxu0 %v6218
    %6234 = vmatmul.bf16.gmra.mxu0 %v6171
    %v6235 = vpop.f32.mrf.mxu0
    %v6236 = vadd.f32 %v1132, %v6235
    %v6237 = vpop.f32.mrf.mxu0
    %v6238 = vadd.f32 %v1133, %v6237
    %6239 = vmatmul.bf16.gmra.mxu0 %v6172
    %v6240 = vpop.f32.mrf.mxu0
    %v6241 = vadd.f32 %v1132, %v6240
    %v6242 = vpop.f32.mrf.mxu0
    %v6243 = vadd.f32 %v1133, %v6242
    %6244 = vmatmul.bf16.gmra.mxu0 %v6173
    %v6245 = vpop.f32.mrf.mxu0
    %v6246 = vadd.f32 %v1132, %v6245
    %v6247 = vpop.f32.mrf.mxu0
    %v6248 = vadd.f32 %v1133, %v6247
    %6249 = vmatmul.bf16.gmra.mxu0 %v6174
    %v6250 = vpop.f32.mrf.mxu0
    %v6251 = vadd.f32 %v1132, %v6250
    %v6252 = vpop.f32.mrf.mxu0
    %v6253 = vadd.f32 %v1133, %v6252
    %6254 = vmatmul.bf16.gmra.mxu0 %v6175
    %v6255 = vpop.f32.mrf.mxu0
    %v6256 = vadd.f32 %v1132, %v6255
    %v6257 = vpop.f32.mrf.mxu0
    %v6258 = vadd.f32 %v1133, %v6257
    %6259 = vmatmul.bf16.gmra.mxu0 %v6176
    %v6260 = vpop.f32.mrf.mxu0
    %v6261 = vadd.f32 %v1132, %v6260
    %v6262 = vpop.f32.mrf.mxu0
    %v6263 = vadd.f32 %v1133, %v6262
    %6264 = vmatmul.bf16.gmra.mxu0 %v6177
    %v6265 = vpop.f32.mrf.mxu0
    %v6266 = vadd.f32 %v1132, %v6265
    %v6267 = vpop.f32.mrf.mxu0
    %v6268 = vadd.f32 %v1133, %v6267
    %6269 = vmatmul.bf16.gmra.mxu0 %v6178
    %v6270 = vpop.f32.mrf.mxu0
    %v6271 = vadd.f32 %v1132, %v6270
    %v6272 = vpop.f32.mrf.mxu0
    %v6273 = vadd.f32 %v1133, %v6272
    %6274 = vmatmul.bf16.gmra.mxu0 %v6179
    %v6275 = vpop.f32.mrf.mxu0
    %v6276 = vadd.f32 %v1132, %v6275
    %v6277 = vpop.f32.mrf.mxu0
    %v6278 = vadd.f32 %v1133, %v6277
    %6279 = vmatmul.bf16.gmra.mxu0 %v6180
    %v6280 = vpop.f32.mrf.mxu0
    %v6281 = vadd.f32 %v1132, %v6280
    %v6282 = vpop.f32.mrf.mxu0
    %v6283 = vadd.f32 %v1133, %v6282
    %6284 = vmatmul.bf16.gmra.mxu0 %v6181
    %v6285 = vpop.f32.mrf.mxu0
    %v6286 = vadd.f32 %v1132, %v6285
    %v6287 = vpop.f32.mrf.mxu0
    %v6288 = vadd.f32 %v1133, %v6287
    %6289 = vmatmul.bf16.gmra.mxu0 %v6182
    %v6290 = vpop.f32.mrf.mxu0
    %v6291 = vadd.f32 %v1132, %v6290
    %v6292 = vpop.f32.mrf.mxu0
    %v6293 = vadd.f32 %v1133, %v6292
    %6294 = vmatmul.bf16.gmra.mxu0 %v6183
    %v6295 = vpop.f32.mrf.mxu0
    %v6296 = vadd.f32 %v1132, %v6295
    %v6297 = vpop.f32.mrf.mxu0
    %v6298 = vadd.f32 %v1133, %v6297
    %6299 = vmatmul.bf16.gmra.mxu0 %v6184
    %v6300 = vpop.f32.mrf.mxu0
    %v6301 = vadd.f32 %v1132, %v6300
    %v6302 = vpop.f32.mrf.mxu0
    %v6303 = vadd.f32 %v1133, %v6302
    %6304 = vmatmul.bf16.gmra.mxu0 %v6185
    %v6305 = vpop.f32.mrf.mxu0
    %v6306 = vadd.f32 %v1132, %v6305
    %v6307 = vpop.f32.mrf.mxu0
    %v6308 = vadd.f32 %v1133, %v6307
    %6309 = vdwg.mxu0
    %v6310 = vsel %vm5029, %v6236, -inf
    %6311 = vmax.xlane.f32.xlu0 %v6310
    %v6312 = vpop.xlane.xlu0 %6311
    %v6313 = vsel %vm5029, %v6238, -inf
    %6314 = vmax.xlane.f32.xlu0 %v6313
    %v6315 = vpop.xlane.xlu0 %6314
    %v6316 = vsel %vm5029, %v6241, -inf
    %6317 = vmax.xlane.f32.xlu0 %v6316
    %v6318 = vpop.xlane.xlu0 %6317
    %v6319 = vsel %vm5029, %v6243, -inf
    %6320 = vmax.xlane.f32.xlu0 %v6319
    %v6321 = vpop.xlane.xlu0 %6320
    %v6322 = vsel %vm5029, %v6246, -inf
    %6323 = vmax.xlane.f32.xlu0 %v6322
    %v6324 = vpop.xlane.xlu0 %6323
    %v6325 = vsel %vm5029, %v6248, -inf
    %6326 = vmax.xlane.f32.xlu0 %v6325
    %v6327 = vpop.xlane.xlu0 %6326
    %v6328 = vsel %vm5029, %v6251, -inf
    %6329 = vmax.xlane.f32.xlu0 %v6328
    %v6330 = vpop.xlane.xlu0 %6329
    %v6331 = vsel %vm5029, %v6253, -inf
    %6332 = vmax.xlane.f32.xlu0 %v6331
    %v6333 = vpop.xlane.xlu0 %6332
    %v6334 = vsel %vm5029, %v6256, -inf
    %6335 = vmax.xlane.f32.xlu0 %v6334
    %v6336 = vpop.xlane.xlu0 %6335
    %v6337 = vsel %vm5029, %v6258, -inf
    %6338 = vmax.xlane.f32.xlu0 %v6337
    %v6339 = vpop.xlane.xlu0 %6338
    %v6340 = vsel %vm5029, %v6261, -inf
    %6341 = vmax.xlane.f32.xlu0 %v6340
    %v6342 = vpop.xlane.xlu0 %6341
    %v6343 = vsel %vm5029, %v6263, -inf
    %6344 = vmax.xlane.f32.xlu0 %v6343
    %v6345 = vpop.xlane.xlu0 %6344
    %v6346 = vsel %vm5029, %v6266, -inf
    %6347 = vmax.xlane.f32.xlu0 %v6346
    %v6348 = vpop.xlane.xlu0 %6347
    %v6349 = vsel %vm5029, %v6268, -inf
    %6350 = vmax.xlane.f32.xlu0 %v6349
    %v6351 = vpop.xlane.xlu0 %6350
    %v6352 = vsel %vm5029, %v6271, -inf
    %6353 = vmax.xlane.f32.xlu0 %v6352
    %v6354 = vpop.xlane.xlu0 %6353
    %v6355 = vsel %vm5029, %v6273, -inf
    %6356 = vmax.xlane.f32.xlu0 %v6355
    %v6357 = vpop.xlane.xlu0 %6356
    %v6358 = vsel %vm5029, %v6276, -inf
    %6359 = vmax.xlane.f32.xlu0 %v6358
    %v6360 = vpop.xlane.xlu0 %6359
    %v6361 = vsel %vm5029, %v6278, -inf
    %6362 = vmax.xlane.f32.xlu0 %v6361
    %v6363 = vpop.xlane.xlu0 %6362
    %v6364 = vsel %vm5029, %v6281, -inf
    %6365 = vmax.xlane.f32.xlu0 %v6364
    %v6366 = vpop.xlane.xlu0 %6365
    %v6367 = vsel %vm5029, %v6283, -inf
    %6368 = vmax.xlane.f32.xlu0 %v6367
    %v6369 = vpop.xlane.xlu0 %6368
    %v6370 = vsel %vm5029, %v6286, -inf
    %6371 = vmax.xlane.f32.xlu0 %v6370
    %v6372 = vpop.xlane.xlu0 %6371
    %v6373 = vsel %vm5029, %v6288, -inf
    %6374 = vmax.xlane.f32.xlu0 %v6373
    %v6375 = vpop.xlane.xlu0 %6374
    %v6376 = vsel %vm5029, %v6291, -inf
    %6377 = vmax.xlane.f32.xlu0 %v6376
    %v6378 = vpop.xlane.xlu0 %6377
    %v6379 = vsel %vm5029, %v6293, -inf
    %6380 = vmax.xlane.f32.xlu0 %v6379
    %v6381 = vpop.xlane.xlu0 %6380
    %v6382 = vsel %vm5029, %v6296, -inf
    %6383 = vmax.xlane.f32.xlu0 %v6382
    %v6384 = vpop.xlane.xlu0 %6383
    %v6385 = vsel %vm5029, %v6298, -inf
    %6386 = vmax.xlane.f32.xlu0 %v6385
    %v6387 = vpop.xlane.xlu0 %6386
    %v6388 = vsel %vm5029, %v6301, -inf
    %6389 = vmax.xlane.f32.xlu0 %v6388
    %v6390 = vpop.xlane.xlu0 %6389
    %v6391 = vsel %vm5029, %v6303, -inf
    %6392 = vmax.xlane.f32.xlu0 %v6391
    %v6393 = vpop.xlane.xlu0 %6392
    %v6394 = vsel %vm5029, %v6306, -inf
    %6395 = vmax.xlane.f32.xlu0 %v6394
    %v6396 = vpop.xlane.xlu0 %6395
    %v6397 = vsel %vm5029, %v6308, -inf
    %6398 = vmax.xlane.f32.xlu0 %v6397
    %v6399 = vpop.xlane.xlu0 %6398
    %v6400 = vsub.f32 %v6236, %v6312
    %v6401 = vsub.f32 %v6238, %v6315
    %v6402 = vsub.f32 %v6241, %v6318
    %v6403 = vsub.f32 %v6243, %v6321
    %v6404 = vsub.f32 %v6246, %v6324
    %v6405 = vsub.f32 %v6248, %v6327
    %v6406 = vsub.f32 %v6251, %v6330
    %v6407 = vsub.f32 %v6253, %v6333
    %v6408 = vsub.f32 %v6256, %v6336
    %v6409 = vsub.f32 %v6258, %v6339
    %v6410 = vsub.f32 %v6261, %v6342
    %v6411 = vsub.f32 %v6263, %v6345
    %v6412 = vsub.f32 %v6266, %v6348
    %v6413 = vsub.f32 %v6268, %v6351
    %v6414 = vsub.f32 %v6271, %v6354
    %v6415 = vsub.f32 %v6273, %v6357
    %v6416 = vsub.f32 %v6276, %v6360
    %v6417 = vsub.f32 %v6278, %v6363
    %v6418 = vsub.f32 %v6281, %v6366
    %v6419 = vsub.f32 %v6283, %v6369
    %v6420 = vsub.f32 %v6286, %v6372
    %v6421 = vsub.f32 %v6288, %v6375
    %v6422 = vsub.f32 %v6291, %v6378
    %v6423 = vsub.f32 %v6293, %v6381
    %v6424 = vsub.f32 %v6296, %v6384
    %v6425 = vsub.f32 %v6298, %v6387
    %v6426 = vsub.f32 %v6301, %v6390
    %v6427 = vsub.f32 %v6303, %v6393
    %v6428 = vsub.f32 %v6306, %v6396
    %v6429 = vsub.f32 %v6308, %v6399
    %v6430 = vmul.f32 %v6400, 1.442695
    %v6431 = vpow.pop %v6430
    %v6432 = vmul.f32 %v6401, 1.442695
    %v6433 = vpow.pop %v6432
    %v6434 = vmul.f32 %v6402, 1.442695
    %v6435 = vpow.pop %v6434
    %v6436 = vmul.f32 %v6403, 1.442695
    %v6437 = vpow.pop %v6436
    %v6438 = vmul.f32 %v6404, 1.442695
    %v6439 = vpow.pop %v6438
    %v6440 = vmul.f32 %v6405, 1.442695
    %v6441 = vpow.pop %v6440
    %v6442 = vmul.f32 %v6406, 1.442695
    %v6443 = vpow.pop %v6442
    %v6444 = vmul.f32 %v6407, 1.442695
    %v6445 = vpow.pop %v6444
    %v6446 = vmul.f32 %v6408, 1.442695
    %v6447 = vpow.pop %v6446
    %v6448 = vmul.f32 %v6409, 1.442695
    %v6449 = vpow.pop %v6448
    %v6450 = vmul.f32 %v6410, 1.442695
    %v6451 = vpow.pop %v6450
    %v6452 = vmul.f32 %v6411, 1.442695
    %v6453 = vpow.pop %v6452
    %v6454 = vmul.f32 %v6412, 1.442695
    %v6455 = vpow.pop %v6454
    %v6456 = vmul.f32 %v6413, 1.442695
    %v6457 = vpow.pop %v6456
    %v6458 = vmul.f32 %v6414, 1.442695
    %v6459 = vpow.pop %v6458
    %v6460 = vmul.f32 %v6415, 1.442695
    %v6461 = vpow.pop %v6460
    %v6462 = vmul.f32 %v6416, 1.442695
    %v6463 = vpow.pop %v6462
    %v6464 = vmul.f32 %v6417, 1.442695
    %v6465 = vpow.pop %v6464
    %v6466 = vmul.f32 %v6418, 1.442695
    %v6467 = vpow.pop %v6466
    %v6468 = vmul.f32 %v6419, 1.442695
    %v6469 = vpow.pop %v6468
    %v6470 = vmul.f32 %v6420, 1.442695
    %v6471 = vpow.pop %v6470
    %v6472 = vmul.f32 %v6421, 1.442695
    %v6473 = vpow.pop %v6472
    %v6474 = vmul.f32 %v6422, 1.442695
    %v6475 = vpow.pop %v6474
    %v6476 = vmul.f32 %v6423, 1.442695
    %v6477 = vpow.pop %v6476
    %v6478 = vmul.f32 %v6424, 1.442695
    %v6479 = vpow.pop %v6478
    %v6480 = vmul.f32 %v6425, 1.442695
    %v6481 = vpow.pop %v6480
    %v6482 = vmul.f32 %v6426, 1.442695
    %v6483 = vpow.pop %v6482
    %v6484 = vmul.f32 %v6427, 1.442695
    %v6485 = vpow.pop %v6484
    %v6486 = vmul.f32 %v6428, 1.442695
    %v6487 = vpow.pop %v6486
    %v6488 = vmul.f32 %v6429, 1.442695
    %v6489 = vpow.pop %v6488
    %v6490 = vsel %vm5029, %v6431, 0.0
    %6491 = vadd.xlane.f32.xlu0 %v6490
    %v6492 = vpop.xlane.xlu0 %6491
    %v6493 = vsel %vm5029, %v6433, 0.0
    %6494 = vadd.xlane.f32.xlu0 %v6493
    %v6495 = vpop.xlane.xlu0 %6494
    %v6496 = vsel %vm5029, %v6435, 0.0
    %6497 = vadd.xlane.f32.xlu0 %v6496
    %v6498 = vpop.xlane.xlu0 %6497
    %v6499 = vsel %vm5029, %v6437, 0.0
    %6500 = vadd.xlane.f32.xlu0 %v6499
    %v6501 = vpop.xlane.xlu0 %6500
    %v6502 = vsel %vm5029, %v6439, 0.0
    %6503 = vadd.xlane.f32.xlu0 %v6502
    %v6504 = vpop.xlane.xlu0 %6503
    %v6505 = vsel %vm5029, %v6441, 0.0
    %6506 = vadd.xlane.f32.xlu0 %v6505
    %v6507 = vpop.xlane.xlu0 %6506
    %v6508 = vsel %vm5029, %v6443, 0.0
    %6509 = vadd.xlane.f32.xlu0 %v6508
    %v6510 = vpop.xlane.xlu0 %6509
    %v6511 = vsel %vm5029, %v6445, 0.0
    %6512 = vadd.xlane.f32.xlu0 %v6511
    %v6513 = vpop.xlane.xlu0 %6512
    %v6514 = vsel %vm5029, %v6447, 0.0
    %6515 = vadd.xlane.f32.xlu0 %v6514
    %v6516 = vpop.xlane.xlu0 %6515
    %v6517 = vsel %vm5029, %v6449, 0.0
    %6518 = vadd.xlane.f32.xlu0 %v6517
    %v6519 = vpop.xlane.xlu0 %6518
    %v6520 = vsel %vm5029, %v6451, 0.0
    %6521 = vadd.xlane.f32.xlu0 %v6520
    %v6522 = vpop.xlane.xlu0 %6521
    %v6523 = vsel %vm5029, %v6453, 0.0
    %6524 = vadd.xlane.f32.xlu0 %v6523
    %v6525 = vpop.xlane.xlu0 %6524
    %v6526 = vsel %vm5029, %v6455, 0.0
    %6527 = vadd.xlane.f32.xlu0 %v6526
    %v6528 = vpop.xlane.xlu0 %6527
    %v6529 = vsel %vm5029, %v6457, 0.0
    %6530 = vadd.xlane.f32.xlu0 %v6529
    %v6531 = vpop.xlane.xlu0 %6530
    %v6532 = vsel %vm5029, %v6459, 0.0
    %6533 = vadd.xlane.f32.xlu0 %v6532
    %v6534 = vpop.xlane.xlu0 %6533
    %v6535 = vsel %vm5029, %v6461, 0.0
    %6536 = vadd.xlane.f32.xlu0 %v6535
    %v6537 = vpop.xlane.xlu0 %6536
    %v6538 = vsel %vm5029, %v6463, 0.0
    %6539 = vadd.xlane.f32.xlu0 %v6538
    %v6540 = vpop.xlane.xlu0 %6539
    %v6541 = vsel %vm5029, %v6465, 0.0
    %6542 = vadd.xlane.f32.xlu0 %v6541
    %v6543 = vpop.xlane.xlu0 %6542
    %v6544 = vsel %vm5029, %v6467, 0.0
    %6545 = vadd.xlane.f32.xlu0 %v6544
    %v6546 = vpop.xlane.xlu0 %6545
    %v6547 = vsel %vm5029, %v6469, 0.0
    %6548 = vadd.xlane.f32.xlu0 %v6547
    %v6549 = vpop.xlane.xlu0 %6548
    %v6550 = vsel %vm5029, %v6471, 0.0
    %6551 = vadd.xlane.f32.xlu0 %v6550
    %v6552 = vpop.xlane.xlu0 %6551
    %v6553 = vsel %vm5029, %v6473, 0.0
    %6554 = vadd.xlane.f32.xlu0 %v6553
    %v6555 = vpop.xlane.xlu0 %6554
    %v6556 = vsel %vm5029, %v6475, 0.0
    %6557 = vadd.xlane.f32.xlu0 %v6556
    %v6558 = vpop.xlane.xlu0 %6557
    %v6559 = vsel %vm5029, %v6477, 0.0
    %6560 = vadd.xlane.f32.xlu0 %v6559
    %v6561 = vpop.xlane.xlu0 %6560
    %v6562 = vsel %vm5029, %v6479, 0.0
    %6563 = vadd.xlane.f32.xlu0 %v6562
    %v6564 = vpop.xlane.xlu0 %6563
    %v6565 = vsel %vm5029, %v6481, 0.0
    %6566 = vadd.xlane.f32.xlu0 %v6565
    %v6567 = vpop.xlane.xlu0 %6566
    %v6568 = vsel %vm5029, %v6483, 0.0
    %6569 = vadd.xlane.f32.xlu0 %v6568
    %v6570 = vpop.xlane.xlu0 %6569
    %v6571 = vsel %vm5029, %v6485, 0.0
    %6572 = vadd.xlane.f32.xlu0 %v6571
    %v6573 = vpop.xlane.xlu0 %6572
    %v6574 = vsel %vm5029, %v6487, 0.0
    %6575 = vadd.xlane.f32.xlu0 %v6574
    %v6576 = vpop.xlane.xlu0 %6575
    %v6577 = vsel %vm5029, %v6489, 0.0
    %6578 = vadd.xlane.f32.xlu0 %v6577
    %v6579 = vpop.xlane.xlu0 %6578
    %v6580 = vrcp.pop %v6492
    %v6581 = vrcp.pop %v6495
    %v6582 = vrcp.pop %v6498
    %v6583 = vrcp.pop %v6501
    %v6584 = vrcp.pop %v6504
    %v6585 = vrcp.pop %v6507
    %v6586 = vrcp.pop %v6510
    %v6587 = vrcp.pop %v6513
    %v6588 = vrcp.pop %v6516
    %v6589 = vrcp.pop %v6519
    %v6590 = vrcp.pop %v6522
    %v6591 = vrcp.pop %v6525
    %v6592 = vrcp.pop %v6528
    %v6593 = vrcp.pop %v6531
    %v6594 = vrcp.pop %v6534
    %v6595 = vrcp.pop %v6537
    %v6596 = vrcp.pop %v6540
    %v6597 = vrcp.pop %v6543
    %v6598 = vrcp.pop %v6546
    %v6599 = vrcp.pop %v6549
    %v6600 = vrcp.pop %v6552
    %v6601 = vrcp.pop %v6555
    %v6602 = vrcp.pop %v6558
    %v6603 = vrcp.pop %v6561
    %v6604 = vrcp.pop %v6564
    %v6605 = vrcp.pop %v6567
    %v6606 = vrcp.pop %v6570
    %v6607 = vrcp.pop %v6573
    %v6608 = vrcp.pop %v6576
    %v6609 = vrcp.pop %v6579
    %v6610 = vmul.f32 %v6431, %v6580
    %v6611 = vmul.f32 %v6433, %v6581
    %v6612 = vmul.f32 %v6435, %v6582
    %v6613 = vmul.f32 %v6437, %v6583
    %v6614 = vmul.f32 %v6439, %v6584
    %v6615 = vmul.f32 %v6441, %v6585
    %v6616 = vmul.f32 %v6443, %v6586
    %v6617 = vmul.f32 %v6445, %v6587
    %v6618 = vmul.f32 %v6447, %v6588
    %v6619 = vmul.f32 %v6449, %v6589
    %v6620 = vmul.f32 %v6451, %v6590
    %v6621 = vmul.f32 %v6453, %v6591
    %v6622 = vmul.f32 %v6455, %v6592
    %v6623 = vmul.f32 %v6457, %v6593
    %v6624 = vmul.f32 %v6459, %v6594
    %v6625 = vmul.f32 %v6461, %v6595
    %v6626 = vmul.f32 %v6463, %v6596
    %v6627 = vmul.f32 %v6465, %v6597
    %v6628 = vmul.f32 %v6467, %v6598
    %v6629 = vmul.f32 %v6469, %v6599
    %v6630 = vmul.f32 %v6471, %v6600
    %v6631 = vmul.f32 %v6473, %v6601
    %v6632 = vmul.f32 %v6475, %v6602
    %v6633 = vmul.f32 %v6477, %v6603
    %v6634 = vmul.f32 %v6479, %v6604
    %v6635 = vmul.f32 %v6481, %v6605
    %v6636 = vmul.f32 %v6483, %v6606
    %v6637 = vmul.f32 %v6485, %v6607
    %v6638 = vmul.f32 %v6487, %v6608
    %v6639 = vmul.f32 %v6489, %v6609
    %v6640 = vpack.c.bf16 %v6611, %v6610
    %v6641 = vpack.c.bf16 %v6613, %v6612
    %v6642 = vpack.c.bf16 %v6615, %v6614
    %v6643 = vpack.c.bf16 %v6617, %v6616
    %v6644 = vpack.c.bf16 %v6619, %v6618
    %v6645 = vpack.c.bf16 %v6621, %v6620
    %v6646 = vpack.c.bf16 %v6623, %v6622
    %v6647 = vpack.c.bf16 %v6625, %v6624
    %v6648 = vpack.c.bf16 %v6627, %v6626
    %v6649 = vpack.c.bf16 %v6629, %v6628
    %v6650 = vpack.c.bf16 %v6631, %v6630
    %v6651 = vpack.c.bf16 %v6633, %v6632
    %v6652 = vpack.c.bf16 %v6635, %v6634
    %v6653 = vpack.c.bf16 %v6637, %v6636
    %v6654 = vpack.c.bf16 %v6639, %v6638
    %v6655 = vpack.c.bf16 %v6139, %v6137
    %v6657 = vsel %vm5029, %v6640, 0
    %v6660 = vsel %vm5029, %v6641, 0
    %v6663 = vsel %vm5029, %v6642, 0
    %v6666 = vsel %vm5029, %v6643, 0
    %v6669 = vsel %vm5029, %v6644, 0
    %v6672 = vsel %vm5029, %v6645, 0
    %v6675 = vsel %vm5029, %v6646, 0
    %v6678 = vsel %vm5029, %v6647, 0
    %v6681 = vsel %vm5029, %v6648, 0
    %v6684 = vsel %vm5029, %v6649, 0
    %v6687 = vsel %vm5029, %v6650, 0
    %v6690 = vsel %vm5029, %v6651, 0
    %v6693 = vsel %vm5029, %v6652, 0
    %v6696 = vsel %vm5029, %v6653, 0
    %v6699 = vsel %vm5029, %v6654, 0
    %6701 = vmatpush.bf16.msra.mxu0 0
    %6702 = vmatpush.bf16.msra.mxu0 0
    %6703 = vmatpush.bf16.msra.mxu0 0
    %6704 = vmatpush.bf16.msra.mxu0 0
    %6705 = vmatpush.bf16.msra.mxu0 0
    %6706 = vmatpush.bf16.msra.mxu0 0
    %6707 = vmatpush.bf16.msra.mxu0 0
    %6708 = vmatpush.bf16.msra.mxu0 %v6655
    %6709 = vmatmul.bf16.gmra.mxu0 %v6657
    %v6710 = vpop.f32.mrf.mxu0
    %v6711 = vadd.f32 0.0, %v6710
    %v6712 = vpop.f32.mrf.mxu0
    %v6713 = vadd.f32 0.0, %v6712
    %6714 = vmatmul.bf16.gmra.mxu0 %v6660
    %v6715 = vpop.f32.mrf.mxu0
    %v6716 = vadd.f32 0.0, %v6715
    %v6717 = vpop.f32.mrf.mxu0
    %v6718 = vadd.f32 0.0, %v6717
    %6719 = vmatmul.bf16.gmra.mxu0 %v6663
    %v6720 = vpop.f32.mrf.mxu0
    %v6721 = vadd.f32 0.0, %v6720
    %v6722 = vpop.f32.mrf.mxu0
    %v6723 = vadd.f32 0.0, %v6722
    %6724 = vmatmul.bf16.gmra.mxu0 %v6666
    %v6725 = vpop.f32.mrf.mxu0
    %v6726 = vadd.f32 0.0, %v6725
    %v6727 = vpop.f32.mrf.mxu0
    %v6728 = vadd.f32 0.0, %v6727
    %6729 = vmatmul.bf16.gmra.mxu0 %v6669
    %v6730 = vpop.f32.mrf.mxu0
    %v6731 = vadd.f32 0.0, %v6730
    %v6732 = vpop.f32.mrf.mxu0
    %v6733 = vadd.f32 0.0, %v6732
    %6734 = vmatmul.bf16.gmra.mxu0 %v6672
    %v6735 = vpop.f32.mrf.mxu0
    %v6736 = vadd.f32 0.0, %v6735
    %v6737 = vpop.f32.mrf.mxu0
    %v6738 = vadd.f32 0.0, %v6737
    %6739 = vmatmul.bf16.gmra.mxu0 %v6675
    %v6740 = vpop.f32.mrf.mxu0
    %v6741 = vadd.f32 0.0, %v6740
    %v6742 = vpop.f32.mrf.mxu0
    %v6743 = vadd.f32 0.0, %v6742
    %6744 = vmatmul.bf16.gmra.mxu0 %v6678
    %v6745 = vpop.f32.mrf.mxu0
    %v6746 = vadd.f32 0.0, %v6745
    %v6747 = vpop.f32.mrf.mxu0
    %v6748 = vadd.f32 0.0, %v6747
    %6749 = vmatmul.bf16.gmra.mxu0 %v6681
    %v6750 = vpop.f32.mrf.mxu0
    %v6751 = vadd.f32 0.0, %v6750
    %v6752 = vpop.f32.mrf.mxu0
    %v6753 = vadd.f32 0.0, %v6752
    %6754 = vmatmul.bf16.gmra.mxu0 %v6684
    %v6755 = vpop.f32.mrf.mxu0
    %v6756 = vadd.f32 0.0, %v6755
    %v6757 = vpop.f32.mrf.mxu0
    %v6758 = vadd.f32 0.0, %v6757
    %6759 = vmatmul.bf16.gmra.mxu0 %v6687
    %v6760 = vpop.f32.mrf.mxu0
    %v6761 = vadd.f32 0.0, %v6760
    %v6762 = vpop.f32.mrf.mxu0
    %v6763 = vadd.f32 0.0, %v6762
    %6764 = vmatmul.bf16.gmra.mxu0 %v6690
    %v6765 = vpop.f32.mrf.mxu0
    %v6766 = vadd.f32 0.0, %v6765
    %v6767 = vpop.f32.mrf.mxu0
    %v6768 = vadd.f32 0.0, %v6767
    %6769 = vmatmul.bf16.gmra.mxu0 %v6693
    %v6770 = vpop.f32.mrf.mxu0
    %v6771 = vadd.f32 0.0, %v6770
    %v6772 = vpop.f32.mrf.mxu0
    %v6773 = vadd.f32 0.0, %v6772
    %6774 = vmatmul.bf16.gmra.mxu0 %v6696
    %v6775 = vpop.f32.mrf.mxu0
    %v6776 = vadd.f32 0.0, %v6775
    %v6777 = vpop.f32.mrf.mxu0
    %v6778 = vadd.f32 0.0, %v6777
    %6779 = vmatmul.bf16.gmra.mxu0 %v6699
    %v6780 = vpop.f32.mrf.mxu0
    %v6781 = vadd.f32 0.0, %v6780
    %v6782 = vpop.f32.mrf.mxu0
    %v6783 = vadd.f32 0.0, %v6782
    %6784 = vdwg.mxu0
    %v6785 = vmul.f32 %v6711, %v4845
    %v6786 = vmul.f32 %v6713, %v4845
    %v6787 = vmul.f32 %v6716, %v4848
    %v6788 = vmul.f32 %v6718, %v4848
    %v6789 = vadd.f32 %v6785, %v6787
    %v6790 = vadd.f32 %v6786, %v6788
    %v6791 = vmul.f32 %v6721, %v4851
    %v6792 = vmul.f32 %v6723, %v4851
    %v6793 = vadd.f32 %v6789, %v6791
    %v6794 = vadd.f32 %v6790, %v6792
    %v6795 = vmul.f32 %v6726, %v4854
    %v6796 = vmul.f32 %v6728, %v4854
    %v6797 = vadd.f32 %v6793, %v6795
    %v6798 = vadd.f32 %v6794, %v6796
    %v6799 = vmul.f32 %v6731, %v4857
    %v6800 = vmul.f32 %v6733, %v4857
    %v6801 = vadd.f32 %v6797, %v6799
    %v6802 = vadd.f32 %v6798, %v6800
    %v6803 = vmul.f32 %v6736, %v4860
    %v6804 = vmul.f32 %v6738, %v4860
    %v6805 = vadd.f32 %v6801, %v6803
    %v6806 = vadd.f32 %v6802, %v6804
    %v6807 = vmul.f32 %v6741, %v4863
    %v6808 = vmul.f32 %v6743, %v4863
    %v6809 = vadd.f32 %v6805, %v6807
    %v6810 = vadd.f32 %v6806, %v6808
    %v6811 = vmul.f32 %v6746, %v4866
    %v6812 = vmul.f32 %v6748, %v4866
    %v6813 = vadd.f32 %v6809, %v6811
    %v6814 = vadd.f32 %v6810, %v6812
    %v6815 = vmul.f32 %v6751, %v4869
    %v6816 = vmul.f32 %v6753, %v4869
    %v6817 = vadd.f32 %v6813, %v6815
    %v6818 = vadd.f32 %v6814, %v6816
    %v6819 = vmul.f32 %v6756, %v4872
    %v6820 = vmul.f32 %v6758, %v4872
    %v6821 = vadd.f32 %v6817, %v6819
    %v6822 = vadd.f32 %v6818, %v6820
    %v6823 = vmul.f32 %v6761, %v4875
    %v6824 = vmul.f32 %v6763, %v4875
    %v6825 = vadd.f32 %v6821, %v6823
    %v6826 = vadd.f32 %v6822, %v6824
    %v6827 = vmul.f32 %v6766, %v4878
    %v6828 = vmul.f32 %v6768, %v4878
    %v6829 = vadd.f32 %v6825, %v6827
    %v6830 = vadd.f32 %v6826, %v6828
    %v6831 = vmul.f32 %v6771, %v4881
    %v6832 = vmul.f32 %v6773, %v4881
    %v6833 = vadd.f32 %v6829, %v6831
    %v6834 = vadd.f32 %v6830, %v6832
    %v6835 = vmul.f32 %v6776, %v4884
    %v6836 = vmul.f32 %v6778, %v4884
    %v6837 = vadd.f32 %v6833, %v6835
    %v6838 = vadd.f32 %v6834, %v6836
    %v6839 = vmul.f32 %v6781, %v4887
    %v6840 = vmul.f32 %v6783, %v4887
    %v6841 = vadd.f32 %v6837, %v6839
    %v6842 = vadd.f32 %v6838, %v6840
    %v6843 = vld [vmem:[%s87] sm:$0xf]
    %v6844 = vld [vmem:[%s87 + $0x4] sm:$0xf]
    %v6845 = vld [vmem:[%s87 + $0x8] sm:$0xf]
    %v6846 = vld [vmem:[%s87 + $0xc] sm:$0xf]
    %v6847 = vld [vmem:[%s87 + $0x10] sm:$0xf]
    %v6848 = vld [vmem:[%s87 + $0x14] sm:$0xf]
    %v6849 = vld [vmem:[%s87 + $0x18] sm:$0xf]
    %v6850 = vld [vmem:[%s87 + $0x1c] sm:$0xf]
    %v6851 = vld [vmem:[%s87 + $0x20] sm:$0xf]
    %v6852 = vld [vmem:[%s87 + $0x24] sm:$0xf]
    %v6853 = vld [vmem:[%s87 + $0x28] sm:$0xf]
    %v6854 = vld [vmem:[%s87 + $0x2c] sm:$0xf]
    %v6855 = vld [vmem:[%s87 + $0x30] sm:$0xf]
    %v6856 = vld [vmem:[%s87 + $0x34] sm:$0xf]
    %v6857 = vld [vmem:[%s87 + $0x38] sm:$0xf]
    %v6858 = vld [vmem:[%s87 + $0x3c] sm:$0xf]
    %v6859 = vpack.c.bf16 %v6842, %v6841
    %v6860 = vld [vmem:[#allocation18] sm:$0x1]
    %v6862 = vperm.slane %v6860, 0
    %v6880 = vunpack.c.l.b16 %v6843
    %v6881 = vunpack.c.l.b16 %v6844
    %v6882 = vunpack.c.l.b16 %v6845
    %v6883 = vunpack.c.l.b16 %v6846
    %v6884 = vunpack.c.l.b16 %v6847
    %v6885 = vunpack.c.l.b16 %v6848
    %v6886 = vunpack.c.l.b16 %v6849
    %v6887 = vunpack.c.l.b16 %v6850
    %v6888 = vunpack.c.l.b16 %v6851
    %v6889 = vunpack.c.l.b16 %v6852
    %v6890 = vunpack.c.l.b16 %v6853
    %v6891 = vunpack.c.l.b16 %v6854
    %v6892 = vunpack.c.l.b16 %v6855
    %v6893 = vunpack.c.l.b16 %v6856
    %v6894 = vunpack.c.l.b16 %v6857
    %v6895 = vunpack.c.l.b16 %v6858
    %v6896 = vpack.c.b16 %v6881, %v6880
    %v6897 = vpack.c.b16 %v6883, %v6882
    %v6898 = vpack.c.b16 %v6885, %v6884
    %v6899 = vpack.c.b16 %v6887, %v6886
    %v6900 = vpack.c.b16 %v6889, %v6888
    %v6901 = vpack.c.b16 %v6891, %v6890
    %v6902 = vpack.c.b16 %v6893, %v6892
    %v6903 = vpack.c.b16 %v6895, %v6894
    %6912 = vmatpush.bf16.msra.mxu0 %v6903
    %6913 = vmatpush.bf16.msra.mxu0 %v6902
    %6914 = vmatpush.bf16.msra.mxu0 %v6901
    %6915 = vmatpush.bf16.msra.mxu0 %v6900
    %6916 = vmatpush.bf16.msra.mxu0 %v6899
    %6917 = vmatpush.bf16.msra.mxu0 %v6898
    %6918 = vmatpush.bf16.msra.mxu0 %v6897
    %6919 = vmatpush.bf16.msra.mxu0 %v6896
    %6920 = vmatmul.bf16.gmra.mxu0 %v6859
    %v6921 = vpop.f32.mrf.mxu0
    %v6922 = vadd.f32 %v6862, %v6921
    %v6923 = vpop.f32.mrf.mxu0
    %v6924 = vadd.f32 %v6862, %v6923
    %6925 = vdwg.mxu0
    %v6926 = vadd.f32 %v5928, %v6922
    %v6927 = vadd.f32 %v5929, %v6924
    %v6928 = vld [vmem:[#allocation19] sm:$0x1]
    %v6929 = vld [vmem:[#allocation21] sm:$0x1]
    %6930 = vadd.xlane.f32.xlu0 %v6926
    %v6931 = vpop.xlane.xlu0 %6930
    %6932 = vadd.xlane.f32.xlu0 %v6927
    %v6933 = vpop.xlane.xlu0 %6932
    %v6934 = vmul.f32 %v6931, 0.033333335
    %v6935 = vmul.f32 %v6933, 0.033333335
    %v6936 = vmul.f32 %v6926, %v6926
    %v6937 = vmul.f32 %v6927, %v6927
    %6938 = vadd.xlane.f32.xlu0 %v6936
    %v6939 = vpop.xlane.xlu0 %6938
    %6940 = vadd.xlane.f32.xlu0 %v6937
    %v6941 = vpop.xlane.xlu0 %6940
    %v6942 = vmul.f32 %v6939, 0.033333335
    %v6943 = vmul.f32 %v6941, 0.033333335
    %v6944 = vmul.f32 %v6934, %v6934
    %v6945 = vmul.f32 %v6935, %v6935
    %v6946 = vsub.f32 %v6942, %v6944
    %v6947 = vsub.f32 %v6943, %v6945
    %v6948 = vsub.f32 %v6926, %v6934
    %v6949 = vsub.f32 %v6927, %v6935
    %v6950 = vadd.f32 %v6946, 1e-05
    %v6951 = vadd.f32 %v6947, 1e-05
    %v6952 = vrsqrt.pop %v6950
    %v6953 = vmul.f32 %v6952, %v6950
    %v6954 = vmul.f32 %v6953, %v6952
    %v6955 = vmul.f32 0.5, %v6954
    %v6956 = vsub.f32 1.5, %v6955
    %v6957 = vmul.f32 %v6952, %v6956
    %vm6958 = vweird.f32 %v6950
    %vm6959 = vweird.f32 %v6952
    %vm6960 = vmor %vm6958, %vm6959
    %v6961 = vsel %vm6960, %v6952, %v6957
    %v6962 = vrsqrt.pop %v6951
    %v6963 = vmul.f32 %v6962, %v6951
    %v6964 = vmul.f32 %v6963, %v6962
    %v6965 = vmul.f32 0.5, %v6964
    %v6966 = vsub.f32 1.5, %v6965
    %v6967 = vmul.f32 %v6962, %v6966
    %vm6968 = vweird.f32 %v6951
    %vm6969 = vweird.f32 %v6962
    %vm6970 = vmor %vm6968, %vm6969
    %v6971 = vsel %vm6970, %v6962, %v6967
    %v6972 = vmul.f32 %v6948, %v6961
    %v6973 = vmul.f32 %v6949, %v6971
    %v6975 = vperm.slane %v6928, 0
    %v6977 = vmul.f32 %v6972, %v6975
    %v6978 = vmul.f32 %v6973, %v6975
    %v6980 = vperm.slane %v6929, 0
    %v6982 = vadd.f32 %v6977, %v6980
    %v6983 = vadd.f32 %v6978, %v6980
    %v6984 = vld [vmem:[%s95] sm:$0xf]
    %v6985 = vld [vmem:[%s95 + $0x4] sm:$0xf]
    %v6986 = vld [vmem:[%s95 + $0x8] sm:$0xf]
    %v6987 = vld [vmem:[%s95 + $0xc] sm:$0xf]
    %v6988 = vld [vmem:[%s95 + $0x10] sm:$0xf]
    %v6989 = vld [vmem:[%s95 + $0x14] sm:$0xf]
    %v6990 = vld [vmem:[%s95 + $0x18] sm:$0xf]
    %v6991 = vld [vmem:[%s95 + $0x1c] sm:$0xf]
    %v6992 = vld [vmem:[%s95 + $0x20] sm:$0xf]
    %v6993 = vld [vmem:[%s95 + $0x24] sm:$0xf]
    %v6994 = vld [vmem:[%s95 + $0x28] sm:$0xf]
    %v6995 = vld [vmem:[%s95 + $0x2c] sm:$0xf]
    %v6996 = vld [vmem:[%s95 + $0x30] sm:$0xf]
    %v6997 = vld [vmem:[%s95 + $0x34] sm:$0xf]
    %v6998 = vld [vmem:[%s95 + $0x38] sm:$0xf]
    %v6999 = vld [vmem:[%s95 + $0x3c] sm:$0xf]
    %v7000 = vpack.c.bf16 %v6983, %v6982
    %v7001 = vld [vmem:[#allocation22] sm:$0x1]
    %v7003 = vperm.slane %v7001, 0
    %v7021 = vunpack.c.l.b16 %v6984
    %v7022 = vunpack.c.l.b16 %v6985
    %v7023 = vunpack.c.l.b16 %v6986
    %v7024 = vunpack.c.l.b16 %v6987
    %v7025 = vunpack.c.l.b16 %v6988
    %v7026 = vunpack.c.l.b16 %v6989
    %v7027 = vunpack.c.l.b16 %v6990
    %v7028 = vunpack.c.l.b16 %v6991
    %v7029 = vunpack.c.l.b16 %v6992
    %v7030 = vunpack.c.l.b16 %v6993
    %v7031 = vunpack.c.l.b16 %v6994
    %v7032 = vunpack.c.l.b16 %v6995
    %v7033 = vunpack.c.l.b16 %v6996
    %v7034 = vunpack.c.l.b16 %v6997
    %v7035 = vunpack.c.l.b16 %v6998
    %v7036 = vunpack.c.l.b16 %v6999
    %v7037 = vpack.c.b16 %v7022, %v7021
    %v7038 = vpack.c.b16 %v7024, %v7023
    %v7039 = vpack.c.b16 %v7026, %v7025
    %v7040 = vpack.c.b16 %v7028, %v7027
    %v7041 = vpack.c.b16 %v7030, %v7029
    %v7042 = vpack.c.b16 %v7032, %v7031
    %v7043 = vpack.c.b16 %v7034, %v7033
    %v7044 = vpack.c.b16 %v7036, %v7035
    %7053 = vmatpush.bf16.msra.mxu0 %v7044
    %7054 = vmatpush.bf16.msra.mxu0 %v7043
    %7055 = vmatpush.bf16.msra.mxu0 %v7042
    %7056 = vmatpush.bf16.msra.mxu0 %v7041
    %7057 = vmatpush.bf16.msra.mxu0 %v7040
    %7058 = vmatpush.bf16.msra.mxu0 %v7039
    %7059 = vmatpush.bf16.msra.mxu0 %v7038
    %7060 = vmatpush.bf16.msra.mxu0 %v7037
    %7061 = vmatmul.bf16.gmra.mxu0 %v7000
    %v7062 = vpop.f32.mrf.mxu0
    %v7063 = vadd.f32 %v7003, %v7062
    %v7064 = vpop.f32.mrf.mxu0
    %v7065 = vadd.f32 %v7003, %v7064
    %7066 = vdwg.mxu0
    %v7067 = vld [vmem:[%s99] sm:$0xff]
    %v7068 = vld [vmem:[%s99 + $0x8] sm:$0xff]
    %v7069 = vld [vmem:[%s99 + $0x10] sm:$0xff]
    %v7070 = vld [vmem:[%s99 + $0x18] sm:$0xff]
    %v7071 = vld [vmem:[%s99 + $0x20] sm:$0xff]
    %v7072 = vld [vmem:[%s99 + $0x28] sm:$0xff]
    %v7073 = vld [vmem:[%s99 + $0x30] sm:$0xff]
    %v7074 = vld [vmem:[%s99 + $0x38] sm:$0xff]
    %v7075 = vld [vmem:[%s99 + $0x40] sm:$0xff]
    %v7076 = vld [vmem:[%s99 + $0x48] sm:$0xff]
    %v7077 = vld [vmem:[%s99 + $0x50] sm:$0xff]
    %v7078 = vld [vmem:[%s99 + $0x58] sm:$0xff]
    %v7079 = vld [vmem:[%s99 + $0x60] sm:$0xff]
    %v7080 = vld [vmem:[%s99 + $0x68] sm:$0xff]
    %v7081 = vld [vmem:[%s99 + $0x70] sm:$0xff]
    %v7082 = vld [vmem:[%s99 + $0x78] sm:$0xff]
    %v7083 = vpack.c.bf16 %v4605, %v4603
    %v7084 = vpack.c.bf16 %v4610, %v4608
    %v7085 = vpack.c.bf16 %v4615, %v4613
    %v7086 = vpack.c.bf16 %v4620, %v4618
    %v7087 = vpack.c.bf16 %v4625, %v4623
    %v7088 = vpack.c.bf16 %v4630, %v4628
    %v7089 = vld [vmem:[%s101] sm:$0x3]
    %v7091 = vperm.slane %v7089, 0
    %v7092 = vperm.slane %v7089, 1
    %v7111 = vunpack.c.l.b16 %v7067
    %v7112 = vunpack.c.h.b16 %v7067
    %v7113 = vunpack.c.l.b16 %v7068
    %v7114 = vunpack.c.h.b16 %v7068
    %v7115 = vunpack.c.l.b16 %v7069
    %v7116 = vunpack.c.h.b16 %v7069
    %v7117 = vunpack.c.l.b16 %v7070
    %v7118 = vunpack.c.h.b16 %v7070
    %v7119 = vunpack.c.l.b16 %v7071
    %v7120 = vunpack.c.h.b16 %v7071
    %v7121 = vunpack.c.l.b16 %v7072
    %v7122 = vunpack.c.h.b16 %v7072
    %v7123 = vunpack.c.l.b16 %v7073
    %v7124 = vunpack.c.h.b16 %v7073
    %v7125 = vunpack.c.l.b16 %v7074
    %v7126 = vunpack.c.h.b16 %v7074
    %v7127 = vunpack.c.l.b16 %v7075
    %v7128 = vunpack.c.h.b16 %v7075
    %v7129 = vunpack.c.l.b16 %v7076
    %v7130 = vunpack.c.h.b16 %v7076
    %v7131 = vunpack.c.l.b16 %v7077
    %v7132 = vunpack.c.h.b16 %v7077
    %v7133 = vunpack.c.l.b16 %v7078
    %v7134 = vunpack.c.h.b16 %v7078
    %v7135 = vunpack.c.l.b16 %v7079
    %v7136 = vunpack.c.h.b16 %v7079
    %v7137 = vunpack.c.l.b16 %v7080
    %v7138 = vunpack.c.h.b16 %v7080
    %v7139 = vunpack.c.l.b16 %v7081
    %v7140 = vunpack.c.h.b16 %v7081
    %v7141 = vunpack.c.l.b16 %v7082
    %v7142 = vunpack.c.h.b16 %v7082
    %v7143 = vpack.c.b16 %v7113, %v7111
    %v7144 = vpack.c.b16 %v7114, %v7112
    %v7145 = vpack.c.b16 %v7117, %v7115
    %v7146 = vpack.c.b16 %v7118, %v7116
    %v7147 = vpack.c.b16 %v7121, %v7119
    %v7148 = vpack.c.b16 %v7122, %v7120
    %v7149 = vpack.c.b16 %v7125, %v7123
    %v7150 = vpack.c.b16 %v7126, %v7124
    %v7151 = vpack.c.b16 %v7129, %v7127
    %v7152 = vpack.c.b16 %v7130, %v7128
    %v7153 = vpack.c.b16 %v7133, %v7131
    %v7154 = vpack.c.b16 %v7134, %v7132
    %v7155 = vpack.c.b16 %v7137, %v7135
    %v7156 = vpack.c.b16 %v7138, %v7136
    %v7157 = vpack.c.b16 %v7141, %v7139
    %v7158 = vpack.c.b16 %v7142, %v7140
    %7175 = vmatpush.bf16.msra.mxu0 %v7157
    %7176 = vmatpush.bf16.msra.mxu0 %v7155
    %7177 = vmatpush.bf16.msra.mxu0 %v7153
    %7178 = vmatpush.bf16.msra.mxu0 %v7151
    %7179 = vmatpush.bf16.msra.mxu0 %v7149
    %7180 = vmatpush.bf16.msra.mxu0 %v7147
    %7181 = vmatpush.bf16.msra.mxu0 %v7145
    %7182 = vmatpush.bf16.msra.mxu0 %v7143
    %7183 = vmatmul.bf16.gmra.mxu0 %v7083
    %v7184 = vpop.f32.mrf.mxu0
    %v7185 = vadd.f32 %v7091, %v7184
    %v7186 = vpop.f32.mrf.mxu0
    %v7187 = vadd.f32 %v7091, %v7186
    %7188 = vmatmul.bf16.gmra.mxu0 %v7084
    %v7189 = vpop.f32.mrf.mxu0
    %v7190 = vadd.f32 %v7091, %v7189
    %v7191 = vpop.f32.mrf.mxu0
    %v7192 = vadd.f32 %v7091, %v7191
    %7193 = vmatmul.bf16.gmra.mxu0 %v7085
    %v7194 = vpop.f32.mrf.mxu0
    %v7195 = vadd.f32 %v7091, %v7194
    %v7196 = vpop.f32.mrf.mxu0
    %v7197 = vadd.f32 %v7091, %v7196
    %7198 = vmatmul.bf16.gmra.mxu0 %v7086
    %v7199 = vpop.f32.mrf.mxu0
    %v7200 = vadd.f32 %v7091, %v7199
    %v7201 = vpop.f32.mrf.mxu0
    %v7202 = vadd.f32 %v7091, %v7201
    %7203 = vmatmul.bf16.gmra.mxu0 %v7087
    %v7204 = vpop.f32.mrf.mxu0
    %v7205 = vadd.f32 %v7091, %v7204
    %v7206 = vpop.f32.mrf.mxu0
    %v7207 = vadd.f32 %v7091, %v7206
    %7208 = vmatmul.bf16.gmra.mxu0 %v7088
    %v7209 = vpop.f32.mrf.mxu0
    %v7210 = vadd.f32 %v7091, %v7209
    %v7211 = vpop.f32.mrf.mxu0
    %v7212 = vadd.f32 %v7091, %v7211
    %7213 = vdwg.mxu0
    %7214 = vmatpush.bf16.msra.mxu0 %v7158
    %7215 = vmatpush.bf16.msra.mxu0 %v7156
    %7216 = vmatpush.bf16.msra.mxu0 %v7154
    %7217 = vmatpush.bf16.msra.mxu0 %v7152
    %7218 = vmatpush.bf16.msra.mxu0 %v7150
    %7219 = vmatpush.bf16.msra.mxu0 %v7148
    %7220 = vmatpush.bf16.msra.mxu0 %v7146
    %7221 = vmatpush.bf16.msra.mxu0 %v7144
    %7222 = vmatmul.bf16.gmra.mxu0 %v7083
    %v7223 = vpop.f32.mrf.mxu0
    %v7224 = vadd.f32 %v7092, %v7223
    %v7225 = vpop.f32.mrf.mxu0
    %v7226 = vadd.f32 %v7092, %v7225
    %7227 = vmatmul.bf16.gmra.mxu0 %v7084
    %v7228 = vpop.f32.mrf.mxu0
    %v7229 = vadd.f32 %v7092, %v7228
    %v7230 = vpop.f32.mrf.mxu0
    %v7231 = vadd.f32 %v7092, %v7230
    %7232 = vmatmul.bf16.gmra.mxu0 %v7085
    %v7233 = vpop.f32.mrf.mxu0
    %v7234 = vadd.f32 %v7092, %v7233
    %v7235 = vpop.f32.mrf.mxu0
    %v7236 = vadd.f32 %v7092, %v7235
    %7237 = vmatmul.bf16.gmra.mxu0 %v7086
    %v7238 = vpop.f32.mrf.mxu0
    %v7239 = vadd.f32 %v7092, %v7238
    %v7240 = vpop.f32.mrf.mxu0
    %v7241 = vadd.f32 %v7092, %v7240
    %7242 = vmatmul.bf16.gmra.mxu0 %v7087
    %v7243 = vpop.f32.mrf.mxu0
    %v7244 = vadd.f32 %v7092, %v7243
    %v7245 = vpop.f32.mrf.mxu0
    %v7246 = vadd.f32 %v7092, %v7245
    %7247 = vmatmul.bf16.gmra.mxu0 %v7088
    %v7248 = vpop.f32.mrf.mxu0
    %v7249 = vadd.f32 %v7092, %v7248
    %v7250 = vpop.f32.mrf.mxu0
    %v7251 = vadd.f32 %v7092, %v7250
    %7252 = vdwg.mxu0
    %v7253 = vmul.f32 %v7063, %v4845
    %v7254 = vmul.f32 %v7065, %v4845
    %v7255 = vmul.f32 %v7063, %v4848
    %v7256 = vmul.f32 %v7065, %v4848
    %v7257 = vmul.f32 %v7063, %v4851
    %v7258 = vmul.f32 %v7065, %v4851
    %v7259 = vmul.f32 %v7063, %v4854
    %v7260 = vmul.f32 %v7065, %v4854
    %v7261 = vmul.f32 %v7063, %v4857
    %v7262 = vmul.f32 %v7065, %v4857
    %v7263 = vmul.f32 %v7063, %v4860
    %v7264 = vmul.f32 %v7065, %v4860
    %v7265 = vmul.f32 %v7063, %v4863
    %v7266 = vmul.f32 %v7065, %v4863
    %v7267 = vmul.f32 %v7063, %v4866
    %v7268 = vmul.f32 %v7065, %v4866
    %v7269 = vmul.f32 %v7063, %v4869
    %v7270 = vmul.f32 %v7065, %v4869
    %v7271 = vmul.f32 %v7063, %v4872
    %v7272 = vmul.f32 %v7065, %v4872
    %v7273 = vmul.f32 %v7063, %v4875
    %v7274 = vmul.f32 %v7065, %v4875
    %v7275 = vmul.f32 %v7063, %v4878
    %v7276 = vmul.f32 %v7065, %v4878
    %v7277 = vmul.f32 %v7063, %v4881
    %v7278 = vmul.f32 %v7065, %v4881
    %v7279 = vmul.f32 %v7063, %v4884
    %v7280 = vmul.f32 %v7065, %v4884
    %v7281 = vmul.f32 %v7063, %v4887
    %v7282 = vmul.f32 %v7065, %v4887
    %v7283 = vpack.c.bf16 %v7254, %v7253
    %v7284 = vpack.c.bf16 %v7256, %v7255
    %v7285 = vpack.c.bf16 %v7258, %v7257
    %v7286 = vpack.c.bf16 %v7260, %v7259
    %v7287 = vpack.c.bf16 %v7262, %v7261
    %v7288 = vpack.c.bf16 %v7264, %v7263
    %v7289 = vpack.c.bf16 %v7266, %v7265
    %v7290 = vpack.c.bf16 %v7268, %v7267
    %v7291 = vpack.c.bf16 %v7270, %v7269
    %v7292 = vpack.c.bf16 %v7272, %v7271
    %v7293 = vpack.c.bf16 %v7274, %v7273
    %v7294 = vpack.c.bf16 %v7276, %v7275
    %v7295 = vpack.c.bf16 %v7278, %v7277
    %v7296 = vpack.c.bf16 %v7280, %v7279
    %v7297 = vpack.c.bf16 %v7282, %v7281
    %7298 = vxpose.xlu0.b32.start [1/16] %v7185, 128
    %7299 = vxpose.xlu0.b32.cont [2/16] %v7187, 128
    %7300 = vxpose.xlu0.b32.cont [3/16] %v7190, 128
    %7301 = vxpose.xlu0.b32.cont [4/16] %v7192, 128
    %7302 = vxpose.xlu0.b32.cont [5/16] %v7195, 128
    %7303 = vxpose.xlu0.b32.cont [6/16] %v7197, 128
    %7304 = vxpose.xlu0.b32.cont [7/16] %v7200, 128
    %7305 = vxpose.xlu0.b32.cont [8/16] %v7202, 128
    %7306 = vxpose.xlu0.b32.cont [9/16] %v7205, 128
    %7307 = vxpose.xlu0.b32.cont [10/16] %v7207, 128
    %7308 = vxpose.xlu0.b32.cont [11/16] %v7210, 128
    %7309 = vxpose.xlu0.b32.cont [12/16] %v7212, 128
    %7310 = vxpose.xlu0.b32.cont [13/16] 0.0, 128
    %7311 = vxpose.xlu0.b32.cont [14/16] 0.0, 128
    %7312 = vxpose.xlu0.b32.cont [15/16] 0.0, 128
    %7313 = vxpose.xlu0.b32.end [16/16] 0.0, 128
    %v7314 = vpop.trf.xlu0
    %v7315 = vpop.trf.xlu0
    %v7316 = vpop.trf.xlu0
    %v7317 = vpop.trf.xlu0
    %v7318 = vpop.trf.xlu0
    %v7319 = vpop.trf.xlu0
    %v7320 = vpop.trf.xlu0
    %v7321 = vpop.trf.xlu0
    %v7322 = vpop.trf.xlu0
    %v7323 = vpop.trf.xlu0
    %v7324 = vpop.trf.xlu0
    %v7325 = vpop.trf.xlu0
    %v7326 = vpop.trf.xlu0
    %v7327 = vpop.trf.xlu0
    %v7328 = vpop.trf.xlu0
    %v7329 = vpop.trf.xlu0
    %v7330 = vpack.c.bf16 %v7315, %v7314
    %v7331 = vpack.c.bf16 %v7317, %v7316
    %v7332 = vpack.c.bf16 %v7319, %v7318
    %v7333 = vpack.c.bf16 %v7321, %v7320
    %v7334 = vpack.c.bf16 %v7323, %v7322
    %v7335 = vpack.c.bf16 %v7325, %v7324
    %v7336 = vpack.c.bf16 %v7327, %v7326
    %v7337 = vpack.c.bf16 %v7329, %v7328
    %7338 = vmatpush.bf16.msra.mxu0 %v7337
    %7339 = vmatpush.bf16.msra.mxu0 %v7336
    %7340 = vmatpush.bf16.msra.mxu0 %v7335
    %7341 = vmatpush.bf16.msra.mxu0 %v7334
    %7342 = vmatpush.bf16.msra.mxu0 %v7333
    %7343 = vmatpush.bf16.msra.mxu0 %v7332
    %7344 = vmatpush.bf16.msra.mxu0 %v7331
    %7345 = vmatpush.bf16.msra.mxu0 %v7330
    %7346 = vmatmul.bf16.gmra.mxu0 %v7283
    %v7347 = vpop.f32.mrf.mxu0
    %v7348 = vadd.f32 %v1134, %v7347
    %v7349 = vpop.f32.mrf.mxu0
    %v7350 = vadd.f32 %v1135, %v7349
    %7351 = vmatmul.bf16.gmra.mxu0 %v7284
    %v7352 = vpop.f32.mrf.mxu0
    %v7353 = vadd.f32 %v1134, %v7352
    %v7354 = vpop.f32.mrf.mxu0
    %v7355 = vadd.f32 %v1135, %v7354
    %7356 = vmatmul.bf16.gmra.mxu0 %v7285
    %v7357 = vpop.f32.mrf.mxu0
    %v7358 = vadd.f32 %v1134, %v7357
    %v7359 = vpop.f32.mrf.mxu0
    %v7360 = vadd.f32 %v1135, %v7359
    %7361 = vmatmul.bf16.gmra.mxu0 %v7286
    %v7362 = vpop.f32.mrf.mxu0
    %v7363 = vadd.f32 %v1134, %v7362
    %v7364 = vpop.f32.mrf.mxu0
    %v7365 = vadd.f32 %v1135, %v7364
    %7366 = vmatmul.bf16.gmra.mxu0 %v7287
    %v7367 = vpop.f32.mrf.mxu0
    %v7368 = vadd.f32 %v1134, %v7367
    %v7369 = vpop.f32.mrf.mxu0
    %v7370 = vadd.f32 %v1135, %v7369
    %7371 = vmatmul.bf16.gmra.mxu0 %v7288
    %v7372 = vpop.f32.mrf.mxu0
    %v7373 = vadd.f32 %v1134, %v7372
    %v7374 = vpop.f32.mrf.mxu0
    %v7375 = vadd.f32 %v1135, %v7374
    %7376 = vmatmul.bf16.gmra.mxu0 %v7289
    %v7377 = vpop.f32.mrf.mxu0
    %v7378 = vadd.f32 %v1134, %v7377
    %v7379 = vpop.f32.mrf.mxu0
    %v7380 = vadd.f32 %v1135, %v7379
    %7381 = vmatmul.bf16.gmra.mxu0 %v7290
    %v7382 = vpop.f32.mrf.mxu0
    %v7383 = vadd.f32 %v1134, %v7382
    %v7384 = vpop.f32.mrf.mxu0
    %v7385 = vadd.f32 %v1135, %v7384
    %7386 = vmatmul.bf16.gmra.mxu0 %v7291
    %v7387 = vpop.f32.mrf.mxu0
    %v7388 = vadd.f32 %v1134, %v7387
    %v7389 = vpop.f32.mrf.mxu0
    %v7390 = vadd.f32 %v1135, %v7389
    %7391 = vmatmul.bf16.gmra.mxu0 %v7292
    %v7392 = vpop.f32.mrf.mxu0
    %v7393 = vadd.f32 %v1134, %v7392
    %v7394 = vpop.f32.mrf.mxu0
    %v7395 = vadd.f32 %v1135, %v7394
    %7396 = vmatmul.bf16.gmra.mxu0 %v7293
    %v7397 = vpop.f32.mrf.mxu0
    %v7398 = vadd.f32 %v1134, %v7397
    %v7399 = vpop.f32.mrf.mxu0
    %v7400 = vadd.f32 %v1135, %v7399
    %7401 = vmatmul.bf16.gmra.mxu0 %v7294
    %v7402 = vpop.f32.mrf.mxu0
    %v7403 = vadd.f32 %v1134, %v7402
    %v7404 = vpop.f32.mrf.mxu0
    %v7405 = vadd.f32 %v1135, %v7404
    %7406 = vmatmul.bf16.gmra.mxu0 %v7295
    %v7407 = vpop.f32.mrf.mxu0
    %v7408 = vadd.f32 %v1134, %v7407
    %v7409 = vpop.f32.mrf.mxu0
    %v7410 = vadd.f32 %v1135, %v7409
    %7411 = vmatmul.bf16.gmra.mxu0 %v7296
    %v7412 = vpop.f32.mrf.mxu0
    %v7413 = vadd.f32 %v1134, %v7412
    %v7414 = vpop.f32.mrf.mxu0
    %v7415 = vadd.f32 %v1135, %v7414
    %7416 = vmatmul.bf16.gmra.mxu0 %v7297
    %v7417 = vpop.f32.mrf.mxu0
    %v7418 = vadd.f32 %v1134, %v7417
    %v7419 = vpop.f32.mrf.mxu0
    %v7420 = vadd.f32 %v1135, %v7419
    %7421 = vdwg.mxu0
    %v7422 = vsel %vm1868, %v7348, -inf
    %7423 = vmax.xlane.f32.xlu0 %v7422
    %v7424 = vpop.xlane.xlu0 %7423
    %v7425 = vsel %vm1868, %v7350, -inf
    %7426 = vmax.xlane.f32.xlu0 %v7425
    %v7427 = vpop.xlane.xlu0 %7426
    %v7428 = vsel %vm1868, %v7353, -inf
    %7429 = vmax.xlane.f32.xlu0 %v7428
    %v7430 = vpop.xlane.xlu0 %7429
    %v7431 = vsel %vm1868, %v7355, -inf
    %7432 = vmax.xlane.f32.xlu0 %v7431
    %v7433 = vpop.xlane.xlu0 %7432
    %v7434 = vsel %vm1868, %v7358, -inf
    %7435 = vmax.xlane.f32.xlu0 %v7434
    %v7436 = vpop.xlane.xlu0 %7435
    %v7437 = vsel %vm1868, %v7360, -inf
    %7438 = vmax.xlane.f32.xlu0 %v7437
    %v7439 = vpop.xlane.xlu0 %7438
    %v7440 = vsel %vm1868, %v7363, -inf
    %7441 = vmax.xlane.f32.xlu0 %v7440
    %v7442 = vpop.xlane.xlu0 %7441
    %v7443 = vsel %vm1868, %v7365, -inf
    %7444 = vmax.xlane.f32.xlu0 %v7443
    %v7445 = vpop.xlane.xlu0 %7444
    %v7446 = vsel %vm1868, %v7368, -inf
    %7447 = vmax.xlane.f32.xlu0 %v7446
    %v7448 = vpop.xlane.xlu0 %7447
    %v7449 = vsel %vm1868, %v7370, -inf
    %7450 = vmax.xlane.f32.xlu0 %v7449
    %v7451 = vpop.xlane.xlu0 %7450
    %v7452 = vsel %vm1868, %v7373, -inf
    %7453 = vmax.xlane.f32.xlu0 %v7452
    %v7454 = vpop.xlane.xlu0 %7453
    %v7455 = vsel %vm1868, %v7375, -inf
    %7456 = vmax.xlane.f32.xlu0 %v7455
    %v7457 = vpop.xlane.xlu0 %7456
    %v7458 = vsel %vm1868, %v7378, -inf
    %7459 = vmax.xlane.f32.xlu0 %v7458
    %v7460 = vpop.xlane.xlu0 %7459
    %v7461 = vsel %vm1868, %v7380, -inf
    %7462 = vmax.xlane.f32.xlu0 %v7461
    %v7463 = vpop.xlane.xlu0 %7462
    %v7464 = vsel %vm1868, %v7383, -inf
    %7465 = vmax.xlane.f32.xlu0 %v7464
    %v7466 = vpop.xlane.xlu0 %7465
    %v7467 = vsel %vm1868, %v7385, -inf
    %7468 = vmax.xlane.f32.xlu0 %v7467
    %v7469 = vpop.xlane.xlu0 %7468
    %v7470 = vsel %vm1868, %v7388, -inf
    %7471 = vmax.xlane.f32.xlu0 %v7470
    %v7472 = vpop.xlane.xlu0 %7471
    %v7473 = vsel %vm1868, %v7390, -inf
    %7474 = vmax.xlane.f32.xlu0 %v7473
    %v7475 = vpop.xlane.xlu0 %7474
    %v7476 = vsel %vm1868, %v7393, -inf
    %7477 = vmax.xlane.f32.xlu0 %v7476
    %v7478 = vpop.xlane.xlu0 %7477
    %v7479 = vsel %vm1868, %v7395, -inf
    %7480 = vmax.xlane.f32.xlu0 %v7479
    %v7481 = vpop.xlane.xlu0 %7480
    %v7482 = vsel %vm1868, %v7398, -inf
    %7483 = vmax.xlane.f32.xlu0 %v7482
    %v7484 = vpop.xlane.xlu0 %7483
    %v7485 = vsel %vm1868, %v7400, -inf
    %7486 = vmax.xlane.f32.xlu0 %v7485
    %v7487 = vpop.xlane.xlu0 %7486
    %v7488 = vsel %vm1868, %v7403, -inf
    %7489 = vmax.xlane.f32.xlu0 %v7488
    %v7490 = vpop.xlane.xlu0 %7489
    %v7491 = vsel %vm1868, %v7405, -inf
    %7492 = vmax.xlane.f32.xlu0 %v7491
    %v7493 = vpop.xlane.xlu0 %7492
    %v7494 = vsel %vm1868, %v7408, -inf
    %7495 = vmax.xlane.f32.xlu0 %v7494
    %v7496 = vpop.xlane.xlu0 %7495
    %v7497 = vsel %vm1868, %v7410, -inf
    %7498 = vmax.xlane.f32.xlu0 %v7497
    %v7499 = vpop.xlane.xlu0 %7498
    %v7500 = vsel %vm1868, %v7413, -inf
    %7501 = vmax.xlane.f32.xlu0 %v7500
    %v7502 = vpop.xlane.xlu0 %7501
    %v7503 = vsel %vm1868, %v7415, -inf
    %7504 = vmax.xlane.f32.xlu0 %v7503
    %v7505 = vpop.xlane.xlu0 %7504
    %v7506 = vsel %vm1868, %v7418, -inf
    %7507 = vmax.xlane.f32.xlu0 %v7506
    %v7508 = vpop.xlane.xlu0 %7507
    %v7509 = vsel %vm1868, %v7420, -inf
    %7510 = vmax.xlane.f32.xlu0 %v7509
    %v7511 = vpop.xlane.xlu0 %7510
    %v7512 = vsub.f32 %v7348, %v7424
    %v7513 = vsub.f32 %v7350, %v7427
    %v7514 = vsub.f32 %v7353, %v7430
    %v7515 = vsub.f32 %v7355, %v7433
    %v7516 = vsub.f32 %v7358, %v7436
    %v7517 = vsub.f32 %v7360, %v7439
    %v7518 = vsub.f32 %v7363, %v7442
    %v7519 = vsub.f32 %v7365, %v7445
    %v7520 = vsub.f32 %v7368, %v7448
    %v7521 = vsub.f32 %v7370, %v7451
    %v7522 = vsub.f32 %v7373, %v7454
    %v7523 = vsub.f32 %v7375, %v7457
    %v7524 = vsub.f32 %v7378, %v7460
    %v7525 = vsub.f32 %v7380, %v7463
    %v7526 = vsub.f32 %v7383, %v7466
    %v7527 = vsub.f32 %v7385, %v7469
    %v7528 = vsub.f32 %v7388, %v7472
    %v7529 = vsub.f32 %v7390, %v7475
    %v7530 = vsub.f32 %v7393, %v7478
    %v7531 = vsub.f32 %v7395, %v7481
    %v7532 = vsub.f32 %v7398, %v7484
    %v7533 = vsub.f32 %v7400, %v7487
    %v7534 = vsub.f32 %v7403, %v7490
    %v7535 = vsub.f32 %v7405, %v7493
    %v7536 = vsub.f32 %v7408, %v7496
    %v7537 = vsub.f32 %v7410, %v7499
    %v7538 = vsub.f32 %v7413, %v7502
    %v7539 = vsub.f32 %v7415, %v7505
    %v7540 = vsub.f32 %v7418, %v7508
    %v7541 = vsub.f32 %v7420, %v7511
    %v7542 = vmul.f32 %v7512, 1.442695
    %v7543 = vpow.pop %v7542
    %v7544 = vmul.f32 %v7513, 1.442695
    %v7545 = vpow.pop %v7544
    %v7546 = vmul.f32 %v7514, 1.442695
    %v7547 = vpow.pop %v7546
    %v7548 = vmul.f32 %v7515, 1.442695
    %v7549 = vpow.pop %v7548
    %v7550 = vmul.f32 %v7516, 1.442695
    %v7551 = vpow.pop %v7550
    %v7552 = vmul.f32 %v7517, 1.442695
    %v7553 = vpow.pop %v7552
    %v7554 = vmul.f32 %v7518, 1.442695
    %v7555 = vpow.pop %v7554
    %v7556 = vmul.f32 %v7519, 1.442695
    %v7557 = vpow.pop %v7556
    %v7558 = vmul.f32 %v7520, 1.442695
    %v7559 = vpow.pop %v7558
    %v7560 = vmul.f32 %v7521, 1.442695
    %v7561 = vpow.pop %v7560
    %v7562 = vmul.f32 %v7522, 1.442695
    %v7563 = vpow.pop %v7562
    %v7564 = vmul.f32 %v7523, 1.442695
    %v7565 = vpow.pop %v7564
    %v7566 = vmul.f32 %v7524, 1.442695
    %v7567 = vpow.pop %v7566
    %v7568 = vmul.f32 %v7525, 1.442695
    %v7569 = vpow.pop %v7568
    %v7570 = vmul.f32 %v7526, 1.442695
    %v7571 = vpow.pop %v7570
    %v7572 = vmul.f32 %v7527, 1.442695
    %v7573 = vpow.pop %v7572
    %v7574 = vmul.f32 %v7528, 1.442695
    %v7575 = vpow.pop %v7574
    %v7576 = vmul.f32 %v7529, 1.442695
    %v7577 = vpow.pop %v7576
    %v7578 = vmul.f32 %v7530, 1.442695
    %v7579 = vpow.pop %v7578
    %v7580 = vmul.f32 %v7531, 1.442695
    %v7581 = vpow.pop %v7580
    %v7582 = vmul.f32 %v7532, 1.442695
    %v7583 = vpow.pop %v7582
    %v7584 = vmul.f32 %v7533, 1.442695
    %v7585 = vpow.pop %v7584
    %v7586 = vmul.f32 %v7534, 1.442695
    %v7587 = vpow.pop %v7586
    %v7588 = vmul.f32 %v7535, 1.442695
    %v7589 = vpow.pop %v7588
    %v7590 = vmul.f32 %v7536, 1.442695
    %v7591 = vpow.pop %v7590
    %v7592 = vmul.f32 %v7537, 1.442695
    %v7593 = vpow.pop %v7592
    %v7594 = vmul.f32 %v7538, 1.442695
    %v7595 = vpow.pop %v7594
    %v7596 = vmul.f32 %v7539, 1.442695
    %v7597 = vpow.pop %v7596
    %v7598 = vmul.f32 %v7540, 1.442695
    %v7599 = vpow.pop %v7598
    %v7600 = vmul.f32 %v7541, 1.442695
    %v7601 = vpow.pop %v7600
    %v7602 = vsel %vm1868, %v7543, 0.0
    %7603 = vadd.xlane.f32.xlu0 %v7602
    %v7604 = vpop.xlane.xlu0 %7603
    %v7605 = vsel %vm1868, %v7545, 0.0
    %7606 = vadd.xlane.f32.xlu0 %v7605
    %v7607 = vpop.xlane.xlu0 %7606
    %v7608 = vsel %vm1868, %v7547, 0.0
    %7609 = vadd.xlane.f32.xlu0 %v7608
    %v7610 = vpop.xlane.xlu0 %7609
    %v7611 = vsel %vm1868, %v7549, 0.0
    %7612 = vadd.xlane.f32.xlu0 %v7611
    %v7613 = vpop.xlane.xlu0 %7612
    %v7614 = vsel %vm1868, %v7551, 0.0
    %7615 = vadd.xlane.f32.xlu0 %v7614
    %v7616 = vpop.xlane.xlu0 %7615
    %v7617 = vsel %vm1868, %v7553, 0.0
    %7618 = vadd.xlane.f32.xlu0 %v7617
    %v7619 = vpop.xlane.xlu0 %7618
    %v7620 = vsel %vm1868, %v7555, 0.0
    %7621 = vadd.xlane.f32.xlu0 %v7620
    %v7622 = vpop.xlane.xlu0 %7621
    %v7623 = vsel %vm1868, %v7557, 0.0
    %7624 = vadd.xlane.f32.xlu0 %v7623
    %v7625 = vpop.xlane.xlu0 %7624
    %v7626 = vsel %vm1868, %v7559, 0.0
    %7627 = vadd.xlane.f32.xlu0 %v7626
    %v7628 = vpop.xlane.xlu0 %7627
    %v7629 = vsel %vm1868, %v7561, 0.0
    %7630 = vadd.xlane.f32.xlu0 %v7629
    %v7631 = vpop.xlane.xlu0 %7630
    %v7632 = vsel %vm1868, %v7563, 0.0
    %7633 = vadd.xlane.f32.xlu0 %v7632
    %v7634 = vpop.xlane.xlu0 %7633
    %v7635 = vsel %vm1868, %v7565, 0.0
    %7636 = vadd.xlane.f32.xlu0 %v7635
    %v7637 = vpop.xlane.xlu0 %7636
    %v7638 = vsel %vm1868, %v7567, 0.0
    %7639 = vadd.xlane.f32.xlu0 %v7638
    %v7640 = vpop.xlane.xlu0 %7639
    %v7641 = vsel %vm1868, %v7569, 0.0
    %7642 = vadd.xlane.f32.xlu0 %v7641
    %v7643 = vpop.xlane.xlu0 %7642
    %v7644 = vsel %vm1868, %v7571, 0.0
    %7645 = vadd.xlane.f32.xlu0 %v7644
    %v7646 = vpop.xlane.xlu0 %7645
    %v7647 = vsel %vm1868, %v7573, 0.0
    %7648 = vadd.xlane.f32.xlu0 %v7647
    %v7649 = vpop.xlane.xlu0 %7648
    %v7650 = vsel %vm1868, %v7575, 0.0
    %7651 = vadd.xlane.f32.xlu0 %v7650
    %v7652 = vpop.xlane.xlu0 %7651
    %v7653 = vsel %vm1868, %v7577, 0.0
    %7654 = vadd.xlane.f32.xlu0 %v7653
    %v7655 = vpop.xlane.xlu0 %7654
    %v7656 = vsel %vm1868, %v7579, 0.0
    %7657 = vadd.xlane.f32.xlu0 %v7656
    %v7658 = vpop.xlane.xlu0 %7657
    %v7659 = vsel %vm1868, %v7581, 0.0
    %7660 = vadd.xlane.f32.xlu0 %v7659
    %v7661 = vpop.xlane.xlu0 %7660
    %v7662 = vsel %vm1868, %v7583, 0.0
    %7663 = vadd.xlane.f32.xlu0 %v7662
    %v7664 = vpop.xlane.xlu0 %7663
    %v7665 = vsel %vm1868, %v7585, 0.0
    %7666 = vadd.xlane.f32.xlu0 %v7665
    %v7667 = vpop.xlane.xlu0 %7666
    %v7668 = vsel %vm1868, %v7587, 0.0
    %7669 = vadd.xlane.f32.xlu0 %v7668
    %v7670 = vpop.xlane.xlu0 %7669
    %v7671 = vsel %vm1868, %v7589, 0.0
    %7672 = vadd.xlane.f32.xlu0 %v7671
    %v7673 = vpop.xlane.xlu0 %7672
    %v7674 = vsel %vm1868, %v7591, 0.0
    %7675 = vadd.xlane.f32.xlu0 %v7674
    %v7676 = vpop.xlane.xlu0 %7675
    %v7677 = vsel %vm1868, %v7593, 0.0
    %7678 = vadd.xlane.f32.xlu0 %v7677
    %v7679 = vpop.xlane.xlu0 %7678
    %v7680 = vsel %vm1868, %v7595, 0.0
    %7681 = vadd.xlane.f32.xlu0 %v7680
    %v7682 = vpop.xlane.xlu0 %7681
    %v7683 = vsel %vm1868, %v7597, 0.0
    %7684 = vadd.xlane.f32.xlu0 %v7683
    %v7685 = vpop.xlane.xlu0 %7684
    %v7686 = vsel %vm1868, %v7599, 0.0
    %7687 = vadd.xlane.f32.xlu0 %v7686
    %v7688 = vpop.xlane.xlu0 %7687
    %v7689 = vsel %vm1868, %v7601, 0.0
    %7690 = vadd.xlane.f32.xlu0 %v7689
    %v7691 = vpop.xlane.xlu0 %7690
    %v7692 = vrcp.pop %v7604
    %v7693 = vrcp.pop %v7607
    %v7694 = vrcp.pop %v7610
    %v7695 = vrcp.pop %v7613
    %v7696 = vrcp.pop %v7616
    %v7697 = vrcp.pop %v7619
    %v7698 = vrcp.pop %v7622
    %v7699 = vrcp.pop %v7625
    %v7700 = vrcp.pop %v7628
    %v7701 = vrcp.pop %v7631
    %v7702 = vrcp.pop %v7634
    %v7703 = vrcp.pop %v7637
    %v7704 = vrcp.pop %v7640
    %v7705 = vrcp.pop %v7643
    %v7706 = vrcp.pop %v7646
    %v7707 = vrcp.pop %v7649
    %v7708 = vrcp.pop %v7652
    %v7709 = vrcp.pop %v7655
    %v7710 = vrcp.pop %v7658
    %v7711 = vrcp.pop %v7661
    %v7712 = vrcp.pop %v7664
    %v7713 = vrcp.pop %v7667
    %v7714 = vrcp.pop %v7670
    %v7715 = vrcp.pop %v7673
    %v7716 = vrcp.pop %v7676
    %v7717 = vrcp.pop %v7679
    %v7718 = vrcp.pop %v7682
    %v7719 = vrcp.pop %v7685
    %v7720 = vrcp.pop %v7688
    %v7721 = vrcp.pop %v7691
    %v7722 = vmul.f32 %v7543, %v7692
    %v7723 = vmul.f32 %v7545, %v7693
    %v7724 = vmul.f32 %v7547, %v7694
    %v7725 = vmul.f32 %v7549, %v7695
    %v7726 = vmul.f32 %v7551, %v7696
    %v7727 = vmul.f32 %v7553, %v7697
    %v7728 = vmul.f32 %v7555, %v7698
    %v7729 = vmul.f32 %v7557, %v7699
    %v7730 = vmul.f32 %v7559, %v7700
    %v7731 = vmul.f32 %v7561, %v7701
    %v7732 = vmul.f32 %v7563, %v7702
    %v7733 = vmul.f32 %v7565, %v7703
    %v7734 = vmul.f32 %v7567, %v7704
    %v7735 = vmul.f32 %v7569, %v7705
    %v7736 = vmul.f32 %v7571, %v7706
    %v7737 = vmul.f32 %v7573, %v7707
    %v7738 = vmul.f32 %v7575, %v7708
    %v7739 = vmul.f32 %v7577, %v7709
    %v7740 = vmul.f32 %v7579, %v7710
    %v7741 = vmul.f32 %v7581, %v7711
    %v7742 = vmul.f32 %v7583, %v7712
    %v7743 = vmul.f32 %v7585, %v7713
    %v7744 = vmul.f32 %v7587, %v7714
    %v7745 = vmul.f32 %v7589, %v7715
    %v7746 = vmul.f32 %v7591, %v7716
    %v7747 = vmul.f32 %v7593, %v7717
    %v7748 = vmul.f32 %v7595, %v7718
    %v7749 = vmul.f32 %v7597, %v7719
    %v7750 = vmul.f32 %v7599, %v7720
    %v7751 = vmul.f32 %v7601, %v7721
    %v7752 = vpack.c.bf16 %v7723, %v7722
    %v7753 = vpack.c.bf16 %v7725, %v7724
    %v7754 = vpack.c.bf16 %v7727, %v7726
    %v7755 = vpack.c.bf16 %v7729, %v7728
    %v7756 = vpack.c.bf16 %v7731, %v7730
    %v7757 = vpack.c.bf16 %v7733, %v7732
    %v7758 = vpack.c.bf16 %v7735, %v7734
    %v7759 = vpack.c.bf16 %v7737, %v7736
    %v7760 = vpack.c.bf16 %v7739, %v7738
    %v7761 = vpack.c.bf16 %v7741, %v7740
    %v7762 = vpack.c.bf16 %v7743, %v7742
    %v7763 = vpack.c.bf16 %v7745, %v7744
    %v7764 = vpack.c.bf16 %v7747, %v7746
    %v7765 = vpack.c.bf16 %v7749, %v7748
    %v7766 = vpack.c.bf16 %v7751, %v7750
    %v7767 = vpack.c.bf16 %v7226, %v7224
    %v7768 = vpack.c.bf16 %v7231, %v7229
    %v7769 = vpack.c.bf16 %v7236, %v7234
    %v7770 = vpack.c.bf16 %v7241, %v7239
    %v7771 = vpack.c.bf16 %v7246, %v7244
    %v7772 = vpack.c.bf16 %v7251, %v7249
    %v7774 = vsel %vm1868, %v7752, 0
    %v7777 = vsel %vm1868, %v7753, 0
    %v7780 = vsel %vm1868, %v7754, 0
    %v7783 = vsel %vm1868, %v7755, 0
    %v7786 = vsel %vm1868, %v7756, 0
    %v7789 = vsel %vm1868, %v7757, 0
    %v7792 = vsel %vm1868, %v7758, 0
    %v7795 = vsel %vm1868, %v7759, 0
    %v7798 = vsel %vm1868, %v7760, 0
    %v7801 = vsel %vm1868, %v7761, 0
    %v7804 = vsel %vm1868, %v7762, 0
    %v7807 = vsel %vm1868, %v7763, 0
    %v7810 = vsel %vm1868, %v7764, 0
    %v7813 = vsel %vm1868, %v7765, 0
    %v7816 = vsel %vm1868, %v7766, 0
    %7818 = vmatpush.bf16.msra.mxu0 0
    %7819 = vmatpush.bf16.msra.mxu0 0
    %7820 = vmatpush.bf16.msra.mxu0 %v7772
    %7821 = vmatpush.bf16.msra.mxu0 %v7771
    %7822 = vmatpush.bf16.msra.mxu0 %v7770
    %7823 = vmatpush.bf16.msra.mxu0 %v7769
    %7824 = vmatpush.bf16.msra.mxu0 %v7768
    %7825 = vmatpush.bf16.msra.mxu0 %v7767
    %7826 = vmatmul.bf16.gmra.mxu0 %v7774
    %v7827 = vpop.f32.mrf.mxu0
    %v7828 = vadd.f32 0.0, %v7827
    %v7829 = vpop.f32.mrf.mxu0
    %v7830 = vadd.f32 0.0, %v7829
    %7831 = vmatmul.bf16.gmra.mxu0 %v7777
    %v7832 = vpop.f32.mrf.mxu0
    %v7833 = vadd.f32 0.0, %v7832
    %v7834 = vpop.f32.mrf.mxu0
    %v7835 = vadd.f32 0.0, %v7834
    %7836 = vmatmul.bf16.gmra.mxu0 %v7780
    %v7837 = vpop.f32.mrf.mxu0
    %v7838 = vadd.f32 0.0, %v7837
    %v7839 = vpop.f32.mrf.mxu0
    %v7840 = vadd.f32 0.0, %v7839
    %7841 = vmatmul.bf16.gmra.mxu0 %v7783
    %v7842 = vpop.f32.mrf.mxu0
    %v7843 = vadd.f32 0.0, %v7842
    %v7844 = vpop.f32.mrf.mxu0
    %v7845 = vadd.f32 0.0, %v7844
    %7846 = vmatmul.bf16.gmra.mxu0 %v7786
    %v7847 = vpop.f32.mrf.mxu0
    %v7848 = vadd.f32 0.0, %v7847
    %v7849 = vpop.f32.mrf.mxu0
    %v7850 = vadd.f32 0.0, %v7849
    %7851 = vmatmul.bf16.gmra.mxu0 %v7789
    %v7852 = vpop.f32.mrf.mxu0
    %v7853 = vadd.f32 0.0, %v7852
    %v7854 = vpop.f32.mrf.mxu0
    %v7855 = vadd.f32 0.0, %v7854
    %7856 = vmatmul.bf16.gmra.mxu0 %v7792
    %v7857 = vpop.f32.mrf.mxu0
    %v7858 = vadd.f32 0.0, %v7857
    %v7859 = vpop.f32.mrf.mxu0
    %v7860 = vadd.f32 0.0, %v7859
    %7861 = vmatmul.bf16.gmra.mxu0 %v7795
    %v7862 = vpop.f32.mrf.mxu0
    %v7863 = vadd.f32 0.0, %v7862
    %v7864 = vpop.f32.mrf.mxu0
    %v7865 = vadd.f32 0.0, %v7864
    %7866 = vmatmul.bf16.gmra.mxu0 %v7798
    %v7867 = vpop.f32.mrf.mxu0
    %v7868 = vadd.f32 0.0, %v7867
    %v7869 = vpop.f32.mrf.mxu0
    %v7870 = vadd.f32 0.0, %v7869
    %7871 = vmatmul.bf16.gmra.mxu0 %v7801
    %v7872 = vpop.f32.mrf.mxu0
    %v7873 = vadd.f32 0.0, %v7872
    %v7874 = vpop.f32.mrf.mxu0
    %v7875 = vadd.f32 0.0, %v7874
    %7876 = vmatmul.bf16.gmra.mxu0 %v7804
    %v7877 = vpop.f32.mrf.mxu0
    %v7878 = vadd.f32 0.0, %v7877
    %v7879 = vpop.f32.mrf.mxu0
    %v7880 = vadd.f32 0.0, %v7879
    %7881 = vmatmul.bf16.gmra.mxu0 %v7807
    %v7882 = vpop.f32.mrf.mxu0
    %v7883 = vadd.f32 0.0, %v7882
    %v7884 = vpop.f32.mrf.mxu0
    %v7885 = vadd.f32 0.0, %v7884
    %7886 = vmatmul.bf16.gmra.mxu0 %v7810
    %v7887 = vpop.f32.mrf.mxu0
    %v7888 = vadd.f32 0.0, %v7887
    %v7889 = vpop.f32.mrf.mxu0
    %v7890 = vadd.f32 0.0, %v7889
    %7891 = vmatmul.bf16.gmra.mxu0 %v7813
    %v7892 = vpop.f32.mrf.mxu0
    %v7893 = vadd.f32 0.0, %v7892
    %v7894 = vpop.f32.mrf.mxu0
    %v7895 = vadd.f32 0.0, %v7894
    %7896 = vmatmul.bf16.gmra.mxu0 %v7816
    %v7897 = vpop.f32.mrf.mxu0
    %v7898 = vadd.f32 0.0, %v7897
    %v7899 = vpop.f32.mrf.mxu0
    %v7900 = vadd.f32 0.0, %v7899
    %7901 = vdwg.mxu0
    %v7902 = vmul.f32 %v7828, %v4845
    %v7903 = vmul.f32 %v7830, %v4845
    %v7904 = vmul.f32 %v7833, %v4848
    %v7905 = vmul.f32 %v7835, %v4848
    %v7906 = vadd.f32 %v7902, %v7904
    %v7907 = vadd.f32 %v7903, %v7905
    %v7908 = vmul.f32 %v7838, %v4851
    %v7909 = vmul.f32 %v7840, %v4851
    %v7910 = vadd.f32 %v7906, %v7908
    %v7911 = vadd.f32 %v7907, %v7909
    %v7912 = vmul.f32 %v7843, %v4854
    %v7913 = vmul.f32 %v7845, %v4854
    %v7914 = vadd.f32 %v7910, %v7912
    %v7915 = vadd.f32 %v7911, %v7913
    %v7916 = vmul.f32 %v7848, %v4857
    %v7917 = vmul.f32 %v7850, %v4857
    %v7918 = vadd.f32 %v7914, %v7916
    %v7919 = vadd.f32 %v7915, %v7917
    %v7920 = vmul.f32 %v7853, %v4860
    %v7921 = vmul.f32 %v7855, %v4860
    %v7922 = vadd.f32 %v7918, %v7920
    %v7923 = vadd.f32 %v7919, %v7921
    %v7924 = vmul.f32 %v7858, %v4863
    %v7925 = vmul.f32 %v7860, %v4863
    %v7926 = vadd.f32 %v7922, %v7924
    %v7927 = vadd.f32 %v7923, %v7925
    %v7928 = vmul.f32 %v7863, %v4866
    %v7929 = vmul.f32 %v7865, %v4866
    %v7930 = vadd.f32 %v7926, %v7928
    %v7931 = vadd.f32 %v7927, %v7929
    %v7932 = vmul.f32 %v7868, %v4869
    %v7933 = vmul.f32 %v7870, %v4869
    %v7934 = vadd.f32 %v7930, %v7932
    %v7935 = vadd.f32 %v7931, %v7933
    %v7936 = vmul.f32 %v7873, %v4872
    %v7937 = vmul.f32 %v7875, %v4872
    %v7938 = vadd.f32 %v7934, %v7936
    %v7939 = vadd.f32 %v7935, %v7937
    %v7940 = vmul.f32 %v7878, %v4875
    %v7941 = vmul.f32 %v7880, %v4875
    %v7942 = vadd.f32 %v7938, %v7940
    %v7943 = vadd.f32 %v7939, %v7941
    %v7944 = vmul.f32 %v7883, %v4878
    %v7945 = vmul.f32 %v7885, %v4878
    %v7946 = vadd.f32 %v7942, %v7944
    %v7947 = vadd.f32 %v7943, %v7945
    %v7948 = vmul.f32 %v7888, %v4881
    %v7949 = vmul.f32 %v7890, %v4881
    %v7950 = vadd.f32 %v7946, %v7948
    %v7951 = vadd.f32 %v7947, %v7949
    %v7952 = vmul.f32 %v7893, %v4884
    %v7953 = vmul.f32 %v7895, %v4884
    %v7954 = vadd.f32 %v7950, %v7952
    %v7955 = vadd.f32 %v7951, %v7953
    %v7956 = vmul.f32 %v7898, %v4887
    %v7957 = vmul.f32 %v7900, %v4887
    %v7958 = vadd.f32 %v7954, %v7956
    %v7959 = vadd.f32 %v7955, %v7957
    %v7960 = vld [vmem:[%s103] sm:$0xf]
    %v7961 = vld [vmem:[%s103 + $0x4] sm:$0xf]
    %v7962 = vld [vmem:[%s103 + $0x8] sm:$0xf]
    %v7963 = vld [vmem:[%s103 + $0xc] sm:$0xf]
    %v7964 = vld [vmem:[%s103 + $0x10] sm:$0xf]
    %v7965 = vld [vmem:[%s103 + $0x14] sm:$0xf]
    %v7966 = vld [vmem:[%s103 + $0x18] sm:$0xf]
    %v7967 = vld [vmem:[%s103 + $0x1c] sm:$0xf]
    %v7968 = vld [vmem:[%s103 + $0x20] sm:$0xf]
    %v7969 = vld [vmem:[%s103 + $0x24] sm:$0xf]
    %v7970 = vld [vmem:[%s103 + $0x28] sm:$0xf]
    %v7971 = vld [vmem:[%s103 + $0x2c] sm:$0xf]
    %v7972 = vld [vmem:[%s103 + $0x30] sm:$0xf]
    %v7973 = vld [vmem:[%s103 + $0x34] sm:$0xf]
    %v7974 = vld [vmem:[%s103 + $0x38] sm:$0xf]
    %v7975 = vld [vmem:[%s103 + $0x3c] sm:$0xf]
    %v7976 = vpack.c.bf16 %v7959, %v7958
    %v7977 = vld [vmem:[#allocation24] sm:$0x1]
    %v7979 = vperm.slane %v7977, 0
    %v7997 = vunpack.c.l.b16 %v7960
    %v7998 = vunpack.c.l.b16 %v7961
    %v7999 = vunpack.c.l.b16 %v7962
    %v8000 = vunpack.c.l.b16 %v7963
    %v8001 = vunpack.c.l.b16 %v7964
    %v8002 = vunpack.c.l.b16 %v7965
    %v8003 = vunpack.c.l.b16 %v7966
    %v8004 = vunpack.c.l.b16 %v7967
    %v8005 = vunpack.c.l.b16 %v7968
    %v8006 = vunpack.c.l.b16 %v7969
    %v8007 = vunpack.c.l.b16 %v7970
    %v8008 = vunpack.c.l.b16 %v7971
    %v8009 = vunpack.c.l.b16 %v7972
    %v8010 = vunpack.c.l.b16 %v7973
    %v8011 = vunpack.c.l.b16 %v7974
    %v8012 = vunpack.c.l.b16 %v7975
    %v8013 = vpack.c.b16 %v7998, %v7997
    %v8014 = vpack.c.b16 %v8000, %v7999
    %v8015 = vpack.c.b16 %v8002, %v8001
    %v8016 = vpack.c.b16 %v8004, %v8003
    %v8017 = vpack.c.b16 %v8006, %v8005
    %v8018 = vpack.c.b16 %v8008, %v8007
    %v8019 = vpack.c.b16 %v8010, %v8009
    %v8020 = vpack.c.b16 %v8012, %v8011
    %8029 = vmatpush.bf16.msra.mxu0 %v8020
    %8030 = vmatpush.bf16.msra.mxu0 %v8019
    %8031 = vmatpush.bf16.msra.mxu0 %v8018
    %8032 = vmatpush.bf16.msra.mxu0 %v8017
    %8033 = vmatpush.bf16.msra.mxu0 %v8016
    %8034 = vmatpush.bf16.msra.mxu0 %v8015
    %8035 = vmatpush.bf16.msra.mxu0 %v8014
    %8036 = vmatpush.bf16.msra.mxu0 %v8013
    %8037 = vmatmul.bf16.gmra.mxu0 %v7976
    %v8038 = vpop.f32.mrf.mxu0
    %v8039 = vadd.f32 %v7979, %v8038
    %v8040 = vpop.f32.mrf.mxu0
    %v8041 = vadd.f32 %v7979, %v8040
    %8042 = vdwg.mxu0
    %v8043 = vadd.f32 %v6982, %v8039
    %v8044 = vadd.f32 %v6983, %v8041
    %v8045 = vld [vmem:[#allocation25] sm:$0x1]
    %v8046 = vld [vmem:[#allocation27] sm:$0x1]
    %8047 = vadd.xlane.f32.xlu0 %v8043
    %v8048 = vpop.xlane.xlu0 %8047
    %8049 = vadd.xlane.f32.xlu0 %v8044
    %v8050 = vpop.xlane.xlu0 %8049
    %v8051 = vmul.f32 %v8048, 0.033333335
    %v8052 = vmul.f32 %v8050, 0.033333335
    %v8053 = vmul.f32 %v8043, %v8043
    %v8054 = vmul.f32 %v8044, %v8044
    %8055 = vadd.xlane.f32.xlu0 %v8053
    %v8056 = vpop.xlane.xlu0 %8055
    %8057 = vadd.xlane.f32.xlu0 %v8054
    %v8058 = vpop.xlane.xlu0 %8057
    %v8059 = vmul.f32 %v8056, 0.033333335
    %v8060 = vmul.f32 %v8058, 0.033333335
    %v8061 = vmul.f32 %v8051, %v8051
    %v8062 = vmul.f32 %v8052, %v8052
    %v8063 = vsub.f32 %v8059, %v8061
    %v8064 = vsub.f32 %v8060, %v8062
    %v8065 = vsub.f32 %v8043, %v8051
    %v8066 = vsub.f32 %v8044, %v8052
    %v8067 = vadd.f32 %v8063, 1e-05
    %v8068 = vadd.f32 %v8064, 1e-05
    %v8069 = vrsqrt.pop %v8067
    %v8070 = vmul.f32 %v8069, %v8067
    %v8071 = vmul.f32 %v8070, %v8069
    %v8072 = vmul.f32 0.5, %v8071
    %v8073 = vsub.f32 1.5, %v8072
    %v8074 = vmul.f32 %v8069, %v8073
    %vm8075 = vweird.f32 %v8067
    %vm8076 = vweird.f32 %v8069
    %vm8077 = vmor %vm8075, %vm8076
    %v8078 = vsel %vm8077, %v8069, %v8074
    %v8079 = vrsqrt.pop %v8068
    %v8080 = vmul.f32 %v8079, %v8068
    %v8081 = vmul.f32 %v8080, %v8079
    %v8082 = vmul.f32 0.5, %v8081
    %v8083 = vsub.f32 1.5, %v8082
    %v8084 = vmul.f32 %v8079, %v8083
    %vm8085 = vweird.f32 %v8068
    %vm8086 = vweird.f32 %v8079
    %vm8087 = vmor %vm8085, %vm8086
    %v8088 = vsel %vm8087, %v8079, %v8084
    %v8089 = vmul.f32 %v8065, %v8078
    %v8090 = vmul.f32 %v8066, %v8088
    %v8092 = vperm.slane %v8045, 0
    %v8094 = vmul.f32 %v8089, %v8092
    %v8095 = vmul.f32 %v8090, %v8092
    %v8097 = vperm.slane %v8046, 0
    %v8099 = vadd.f32 %v8094, %v8097
    %v8100 = vadd.f32 %v8095, %v8097
    %v8101 = vld [vmem:[%s111] sm:$0xf]
    %v8102 = vld [vmem:[%s111 + $0x4] sm:$0xf]
    %v8103 = vld [vmem:[%s111 + $0x8] sm:$0xf]
    %v8104 = vld [vmem:[%s111 + $0xc] sm:$0xf]
    %v8105 = vld [vmem:[%s111 + $0x10] sm:$0xf]
    %v8106 = vld [vmem:[%s111 + $0x14] sm:$0xf]
    %v8107 = vld [vmem:[%s111 + $0x18] sm:$0xf]
    %v8108 = vld [vmem:[%s111 + $0x1c] sm:$0xf]
    %v8109 = vld [vmem:[%s111 + $0x20] sm:$0xf]
    %v8110 = vld [vmem:[%s111 + $0x24] sm:$0xf]
    %v8111 = vld [vmem:[%s111 + $0x28] sm:$0xf]
    %v8112 = vld [vmem:[%s111 + $0x2c] sm:$0xf]
    %v8113 = vld [vmem:[%s111 + $0x30] sm:$0xf]
    %v8114 = vld [vmem:[%s111 + $0x34] sm:$0xf]
    %v8115 = vld [vmem:[%s111 + $0x38] sm:$0xf]
    %v8116 = vld [vmem:[%s111 + $0x3c] sm:$0xf]
    %v8117 = vpack.c.bf16 %v8100, %v8099
    %v8118 = vld [vmem:[#allocation28] sm:$0x1]
    %v8120 = vperm.slane %v8118, 0
    %v8138 = vunpack.c.l.b16 %v8101
    %v8139 = vunpack.c.l.b16 %v8102
    %v8140 = vunpack.c.l.b16 %v8103
    %v8141 = vunpack.c.l.b16 %v8104
    %v8142 = vunpack.c.l.b16 %v8105
    %v8143 = vunpack.c.l.b16 %v8106
    %v8144 = vunpack.c.l.b16 %v8107
    %v8145 = vunpack.c.l.b16 %v8108
    %v8146 = vunpack.c.l.b16 %v8109
    %v8147 = vunpack.c.l.b16 %v8110
    %v8148 = vunpack.c.l.b16 %v8111
    %v8149 = vunpack.c.l.b16 %v8112
    %v8150 = vunpack.c.l.b16 %v8113
    %v8151 = vunpack.c.l.b16 %v8114
    %v8152 = vunpack.c.l.b16 %v8115
    %v8153 = vunpack.c.l.b16 %v8116
    %v8154 = vpack.c.b16 %v8139, %v8138
    %v8155 = vpack.c.b16 %v8141, %v8140
    %v8156 = vpack.c.b16 %v8143, %v8142
    %v8157 = vpack.c.b16 %v8145, %v8144
    %v8158 = vpack.c.b16 %v8147, %v8146
    %v8159 = vpack.c.b16 %v8149, %v8148
    %v8160 = vpack.c.b16 %v8151, %v8150
    %v8161 = vpack.c.b16 %v8153, %v8152
    %8170 = vmatpush.bf16.msra.mxu0 %v8161
    %8171 = vmatpush.bf16.msra.mxu0 %v8160
    %8172 = vmatpush.bf16.msra.mxu0 %v8159
    %8173 = vmatpush.bf16.msra.mxu0 %v8158
    %8174 = vmatpush.bf16.msra.mxu0 %v8157
    %8175 = vmatpush.bf16.msra.mxu0 %v8156
    %8176 = vmatpush.bf16.msra.mxu0 %v8155
    %8177 = vmatpush.bf16.msra.mxu0 %v8154
    %8178 = vmatmul.bf16.gmra.mxu0 %v8117
    %v8179 = vpop.f32.mrf.mxu0
    %v8180 = vadd.f32 %v8120, %v8179
    %v8181 = vpop.f32.mrf.mxu0
    %v8182 = vadd.f32 %v8120, %v8181
    %8183 = vdwg.mxu0
    %v8184 = vmax.f32 %v8180, 0.0
    %v8185 = vmax.f32 %v8182, 0.0
    %v8186 = vld [vmem:[%s115] sm:$0xf]
    %v8187 = vld [vmem:[%s115 + $0x4] sm:$0xf]
    %v8188 = vld [vmem:[%s115 + $0x8] sm:$0xf]
    %v8189 = vld [vmem:[%s115 + $0xc] sm:$0xf]
    %v8190 = vld [vmem:[%s115 + $0x10] sm:$0xf]
    %v8191 = vld [vmem:[%s115 + $0x14] sm:$0xf]
    %v8192 = vld [vmem:[%s115 + $0x18] sm:$0xf]
    %v8193 = vld [vmem:[%s115 + $0x1c] sm:$0xf]
    %v8194 = vld [vmem:[%s115 + $0x20] sm:$0xf]
    %v8195 = vld [vmem:[%s115 + $0x24] sm:$0xf]
    %v8196 = vld [vmem:[%s115 + $0x28] sm:$0xf]
    %v8197 = vld [vmem:[%s115 + $0x2c] sm:$0xf]
    %v8198 = vld [vmem:[%s115 + $0x30] sm:$0xf]
    %v8199 = vld [vmem:[%s115 + $0x34] sm:$0xf]
    %v8200 = vld [vmem:[%s115 + $0x38] sm:$0xf]
    %v8201 = vld [vmem:[%s115 + $0x3c] sm:$0xf]
    %v8202 = vpack.c.bf16 %v8185, %v8184
    %v8203 = vld [vmem:[#allocation30] sm:$0x1]
    %v8205 = vperm.slane %v8203, 0
    %v8223 = vunpack.c.l.b16 %v8186
    %v8224 = vunpack.c.l.b16 %v8187
    %v8225 = vunpack.c.l.b16 %v8188
    %v8226 = vunpack.c.l.b16 %v8189
    %v8227 = vunpack.c.l.b16 %v8190
    %v8228 = vunpack.c.l.b16 %v8191
    %v8229 = vunpack.c.l.b16 %v8192
    %v8230 = vunpack.c.l.b16 %v8193
    %v8231 = vunpack.c.l.b16 %v8194
    %v8232 = vunpack.c.l.b16 %v8195
    %v8233 = vunpack.c.l.b16 %v8196
    %v8234 = vunpack.c.l.b16 %v8197
    %v8235 = vunpack.c.l.b16 %v8198
    %v8236 = vunpack.c.l.b16 %v8199
    %v8237 = vunpack.c.l.b16 %v8200
    %v8238 = vunpack.c.l.b16 %v8201
    %v8239 = vpack.c.b16 %v8224, %v8223
    %v8240 = vpack.c.b16 %v8226, %v8225
    %v8241 = vpack.c.b16 %v8228, %v8227
    %v8242 = vpack.c.b16 %v8230, %v8229
    %v8243 = vpack.c.b16 %v8232, %v8231
    %v8244 = vpack.c.b16 %v8234, %v8233
    %v8245 = vpack.c.b16 %v8236, %v8235
    %v8246 = vpack.c.b16 %v8238, %v8237
    %8255 = vmatpush.bf16.msra.mxu0 %v8246
    %8256 = vmatpush.bf16.msra.mxu0 %v8245
    %8257 = vmatpush.bf16.msra.mxu0 %v8244
    %8258 = vmatpush.bf16.msra.mxu0 %v8243
    %8259 = vmatpush.bf16.msra.mxu0 %v8242
    %8260 = vmatpush.bf16.msra.mxu0 %v8241
    %8261 = vmatpush.bf16.msra.mxu0 %v8240
    %8262 = vmatpush.bf16.msra.mxu0 %v8239
    %8263 = vmatmul.bf16.gmra.mxu0 %v8202
    %v8264 = vpop.f32.mrf.mxu0
    %v8265 = vadd.f32 %v8205, %v8264
    %v8266 = vpop.f32.mrf.mxu0
    %v8267 = vadd.f32 %v8205, %v8266
    %8268 = vdwg.mxu0
    %v8269 = vadd.f32 %v8099, %v8265
    %v8270 = vadd.f32 %v8100, %v8267
    %v8271 = vld [vmem:[#allocation31] sm:$0x1]
    %v8272 = vld [vmem:[#allocation33] sm:$0x1]
    %8273 = vadd.xlane.f32.xlu0 %v8269
    %v8274 = vpop.xlane.xlu0 %8273
    %8275 = vadd.xlane.f32.xlu0 %v8270
    %v8276 = vpop.xlane.xlu0 %8275
    %v8277 = vmul.f32 %v8274, 0.033333335
    %v8278 = vmul.f32 %v8276, 0.033333335
    %v8279 = vmul.f32 %v8269, %v8269
    %v8280 = vmul.f32 %v8270, %v8270
    %8281 = vadd.xlane.f32.xlu0 %v8279
    %v8282 = vpop.xlane.xlu0 %8281
    %8283 = vadd.xlane.f32.xlu0 %v8280
    %v8284 = vpop.xlane.xlu0 %8283
    %v8285 = vmul.f32 %v8282, 0.033333335
    %v8286 = vmul.f32 %v8284, 0.033333335
    %v8287 = vmul.f32 %v8277, %v8277
    %v8288 = vmul.f32 %v8278, %v8278
    %v8289 = vsub.f32 %v8285, %v8287
    %v8290 = vsub.f32 %v8286, %v8288
    %v8291 = vsub.f32 %v8269, %v8277
    %v8292 = vsub.f32 %v8270, %v8278
    %v8293 = vadd.f32 %v8289, 1e-05
    %v8294 = vadd.f32 %v8290, 1e-05
    %v8295 = vrsqrt.pop %v8293
    %v8296 = vmul.f32 %v8295, %v8293
    %v8297 = vmul.f32 %v8296, %v8295
    %v8298 = vmul.f32 0.5, %v8297
    %v8299 = vsub.f32 1.5, %v8298
    %v8300 = vmul.f32 %v8295, %v8299
    %vm8301 = vweird.f32 %v8293
    %vm8302 = vweird.f32 %v8295
    %vm8303 = vmor %vm8301, %vm8302
    %v8304 = vsel %vm8303, %v8295, %v8300
    %v8305 = vrsqrt.pop %v8294
    %v8306 = vmul.f32 %v8305, %v8294
    %v8307 = vmul.f32 %v8306, %v8305
    %v8308 = vmul.f32 0.5, %v8307
    %v8309 = vsub.f32 1.5, %v8308
    %v8310 = vmul.f32 %v8305, %v8309
    %vm8311 = vweird.f32 %v8294
    %vm8312 = vweird.f32 %v8305
    %vm8313 = vmor %vm8311, %vm8312
    %v8314 = vsel %vm8313, %v8305, %v8310
    %v8315 = vmul.f32 %v8291, %v8304
    %v8316 = vmul.f32 %v8292, %v8314
    %v8318 = vperm.slane %v8271, 0
    %v8320 = vmul.f32 %v8315, %v8318
    %v8321 = vmul.f32 %v8316, %v8318
    %v8323 = vperm.slane %v8272, 0
    %v8325 = vadd.f32 %v8320, %v8323
    %v8326 = vadd.f32 %v8321, %v8323
    %v8327 = vld [vmem:[%s123] sm:$0xf]
    %v8328 = vld [vmem:[%s123 + $0x4] sm:$0xf]
    %v8329 = vld [vmem:[%s123 + $0x8] sm:$0xf]
    %v8330 = vld [vmem:[%s123 + $0xc] sm:$0xf]
    %v8331 = vld [vmem:[%s123 + $0x10] sm:$0xf]
    %v8332 = vld [vmem:[%s123 + $0x14] sm:$0xf]
    %v8333 = vld [vmem:[%s123 + $0x18] sm:$0xf]
    %v8334 = vld [vmem:[%s123 + $0x1c] sm:$0xf]
    %v8335 = vld [vmem:[%s123 + $0x20] sm:$0xf]
    %v8336 = vld [vmem:[%s123 + $0x24] sm:$0xf]
    %v8337 = vld [vmem:[%s123 + $0x28] sm:$0xf]
    %v8338 = vld [vmem:[%s123 + $0x2c] sm:$0xf]
    %v8339 = vld [vmem:[%s123 + $0x30] sm:$0xf]
    %v8340 = vld [vmem:[%s123 + $0x34] sm:$0xf]
    %v8341 = vld [vmem:[%s123 + $0x38] sm:$0xf]
    %v8342 = vld [vmem:[%s123 + $0x3c] sm:$0xf]
    %v8343 = vpack.c.bf16 %v8326, %v8325
    %v8344 = vld [vmem:[#allocation34] sm:$0x1]
    %v8346 = vperm.slane %v8344, 0
    %v8364 = vunpack.c.l.b16 %v8327
    %v8365 = vunpack.c.l.b16 %v8328
    %v8366 = vunpack.c.l.b16 %v8329
    %v8367 = vunpack.c.l.b16 %v8330
    %v8368 = vunpack.c.l.b16 %v8331
    %v8369 = vunpack.c.l.b16 %v8332
    %v8370 = vunpack.c.l.b16 %v8333
    %v8371 = vunpack.c.l.b16 %v8334
    %v8372 = vunpack.c.l.b16 %v8335
    %v8373 = vunpack.c.l.b16 %v8336
    %v8374 = vunpack.c.l.b16 %v8337
    %v8375 = vunpack.c.l.b16 %v8338
    %v8376 = vunpack.c.l.b16 %v8339
    %v8377 = vunpack.c.l.b16 %v8340
    %v8378 = vunpack.c.l.b16 %v8341
    %v8379 = vunpack.c.l.b16 %v8342
    %v8380 = vpack.c.b16 %v8365, %v8364
    %v8381 = vpack.c.b16 %v8367, %v8366
    %v8382 = vpack.c.b16 %v8369, %v8368
    %v8383 = vpack.c.b16 %v8371, %v8370
    %v8384 = vpack.c.b16 %v8373, %v8372
    %v8385 = vpack.c.b16 %v8375, %v8374
    %v8386 = vpack.c.b16 %v8377, %v8376
    %v8387 = vpack.c.b16 %v8379, %v8378
    %8396 = vmatpush.bf16.msra.mxu0 %v8387
    %8397 = vmatpush.bf16.msra.mxu0 %v8386
    %8398 = vmatpush.bf16.msra.mxu0 %v8385
    %8399 = vmatpush.bf16.msra.mxu0 %v8384
    %8400 = vmatpush.bf16.msra.mxu0 %v8383
    %8401 = vmatpush.bf16.msra.mxu0 %v8382
    %8402 = vmatpush.bf16.msra.mxu0 %v8381
    %8403 = vmatpush.bf16.msra.mxu0 %v8380
    %8404 = vmatmul.bf16.gmra.mxu0 %v8343
    %v8405 = vpop.f32.mrf.mxu0
    %v8406 = vadd.f32 %v8346, %v8405
    %v8407 = vpop.f32.mrf.mxu0
    %v8408 = vadd.f32 %v8346, %v8407
    %8409 = vdwg.mxu0
    %8410 = vst [vmem:[%s127] sm:$0xff] %v8406
    %8411 = vst [vmem:[%s127 + $0x8] sm:$0xff] %v8408
    // Predicated region
    $region342: #{attention_forward.1} parent=1 // pred_check
      _
    $region343: #{attention_forward.1} parent=1 // pred_check_branch
      %8413 = sbr.rel (0) target = $region345
    $region344: #{attention_forward.1} parent=1 // pred_region
      _
    $region345: #{attention_forward.1} parent=1 // pred_fallthru
      _
    // Predicated region
    $region346: #{attention_forward.1} parent=1 // pred_check
      _
    $region347: #{attention_forward.1} parent=1 // pred_check_branch
      %8415 = sbr.rel (0) target = $region349
    $region348: #{attention_forward.1} parent=1 // pred_region
      _
    $region349: #{attention_forward.1} parent=1 // pred_fallthru
      _
    %8416 = vsyncpa [#allocation3], 1
    %8417 = vsyncpa [#allocation5], 1
    %8418 = vsyncpa [#allocation8], 1
    %8419 = vsyncpa [#allocation11], 1
    %8420 = vsyncpa [#allocation14], 1
    %8421 = vsyncpa [#allocation17], 1
    %8422 = vsyncpa [#allocation20], 1
    %8423 = vsyncpa [#allocation23], 1
    %8424 = vsyncpa [#allocation26], 1
    %8425 = vsyncpa [#allocation29], 1
    %8426 = vsyncpa [#allocation32], 1
    %8427 = vsyncpa [#allocation35], 1

</llo_original>
